<compile_context>
chip_gen: v7x
topology: tpu7x:2x2x1
jax: 0.10.0
libtpu: 0.0.40
codegen_flags: <defaults>
</compile_context>

<pallas_src>
import math

import jax
import jax.numpy as jnp
from jax import lax
from jax.experimental import pallas as pl
from jax.experimental.pallas import tpu as pltpu


LANE = 128
SUBLANE = 8


def _round_up(x, m):
    return (x + m - 1) // m * m


# ----------------------------------------------------------------------------
# Fused kernel: input projection + GRU recurrence + output head.
# ----------------------------------------------------------------------------
def _decoder_fused_kernel(x_ref, len_ref, wih_ref, whh_ref, bih_ref, bhn_ref,
                          w0_ref, b0_ref, w1_ref, b1_ref, w2_ref, b2_ref,
                          out_ref, gx_scr, y_scr, h_scr, g_scr):
    TB, HP = y_scr.shape          # T*BP rows, padded hidden
    BP = h_scr.shape[0]           # padded batch (sublane multiple)
    T = TB // BP                  # time steps

    # Everything except the final (vocab-tiled) matmul runs only on the first
    # vocab tile; y_scr / g_scr persist in scratch across grid steps.
    @pl.when(pl.program_id(0) == 0)
    def _():
        # ---- 1) input projection for ALL time steps, one bf16 MXU matmul
        #         (f32 accumulation).  b_hr / b_hz are pre-folded into bih.
        gx_scr[...] = (jnp.dot(x_ref[...], wih_ref[...],
                               preferred_element_type=jnp.float32)
                       + bih_ref[...])

        # ---- 2) serial GRU recurrence (latency-bound: keep the chain lean).
        h_scr[...] = jnp.zeros_like(h_scr)
        lens = len_ref[...]                                  # hoisted load
        bhn = jnp.broadcast_to(bhn_ref[...], (BP, HP))       # hoisted bcast
        whh = whh_ref[...]                                   # hoisted load

        def step(t, carry):
            h = h_scr[...]                                   # (BP, HP)
            row = pl.multiple_of(t * BP, SUBLANE)            # BP % 8 == 0
            gx = gx_scr[pl.ds(row, BP), :]                   # (BP, 3*HP)
            gh = jnp.dot(h, whh, preferred_element_type=jnp.float32)
            # gate slices are full-vreg aligned (each gate padded to HP lanes)
            r = jax.nn.sigmoid(gx[:, 0:HP] + gh[:, 0:HP])
            z = jax.nn.sigmoid(gx[:, HP:2 * HP] + gh[:, HP:2 * HP])
            n = jnp.tanh(gx[:, 2 * HP:3 * HP]
                         + r * (gh[:, 2 * HP:3 * HP] + bhn))
            h_new = n + z * (h - n)
            # pack_padded / pad_packed semantics: finished rows freeze h,
            # emit zeros.
            m = t < lens                                     # (BP, 1) bool
            h_scr[...] = jnp.where(m, h_new, h)
            y_scr[pl.ds(row, BP), :] = jnp.where(m, h_new, 0.0)
            return carry

        lax.fori_loop(0, T, step, 0, unroll=True if T <= 32 else 8)

        # ---- 3) head stages 1-2 over the whole flattened slab, once.
        #         All intermediates lane-dense (EP / E4P padded to 128).
        y_bf = y_scr[...].astype(jnp.bfloat16)
        e = (jnp.dot(y_bf, w0_ref[...],
                     preferred_element_type=jnp.float32) + b0_ref[...])
        h1 = (jnp.dot(e.astype(jnp.bfloat16), w1_ref[...],
                      preferred_element_type=jnp.float32) + b1_ref[...])
        inv_sqrt2 = jnp.float32(0.7071067811865476)
        g = 0.5 * h1 * (1.0 + lax.erf(h1 * inv_sqrt2))       # exact erf GELU
        g_scr[...] = g.astype(jnp.bfloat16)

    # ---- 4) final matmul, tiled over the vocab axis (one tile / grid step).
    out_ref[...] = (jnp.dot(g_scr[...], w2_ref[...],
                            preferred_element_type=jnp.float32)
                    + b2_ref[...]).astype(out_ref.dtype)


def _decoder_fused_call(x2d, len_p, kp, *, T, BP, TV):
    TB = T * BP
    HP = kp["whh_p"].shape[0]
    E4P = kp["w1_p"].shape[1]
    VP = kp["w2_p"].shape[1]
    grid = (VP // TV,)

    def full(arr):
        nd = arr.ndim

        def imap(j):
            return (0,) * nd

        return pl.BlockSpec(arr.shape, imap)

    ins = (x2d, len_p, kp["wih_p"], kp["whh_p"], kp["bih_p"], kp["bhn_p"],
           kp["w0_p"], kp["b0_p"], kp["w1_p"], kp["b1_p"], kp["w2_p"],
           kp["b2_p"])
    in_specs = [full(a) for a in ins[:10]]
    in_specs.append(pl.BlockSpec((E4P, TV), lambda j: (0, j)))   # w2 tile
    in_specs.append(pl.BlockSpec((1, TV), lambda j: (0, j)))     # b2 tile
    out_spec = pl.BlockSpec((TB, TV), lambda j: (0, j))          # lane-dense

    scratch = [
        pltpu.VMEM((TB, 3 * HP), jnp.float32),    # precomputed x-projection
        pltpu.VMEM((TB, HP), jnp.float32),        # rnn output slab
        pltpu.VMEM((BP, HP), jnp.float32),        # hidden state
        pltpu.VMEM((TB, E4P), jnp.bfloat16),      # GELU output (head stage 2)
    ]

    # vmem_limit_bytes sized to the actual scratch + (double-buffered) block
    # footprint, with headroom; capped at physical capacity.
    scratch_bytes = (TB * 3 * HP + TB * HP + BP * HP) * 4 + TB * E4P * 2
    io_bytes = 2 * sum(int(a.size) * a.dtype.itemsize for a in ins)
    io_bytes += 2 * TB * TV * 4
    vmem_limit = min(64 * 1024 * 1024, scratch_bytes + io_bytes + (8 << 20))

    return pl.pallas_call(
        _decoder_fused_kernel,
        out_shape=jax.ShapeDtypeStruct((TB, VP), jnp.float32),
        grid=grid,
        in_specs=in_specs,
        out_specs=out_spec,
        scratch_shapes=scratch,
        compiler_params=pltpu.CompilerParams(
            # vocab axis must be sequential: tile 0 produces y_scr / g_scr.
            dimension_semantics=("arbitrary",),
            vmem_limit_bytes=vmem_limit,
        ),
    )(*ins)


# ----------------------------------------------------------------------------
# Decoder forward (GRU variant), Pallas-backed.
# ----------------------------------------------------------------------------
def decoder_forward(features, caption_ids, kernel_params, embed_table):
    B, T = caption_ids.shape
    E = embed_table.shape[1]

    emb = embed_table[caption_ids]                                # (B, T, E)
    feats = jnp.broadcast_to(features[:, None, :], (B, T, E))     # (B, T, E)
    x = jnp.concatenate([feats, emb], axis=2)                     # (B, T, 2E)
    x_tm = jnp.transpose(x, (1, 0, 2))                            # (T, B, 2E)

    BP = max(SUBLANE, _round_up(B, SUBLANE))
    x_p = jnp.pad(x_tm, ((0, 0), (0, BP - B), (0, 0)))            # (T, BP, 2E)
    x2d = x_p.reshape(T * BP, 2 * E).astype(jnp.bfloat16)

    # lengths: number of non-pad (non-zero) tokens per row (as in the module).
    lengths = (caption_ids != 0).sum(axis=1).astype(jnp.int32)    # (B,)
    len_p = jnp.pad(lengths, (0, BP - B))[:, None]                # (BP, 1)

    VP = kernel_params["w2_p"].shape[1]
    V = kernel_params["vocab_size"]
    TV = 512 if VP % 512 == 0 else (256 if VP % 256 == 0 else 128)

    logits2d = _decoder_fused_call(x2d, len_p, kernel_params,
                                   T=T, BP=BP, TV=TV)             # (T*BP, VP)
    logits = logits2d.reshape(T, BP, VP)[:, :B, :V]               # (T, B, V)
    return jnp.transpose(logits, (1, 0, 2))                       # (B, T, V)


# ----------------------------------------------------------------------------
# Parameter construction (PyTorch layout) + padded kernel layout.
# ----------------------------------------------------------------------------
def make_params(key, embed_dim, hidden_dim, vocab_size):
    E, H, V = embed_dim, hidden_dim, vocab_size
    ks = jax.random.split(key, 10)

    def u(k, shape, fan):
        bound = 1.0 / math.sqrt(fan)
        return jax.random.uniform(k, shape, jnp.float32, -bound, bound)

    return {
        "embed": jax.random.normal(jax.random.fold_in(key, 99), (V, E),
                                   jnp.float32),
        "wih": u(ks[0], (3 * H, 2 * E), H),     # nn.GRU weight_ih_l0
        "whh": u(ks[1], (3 * H, H), H),         # nn.GRU weight_hh_l0
        "bih": u(ks[2], (3 * H,), H),
        "bhh": u(ks[3], (3 * H,), H),
        "w_r2e": u(ks[4], (E, H), H),           # rnn_output_to_embed_linear
        "b_r2e": u(ks[5], (E,), H),
        "w_l1": u(ks[6], (4 * E, E), E),        # decoder_linear1
        "b_l1": u(ks[7], (4 * E,), E),
        "w_l2": u(ks[8], (V, 4 * E), 4 * E),    # decoder_linear2
        "b_l2": u(ks[9], (V,), 4 * E),
    }


def prepare_kernel_params(raw):
    """Transpose + pad torch-layout weights into the kernel's padded layout."""
    H = raw["whh"].shape[1]
    E = raw["w_r2e"].shape[0]
    E4 = raw["w_l1"].shape[0]
    V = raw["w_l2"].shape[0]
    HP = _round_up(H, LANE)       # each gate padded to a full 128-lane block
    EP = _round_up(E, LANE)       # lane-dense head intermediate (stage 1)
    E4P = _round_up(E4, LANE)     # lane-dense head intermediate (stage 2)
    VP = _round_up(V, LANE)       # lane-dense logits

    def gate_pad(w, k_real, k_pad, dtype):
        # w: (3H, K) torch layout -> (k_pad, 3*HP), transposed, gate-padded.
        out = jnp.zeros((k_pad, 3 * HP), jnp.float32)
        for g in range(3):
            out = out.at[:k_real, g * HP:g * HP + H].set(
                w[g * H:(g + 1) * H, :].T)
        return out.astype(dtype)

    def gate_pad_bias(b):
        out = jnp.zeros((1, 3 * HP), jnp.float32)
        for g in range(3):
            out = out.at[0, g * HP:g * HP + H].set(b[g * H:(g + 1) * H])
        return out

    bih, bhh = raw["bih"], raw["bhh"]
    # fold b_hr / b_hz into bih (exact); b_hn must stay inside r*(W_hn h+b_hn)
    bih_fold = jnp.concatenate([bih[0:H] + bhh[0:H],
                                bih[H:2 * H] + bhh[H:2 * H],
                                bih[2 * H:3 * H]])
    bhn_p = jnp.zeros((1, HP), jnp.float32).at[0, :H].set(bhh[2 * H:3 * H])

    w0_p = (jnp.zeros((HP, EP), jnp.float32)
            .at[:H, :E].set(raw["w_r2e"].T).astype(jnp.bfloat16))
    b0_p = jnp.zeros((1, EP), jnp.float32).at[0, :E].set(raw["b_r2e"])
    w1_p = (jnp.zeros((EP, E4P), jnp.float32)
            .at[:E, :E4].set(raw["w_l1"].T).astype(jnp.bfloat16))
    b1_p = jnp.zeros((1, E4P), jnp.float32).at[0, :E4].set(raw["b_l1"])
    w2_p = (jnp.zeros((E4P, VP), jnp.float32)
            .at[:E4, :V].set(raw["w_l2"].T).astype(jnp.bfloat16))
    b2_p = jnp.zeros((1, VP), jnp.float32).at[0, :V].set(raw["b_l2"])

    return {
        "wih_p": gate_pad(raw["wih"], 2 * E, 2 * E, jnp.bfloat16),
        "whh_p": gate_pad(raw["whh"], H, HP, jnp.float32),  # recurrence f32
        "bih_p": gate_pad_bias(bih_fold),
        "bhn_p": bhn_p,
        "w0_p": w0_p, "b0_p": b0_p,
        "w1_p": w1_p, "b1_p": b1_p,
        "w2_p": w2_p, "b2_p": b2_p,
        "vocab_size": V,
    }


# ----------------------------------------------------------------------------
# Pure-JAX reference (mirrors the PyTorch forward, f32) for verification.
# ----------------------------------------------------------------------------
def decoder_forward_ref(features, caption_ids, raw):
    B, T = caption_ids.shape
    emb = raw["embed"][caption_ids]
    feats = jnp.repeat(features[:, None, :], T, axis=1)
    x = jnp.concatenate([feats, emb], axis=2).astype(jnp.float32)
    x_tm = jnp.transpose(x, (1, 0, 2))
    lengths = (caption_ids != 0).sum(axis=1)

    Wih_t, Whh_t = raw["wih"].T, raw["whh"].T
    bih, bhh = raw["bih"], raw["bhh"]
    H = raw["whh"].shape[1]

    def step(h, inp):
        xt, t = inp
        gx = xt @ Wih_t + bih
        gh = h @ Whh_t + bhh
        r = jax.nn.sigmoid(gx[:, :H] + gh[:, :H])
        z = jax.nn.sigmoid(gx[:, H:2 * H] + gh[:, H:2 * H])
        n = jnp.tanh(gx[:, 2 * H:] + r * gh[:, 2 * H:])
        hn = (1.0 - z) * n + z * h
        m = (t < lengths)[:, None]
        return jnp.where(m, hn, h), jnp.where(m, hn, 0.0)

    h0 = jnp.zeros((B, H), jnp.float32)
    _, outs = lax.scan(step, h0, (x_tm, jnp.arange(T)))
    y = jnp.transpose(outs, (1, 0, 2))                       # (B, T, H)
    e = y @ raw["w_r2e"].T + raw["b_r2e"]
    h1 = e @ raw["w_l1"].T + raw["b_l1"]
    g = jax.nn.gelu(h1, approximate=False)
    return g @ raw["w_l2"].T + raw["b_l2"]                   # (B, T, V)


if __name__ == "__main__":
    # Small config consistent with the module: decoder_type="gru",
    # num_layers=1, bidirectional=False.
    EMBED_DIM = 16
    HIDDEN_DIM = 32
    VOCAB_SIZE = 40
    MAX_SEQ_LEN = 20
    B = 4
    T = MAX_SEQ_LEN - 1                  # caption_ids has max_seq_len-1 tokens

    key = jax.random.PRNGKey(0)
    k_feat, k_tok, k_par = jax.random.split(key, 3)

    raw_params = make_params(k_par, EMBED_DIM, HIDDEN_DIM, VOCAB_SIZE)
    kernel_params = prepare_kernel_params(raw_params)

    features = jax.random.normal(k_feat, (B, EMBED_DIM), jnp.float32)

    # captions with descending non-pad lengths (pack_padded_sequence semantics)
    lengths = jnp.array([19, 15, 10, 6], jnp.int32)
    tokens = jax.random.randint(k_tok, (B, T), 1, VOCAB_SIZE)
    pos = jnp.arange(T)[None, :]
    caption_ids = jnp.where(pos < lengths[:, None], tokens, 0).astype(jnp.int32)

    logits = decoder_forward(features, caption_ids, kernel_params,
                             raw_params["embed"])
    logits = jax.block_until_ready(logits)

    ref = decoder_forward_ref(features, caption_ids, raw_params)
    assert logits.shape == (B, T, VOCAB_SIZE)
    # bf16 matmul operands (f32 accumulation) -> bf16-appropriate tolerance.
    max_err = float(jnp.max(jnp.abs(logits - ref)))
    assert jnp.allclose(logits, ref, atol=5e-2, rtol=5e-2), max_err

    print("KERNEL_OK")
</pallas_src>

<mosaic_0001>
module attributes {stable_mosaic.version = 11 : i64} {
  func.func @_decoder_fused_kernel(%arg0: i32, %arg1: memref<152x32xbf16, #tpu.memory_space<vmem>>, %arg2: memref<8x1xi32, #tpu.memory_space<vmem>>, %arg3: memref<32x384xbf16, #tpu.memory_space<vmem>>, %arg4: memref<128x384xf32, #tpu.memory_space<vmem>>, %arg5: memref<1x384xf32, #tpu.memory_space<vmem>>, %arg6: memref<1x128xf32, #tpu.memory_space<vmem>>, %arg7: memref<128x128xbf16, #tpu.memory_space<vmem>>, %arg8: memref<1x128xf32, #tpu.memory_space<vmem>>, %arg9: memref<128x128xbf16, #tpu.memory_space<vmem>>, %arg10: memref<1x128xf32, #tpu.memory_space<vmem>>, %arg11: memref<128x128xbf16, #tpu.memory_space<vmem>>, %arg12: memref<1x128xf32, #tpu.memory_space<vmem>>, %arg13: memref<152x128xf32, #tpu.memory_space<vmem>>, %arg14: memref<152x384xf32, #tpu.memory_space<vmem>>, %arg15: memref<152x128xf32, #tpu.memory_space<vmem>>, %arg16: memref<8x128xf32, #tpu.memory_space<vmem>>, %arg17: memref<152x128xbf16, #tpu.memory_space<vmem>>) attributes {dimension_semantics = [#tpu.dimension_semantics<arbitrary>], iteration_bounds = array<i64: 1>, scalar_prefetch = 0 : i64, scratch_operands = 4 : i64, tpu.core_type = #tpu.core_type<tc>, window_params = [{pipeline_mode = #tpu.pipeline_mode<synchronous>, transform_indices = @transform_0, window_bounds = array<i64: 152, 32>}, {pipeline_mode = #tpu.pipeline_mode<synchronous>, transform_indices = @transform_1, window_bounds = array<i64: 8, 1>}, {pipeline_mode = #tpu.pipeline_mode<synchronous>, transform_indices = @transform_2, window_bounds = array<i64: 32, 384>}, {pipeline_mode = #tpu.pipeline_mode<synchronous>, transform_indices = @transform_3, window_bounds = array<i64: 128, 384>}, {pipeline_mode = #tpu.pipeline_mode<synchronous>, transform_indices = @transform_4, window_bounds = array<i64: 1, 384>}, {pipeline_mode = #tpu.pipeline_mode<synchronous>, transform_indices = @transform_5, window_bounds = array<i64: 1, 128>}, {pipeline_mode = #tpu.pipeline_mode<synchronous>, transform_indices = @transform_6, window_bounds = array<i64: 128, 128>}, {pipeline_mode = #tpu.pipeline_mode<synchronous>, transform_indices = @transform_7, window_bounds = array<i64: 1, 128>}, {pipeline_mode = #tpu.pipeline_mode<synchronous>, transform_indices = @transform_8, window_bounds = array<i64: 128, 128>}, {pipeline_mode = #tpu.pipeline_mode<synchronous>, transform_indices = @transform_9, window_bounds = array<i64: 1, 128>}, {transform_indices = @transform_10, window_bounds = array<i64: 128, 128>}, {transform_indices = @transform_11, window_bounds = array<i64: 1, 128>}, {transform_indices = @transform_12, window_bounds = array<i64: 152, 128>}]} {
    %c0_i32 = arith.constant 0 : i32
    %0 = arith.cmpi eq, %arg0, %c0_i32 : i32
    %1 = arith.extui %0 : i1 to i32
    %c0_i32_0 = arith.constant 0 : i32
    %2 = arith.cmpi ne, %1, %c0_i32_0 : i32
    scf.if %2 {
      %c0_8 = arith.constant 0 : index
      %c0_9 = arith.constant 0 : index
      %10 = vector.load %arg1[%c0_8, %c0_9] : memref<152x32xbf16, #tpu.memory_space<vmem>>, vector<152x32xbf16>
      %c0_10 = arith.constant 0 : index
      %c0_11 = arith.constant 0 : index
      %11 = vector.load %arg3[%c0_10, %c0_11] : memref<32x384xbf16, #tpu.memory_space<vmem>>, vector<32x384xbf16>
      %cst_12 = arith.constant dense<0.000000e+00> : vector<152x384xf32>
      %12 = tpu.matmul %10, %11, %cst_12 {dimension_numbers = #tpu.dot_dimension_numbers<[1], [0], [0], [1], [0, 0, 1, 1], [], []>} : vector<152x32xbf16>, vector<32x384xbf16>, vector<152x384xf32> -> vector<152x384xf32>
      %c0_13 = arith.constant 0 : index
      %c0_14 = arith.constant 0 : index
      %13 = vector.load %arg5[%c0_13, %c0_14] : memref<1x384xf32, #tpu.memory_space<vmem>>, vector<1x384xf32>
      %14 = vector.broadcast %13 : vector<1x384xf32> to vector<152x384xf32>
      %15 = arith.addf %12, %14 : vector<152x384xf32>
      %c0_15 = arith.constant 0 : index
      %c0_16 = arith.constant 0 : index
      %16 = vector.load %arg14[%c0_15, %c0_16] : memref<152x384xf32, #tpu.memory_space<vmem>>, vector<152x384xf32>
      tpu.vector_store %arg14[%c0_15, %c0_16], %15 {strides = array<i32>} : memref<152x384xf32, #tpu.memory_space<vmem>>, vector<152x384xf32>,
      %cst_17 = arith.constant 0.000000e+00 : f32
      %17 = vector.broadcast %cst_17 : f32 to vector<8x128xf32>
      %c0_18 = arith.constant 0 : index
      %c0_19 = arith.constant 0 : index
      %18 = vector.load %arg16[%c0_18, %c0_19] : memref<8x128xf32, #tpu.memory_space<vmem>>, vector<8x128xf32>
      tpu.vector_store %arg16[%c0_18, %c0_19], %17 {strides = array<i32>} : memref<8x128xf32, #tpu.memory_space<vmem>>, vector<8x128xf32>,
      %c0_20 = arith.constant 0 : index
      %c0_21 = arith.constant 0 : index
      %19 = vector.load %arg2[%c0_20, %c0_21] : memref<8x1xi32, #tpu.memory_space<vmem>>, vector<8x1xi32>
      %c0_22 = arith.constant 0 : index
      %c0_23 = arith.constant 0 : index
      %20 = vector.load %arg6[%c0_22, %c0_23] : memref<1x128xf32, #tpu.memory_space<vmem>>, vector<1x128xf32>
      %21 = vector.shape_cast %20 : vector<1x128xf32> to vector<1x128xf32>
      %22 = vector.broadcast %21 : vector<1x128xf32> to vector<8x128xf32>
      %c0_24 = arith.constant 0 : index
      %c0_25 = arith.constant 0 : index
      %23 = vector.load %arg4[%c0_24, %c0_25] : memref<128x384xf32, #tpu.memory_space<vmem>>, vector<128x384xf32>
      %c0_i32_26 = arith.constant 0 : i32
      %c0_27 = arith.constant 0 : index
      %c0_28 = arith.constant 0 : index
      %24 = vector.load %arg16[%c0_27, %c0_28] : memref<8x128xf32, #tpu.memory_space<vmem>>, vector<8x128xf32>
      %c8_i32 = arith.constant 8 : i32
      %25 = arith.muli %c0_i32_26, %c8_i32 : i32
      %26 = tpu.assume_multiple %25, 8 : i32
      %27 = arith.index_cast %26 : i32 to index
      %c0_29 = arith.constant 0 : index
      %28 = vector.load %arg14[%27, %c0_29] : memref<152x384xf32, #tpu.memory_space<vmem>>, vector<8x384xf32>
      %cst_30 = arith.constant dense<0.000000e+00> : vector<8x384xf32>
      %29 = tpu.matmul %24, %23, %cst_30 {dimension_numbers = #tpu.dot_dimension_numbers<[1], [0], [0], [1], [0, 0, 1, 1], [], []>} : vector<8x128xf32>, vector<128x384xf32>, vector<8x384xf32> -> vector<8x384xf32>
      %30 = vector.extract_strided_slice %28 {offsets = [0, 0], sizes = [8, 128], strides = [1, 1]} : vector<8x384xf32> to vector<8x128xf32>
      %31 = vector.extract_strided_slice %29 {offsets = [0, 0], sizes = [8, 128], strides = [1, 1]} : vector<8x384xf32> to vector<8x128xf32>
      %32 = arith.addf %30, %31 : vector<8x128xf32>
      %33 = arith.negf %32 : vector<8x128xf32>
      %34 = math.exp %33 : vector<8x128xf32>
      %cst_31 = arith.constant 1.000000e+00 : f32
      %35 = vector.broadcast %cst_31 : f32 to vector<8x128xf32>
      %36 = arith.addf %35, %34 : vector<8x128xf32>
      %37 = arith.divf %35, %36 : vector<8x128xf32>
      %38 = vector.extract_strided_slice %28 {offsets = [0, 128], sizes = [8, 128], strides = [1, 1]} : vector<8x384xf32> to vector<8x128xf32>
      %39 = vector.extract_strided_slice %29 {offsets = [0, 128], sizes = [8, 128], strides = [1, 1]} : vector<8x384xf32> to vector<8x128xf32>
      %40 = arith.addf %38, %39 : vector<8x128xf32>
      %41 = arith.negf %40 : vector<8x128xf32>
      %42 = math.exp %41 : vector<8x128xf32>
      %cst_32 = arith.constant 1.000000e+00 : f32
      %43 = vector.broadcast %cst_32 : f32 to vector<8x128xf32>
      %44 = arith.addf %43, %42 : vector<8x128xf32>
      %45 = arith.divf %43, %44 : vector<8x128xf32>
      %46 = vector.extract_strided_slice %28 {offsets = [0, 256], sizes = [8, 128], strides = [1, 1]} : vector<8x384xf32> to vector<8x128xf32>
      %47 = vector.extract_strided_slice %29 {offsets = [0, 256], sizes = [8, 128], strides = [1, 1]} : vector<8x384xf32> to vector<8x128xf32>
      %48 = arith.addf %47, %22 : vector<8x128xf32>
      %49 = arith.mulf %37, %48 : vector<8x128xf32>
      %50 = arith.addf %46, %49 : vector<8x128xf32>
      %51 = math.tanh %50 : vector<8x128xf32>
      %52 = arith.subf %24, %51 : vector<8x128xf32>
      %53 = arith.mulf %45, %52 : vector<8x128xf32>
      %54 = arith.addf %51, %53 : vector<8x128xf32>
      %55 = vector.broadcast %c0_i32_26 : i32 to vector<8x1xi32>
      %56 = arith.cmpi slt, %55, %19 : vector<8x1xi32>
      %57 = vector.shape_cast %56 : vector<8x1xi1> to vector<8x1xi1>
      %58 = vector.broadcast %57 : vector<8x1xi1> to vector<8x128xi1>
      %59 = arith.select %58, %54, %24 : vector<8x128xi1>, vector<8x128xf32>
      %c0_33 = arith.constant 0 : index
      %c0_34 = arith.constant 0 : index
      %60 = vector.load %arg16[%c0_33, %c0_34] : memref<8x128xf32, #tpu.memory_space<vmem>>, vector<8x128xf32>
      tpu.vector_store %arg16[%c0_33, %c0_34], %59 {strides = array<i32>} : memref<8x128xf32, #tpu.memory_space<vmem>>, vector<8x128xf32>,
      %cst_35 = arith.constant 0.000000e+00 : f32
      %61 = vector.shape_cast %56 : vector<8x1xi1> to vector<8x1xi1>
      %62 = vector.broadcast %61 : vector<8x1xi1> to vector<8x128xi1>
      %63 = vector.broadcast %cst_35 : f32 to vector<8x128xf32>
      %64 = arith.select %62, %54, %63 : vector<8x128xi1>, vector<8x128xf32>
      %65 = arith.index_cast %26 : i32 to index
      %c0_36 = arith.constant 0 : index
      %66 = vector.load %arg15[%65, %c0_36] : memref<152x128xf32, #tpu.memory_space<vmem>>, vector<8x128xf32>
      tpu.vector_store %arg15[%65, %c0_36], %64 {strides = array<i32>} : memref<152x128xf32, #tpu.memory_space<vmem>>, vector<8x128xf32>,
      %c1_i32 = arith.constant 1 : i32
      %c0_37 = arith.constant 0 : index
      %c0_38 = arith.constant 0 : index
      %67 = vector.load %arg16[%c0_37, %c0_38] : memref<8x128xf32, #tpu.memory_space<vmem>>, vector<8x128xf32>
      %c8_i32_39 = arith.constant 8 : i32
      %68 = arith.muli %c1_i32, %c8_i32_39 : i32
      %69 = tpu.assume_multiple %68, 8 : i32
      %70 = arith.index_cast %69 : i32 to index
      %c0_40 = arith.constant 0 : index
      %71 = vector.load %arg14[%70, %c0_40] : memref<152x384xf32, #tpu.memory_space<vmem>>, vector<8x384xf32>
      %cst_41 = arith.constant dense<0.000000e+00> : vector<8x384xf32>
      %72 = tpu.matmul %67, %23, %cst_41 {dimension_numbers = #tpu.dot_dimension_numbers<[1], [0], [0], [1], [0, 0, 1, 1], [], []>} : vector<8x128xf32>, vector<128x384xf32>, vector<8x384xf32> -> vector<8x384xf32>
      %73 = vector.extract_strided_slice %71 {offsets = [0, 0], sizes = [8, 128], strides = [1, 1]} : vector<8x384xf32> to vector<8x128xf32>
      %74 = vector.extract_strided_slice %72 {offsets = [0, 0], sizes = [8, 128], strides = [1, 1]} : vector<8x384xf32> to vector<8x128xf32>
      %75 = arith.addf %73, %74 : vector<8x128xf32>
      %76 = arith.negf %75 : vector<8x128xf32>
      %77 = math.exp %76 : vector<8x128xf32>
      %cst_42 = arith.constant 1.000000e+00 : f32
      %78 = vector.broadcast %cst_42 : f32 to vector<8x128xf32>
      %79 = arith.addf %78, %77 : vector<8x128xf32>
      %80 = arith.divf %78, %79 : vector<8x128xf32>
      %81 = vector.extract_strided_slice %71 {offsets = [0, 128], sizes = [8, 128], strides = [1, 1]} : vector<8x384xf32> to vector<8x128xf32>
      %82 = vector.extract_strided_slice %72 {offsets = [0, 128], sizes = [8, 128], strides = [1, 1]} : vector<8x384xf32> to vector<8x128xf32>
      %83 = arith.addf %81, %82 : vector<8x128xf32>
      %84 = arith.negf %83 : vector<8x128xf32>
      %85 = math.exp %84 : vector<8x128xf32>
      %cst_43 = arith.constant 1.000000e+00 : f32
      %86 = vector.broadcast %cst_43 : f32 to vector<8x128xf32>
      %87 = arith.addf %86, %85 : vector<8x128xf32>
      %88 = arith.divf %86, %87 : vector<8x128xf32>
      %89 = vector.extract_strided_slice %71 {offsets = [0, 256], sizes = [8, 128], strides = [1, 1]} : vector<8x384xf32> to vector<8x128xf32>
      %90 = vector.extract_strided_slice %72 {offsets = [0, 256], sizes = [8, 128], strides = [1, 1]} : vector<8x384xf32> to vector<8x128xf32>
      %91 = arith.addf %90, %22 : vector<8x128xf32>
      %92 = arith.mulf %80, %91 : vector<8x128xf32>
      %93 = arith.addf %89, %92 : vector<8x128xf32>
      %94 = math.tanh %93 : vector<8x128xf32>
      %95 = arith.subf %67, %94 : vector<8x128xf32>
      %96 = arith.mulf %88, %95 : vector<8x128xf32>
      %97 = arith.addf %94, %96 : vector<8x128xf32>
      %98 = vector.broadcast %c1_i32 : i32 to vector<8x1xi32>
      %99 = arith.cmpi slt, %98, %19 : vector<8x1xi32>
      %100 = vector.shape_cast %99 : vector<8x1xi1> to vector<8x1xi1>
      %101 = vector.broadcast %100 : vector<8x1xi1> to vector<8x128xi1>
      %102 = arith.select %101, %97, %67 : vector<8x128xi1>, vector<8x128xf32>
      %c0_44 = arith.constant 0 : index
      %c0_45 = arith.constant 0 : index
      %103 = vector.load %arg16[%c0_44, %c0_45] : memref<8x128xf32, #tpu.memory_space<vmem>>, vector<8x128xf32>
      tpu.vector_store %arg16[%c0_44, %c0_45], %102 {strides = array<i32>} : memref<8x128xf32, #tpu.memory_space<vmem>>, vector<8x128xf32>,
      %cst_46 = arith.constant 0.000000e+00 : f32
      %104 = vector.shape_cast %99 : vector<8x1xi1> to vector<8x1xi1>
      %105 = vector.broadcast %104 : vector<8x1xi1> to vector<8x128xi1>
      %106 = vector.broadcast %cst_46 : f32 to vector<8x128xf32>
      %107 = arith.select %105, %97, %106 : vector<8x128xi1>, vector<8x128xf32>
      %108 = arith.index_cast %69 : i32 to index
      %c0_47 = arith.constant 0 : index
      %109 = vector.load %arg15[%108, %c0_47] : memref<152x128xf32, #tpu.memory_space<vmem>>, vector<8x128xf32>
      tpu.vector_store %arg15[%108, %c0_47], %107 {strides = array<i32>} : memref<152x128xf32, #tpu.memory_space<vmem>>, vector<8x128xf32>,
      %c2_i32 = arith.constant 2 : i32
      %c0_48 = arith.constant 0 : index
      %c0_49 = arith.constant 0 : index
      %110 = vector.load %arg16[%c0_48, %c0_49] : memref<8x128xf32, #tpu.memory_space<vmem>>, vector<8x128xf32>
      %c8_i32_50 = arith.constant 8 : i32
      %111 = arith.muli %c2_i32, %c8_i32_50 : i32
      %112 = tpu.assume_multiple %111, 8 : i32
      %113 = arith.index_cast %112 : i32 to index
      %c0_51 = arith.constant 0 : index
      %114 = vector.load %arg14[%113, %c0_51] : memref<152x384xf32, #tpu.memory_space<vmem>>, vector<8x384xf32>
      %cst_52 = arith.constant dense<0.000000e+00> : vector<8x384xf32>
      %115 = tpu.matmul %110, %23, %cst_52 {dimension_numbers = #tpu.dot_dimension_numbers<[1], [0], [0], [1], [0, 0, 1, 1], [], []>} : vector<8x128xf32>, vector<128x384xf32>, vector<8x384xf32> -> vector<8x384xf32>
      %116 = vector.extract_strided_slice %114 {offsets = [0, 0], sizes = [8, 128], strides = [1, 1]} : vector<8x384xf32> to vector<8x128xf32>
      %117 = vector.extract_strided_slice %115 {offsets = [0, 0], sizes = [8, 128], strides = [1, 1]} : vector<8x384xf32> to vector<8x128xf32>
      %118 = arith.addf %116, %117 : vector<8x128xf32>
      %119 = arith.negf %118 : vector<8x128xf32>
      %120 = math.exp %119 : vector<8x128xf32>
      %cst_53 = arith.constant 1.000000e+00 : f32
      %121 = vector.broadcast %cst_53 : f32 to vector<8x128xf32>
      %122 = arith.addf %121, %120 : vector<8x128xf32>
      %123 = arith.divf %121, %122 : vector<8x128xf32>
      %124 = vector.extract_strided_slice %114 {offsets = [0, 128], sizes = [8, 128], strides = [1, 1]} : vector<8x384xf32> to vector<8x128xf32>
      %125 = vector.extract_strided_slice %115 {offsets = [0, 128], sizes = [8, 128], strides = [1, 1]} : vector<8x384xf32> to vector<8x128xf32>
      %126 = arith.addf %124, %125 : vector<8x128xf32>
      %127 = arith.negf %126 : vector<8x128xf32>
      %128 = math.exp %127 : vector<8x128xf32>
      %cst_54 = arith.constant 1.000000e+00 : f32
      %129 = vector.broadcast %cst_54 : f32 to vector<8x128xf32>
      %130 = arith.addf %129, %128 : vector<8x128xf32>
      %131 = arith.divf %129, %130 : vector<8x128xf32>
      %132 = vector.extract_strided_slice %114 {offsets = [0, 256], sizes = [8, 128], strides = [1, 1]} : vector<8x384xf32> to vector<8x128xf32>
      %133 = vector.extract_strided_slice %115 {offsets = [0, 256], sizes = [8, 128], strides = [1, 1]} : vector<8x384xf32> to vector<8x128xf32>
      %134 = arith.addf %133, %22 : vector<8x128xf32>
      %135 = arith.mulf %123, %134 : vector<8x128xf32>
      %136 = arith.addf %132, %135 : vector<8x128xf32>
      %137 = math.tanh %136 : vector<8x128xf32>
      %138 = arith.subf %110, %137 : vector<8x128xf32>
      %139 = arith.mulf %131, %138 : vector<8x128xf32>
      %140 = arith.addf %137, %139 : vector<8x128xf32>
      %141 = vector.broadcast %c2_i32 : i32 to vector<8x1xi32>
      %142 = arith.cmpi slt, %141, %19 : vector<8x1xi32>
      %143 = vector.shape_cast %142 : vector<8x1xi1> to vector<8x1xi1>
      %144 = vector.broadcast %143 : vector<8x1xi1> to vector<8x128xi1>
      %145 = arith.select %144, %140, %110 : vector<8x128xi1>, vector<8x128xf32>
      %c0_55 = arith.constant 0 : index
      %c0_56 = arith.constant 0 : index
      %146 = vector.load %arg16[%c0_55, %c0_56] : memref<8x128xf32, #tpu.memory_space<vmem>>, vector<8x128xf32>
      tpu.vector_store %arg16[%c0_55, %c0_56], %145 {strides = array<i32>} : memref<8x128xf32, #tpu.memory_space<vmem>>, vector<8x128xf32>,
      %cst_57 = arith.constant 0.000000e+00 : f32
      %147 = vector.shape_cast %142 : vector<8x1xi1> to vector<8x1xi1>
      %148 = vector.broadcast %147 : vector<8x1xi1> to vector<8x128xi1>
      %149 = vector.broadcast %cst_57 : f32 to vector<8x128xf32>
      %150 = arith.select %148, %140, %149 : vector<8x128xi1>, vector<8x128xf32>
      %151 = arith.index_cast %112 : i32 to index
      %c0_58 = arith.constant 0 : index
      %152 = vector.load %arg15[%151, %c0_58] : memref<152x128xf32, #tpu.memory_space<vmem>>, vector<8x128xf32>
      tpu.vector_store %arg15[%151, %c0_58], %150 {strides = array<i32>} : memref<152x128xf32, #tpu.memory_space<vmem>>, vector<8x128xf32>,
      %c3_i32 = arith.constant 3 : i32
      %c0_59 = arith.constant 0 : index
      %c0_60 = arith.constant 0 : index
      %153 = vector.load %arg16[%c0_59, %c0_60] : memref<8x128xf32, #tpu.memory_space<vmem>>, vector<8x128xf32>
      %c8_i32_61 = arith.constant 8 : i32
      %154 = arith.muli %c3_i32, %c8_i32_61 : i32
      %155 = tpu.assume_multiple %154, 8 : i32
      %156 = arith.index_cast %155 : i32 to index
      %c0_62 = arith.constant 0 : index
      %157 = vector.load %arg14[%156, %c0_62] : memref<152x384xf32, #tpu.memory_space<vmem>>, vector<8x384xf32>
      %cst_63 = arith.constant dense<0.000000e+00> : vector<8x384xf32>
      %158 = tpu.matmul %153, %23, %cst_63 {dimension_numbers = #tpu.dot_dimension_numbers<[1], [0], [0], [1], [0, 0, 1, 1], [], []>} : vector<8x128xf32>, vector<128x384xf32>, vector<8x384xf32> -> vector<8x384xf32>
      %159 = vector.extract_strided_slice %157 {offsets = [0, 0], sizes = [8, 128], strides = [1, 1]} : vector<8x384xf32> to vector<8x128xf32>
      %160 = vector.extract_strided_slice %158 {offsets = [0, 0], sizes = [8, 128], strides = [1, 1]} : vector<8x384xf32> to vector<8x128xf32>
      %161 = arith.addf %159, %160 : vector<8x128xf32>
      %162 = arith.negf %161 : vector<8x128xf32>
      %163 = math.exp %162 : vector<8x128xf32>
      %cst_64 = arith.constant 1.000000e+00 : f32
      %164 = vector.broadcast %cst_64 : f32 to vector<8x128xf32>
      %165 = arith.addf %164, %163 : vector<8x128xf32>
      %166 = arith.divf %164, %165 : vector<8x128xf32>
      %167 = vector.extract_strided_slice %157 {offsets = [0, 128], sizes = [8, 128], strides = [1, 1]} : vector<8x384xf32> to vector<8x128xf32>
      %168 = vector.extract_strided_slice %158 {offsets = [0, 128], sizes = [8, 128], strides = [1, 1]} : vector<8x384xf32> to vector<8x128xf32>
      %169 = arith.addf %167, %168 : vector<8x128xf32>
      %170 = arith.negf %169 : vector<8x128xf32>
      %171 = math.exp %170 : vector<8x128xf32>
      %cst_65 = arith.constant 1.000000e+00 : f32
      %172 = vector.broadcast %cst_65 : f32 to vector<8x128xf32>
      %173 = arith.addf %172, %171 : vector<8x128xf32>
      %174 = arith.divf %172, %173 : vector<8x128xf32>
      %175 = vector.extract_strided_slice %157 {offsets = [0, 256], sizes = [8, 128], strides = [1, 1]} : vector<8x384xf32> to vector<8x128xf32>
      %176 = vector.extract_strided_slice %158 {offsets = [0, 256], sizes = [8, 128], strides = [1, 1]} : vector<8x384xf32> to vector<8x128xf32>
      %177 = arith.addf %176, %22 : vector<8x128xf32>
      %178 = arith.mulf %166, %177 : vector<8x128xf32>
      %179 = arith.addf %175, %178 : vector<8x128xf32>
      %180 = math.tanh %179 : vector<8x128xf32>
      %181 = arith.subf %153, %180 : vector<8x128xf32>
      %182 = arith.mulf %174, %181 : vector<8x128xf32>
      %183 = arith.addf %180, %182 : vector<8x128xf32>
      %184 = vector.broadcast %c3_i32 : i32 to vector<8x1xi32>
      %185 = arith.cmpi slt, %184, %19 : vector<8x1xi32>
      %186 = vector.shape_cast %185 : vector<8x1xi1> to vector<8x1xi1>
      %187 = vector.broadcast %186 : vector<8x1xi1> to vector<8x128xi1>
      %188 = arith.select %187, %183, %153 : vector<8x128xi1>, vector<8x128xf32>
      %c0_66 = arith.constant 0 : index
      %c0_67 = arith.constant 0 : index
      %189 = vector.load %arg16[%c0_66, %c0_67] : memref<8x128xf32, #tpu.memory_space<vmem>>, vector<8x128xf32>
      tpu.vector_store %arg16[%c0_66, %c0_67], %188 {strides = array<i32>} : memref<8x128xf32, #tpu.memory_space<vmem>>, vector<8x128xf32>,
      %cst_68 = arith.constant 0.000000e+00 : f32
      %190 = vector.shape_cast %185 : vector<8x1xi1> to vector<8x1xi1>
      %191 = vector.broadcast %190 : vector<8x1xi1> to vector<8x128xi1>
      %192 = vector.broadcast %cst_68 : f32 to vector<8x128xf32>
      %193 = arith.select %191, %183, %192 : vector<8x128xi1>, vector<8x128xf32>
      %194 = arith.index_cast %155 : i32 to index
      %c0_69 = arith.constant 0 : index
      %195 = vector.load %arg15[%194, %c0_69] : memref<152x128xf32, #tpu.memory_space<vmem>>, vector<8x128xf32>
      tpu.vector_store %arg15[%194, %c0_69], %193 {strides = array<i32>} : memref<152x128xf32, #tpu.memory_space<vmem>>, vector<8x128xf32>,
      %c4_i32 = arith.constant 4 : i32
      %c0_70 = arith.constant 0 : index
      %c0_71 = arith.constant 0 : index
      %196 = vector.load %arg16[%c0_70, %c0_71] : memref<8x128xf32, #tpu.memory_space<vmem>>, vector<8x128xf32>
      %c8_i32_72 = arith.constant 8 : i32
      %197 = arith.muli %c4_i32, %c8_i32_72 : i32
      %198 = tpu.assume_multiple %197, 8 : i32
      %199 = arith.index_cast %198 : i32 to index
      %c0_73 = arith.constant 0 : index
      %200 = vector.load %arg14[%199, %c0_73] : memref<152x384xf32, #tpu.memory_space<vmem>>, vector<8x384xf32>
      %cst_74 = arith.constant dense<0.000000e+00> : vector<8x384xf32>
      %201 = tpu.matmul %196, %23, %cst_74 {dimension_numbers = #tpu.dot_dimension_numbers<[1], [0], [0], [1], [0, 0, 1, 1], [], []>} : vector<8x128xf32>, vector<128x384xf32>, vector<8x384xf32> -> vector<8x384xf32>
      %202 = vector.extract_strided_slice %200 {offsets = [0, 0], sizes = [8, 128], strides = [1, 1]} : vector<8x384xf32> to vector<8x128xf32>
      %203 = vector.extract_strided_slice %201 {offsets = [0, 0], sizes = [8, 128], strides = [1, 1]} : vector<8x384xf32> to vector<8x128xf32>
      %204 = arith.addf %202, %203 : vector<8x128xf32>
      %205 = arith.negf %204 : vector<8x128xf32>
      %206 = math.exp %205 : vector<8x128xf32>
      %cst_75 = arith.constant 1.000000e+00 : f32
      %207 = vector.broadcast %cst_75 : f32 to vector<8x128xf32>
      %208 = arith.addf %207, %206 : vector<8x128xf32>
      %209 = arith.divf %207, %208 : vector<8x128xf32>
      %210 = vector.extract_strided_slice %200 {offsets = [0, 128], sizes = [8, 128], strides = [1, 1]} : vector<8x384xf32> to vector<8x128xf32>
      %211 = vector.extract_strided_slice %201 {offsets = [0, 128], sizes = [8, 128], strides = [1, 1]} : vector<8x384xf32> to vector<8x128xf32>
      %212 = arith.addf %210, %211 : vector<8x128xf32>
      %213 = arith.negf %212 : vector<8x128xf32>
      %214 = math.exp %213 : vector<8x128xf32>
      %cst_76 = arith.constant 1.000000e+00 : f32
      %215 = vector.broadcast %cst_76 : f32 to vector<8x128xf32>
      %216 = arith.addf %215, %214 : vector<8x128xf32>
      %217 = arith.divf %215, %216 : vector<8x128xf32>
      %218 = vector.extract_strided_slice %200 {offsets = [0, 256], sizes = [8, 128], strides = [1, 1]} : vector<8x384xf32> to vector<8x128xf32>
      %219 = vector.extract_strided_slice %201 {offsets = [0, 256], sizes = [8, 128], strides = [1, 1]} : vector<8x384xf32> to vector<8x128xf32>
      %220 = arith.addf %219, %22 : vector<8x128xf32>
      %221 = arith.mulf %209, %220 : vector<8x128xf32>
      %222 = arith.addf %218, %221 : vector<8x128xf32>
      %223 = math.tanh %222 : vector<8x128xf32>
      %224 = arith.subf %196, %223 : vector<8x128xf32>
      %225 = arith.mulf %217, %224 : vector<8x128xf32>
      %226 = arith.addf %223, %225 : vector<8x128xf32>
      %227 = vector.broadcast %c4_i32 : i32 to vector<8x1xi32>
      %228 = arith.cmpi slt, %227, %19 : vector<8x1xi32>
      %229 = vector.shape_cast %228 : vector<8x1xi1> to vector<8x1xi1>
      %230 = vector.broadcast %229 : vector<8x1xi1> to vector<8x128xi1>
      %231 = arith.select %230, %226, %196 : vector<8x128xi1>, vector<8x128xf32>
      %c0_77 = arith.constant 0 : index
      %c0_78 = arith.constant 0 : index
      %232 = vector.load %arg16[%c0_77, %c0_78] : memref<8x128xf32, #tpu.memory_space<vmem>>, vector<8x128xf32>
      tpu.vector_store %arg16[%c0_77, %c0_78], %231 {strides = array<i32>} : memref<8x128xf32, #tpu.memory_space<vmem>>, vector<8x128xf32>,
      %cst_79 = arith.constant 0.000000e+00 : f32
      %233 = vector.shape_cast %228 : vector<8x1xi1> to vector<8x1xi1>
      %234 = vector.broadcast %233 : vector<8x1xi1> to vector<8x128xi1>
      %235 = vector.broadcast %cst_79 : f32 to vector<8x128xf32>
      %236 = arith.select %234, %226, %235 : vector<8x128xi1>, vector<8x128xf32>
      %237 = arith.index_cast %198 : i32 to index
      %c0_80 = arith.constant 0 : index
      %238 = vector.load %arg15[%237, %c0_80] : memref<152x128xf32, #tpu.memory_space<vmem>>, vector<8x128xf32>
      tpu.vector_store %arg15[%237, %c0_80], %236 {strides = array<i32>} : memref<152x128xf32, #tpu.memory_space<vmem>>, vector<8x128xf32>,
      %c5_i32 = arith.constant 5 : i32
      %c0_81 = arith.constant 0 : index
      %c0_82 = arith.constant 0 : index
      %239 = vector.load %arg16[%c0_81, %c0_82] : memref<8x128xf32, #tpu.memory_space<vmem>>, vector<8x128xf32>
      %c8_i32_83 = arith.constant 8 : i32
      %240 = arith.muli %c5_i32, %c8_i32_83 : i32
      %241 = tpu.assume_multiple %240, 8 : i32
      %242 = arith.index_cast %241 : i32 to index
      %c0_84 = arith.constant 0 : index
      %243 = vector.load %arg14[%242, %c0_84] : memref<152x384xf32, #tpu.memory_space<vmem>>, vector<8x384xf32>
      %cst_85 = arith.constant dense<0.000000e+00> : vector<8x384xf32>
      %244 = tpu.matmul %239, %23, %cst_85 {dimension_numbers = #tpu.dot_dimension_numbers<[1], [0], [0], [1], [0, 0, 1, 1], [], []>} : vector<8x128xf32>, vector<128x384xf32>, vector<8x384xf32> -> vector<8x384xf32>
      %245 = vector.extract_strided_slice %243 {offsets = [0, 0], sizes = [8, 128], strides = [1, 1]} : vector<8x384xf32> to vector<8x128xf32>
      %246 = vector.extract_strided_slice %244 {offsets = [0, 0], sizes = [8, 128], strides = [1, 1]} : vector<8x384xf32> to vector<8x128xf32>
      %247 = arith.addf %245, %246 : vector<8x128xf32>
      %248 = arith.negf %247 : vector<8x128xf32>
      %249 = math.exp %248 : vector<8x128xf32>
      %cst_86 = arith.constant 1.000000e+00 : f32
      %250 = vector.broadcast %cst_86 : f32 to vector<8x128xf32>
      %251 = arith.addf %250, %249 : vector<8x128xf32>
      %252 = arith.divf %250, %251 : vector<8x128xf32>
      %253 = vector.extract_strided_slice %243 {offsets = [0, 128], sizes = [8, 128], strides = [1, 1]} : vector<8x384xf32> to vector<8x128xf32>
      %254 = vector.extract_strided_slice %244 {offsets = [0, 128], sizes = [8, 128], strides = [1, 1]} : vector<8x384xf32> to vector<8x128xf32>
      %255 = arith.addf %253, %254 : vector<8x128xf32>
      %256 = arith.negf %255 : vector<8x128xf32>
      %257 = math.exp %256 : vector<8x128xf32>
      %cst_87 = arith.constant 1.000000e+00 : f32
      %258 = vector.broadcast %cst_87 : f32 to vector<8x128xf32>
      %259 = arith.addf %258, %257 : vector<8x128xf32>
      %260 = arith.divf %258, %259 : vector<8x128xf32>
      %261 = vector.extract_strided_slice %243 {offsets = [0, 256], sizes = [8, 128], strides = [1, 1]} : vector<8x384xf32> to vector<8x128xf32>
      %262 = vector.extract_strided_slice %244 {offsets = [0, 256], sizes = [8, 128], strides = [1, 1]} : vector<8x384xf32> to vector<8x128xf32>
      %263 = arith.addf %262, %22 : vector<8x128xf32>
      %264 = arith.mulf %252, %263 : vector<8x128xf32>
      %265 = arith.addf %261, %264 : vector<8x128xf32>
      %266 = math.tanh %265 : vector<8x128xf32>
      %267 = arith.subf %239, %266 : vector<8x128xf32>
      %268 = arith.mulf %260, %267 : vector<8x128xf32>
      %269 = arith.addf %266, %268 : vector<8x128xf32>
      %270 = vector.broadcast %c5_i32 : i32 to vector<8x1xi32>
      %271 = arith.cmpi slt, %270, %19 : vector<8x1xi32>
      %272 = vector.shape_cast %271 : vector<8x1xi1> to vector<8x1xi1>
      %273 = vector.broadcast %272 : vector<8x1xi1> to vector<8x128xi1>
      %274 = arith.select %273, %269, %239 : vector<8x128xi1>, vector<8x128xf32>
      %c0_88 = arith.constant 0 : index
      %c0_89 = arith.constant 0 : index
      %275 = vector.load %arg16[%c0_88, %c0_89] : memref<8x128xf32, #tpu.memory_space<vmem>>, vector<8x128xf32>
      tpu.vector_store %arg16[%c0_88, %c0_89], %274 {strides = array<i32>} : memref<8x128xf32, #tpu.memory_space<vmem>>, vector<8x128xf32>,
      %cst_90 = arith.constant 0.000000e+00 : f32
      %276 = vector.shape_cast %271 : vector<8x1xi1> to vector<8x1xi1>
      %277 = vector.broadcast %276 : vector<8x1xi1> to vector<8x128xi1>
      %278 = vector.broadcast %cst_90 : f32 to vector<8x128xf32>
      %279 = arith.select %277, %269, %278 : vector<8x128xi1>, vector<8x128xf32>
      %280 = arith.index_cast %241 : i32 to index
      %c0_91 = arith.constant 0 : index
      %281 = vector.load %arg15[%280, %c0_91] : memref<152x128xf32, #tpu.memory_space<vmem>>, vector<8x128xf32>
      tpu.vector_store %arg15[%280, %c0_91], %279 {strides = array<i32>} : memref<152x128xf32, #tpu.memory_space<vmem>>, vector<8x128xf32>,
      %c6_i32 = arith.constant 6 : i32
      %c0_92 = arith.constant 0 : index
      %c0_93 = arith.constant 0 : index
      %282 = vector.load %arg16[%c0_92, %c0_93] : memref<8x128xf32, #tpu.memory_space<vmem>>, vector<8x128xf32>
      %c8_i32_94 = arith.constant 8 : i32
      %283 = arith.muli %c6_i32, %c8_i32_94 : i32
      %284 = tpu.assume_multiple %283, 8 : i32
      %285 = arith.index_cast %284 : i32 to index
      %c0_95 = arith.constant 0 : index
      %286 = vector.load %arg14[%285, %c0_95] : memref<152x384xf32, #tpu.memory_space<vmem>>, vector<8x384xf32>
      %cst_96 = arith.constant dense<0.000000e+00> : vector<8x384xf32>
      %287 = tpu.matmul %282, %23, %cst_96 {dimension_numbers = #tpu.dot_dimension_numbers<[1], [0], [0], [1], [0, 0, 1, 1], [], []>} : vector<8x128xf32>, vector<128x384xf32>, vector<8x384xf32> -> vector<8x384xf32>
      %288 = vector.extract_strided_slice %286 {offsets = [0, 0], sizes = [8, 128], strides = [1, 1]} : vector<8x384xf32> to vector<8x128xf32>
      %289 = vector.extract_strided_slice %287 {offsets = [0, 0], sizes = [8, 128], strides = [1, 1]} : vector<8x384xf32> to vector<8x128xf32>
      %290 = arith.addf %288, %289 : vector<8x128xf32>
      %291 = arith.negf %290 : vector<8x128xf32>
      %292 = math.exp %291 : vector<8x128xf32>
      %cst_97 = arith.constant 1.000000e+00 : f32
      %293 = vector.broadcast %cst_97 : f32 to vector<8x128xf32>
      %294 = arith.addf %293, %292 : vector<8x128xf32>
      %295 = arith.divf %293, %294 : vector<8x128xf32>
      %296 = vector.extract_strided_slice %286 {offsets = [0, 128], sizes = [8, 128], strides = [1, 1]} : vector<8x384xf32> to vector<8x128xf32>
      %297 = vector.extract_strided_slice %287 {offsets = [0, 128], sizes = [8, 128], strides = [1, 1]} : vector<8x384xf32> to vector<8x128xf32>
      %298 = arith.addf %296, %297 : vector<8x128xf32>
      %299 = arith.negf %298 : vector<8x128xf32>
      %300 = math.exp %299 : vector<8x128xf32>
      %cst_98 = arith.constant 1.000000e+00 : f32
      %301 = vector.broadcast %cst_98 : f32 to vector<8x128xf32>
      %302 = arith.addf %301, %300 : vector<8x128xf32>
      %303 = arith.divf %301, %302 : vector<8x128xf32>
      %304 = vector.extract_strided_slice %286 {offsets = [0, 256], sizes = [8, 128], strides = [1, 1]} : vector<8x384xf32> to vector<8x128xf32>
      %305 = vector.extract_strided_slice %287 {offsets = [0, 256], sizes = [8, 128], strides = [1, 1]} : vector<8x384xf32> to vector<8x128xf32>
      %306 = arith.addf %305, %22 : vector<8x128xf32>
      %307 = arith.mulf %295, %306 : vector<8x128xf32>
      %308 = arith.addf %304, %307 : vector<8x128xf32>
      %309 = math.tanh %308 : vector<8x128xf32>
      %310 = arith.subf %282, %309 : vector<8x128xf32>
      %311 = arith.mulf %303, %310 : vector<8x128xf32>
      %312 = arith.addf %309, %311 : vector<8x128xf32>
      %313 = vector.broadcast %c6_i32 : i32 to vector<8x1xi32>
      %314 = arith.cmpi slt, %313, %19 : vector<8x1xi32>
      %315 = vector.shape_cast %314 : vector<8x1xi1> to vector<8x1xi1>
      %316 = vector.broadcast %315 : vector<8x1xi1> to vector<8x128xi1>
      %317 = arith.select %316, %312, %282 : vector<8x128xi1>, vector<8x128xf32>
      %c0_99 = arith.constant 0 : index
      %c0_100 = arith.constant 0 : index
      %318 = vector.load %arg16[%c0_99, %c0_100] : memref<8x128xf32, #tpu.memory_space<vmem>>, vector<8x128xf32>
      tpu.vector_store %arg16[%c0_99, %c0_100], %317 {strides = array<i32>} : memref<8x128xf32, #tpu.memory_space<vmem>>, vector<8x128xf32>,
      %cst_101 = arith.constant 0.000000e+00 : f32
      %319 = vector.shape_cast %314 : vector<8x1xi1> to vector<8x1xi1>
      %320 = vector.broadcast %319 : vector<8x1xi1> to vector<8x128xi1>
      %321 = vector.broadcast %cst_101 : f32 to vector<8x128xf32>
      %322 = arith.select %320, %312, %321 : vector<8x128xi1>, vector<8x128xf32>
      %323 = arith.index_cast %284 : i32 to index
      %c0_102 = arith.constant 0 : index
      %324 = vector.load %arg15[%323, %c0_102] : memref<152x128xf32, #tpu.memory_space<vmem>>, vector<8x128xf32>
      tpu.vector_store %arg15[%323, %c0_102], %322 {strides = array<i32>} : memref<152x128xf32, #tpu.memory_space<vmem>>, vector<8x128xf32>,
      %c7_i32 = arith.constant 7 : i32
      %c0_103 = arith.constant 0 : index
      %c0_104 = arith.constant 0 : index
      %325 = vector.load %arg16[%c0_103, %c0_104] : memref<8x128xf32, #tpu.memory_space<vmem>>, vector<8x128xf32>
      %c8_i32_105 = arith.constant 8 : i32
      %326 = arith.muli %c7_i32, %c8_i32_105 : i32
      %327 = tpu.assume_multiple %326, 8 : i32
      %328 = arith.index_cast %327 : i32 to index
      %c0_106 = arith.constant 0 : index
      %329 = vector.load %arg14[%328, %c0_106] : memref<152x384xf32, #tpu.memory_space<vmem>>, vector<8x384xf32>
      %cst_107 = arith.constant dense<0.000000e+00> : vector<8x384xf32>
      %330 = tpu.matmul %325, %23, %cst_107 {dimension_numbers = #tpu.dot_dimension_numbers<[1], [0], [0], [1], [0, 0, 1, 1], [], []>} : vector<8x128xf32>, vector<128x384xf32>, vector<8x384xf32> -> vector<8x384xf32>
      %331 = vector.extract_strided_slice %329 {offsets = [0, 0], sizes = [8, 128], strides = [1, 1]} : vector<8x384xf32> to vector<8x128xf32>
      %332 = vector.extract_strided_slice %330 {offsets = [0, 0], sizes = [8, 128], strides = [1, 1]} : vector<8x384xf32> to vector<8x128xf32>
      %333 = arith.addf %331, %332 : vector<8x128xf32>
      %334 = arith.negf %333 : vector<8x128xf32>
      %335 = math.exp %334 : vector<8x128xf32>
      %cst_108 = arith.constant 1.000000e+00 : f32
      %336 = vector.broadcast %cst_108 : f32 to vector<8x128xf32>
      %337 = arith.addf %336, %335 : vector<8x128xf32>
      %338 = arith.divf %336, %337 : vector<8x128xf32>
      %339 = vector.extract_strided_slice %329 {offsets = [0, 128], sizes = [8, 128], strides = [1, 1]} : vector<8x384xf32> to vector<8x128xf32>
      %340 = vector.extract_strided_slice %330 {offsets = [0, 128], sizes = [8, 128], strides = [1, 1]} : vector<8x384xf32> to vector<8x128xf32>
      %341 = arith.addf %339, %340 : vector<8x128xf32>
      %342 = arith.negf %341 : vector<8x128xf32>
      %343 = math.exp %342 : vector<8x128xf32>
      %cst_109 = arith.constant 1.000000e+00 : f32
      %344 = vector.broadcast %cst_109 : f32 to vector<8x128xf32>
      %345 = arith.addf %344, %343 : vector<8x128xf32>
      %346 = arith.divf %344, %345 : vector<8x128xf32>
      %347 = vector.extract_strided_slice %329 {offsets = [0, 256], sizes = [8, 128], strides = [1, 1]} : vector<8x384xf32> to vector<8x128xf32>
      %348 = vector.extract_strided_slice %330 {offsets = [0, 256], sizes = [8, 128], strides = [1, 1]} : vector<8x384xf32> to vector<8x128xf32>
      %349 = arith.addf %348, %22 : vector<8x128xf32>
      %350 = arith.mulf %338, %349 : vector<8x128xf32>
      %351 = arith.addf %347, %350 : vector<8x128xf32>
      %352 = math.tanh %351 : vector<8x128xf32>
      %353 = arith.subf %325, %352 : vector<8x128xf32>
      %354 = arith.mulf %346, %353 : vector<8x128xf32>
      %355 = arith.addf %352, %354 : vector<8x128xf32>
      %356 = vector.broadcast %c7_i32 : i32 to vector<8x1xi32>
      %357 = arith.cmpi slt, %356, %19 : vector<8x1xi32>
      %358 = vector.shape_cast %357 : vector<8x1xi1> to vector<8x1xi1>
      %359 = vector.broadcast %358 : vector<8x1xi1> to vector<8x128xi1>
      %360 = arith.select %359, %355, %325 : vector<8x128xi1>, vector<8x128xf32>
      %c0_110 = arith.constant 0 : index
      %c0_111 = arith.constant 0 : index
      %361 = vector.load %arg16[%c0_110, %c0_111] : memref<8x128xf32, #tpu.memory_space<vmem>>, vector<8x128xf32>
      tpu.vector_store %arg16[%c0_110, %c0_111], %360 {strides = array<i32>} : memref<8x128xf32, #tpu.memory_space<vmem>>, vector<8x128xf32>,
      %cst_112 = arith.constant 0.000000e+00 : f32
      %362 = vector.shape_cast %357 : vector<8x1xi1> to vector<8x1xi1>
      %363 = vector.broadcast %362 : vector<8x1xi1> to vector<8x128xi1>
      %364 = vector.broadcast %cst_112 : f32 to vector<8x128xf32>
      %365 = arith.select %363, %355, %364 : vector<8x128xi1>, vector<8x128xf32>
      %366 = arith.index_cast %327 : i32 to index
      %c0_113 = arith.constant 0 : index
      %367 = vector.load %arg15[%366, %c0_113] : memref<152x128xf32, #tpu.memory_space<vmem>>, vector<8x128xf32>
      tpu.vector_store %arg15[%366, %c0_113], %365 {strides = array<i32>} : memref<152x128xf32, #tpu.memory_space<vmem>>, vector<8x128xf32>,
      %c8_i32_114 = arith.constant 8 : i32
      %c0_115 = arith.constant 0 : index
      %c0_116 = arith.constant 0 : index
      %368 = vector.load %arg16[%c0_115, %c0_116] : memref<8x128xf32, #tpu.memory_space<vmem>>, vector<8x128xf32>
      %c8_i32_117 = arith.constant 8 : i32
      %369 = arith.muli %c8_i32_114, %c8_i32_117 : i32
      %370 = tpu.assume_multiple %369, 8 : i32
      %371 = arith.index_cast %370 : i32 to index
      %c0_118 = arith.constant 0 : index
      %372 = vector.load %arg14[%371, %c0_118] : memref<152x384xf32, #tpu.memory_space<vmem>>, vector<8x384xf32>
      %cst_119 = arith.constant dense<0.000000e+00> : vector<8x384xf32>
      %373 = tpu.matmul %368, %23, %cst_119 {dimension_numbers = #tpu.dot_dimension_numbers<[1], [0], [0], [1], [0, 0, 1, 1], [], []>} : vector<8x128xf32>, vector<128x384xf32>, vector<8x384xf32> -> vector<8x384xf32>
      %374 = vector.extract_strided_slice %372 {offsets = [0, 0], sizes = [8, 128], strides = [1, 1]} : vector<8x384xf32> to vector<8x128xf32>
      %375 = vector.extract_strided_slice %373 {offsets = [0, 0], sizes = [8, 128], strides = [1, 1]} : vector<8x384xf32> to vector<8x128xf32>
      %376 = arith.addf %374, %375 : vector<8x128xf32>
      %377 = arith.negf %376 : vector<8x128xf32>
      %378 = math.exp %377 : vector<8x128xf32>
      %cst_120 = arith.constant 1.000000e+00 : f32
      %379 = vector.broadcast %cst_120 : f32 to vector<8x128xf32>
      %380 = arith.addf %379, %378 : vector<8x128xf32>
      %381 = arith.divf %379, %380 : vector<8x128xf32>
      %382 = vector.extract_strided_slice %372 {offsets = [0, 128], sizes = [8, 128], strides = [1, 1]} : vector<8x384xf32> to vector<8x128xf32>
      %383 = vector.extract_strided_slice %373 {offsets = [0, 128], sizes = [8, 128], strides = [1, 1]} : vector<8x384xf32> to vector<8x128xf32>
      %384 = arith.addf %382, %383 : vector<8x128xf32>
      %385 = arith.negf %384 : vector<8x128xf32>
      %386 = math.exp %385 : vector<8x128xf32>
      %cst_121 = arith.constant 1.000000e+00 : f32
      %387 = vector.broadcast %cst_121 : f32 to vector<8x128xf32>
      %388 = arith.addf %387, %386 : vector<8x128xf32>
      %389 = arith.divf %387, %388 : vector<8x128xf32>
      %390 = vector.extract_strided_slice %372 {offsets = [0, 256], sizes = [8, 128], strides = [1, 1]} : vector<8x384xf32> to vector<8x128xf32>
      %391 = vector.extract_strided_slice %373 {offsets = [0, 256], sizes = [8, 128], strides = [1, 1]} : vector<8x384xf32> to vector<8x128xf32>
      %392 = arith.addf %391, %22 : vector<8x128xf32>
      %393 = arith.mulf %381, %392 : vector<8x128xf32>
      %394 = arith.addf %390, %393 : vector<8x128xf32>
      %395 = math.tanh %394 : vector<8x128xf32>
      %396 = arith.subf %368, %395 : vector<8x128xf32>
      %397 = arith.mulf %389, %396 : vector<8x128xf32>
      %398 = arith.addf %395, %397 : vector<8x128xf32>
      %399 = vector.broadcast %c8_i32_114 : i32 to vector<8x1xi32>
      %400 = arith.cmpi slt, %399, %19 : vector<8x1xi32>
      %401 = vector.shape_cast %400 : vector<8x1xi1> to vector<8x1xi1>
      %402 = vector.broadcast %401 : vector<8x1xi1> to vector<8x128xi1>
      %403 = arith.select %402, %398, %368 : vector<8x128xi1>, vector<8x128xf32>
      %c0_122 = arith.constant 0 : index
      %c0_123 = arith.constant 0 : index
      %404 = vector.load %arg16[%c0_122, %c0_123] : memref<8x128xf32, #tpu.memory_space<vmem>>, vector<8x128xf32>
      tpu.vector_store %arg16[%c0_122, %c0_123], %403 {strides = array<i32>} : memref<8x128xf32, #tpu.memory_space<vmem>>, vector<8x128xf32>,
      %cst_124 = arith.constant 0.000000e+00 : f32
      %405 = vector.shape_cast %400 : vector<8x1xi1> to vector<8x1xi1>
      %406 = vector.broadcast %405 : vector<8x1xi1> to vector<8x128xi1>
      %407 = vector.broadcast %cst_124 : f32 to vector<8x128xf32>
      %408 = arith.select %406, %398, %407 : vector<8x128xi1>, vector<8x128xf32>
      %409 = arith.index_cast %370 : i32 to index
      %c0_125 = arith.constant 0 : index
      %410 = vector.load %arg15[%409, %c0_125] : memref<152x128xf32, #tpu.memory_space<vmem>>, vector<8x128xf32>
      tpu.vector_store %arg15[%409, %c0_125], %408 {strides = array<i32>} : memref<152x128xf32, #tpu.memory_space<vmem>>, vector<8x128xf32>,
      %c9_i32 = arith.constant 9 : i32
      %c0_126 = arith.constant 0 : index
      %c0_127 = arith.constant 0 : index
      %411 = vector.load %arg16[%c0_126, %c0_127] : memref<8x128xf32, #tpu.memory_space<vmem>>, vector<8x128xf32>
      %c8_i32_128 = arith.constant 8 : i32
      %412 = arith.muli %c9_i32, %c8_i32_128 : i32
      %413 = tpu.assume_multiple %412, 8 : i32
      %414 = arith.index_cast %413 : i32 to index
      %c0_129 = arith.constant 0 : index
      %415 = vector.load %arg14[%414, %c0_129] : memref<152x384xf32, #tpu.memory_space<vmem>>, vector<8x384xf32>
      %cst_130 = arith.constant dense<0.000000e+00> : vector<8x384xf32>
      %416 = tpu.matmul %411, %23, %cst_130 {dimension_numbers = #tpu.dot_dimension_numbers<[1], [0], [0], [1], [0, 0, 1, 1], [], []>} : vector<8x128xf32>, vector<128x384xf32>, vector<8x384xf32> -> vector<8x384xf32>
      %417 = vector.extract_strided_slice %415 {offsets = [0, 0], sizes = [8, 128], strides = [1, 1]} : vector<8x384xf32> to vector<8x128xf32>
      %418 = vector.extract_strided_slice %416 {offsets = [0, 0], sizes = [8, 128], strides = [1, 1]} : vector<8x384xf32> to vector<8x128xf32>
      %419 = arith.addf %417, %418 : vector<8x128xf32>
      %420 = arith.negf %419 : vector<8x128xf32>
      %421 = math.exp %420 : vector<8x128xf32>
      %cst_131 = arith.constant 1.000000e+00 : f32
      %422 = vector.broadcast %cst_131 : f32 to vector<8x128xf32>
      %423 = arith.addf %422, %421 : vector<8x128xf32>
      %424 = arith.divf %422, %423 : vector<8x128xf32>
      %425 = vector.extract_strided_slice %415 {offsets = [0, 128], sizes = [8, 128], strides = [1, 1]} : vector<8x384xf32> to vector<8x128xf32>
      %426 = vector.extract_strided_slice %416 {offsets = [0, 128], sizes = [8, 128], strides = [1, 1]} : vector<8x384xf32> to vector<8x128xf32>
      %427 = arith.addf %425, %426 : vector<8x128xf32>
      %428 = arith.negf %427 : vector<8x128xf32>
      %429 = math.exp %428 : vector<8x128xf32>
      %cst_132 = arith.constant 1.000000e+00 : f32
      %430 = vector.broadcast %cst_132 : f32 to vector<8x128xf32>
      %431 = arith.addf %430, %429 : vector<8x128xf32>
      %432 = arith.divf %430, %431 : vector<8x128xf32>
      %433 = vector.extract_strided_slice %415 {offsets = [0, 256], sizes = [8, 128], strides = [1, 1]} : vector<8x384xf32> to vector<8x128xf32>
      %434 = vector.extract_strided_slice %416 {offsets = [0, 256], sizes = [8, 128], strides = [1, 1]} : vector<8x384xf32> to vector<8x128xf32>
      %435 = arith.addf %434, %22 : vector<8x128xf32>
      %436 = arith.mulf %424, %435 : vector<8x128xf32>
      %437 = arith.addf %433, %436 : vector<8x128xf32>
      %438 = math.tanh %437 : vector<8x128xf32>
      %439 = arith.subf %411, %438 : vector<8x128xf32>
      %440 = arith.mulf %432, %439 : vector<8x128xf32>
      %441 = arith.addf %438, %440 : vector<8x128xf32>
      %442 = vector.broadcast %c9_i32 : i32 to vector<8x1xi32>
      %443 = arith.cmpi slt, %442, %19 : vector<8x1xi32>
      %444 = vector.shape_cast %443 : vector<8x1xi1> to vector<8x1xi1>
      %445 = vector.broadcast %444 : vector<8x1xi1> to vector<8x128xi1>
      %446 = arith.select %445, %441, %411 : vector<8x128xi1>, vector<8x128xf32>
      %c0_133 = arith.constant 0 : index
      %c0_134 = arith.constant 0 : index
      %447 = vector.load %arg16[%c0_133, %c0_134] : memref<8x128xf32, #tpu.memory_space<vmem>>, vector<8x128xf32>
      tpu.vector_store %arg16[%c0_133, %c0_134], %446 {strides = array<i32>} : memref<8x128xf32, #tpu.memory_space<vmem>>, vector<8x128xf32>,
      %cst_135 = arith.constant 0.000000e+00 : f32
      %448 = vector.shape_cast %443 : vector<8x1xi1> to vector<8x1xi1>
      %449 = vector.broadcast %448 : vector<8x1xi1> to vector<8x128xi1>
      %450 = vector.broadcast %cst_135 : f32 to vector<8x128xf32>
      %451 = arith.select %449, %441, %450 : vector<8x128xi1>, vector<8x128xf32>
      %452 = arith.index_cast %413 : i32 to index
      %c0_136 = arith.constant 0 : index
      %453 = vector.load %arg15[%452, %c0_136] : memref<152x128xf32, #tpu.memory_space<vmem>>, vector<8x128xf32>
      tpu.vector_store %arg15[%452, %c0_136], %451 {strides = array<i32>} : memref<152x128xf32, #tpu.memory_space<vmem>>, vector<8x128xf32>,
      %c10_i32 = arith.constant 10 : i32
      %c0_137 = arith.constant 0 : index
      %c0_138 = arith.constant 0 : index
      %454 = vector.load %arg16[%c0_137, %c0_138] : memref<8x128xf32, #tpu.memory_space<vmem>>, vector<8x128xf32>
      %c8_i32_139 = arith.constant 8 : i32
      %455 = arith.muli %c10_i32, %c8_i32_139 : i32
      %456 = tpu.assume_multiple %455, 8 : i32
      %457 = arith.index_cast %456 : i32 to index
      %c0_140 = arith.constant 0 : index
      %458 = vector.load %arg14[%457, %c0_140] : memref<152x384xf32, #tpu.memory_space<vmem>>, vector<8x384xf32>
      %cst_141 = arith.constant dense<0.000000e+00> : vector<8x384xf32>
      %459 = tpu.matmul %454, %23, %cst_141 {dimension_numbers = #tpu.dot_dimension_numbers<[1], [0], [0], [1], [0, 0, 1, 1], [], []>} : vector<8x128xf32>, vector<128x384xf32>, vector<8x384xf32> -> vector<8x384xf32>
      %460 = vector.extract_strided_slice %458 {offsets = [0, 0], sizes = [8, 128], strides = [1, 1]} : vector<8x384xf32> to vector<8x128xf32>
      %461 = vector.extract_strided_slice %459 {offsets = [0, 0], sizes = [8, 128], strides = [1, 1]} : vector<8x384xf32> to vector<8x128xf32>
      %462 = arith.addf %460, %461 : vector<8x128xf32>
      %463 = arith.negf %462 : vector<8x128xf32>
      %464 = math.exp %463 : vector<8x128xf32>
      %cst_142 = arith.constant 1.000000e+00 : f32
      %465 = vector.broadcast %cst_142 : f32 to vector<8x128xf32>
      %466 = arith.addf %465, %464 : vector<8x128xf32>
      %467 = arith.divf %465, %466 : vector<8x128xf32>
      %468 = vector.extract_strided_slice %458 {offsets = [0, 128], sizes = [8, 128], strides = [1, 1]} : vector<8x384xf32> to vector<8x128xf32>
      %469 = vector.extract_strided_slice %459 {offsets = [0, 128], sizes = [8, 128], strides = [1, 1]} : vector<8x384xf32> to vector<8x128xf32>
      %470 = arith.addf %468, %469 : vector<8x128xf32>
      %471 = arith.negf %470 : vector<8x128xf32>
      %472 = math.exp %471 : vector<8x128xf32>
      %cst_143 = arith.constant 1.000000e+00 : f32
      %473 = vector.broadcast %cst_143 : f32 to vector<8x128xf32>
      %474 = arith.addf %473, %472 : vector<8x128xf32>
      %475 = arith.divf %473, %474 : vector<8x128xf32>
      %476 = vector.extract_strided_slice %458 {offsets = [0, 256], sizes = [8, 128], strides = [1, 1]} : vector<8x384xf32> to vector<8x128xf32>
      %477 = vector.extract_strided_slice %459 {offsets = [0, 256], sizes = [8, 128], strides = [1, 1]} : vector<8x384xf32> to vector<8x128xf32>
      %478 = arith.addf %477, %22 : vector<8x128xf32>
      %479 = arith.mulf %467, %478 : vector<8x128xf32>
      %480 = arith.addf %476, %479 : vector<8x128xf32>
      %481 = math.tanh %480 : vector<8x128xf32>
      %482 = arith.subf %454, %481 : vector<8x128xf32>
      %483 = arith.mulf %475, %482 : vector<8x128xf32>
      %484 = arith.addf %481, %483 : vector<8x128xf32>
      %485 = vector.broadcast %c10_i32 : i32 to vector<8x1xi32>
      %486 = arith.cmpi slt, %485, %19 : vector<8x1xi32>
      %487 = vector.shape_cast %486 : vector<8x1xi1> to vector<8x1xi1>
      %488 = vector.broadcast %487 : vector<8x1xi1> to vector<8x128xi1>
      %489 = arith.select %488, %484, %454 : vector<8x128xi1>, vector<8x128xf32>
      %c0_144 = arith.constant 0 : index
      %c0_145 = arith.constant 0 : index
      %490 = vector.load %arg16[%c0_144, %c0_145] : memref<8x128xf32, #tpu.memory_space<vmem>>, vector<8x128xf32>
      tpu.vector_store %arg16[%c0_144, %c0_145], %489 {strides = array<i32>} : memref<8x128xf32, #tpu.memory_space<vmem>>, vector<8x128xf32>,
      %cst_146 = arith.constant 0.000000e+00 : f32
      %491 = vector.shape_cast %486 : vector<8x1xi1> to vector<8x1xi1>
      %492 = vector.broadcast %491 : vector<8x1xi1> to vector<8x128xi1>
      %493 = vector.broadcast %cst_146 : f32 to vector<8x128xf32>
      %494 = arith.select %492, %484, %493 : vector<8x128xi1>, vector<8x128xf32>
      %495 = arith.index_cast %456 : i32 to index
      %c0_147 = arith.constant 0 : index
      %496 = vector.load %arg15[%495, %c0_147] : memref<152x128xf32, #tpu.memory_space<vmem>>, vector<8x128xf32>
      tpu.vector_store %arg15[%495, %c0_147], %494 {strides = array<i32>} : memref<152x128xf32, #tpu.memory_space<vmem>>, vector<8x128xf32>,
      %c11_i32 = arith.constant 11 : i32
      %c0_148 = arith.constant 0 : index
      %c0_149 = arith.constant 0 : index
      %497 = vector.load %arg16[%c0_148, %c0_149] : memref<8x128xf32, #tpu.memory_space<vmem>>, vector<8x128xf32>
      %c8_i32_150 = arith.constant 8 : i32
      %498 = arith.muli %c11_i32, %c8_i32_150 : i32
      %499 = tpu.assume_multiple %498, 8 : i32
      %500 = arith.index_cast %499 : i32 to index
      %c0_151 = arith.constant 0 : index
      %501 = vector.load %arg14[%500, %c0_151] : memref<152x384xf32, #tpu.memory_space<vmem>>, vector<8x384xf32>
      %cst_152 = arith.constant dense<0.000000e+00> : vector<8x384xf32>
      %502 = tpu.matmul %497, %23, %cst_152 {dimension_numbers = #tpu.dot_dimension_numbers<[1], [0], [0], [1], [0, 0, 1, 1], [], []>} : vector<8x128xf32>, vector<128x384xf32>, vector<8x384xf32> -> vector<8x384xf32>
      %503 = vector.extract_strided_slice %501 {offsets = [0, 0], sizes = [8, 128], strides = [1, 1]} : vector<8x384xf32> to vector<8x128xf32>
      %504 = vector.extract_strided_slice %502 {offsets = [0, 0], sizes = [8, 128], strides = [1, 1]} : vector<8x384xf32> to vector<8x128xf32>
      %505 = arith.addf %503, %504 : vector<8x128xf32>
      %506 = arith.negf %505 : vector<8x128xf32>
      %507 = math.exp %506 : vector<8x128xf32>
      %cst_153 = arith.constant 1.000000e+00 : f32
      %508 = vector.broadcast %cst_153 : f32 to vector<8x128xf32>
      %509 = arith.addf %508, %507 : vector<8x128xf32>
      %510 = arith.divf %508, %509 : vector<8x128xf32>
      %511 = vector.extract_strided_slice %501 {offsets = [0, 128], sizes = [8, 128], strides = [1, 1]} : vector<8x384xf32> to vector<8x128xf32>
      %512 = vector.extract_strided_slice %502 {offsets = [0, 128], sizes = [8, 128], strides = [1, 1]} : vector<8x384xf32> to vector<8x128xf32>
      %513 = arith.addf %511, %512 : vector<8x128xf32>
      %514 = arith.negf %513 : vector<8x128xf32>
      %515 = math.exp %514 : vector<8x128xf32>
      %cst_154 = arith.constant 1.000000e+00 : f32
      %516 = vector.broadcast %cst_154 : f32 to vector<8x128xf32>
      %517 = arith.addf %516, %515 : vector<8x128xf32>
      %518 = arith.divf %516, %517 : vector<8x128xf32>
      %519 = vector.extract_strided_slice %501 {offsets = [0, 256], sizes = [8, 128], strides = [1, 1]} : vector<8x384xf32> to vector<8x128xf32>
      %520 = vector.extract_strided_slice %502 {offsets = [0, 256], sizes = [8, 128], strides = [1, 1]} : vector<8x384xf32> to vector<8x128xf32>
      %521 = arith.addf %520, %22 : vector<8x128xf32>
      %522 = arith.mulf %510, %521 : vector<8x128xf32>
      %523 = arith.addf %519, %522 : vector<8x128xf32>
      %524 = math.tanh %523 : vector<8x128xf32>
      %525 = arith.subf %497, %524 : vector<8x128xf32>
      %526 = arith.mulf %518, %525 : vector<8x128xf32>
      %527 = arith.addf %524, %526 : vector<8x128xf32>
      %528 = vector.broadcast %c11_i32 : i32 to vector<8x1xi32>
      %529 = arith.cmpi slt, %528, %19 : vector<8x1xi32>
      %530 = vector.shape_cast %529 : vector<8x1xi1> to vector<8x1xi1>
      %531 = vector.broadcast %530 : vector<8x1xi1> to vector<8x128xi1>
      %532 = arith.select %531, %527, %497 : vector<8x128xi1>, vector<8x128xf32>
      %c0_155 = arith.constant 0 : index
      %c0_156 = arith.constant 0 : index
      %533 = vector.load %arg16[%c0_155, %c0_156] : memref<8x128xf32, #tpu.memory_space<vmem>>, vector<8x128xf32>
      tpu.vector_store %arg16[%c0_155, %c0_156], %532 {strides = array<i32>} : memref<8x128xf32, #tpu.memory_space<vmem>>, vector<8x128xf32>,
      %cst_157 = arith.constant 0.000000e+00 : f32
      %534 = vector.shape_cast %529 : vector<8x1xi1> to vector<8x1xi1>
      %535 = vector.broadcast %534 : vector<8x1xi1> to vector<8x128xi1>
      %536 = vector.broadcast %cst_157 : f32 to vector<8x128xf32>
      %537 = arith.select %535, %527, %536 : vector<8x128xi1>, vector<8x128xf32>
      %538 = arith.index_cast %499 : i32 to index
      %c0_158 = arith.constant 0 : index
      %539 = vector.load %arg15[%538, %c0_158] : memref<152x128xf32, #tpu.memory_space<vmem>>, vector<8x128xf32>
      tpu.vector_store %arg15[%538, %c0_158], %537 {strides = array<i32>} : memref<152x128xf32, #tpu.memory_space<vmem>>, vector<8x128xf32>,
      %c12_i32 = arith.constant 12 : i32
      %c0_159 = arith.constant 0 : index
      %c0_160 = arith.constant 0 : index
      %540 = vector.load %arg16[%c0_159, %c0_160] : memref<8x128xf32, #tpu.memory_space<vmem>>, vector<8x128xf32>
      %c8_i32_161 = arith.constant 8 : i32
      %541 = arith.muli %c12_i32, %c8_i32_161 : i32
      %542 = tpu.assume_multiple %541, 8 : i32
      %543 = arith.index_cast %542 : i32 to index
      %c0_162 = arith.constant 0 : index
      %544 = vector.load %arg14[%543, %c0_162] : memref<152x384xf32, #tpu.memory_space<vmem>>, vector<8x384xf32>
      %cst_163 = arith.constant dense<0.000000e+00> : vector<8x384xf32>
      %545 = tpu.matmul %540, %23, %cst_163 {dimension_numbers = #tpu.dot_dimension_numbers<[1], [0], [0], [1], [0, 0, 1, 1], [], []>} : vector<8x128xf32>, vector<128x384xf32>, vector<8x384xf32> -> vector<8x384xf32>
      %546 = vector.extract_strided_slice %544 {offsets = [0, 0], sizes = [8, 128], strides = [1, 1]} : vector<8x384xf32> to vector<8x128xf32>
      %547 = vector.extract_strided_slice %545 {offsets = [0, 0], sizes = [8, 128], strides = [1, 1]} : vector<8x384xf32> to vector<8x128xf32>
      %548 = arith.addf %546, %547 : vector<8x128xf32>
      %549 = arith.negf %548 : vector<8x128xf32>
      %550 = math.exp %549 : vector<8x128xf32>
      %cst_164 = arith.constant 1.000000e+00 : f32
      %551 = vector.broadcast %cst_164 : f32 to vector<8x128xf32>
      %552 = arith.addf %551, %550 : vector<8x128xf32>
      %553 = arith.divf %551, %552 : vector<8x128xf32>
      %554 = vector.extract_strided_slice %544 {offsets = [0, 128], sizes = [8, 128], strides = [1, 1]} : vector<8x384xf32> to vector<8x128xf32>
      %555 = vector.extract_strided_slice %545 {offsets = [0, 128], sizes = [8, 128], strides = [1, 1]} : vector<8x384xf32> to vector<8x128xf32>
      %556 = arith.addf %554, %555 : vector<8x128xf32>
      %557 = arith.negf %556 : vector<8x128xf32>
      %558 = math.exp %557 : vector<8x128xf32>
      %cst_165 = arith.constant 1.000000e+00 : f32
      %559 = vector.broadcast %cst_165 : f32 to vector<8x128xf32>
      %560 = arith.addf %559, %558 : vector<8x128xf32>
      %561 = arith.divf %559, %560 : vector<8x128xf32>
      %562 = vector.extract_strided_slice %544 {offsets = [0, 256], sizes = [8, 128], strides = [1, 1]} : vector<8x384xf32> to vector<8x128xf32>
      %563 = vector.extract_strided_slice %545 {offsets = [0, 256], sizes = [8, 128], strides = [1, 1]} : vector<8x384xf32> to vector<8x128xf32>
      %564 = arith.addf %563, %22 : vector<8x128xf32>
      %565 = arith.mulf %553, %564 : vector<8x128xf32>
      %566 = arith.addf %562, %565 : vector<8x128xf32>
      %567 = math.tanh %566 : vector<8x128xf32>
      %568 = arith.subf %540, %567 : vector<8x128xf32>
      %569 = arith.mulf %561, %568 : vector<8x128xf32>
      %570 = arith.addf %567, %569 : vector<8x128xf32>
      %571 = vector.broadcast %c12_i32 : i32 to vector<8x1xi32>
      %572 = arith.cmpi slt, %571, %19 : vector<8x1xi32>
      %573 = vector.shape_cast %572 : vector<8x1xi1> to vector<8x1xi1>
      %574 = vector.broadcast %573 : vector<8x1xi1> to vector<8x128xi1>
      %575 = arith.select %574, %570, %540 : vector<8x128xi1>, vector<8x128xf32>
      %c0_166 = arith.constant 0 : index
      %c0_167 = arith.constant 0 : index
      %576 = vector.load %arg16[%c0_166, %c0_167] : memref<8x128xf32, #tpu.memory_space<vmem>>, vector<8x128xf32>
      tpu.vector_store %arg16[%c0_166, %c0_167], %575 {strides = array<i32>} : memref<8x128xf32, #tpu.memory_space<vmem>>, vector<8x128xf32>,
      %cst_168 = arith.constant 0.000000e+00 : f32
      %577 = vector.shape_cast %572 : vector<8x1xi1> to vector<8x1xi1>
      %578 = vector.broadcast %577 : vector<8x1xi1> to vector<8x128xi1>
      %579 = vector.broadcast %cst_168 : f32 to vector<8x128xf32>
      %580 = arith.select %578, %570, %579 : vector<8x128xi1>, vector<8x128xf32>
      %581 = arith.index_cast %542 : i32 to index
      %c0_169 = arith.constant 0 : index
      %582 = vector.load %arg15[%581, %c0_169] : memref<152x128xf32, #tpu.memory_space<vmem>>, vector<8x128xf32>
      tpu.vector_store %arg15[%581, %c0_169], %580 {strides = array<i32>} : memref<152x128xf32, #tpu.memory_space<vmem>>, vector<8x128xf32>,
      %c13_i32 = arith.constant 13 : i32
      %c0_170 = arith.constant 0 : index
      %c0_171 = arith.constant 0 : index
      %583 = vector.load %arg16[%c0_170, %c0_171] : memref<8x128xf32, #tpu.memory_space<vmem>>, vector<8x128xf32>
      %c8_i32_172 = arith.constant 8 : i32
      %584 = arith.muli %c13_i32, %c8_i32_172 : i32
      %585 = tpu.assume_multiple %584, 8 : i32
      %586 = arith.index_cast %585 : i32 to index
      %c0_173 = arith.constant 0 : index
      %587 = vector.load %arg14[%586, %c0_173] : memref<152x384xf32, #tpu.memory_space<vmem>>, vector<8x384xf32>
      %cst_174 = arith.constant dense<0.000000e+00> : vector<8x384xf32>
      %588 = tpu.matmul %583, %23, %cst_174 {dimension_numbers = #tpu.dot_dimension_numbers<[1], [0], [0], [1], [0, 0, 1, 1], [], []>} : vector<8x128xf32>, vector<128x384xf32>, vector<8x384xf32> -> vector<8x384xf32>
      %589 = vector.extract_strided_slice %587 {offsets = [0, 0], sizes = [8, 128], strides = [1, 1]} : vector<8x384xf32> to vector<8x128xf32>
      %590 = vector.extract_strided_slice %588 {offsets = [0, 0], sizes = [8, 128], strides = [1, 1]} : vector<8x384xf32> to vector<8x128xf32>
      %591 = arith.addf %589, %590 : vector<8x128xf32>
      %592 = arith.negf %591 : vector<8x128xf32>
      %593 = math.exp %592 : vector<8x128xf32>
      %cst_175 = arith.constant 1.000000e+00 : f32
      %594 = vector.broadcast %cst_175 : f32 to vector<8x128xf32>
      %595 = arith.addf %594, %593 : vector<8x128xf32>
      %596 = arith.divf %594, %595 : vector<8x128xf32>
      %597 = vector.extract_strided_slice %587 {offsets = [0, 128], sizes = [8, 128], strides = [1, 1]} : vector<8x384xf32> to vector<8x128xf32>
      %598 = vector.extract_strided_slice %588 {offsets = [0, 128], sizes = [8, 128], strides = [1, 1]} : vector<8x384xf32> to vector<8x128xf32>
      %599 = arith.addf %597, %598 : vector<8x128xf32>
      %600 = arith.negf %599 : vector<8x128xf32>
      %601 = math.exp %600 : vector<8x128xf32>
      %cst_176 = arith.constant 1.000000e+00 : f32
      %602 = vector.broadcast %cst_176 : f32 to vector<8x128xf32>
      %603 = arith.addf %602, %601 : vector<8x128xf32>
      %604 = arith.divf %602, %603 : vector<8x128xf32>
      %605 = vector.extract_strided_slice %587 {offsets = [0, 256], sizes = [8, 128], strides = [1, 1]} : vector<8x384xf32> to vector<8x128xf32>
      %606 = vector.extract_strided_slice %588 {offsets = [0, 256], sizes = [8, 128], strides = [1, 1]} : vector<8x384xf32> to vector<8x128xf32>
      %607 = arith.addf %606, %22 : vector<8x128xf32>
      %608 = arith.mulf %596, %607 : vector<8x128xf32>
      %609 = arith.addf %605, %608 : vector<8x128xf32>
      %610 = math.tanh %609 : vector<8x128xf32>
      %611 = arith.subf %583, %610 : vector<8x128xf32>
      %612 = arith.mulf %604, %611 : vector<8x128xf32>
      %613 = arith.addf %610, %612 : vector<8x128xf32>
      %614 = vector.broadcast %c13_i32 : i32 to vector<8x1xi32>
      %615 = arith.cmpi slt, %614, %19 : vector<8x1xi32>
      %616 = vector.shape_cast %615 : vector<8x1xi1> to vector<8x1xi1>
      %617 = vector.broadcast %616 : vector<8x1xi1> to vector<8x128xi1>
      %618 = arith.select %617, %613, %583 : vector<8x128xi1>, vector<8x128xf32>
      %c0_177 = arith.constant 0 : index
      %c0_178 = arith.constant 0 : index
      %619 = vector.load %arg16[%c0_177, %c0_178] : memref<8x128xf32, #tpu.memory_space<vmem>>, vector<8x128xf32>
      tpu.vector_store %arg16[%c0_177, %c0_178], %618 {strides = array<i32>} : memref<8x128xf32, #tpu.memory_space<vmem>>, vector<8x128xf32>,
      %cst_179 = arith.constant 0.000000e+00 : f32
      %620 = vector.shape_cast %615 : vector<8x1xi1> to vector<8x1xi1>
      %621 = vector.broadcast %620 : vector<8x1xi1> to vector<8x128xi1>
      %622 = vector.broadcast %cst_179 : f32 to vector<8x128xf32>
      %623 = arith.select %621, %613, %622 : vector<8x128xi1>, vector<8x128xf32>
      %624 = arith.index_cast %585 : i32 to index
      %c0_180 = arith.constant 0 : index
      %625 = vector.load %arg15[%624, %c0_180] : memref<152x128xf32, #tpu.memory_space<vmem>>, vector<8x128xf32>
      tpu.vector_store %arg15[%624, %c0_180], %623 {strides = array<i32>} : memref<152x128xf32, #tpu.memory_space<vmem>>, vector<8x128xf32>,
      %c14_i32 = arith.constant 14 : i32
      %c0_181 = arith.constant 0 : index
      %c0_182 = arith.constant 0 : index
      %626 = vector.load %arg16[%c0_181, %c0_182] : memref<8x128xf32, #tpu.memory_space<vmem>>, vector<8x128xf32>
      %c8_i32_183 = arith.constant 8 : i32
      %627 = arith.muli %c14_i32, %c8_i32_183 : i32
      %628 = tpu.assume_multiple %627, 8 : i32
      %629 = arith.index_cast %628 : i32 to index
      %c0_184 = arith.constant 0 : index
      %630 = vector.load %arg14[%629, %c0_184] : memref<152x384xf32, #tpu.memory_space<vmem>>, vector<8x384xf32>
      %cst_185 = arith.constant dense<0.000000e+00> : vector<8x384xf32>
      %631 = tpu.matmul %626, %23, %cst_185 {dimension_numbers = #tpu.dot_dimension_numbers<[1], [0], [0], [1], [0, 0, 1, 1], [], []>} : vector<8x128xf32>, vector<128x384xf32>, vector<8x384xf32> -> vector<8x384xf32>
      %632 = vector.extract_strided_slice %630 {offsets = [0, 0], sizes = [8, 128], strides = [1, 1]} : vector<8x384xf32> to vector<8x128xf32>
      %633 = vector.extract_strided_slice %631 {offsets = [0, 0], sizes = [8, 128], strides = [1, 1]} : vector<8x384xf32> to vector<8x128xf32>
      %634 = arith.addf %632, %633 : vector<8x128xf32>
      %635 = arith.negf %634 : vector<8x128xf32>
      %636 = math.exp %635 : vector<8x128xf32>
      %cst_186 = arith.constant 1.000000e+00 : f32
      %637 = vector.broadcast %cst_186 : f32 to vector<8x128xf32>
      %638 = arith.addf %637, %636 : vector<8x128xf32>
      %639 = arith.divf %637, %638 : vector<8x128xf32>
      %640 = vector.extract_strided_slice %630 {offsets = [0, 128], sizes = [8, 128], strides = [1, 1]} : vector<8x384xf32> to vector<8x128xf32>
      %641 = vector.extract_strided_slice %631 {offsets = [0, 128], sizes = [8, 128], strides = [1, 1]} : vector<8x384xf32> to vector<8x128xf32>
      %642 = arith.addf %640, %641 : vector<8x128xf32>
      %643 = arith.negf %642 : vector<8x128xf32>
      %644 = math.exp %643 : vector<8x128xf32>
      %cst_187 = arith.constant 1.000000e+00 : f32
      %645 = vector.broadcast %cst_187 : f32 to vector<8x128xf32>
      %646 = arith.addf %645, %644 : vector<8x128xf32>
      %647 = arith.divf %645, %646 : vector<8x128xf32>
      %648 = vector.extract_strided_slice %630 {offsets = [0, 256], sizes = [8, 128], strides = [1, 1]} : vector<8x384xf32> to vector<8x128xf32>
      %649 = vector.extract_strided_slice %631 {offsets = [0, 256], sizes = [8, 128], strides = [1, 1]} : vector<8x384xf32> to vector<8x128xf32>
      %650 = arith.addf %649, %22 : vector<8x128xf32>
      %651 = arith.mulf %639, %650 : vector<8x128xf32>
      %652 = arith.addf %648, %651 : vector<8x128xf32>
      %653 = math.tanh %652 : vector<8x128xf32>
      %654 = arith.subf %626, %653 : vector<8x128xf32>
      %655 = arith.mulf %647, %654 : vector<8x128xf32>
      %656 = arith.addf %653, %655 : vector<8x128xf32>
      %657 = vector.broadcast %c14_i32 : i32 to vector<8x1xi32>
      %658 = arith.cmpi slt, %657, %19 : vector<8x1xi32>
      %659 = vector.shape_cast %658 : vector<8x1xi1> to vector<8x1xi1>
      %660 = vector.broadcast %659 : vector<8x1xi1> to vector<8x128xi1>
      %661 = arith.select %660, %656, %626 : vector<8x128xi1>, vector<8x128xf32>
      %c0_188 = arith.constant 0 : index
      %c0_189 = arith.constant 0 : index
      %662 = vector.load %arg16[%c0_188, %c0_189] : memref<8x128xf32, #tpu.memory_space<vmem>>, vector<8x128xf32>
      tpu.vector_store %arg16[%c0_188, %c0_189], %661 {strides = array<i32>} : memref<8x128xf32, #tpu.memory_space<vmem>>, vector<8x128xf32>,
      %cst_190 = arith.constant 0.000000e+00 : f32
      %663 = vector.shape_cast %658 : vector<8x1xi1> to vector<8x1xi1>
      %664 = vector.broadcast %663 : vector<8x1xi1> to vector<8x128xi1>
      %665 = vector.broadcast %cst_190 : f32 to vector<8x128xf32>
      %666 = arith.select %664, %656, %665 : vector<8x128xi1>, vector<8x128xf32>
      %667 = arith.index_cast %628 : i32 to index
      %c0_191 = arith.constant 0 : index
      %668 = vector.load %arg15[%667, %c0_191] : memref<152x128xf32, #tpu.memory_space<vmem>>, vector<8x128xf32>
      tpu.vector_store %arg15[%667, %c0_191], %666 {strides = array<i32>} : memref<152x128xf32, #tpu.memory_space<vmem>>, vector<8x128xf32>,
      %c15_i32 = arith.constant 15 : i32
      %c0_192 = arith.constant 0 : index
      %c0_193 = arith.constant 0 : index
      %669 = vector.load %arg16[%c0_192, %c0_193] : memref<8x128xf32, #tpu.memory_space<vmem>>, vector<8x128xf32>
      %c8_i32_194 = arith.constant 8 : i32
      %670 = arith.muli %c15_i32, %c8_i32_194 : i32
      %671 = tpu.assume_multiple %670, 8 : i32
      %672 = arith.index_cast %671 : i32 to index
      %c0_195 = arith.constant 0 : index
      %673 = vector.load %arg14[%672, %c0_195] : memref<152x384xf32, #tpu.memory_space<vmem>>, vector<8x384xf32>
      %cst_196 = arith.constant dense<0.000000e+00> : vector<8x384xf32>
      %674 = tpu.matmul %669, %23, %cst_196 {dimension_numbers = #tpu.dot_dimension_numbers<[1], [0], [0], [1], [0, 0, 1, 1], [], []>} : vector<8x128xf32>, vector<128x384xf32>, vector<8x384xf32> -> vector<8x384xf32>
      %675 = vector.extract_strided_slice %673 {offsets = [0, 0], sizes = [8, 128], strides = [1, 1]} : vector<8x384xf32> to vector<8x128xf32>
      %676 = vector.extract_strided_slice %674 {offsets = [0, 0], sizes = [8, 128], strides = [1, 1]} : vector<8x384xf32> to vector<8x128xf32>
      %677 = arith.addf %675, %676 : vector<8x128xf32>
      %678 = arith.negf %677 : vector<8x128xf32>
      %679 = math.exp %678 : vector<8x128xf32>
      %cst_197 = arith.constant 1.000000e+00 : f32
      %680 = vector.broadcast %cst_197 : f32 to vector<8x128xf32>
      %681 = arith.addf %680, %679 : vector<8x128xf32>
      %682 = arith.divf %680, %681 : vector<8x128xf32>
      %683 = vector.extract_strided_slice %673 {offsets = [0, 128], sizes = [8, 128], strides = [1, 1]} : vector<8x384xf32> to vector<8x128xf32>
      %684 = vector.extract_strided_slice %674 {offsets = [0, 128], sizes = [8, 128], strides = [1, 1]} : vector<8x384xf32> to vector<8x128xf32>
      %685 = arith.addf %683, %684 : vector<8x128xf32>
      %686 = arith.negf %685 : vector<8x128xf32>
      %687 = math.exp %686 : vector<8x128xf32>
      %cst_198 = arith.constant 1.000000e+00 : f32
      %688 = vector.broadcast %cst_198 : f32 to vector<8x128xf32>
      %689 = arith.addf %688, %687 : vector<8x128xf32>
      %690 = arith.divf %688, %689 : vector<8x128xf32>
      %691 = vector.extract_strided_slice %673 {offsets = [0, 256], sizes = [8, 128], strides = [1, 1]} : vector<8x384xf32> to vector<8x128xf32>
      %692 = vector.extract_strided_slice %674 {offsets = [0, 256], sizes = [8, 128], strides = [1, 1]} : vector<8x384xf32> to vector<8x128xf32>
      %693 = arith.addf %692, %22 : vector<8x128xf32>
      %694 = arith.mulf %682, %693 : vector<8x128xf32>
      %695 = arith.addf %691, %694 : vector<8x128xf32>
      %696 = math.tanh %695 : vector<8x128xf32>
      %697 = arith.subf %669, %696 : vector<8x128xf32>
      %698 = arith.mulf %690, %697 : vector<8x128xf32>
      %699 = arith.addf %696, %698 : vector<8x128xf32>
      %700 = vector.broadcast %c15_i32 : i32 to vector<8x1xi32>
      %701 = arith.cmpi slt, %700, %19 : vector<8x1xi32>
      %702 = vector.shape_cast %701 : vector<8x1xi1> to vector<8x1xi1>
      %703 = vector.broadcast %702 : vector<8x1xi1> to vector<8x128xi1>
      %704 = arith.select %703, %699, %669 : vector<8x128xi1>, vector<8x128xf32>
      %c0_199 = arith.constant 0 : index
      %c0_200 = arith.constant 0 : index
      %705 = vector.load %arg16[%c0_199, %c0_200] : memref<8x128xf32, #tpu.memory_space<vmem>>, vector<8x128xf32>
      tpu.vector_store %arg16[%c0_199, %c0_200], %704 {strides = array<i32>} : memref<8x128xf32, #tpu.memory_space<vmem>>, vector<8x128xf32>,
      %cst_201 = arith.constant 0.000000e+00 : f32
      %706 = vector.shape_cast %701 : vector<8x1xi1> to vector<8x1xi1>
      %707 = vector.broadcast %706 : vector<8x1xi1> to vector<8x128xi1>
      %708 = vector.broadcast %cst_201 : f32 to vector<8x128xf32>
      %709 = arith.select %707, %699, %708 : vector<8x128xi1>, vector<8x128xf32>
      %710 = arith.index_cast %671 : i32 to index
      %c0_202 = arith.constant 0 : index
      %711 = vector.load %arg15[%710, %c0_202] : memref<152x128xf32, #tpu.memory_space<vmem>>, vector<8x128xf32>
      tpu.vector_store %arg15[%710, %c0_202], %709 {strides = array<i32>} : memref<152x128xf32, #tpu.memory_space<vmem>>, vector<8x128xf32>,
      %c16_i32 = arith.constant 16 : i32
      %c0_203 = arith.constant 0 : index
      %c0_204 = arith.constant 0 : index
      %712 = vector.load %arg16[%c0_203, %c0_204] : memref<8x128xf32, #tpu.memory_space<vmem>>, vector<8x128xf32>
      %c8_i32_205 = arith.constant 8 : i32
      %713 = arith.muli %c16_i32, %c8_i32_205 : i32
      %714 = tpu.assume_multiple %713, 8 : i32
      %715 = arith.index_cast %714 : i32 to index
      %c0_206 = arith.constant 0 : index
      %716 = vector.load %arg14[%715, %c0_206] : memref<152x384xf32, #tpu.memory_space<vmem>>, vector<8x384xf32>
      %cst_207 = arith.constant dense<0.000000e+00> : vector<8x384xf32>
      %717 = tpu.matmul %712, %23, %cst_207 {dimension_numbers = #tpu.dot_dimension_numbers<[1], [0], [0], [1], [0, 0, 1, 1], [], []>} : vector<8x128xf32>, vector<128x384xf32>, vector<8x384xf32> -> vector<8x384xf32>
      %718 = vector.extract_strided_slice %716 {offsets = [0, 0], sizes = [8, 128], strides = [1, 1]} : vector<8x384xf32> to vector<8x128xf32>
      %719 = vector.extract_strided_slice %717 {offsets = [0, 0], sizes = [8, 128], strides = [1, 1]} : vector<8x384xf32> to vector<8x128xf32>
      %720 = arith.addf %718, %719 : vector<8x128xf32>
      %721 = arith.negf %720 : vector<8x128xf32>
      %722 = math.exp %721 : vector<8x128xf32>
      %cst_208 = arith.constant 1.000000e+00 : f32
      %723 = vector.broadcast %cst_208 : f32 to vector<8x128xf32>
      %724 = arith.addf %723, %722 : vector<8x128xf32>
      %725 = arith.divf %723, %724 : vector<8x128xf32>
      %726 = vector.extract_strided_slice %716 {offsets = [0, 128], sizes = [8, 128], strides = [1, 1]} : vector<8x384xf32> to vector<8x128xf32>
      %727 = vector.extract_strided_slice %717 {offsets = [0, 128], sizes = [8, 128], strides = [1, 1]} : vector<8x384xf32> to vector<8x128xf32>
      %728 = arith.addf %726, %727 : vector<8x128xf32>
      %729 = arith.negf %728 : vector<8x128xf32>
      %730 = math.exp %729 : vector<8x128xf32>
      %cst_209 = arith.constant 1.000000e+00 : f32
      %731 = vector.broadcast %cst_209 : f32 to vector<8x128xf32>
      %732 = arith.addf %731, %730 : vector<8x128xf32>
      %733 = arith.divf %731, %732 : vector<8x128xf32>
      %734 = vector.extract_strided_slice %716 {offsets = [0, 256], sizes = [8, 128], strides = [1, 1]} : vector<8x384xf32> to vector<8x128xf32>
      %735 = vector.extract_strided_slice %717 {offsets = [0, 256], sizes = [8, 128], strides = [1, 1]} : vector<8x384xf32> to vector<8x128xf32>
      %736 = arith.addf %735, %22 : vector<8x128xf32>
      %737 = arith.mulf %725, %736 : vector<8x128xf32>
      %738 = arith.addf %734, %737 : vector<8x128xf32>
      %739 = math.tanh %738 : vector<8x128xf32>
      %740 = arith.subf %712, %739 : vector<8x128xf32>
      %741 = arith.mulf %733, %740 : vector<8x128xf32>
      %742 = arith.addf %739, %741 : vector<8x128xf32>
      %743 = vector.broadcast %c16_i32 : i32 to vector<8x1xi32>
      %744 = arith.cmpi slt, %743, %19 : vector<8x1xi32>
      %745 = vector.shape_cast %744 : vector<8x1xi1> to vector<8x1xi1>
      %746 = vector.broadcast %745 : vector<8x1xi1> to vector<8x128xi1>
      %747 = arith.select %746, %742, %712 : vector<8x128xi1>, vector<8x128xf32>
      %c0_210 = arith.constant 0 : index
      %c0_211 = arith.constant 0 : index
      %748 = vector.load %arg16[%c0_210, %c0_211] : memref<8x128xf32, #tpu.memory_space<vmem>>, vector<8x128xf32>
      tpu.vector_store %arg16[%c0_210, %c0_211], %747 {strides = array<i32>} : memref<8x128xf32, #tpu.memory_space<vmem>>, vector<8x128xf32>,
      %cst_212 = arith.constant 0.000000e+00 : f32
      %749 = vector.shape_cast %744 : vector<8x1xi1> to vector<8x1xi1>
      %750 = vector.broadcast %749 : vector<8x1xi1> to vector<8x128xi1>
      %751 = vector.broadcast %cst_212 : f32 to vector<8x128xf32>
      %752 = arith.select %750, %742, %751 : vector<8x128xi1>, vector<8x128xf32>
      %753 = arith.index_cast %714 : i32 to index
      %c0_213 = arith.constant 0 : index
      %754 = vector.load %arg15[%753, %c0_213] : memref<152x128xf32, #tpu.memory_space<vmem>>, vector<8x128xf32>
      tpu.vector_store %arg15[%753, %c0_213], %752 {strides = array<i32>} : memref<152x128xf32, #tpu.memory_space<vmem>>, vector<8x128xf32>,
      %c17_i32 = arith.constant 17 : i32
      %c0_214 = arith.constant 0 : index
      %c0_215 = arith.constant 0 : index
      %755 = vector.load %arg16[%c0_214, %c0_215] : memref<8x128xf32, #tpu.memory_space<vmem>>, vector<8x128xf32>
      %c8_i32_216 = arith.constant 8 : i32
      %756 = arith.muli %c17_i32, %c8_i32_216 : i32
      %757 = tpu.assume_multiple %756, 8 : i32
      %758 = arith.index_cast %757 : i32 to index
      %c0_217 = arith.constant 0 : index
      %759 = vector.load %arg14[%758, %c0_217] : memref<152x384xf32, #tpu.memory_space<vmem>>, vector<8x384xf32>
      %cst_218 = arith.constant dense<0.000000e+00> : vector<8x384xf32>
      %760 = tpu.matmul %755, %23, %cst_218 {dimension_numbers = #tpu.dot_dimension_numbers<[1], [0], [0], [1], [0, 0, 1, 1], [], []>} : vector<8x128xf32>, vector<128x384xf32>, vector<8x384xf32> -> vector<8x384xf32>
      %761 = vector.extract_strided_slice %759 {offsets = [0, 0], sizes = [8, 128], strides = [1, 1]} : vector<8x384xf32> to vector<8x128xf32>
      %762 = vector.extract_strided_slice %760 {offsets = [0, 0], sizes = [8, 128], strides = [1, 1]} : vector<8x384xf32> to vector<8x128xf32>
      %763 = arith.addf %761, %762 : vector<8x128xf32>
      %764 = arith.negf %763 : vector<8x128xf32>
      %765 = math.exp %764 : vector<8x128xf32>
      %cst_219 = arith.constant 1.000000e+00 : f32
      %766 = vector.broadcast %cst_219 : f32 to vector<8x128xf32>
      %767 = arith.addf %766, %765 : vector<8x128xf32>
      %768 = arith.divf %766, %767 : vector<8x128xf32>
      %769 = vector.extract_strided_slice %759 {offsets = [0, 128], sizes = [8, 128], strides = [1, 1]} : vector<8x384xf32> to vector<8x128xf32>
      %770 = vector.extract_strided_slice %760 {offsets = [0, 128], sizes = [8, 128], strides = [1, 1]} : vector<8x384xf32> to vector<8x128xf32>
      %771 = arith.addf %769, %770 : vector<8x128xf32>
      %772 = arith.negf %771 : vector<8x128xf32>
      %773 = math.exp %772 : vector<8x128xf32>
      %cst_220 = arith.constant 1.000000e+00 : f32
      %774 = vector.broadcast %cst_220 : f32 to vector<8x128xf32>
      %775 = arith.addf %774, %773 : vector<8x128xf32>
      %776 = arith.divf %774, %775 : vector<8x128xf32>
      %777 = vector.extract_strided_slice %759 {offsets = [0, 256], sizes = [8, 128], strides = [1, 1]} : vector<8x384xf32> to vector<8x128xf32>
      %778 = vector.extract_strided_slice %760 {offsets = [0, 256], sizes = [8, 128], strides = [1, 1]} : vector<8x384xf32> to vector<8x128xf32>
      %779 = arith.addf %778, %22 : vector<8x128xf32>
      %780 = arith.mulf %768, %779 : vector<8x128xf32>
      %781 = arith.addf %777, %780 : vector<8x128xf32>
      %782 = math.tanh %781 : vector<8x128xf32>
      %783 = arith.subf %755, %782 : vector<8x128xf32>
      %784 = arith.mulf %776, %783 : vector<8x128xf32>
      %785 = arith.addf %782, %784 : vector<8x128xf32>
      %786 = vector.broadcast %c17_i32 : i32 to vector<8x1xi32>
      %787 = arith.cmpi slt, %786, %19 : vector<8x1xi32>
      %788 = vector.shape_cast %787 : vector<8x1xi1> to vector<8x1xi1>
      %789 = vector.broadcast %788 : vector<8x1xi1> to vector<8x128xi1>
      %790 = arith.select %789, %785, %755 : vector<8x128xi1>, vector<8x128xf32>
      %c0_221 = arith.constant 0 : index
      %c0_222 = arith.constant 0 : index
      %791 = vector.load %arg16[%c0_221, %c0_222] : memref<8x128xf32, #tpu.memory_space<vmem>>, vector<8x128xf32>
      tpu.vector_store %arg16[%c0_221, %c0_222], %790 {strides = array<i32>} : memref<8x128xf32, #tpu.memory_space<vmem>>, vector<8x128xf32>,
      %cst_223 = arith.constant 0.000000e+00 : f32
      %792 = vector.shape_cast %787 : vector<8x1xi1> to vector<8x1xi1>
      %793 = vector.broadcast %792 : vector<8x1xi1> to vector<8x128xi1>
      %794 = vector.broadcast %cst_223 : f32 to vector<8x128xf32>
      %795 = arith.select %793, %785, %794 : vector<8x128xi1>, vector<8x128xf32>
      %796 = arith.index_cast %757 : i32 to index
      %c0_224 = arith.constant 0 : index
      %797 = vector.load %arg15[%796, %c0_224] : memref<152x128xf32, #tpu.memory_space<vmem>>, vector<8x128xf32>
      tpu.vector_store %arg15[%796, %c0_224], %795 {strides = array<i32>} : memref<152x128xf32, #tpu.memory_space<vmem>>, vector<8x128xf32>,
      %c18_i32 = arith.constant 18 : i32
      %c0_225 = arith.constant 0 : index
      %c0_226 = arith.constant 0 : index
      %798 = vector.load %arg16[%c0_225, %c0_226] : memref<8x128xf32, #tpu.memory_space<vmem>>, vector<8x128xf32>
      %c8_i32_227 = arith.constant 8 : i32
      %799 = arith.muli %c18_i32, %c8_i32_227 : i32
      %800 = tpu.assume_multiple %799, 8 : i32
      %801 = arith.index_cast %800 : i32 to index
      %c0_228 = arith.constant 0 : index
      %802 = vector.load %arg14[%801, %c0_228] : memref<152x384xf32, #tpu.memory_space<vmem>>, vector<8x384xf32>
      %cst_229 = arith.constant dense<0.000000e+00> : vector<8x384xf32>
      %803 = tpu.matmul %798, %23, %cst_229 {dimension_numbers = #tpu.dot_dimension_numbers<[1], [0], [0], [1], [0, 0, 1, 1], [], []>} : vector<8x128xf32>, vector<128x384xf32>, vector<8x384xf32> -> vector<8x384xf32>
      %804 = vector.extract_strided_slice %802 {offsets = [0, 0], sizes = [8, 128], strides = [1, 1]} : vector<8x384xf32> to vector<8x128xf32>
      %805 = vector.extract_strided_slice %803 {offsets = [0, 0], sizes = [8, 128], strides = [1, 1]} : vector<8x384xf32> to vector<8x128xf32>
      %806 = arith.addf %804, %805 : vector<8x128xf32>
      %807 = arith.negf %806 : vector<8x128xf32>
      %808 = math.exp %807 : vector<8x128xf32>
      %cst_230 = arith.constant 1.000000e+00 : f32
      %809 = vector.broadcast %cst_230 : f32 to vector<8x128xf32>
      %810 = arith.addf %809, %808 : vector<8x128xf32>
      %811 = arith.divf %809, %810 : vector<8x128xf32>
      %812 = vector.extract_strided_slice %802 {offsets = [0, 128], sizes = [8, 128], strides = [1, 1]} : vector<8x384xf32> to vector<8x128xf32>
      %813 = vector.extract_strided_slice %803 {offsets = [0, 128], sizes = [8, 128], strides = [1, 1]} : vector<8x384xf32> to vector<8x128xf32>
      %814 = arith.addf %812, %813 : vector<8x128xf32>
      %815 = arith.negf %814 : vector<8x128xf32>
      %816 = math.exp %815 : vector<8x128xf32>
      %cst_231 = arith.constant 1.000000e+00 : f32
      %817 = vector.broadcast %cst_231 : f32 to vector<8x128xf32>
      %818 = arith.addf %817, %816 : vector<8x128xf32>
      %819 = arith.divf %817, %818 : vector<8x128xf32>
      %820 = vector.extract_strided_slice %802 {offsets = [0, 256], sizes = [8, 128], strides = [1, 1]} : vector<8x384xf32> to vector<8x128xf32>
      %821 = vector.extract_strided_slice %803 {offsets = [0, 256], sizes = [8, 128], strides = [1, 1]} : vector<8x384xf32> to vector<8x128xf32>
      %822 = arith.addf %821, %22 : vector<8x128xf32>
      %823 = arith.mulf %811, %822 : vector<8x128xf32>
      %824 = arith.addf %820, %823 : vector<8x128xf32>
      %825 = math.tanh %824 : vector<8x128xf32>
      %826 = arith.subf %798, %825 : vector<8x128xf32>
      %827 = arith.mulf %819, %826 : vector<8x128xf32>
      %828 = arith.addf %825, %827 : vector<8x128xf32>
      %829 = vector.broadcast %c18_i32 : i32 to vector<8x1xi32>
      %830 = arith.cmpi slt, %829, %19 : vector<8x1xi32>
      %831 = vector.shape_cast %830 : vector<8x1xi1> to vector<8x1xi1>
      %832 = vector.broadcast %831 : vector<8x1xi1> to vector<8x128xi1>
      %833 = arith.select %832, %828, %798 : vector<8x128xi1>, vector<8x128xf32>
      %c0_232 = arith.constant 0 : index
      %c0_233 = arith.constant 0 : index
      %834 = vector.load %arg16[%c0_232, %c0_233] : memref<8x128xf32, #tpu.memory_space<vmem>>, vector<8x128xf32>
      tpu.vector_store %arg16[%c0_232, %c0_233], %833 {strides = array<i32>} : memref<8x128xf32, #tpu.memory_space<vmem>>, vector<8x128xf32>,
      %cst_234 = arith.constant 0.000000e+00 : f32
      %835 = vector.shape_cast %830 : vector<8x1xi1> to vector<8x1xi1>
      %836 = vector.broadcast %835 : vector<8x1xi1> to vector<8x128xi1>
      %837 = vector.broadcast %cst_234 : f32 to vector<8x128xf32>
      %838 = arith.select %836, %828, %837 : vector<8x128xi1>, vector<8x128xf32>
      %839 = arith.index_cast %800 : i32 to index
      %c0_235 = arith.constant 0 : index
      %840 = vector.load %arg15[%839, %c0_235] : memref<152x128xf32, #tpu.memory_space<vmem>>, vector<8x128xf32>
      tpu.vector_store %arg15[%839, %c0_235], %838 {strides = array<i32>} : memref<152x128xf32, #tpu.memory_space<vmem>>, vector<8x128xf32>,
      %c19_i32 = arith.constant 19 : i32
      %c0_236 = arith.constant 0 : index
      %c0_237 = arith.constant 0 : index
      %841 = vector.load %arg15[%c0_236, %c0_237] : memref<152x128xf32, #tpu.memory_space<vmem>>, vector<152x128xf32>
      %842 = arith.truncf %841 : vector<152x128xf32> to vector<152x128xbf16>
      %c0_238 = arith.constant 0 : index
      %c0_239 = arith.constant 0 : index
      %843 = vector.load %arg7[%c0_238, %c0_239] : memref<128x128xbf16, #tpu.memory_space<vmem>>, vector<128x128xbf16>
      %cst_240 = arith.constant dense<0.000000e+00> : vector<152x128xf32>
      %844 = tpu.matmul %842, %843, %cst_240 {dimension_numbers = #tpu.dot_dimension_numbers<[1], [0], [0], [1], [0, 0, 1, 1], [], []>} : vector<152x128xbf16>, vector<128x128xbf16>, vector<152x128xf32> -> vector<152x128xf32>
      %c0_241 = arith.constant 0 : index
      %c0_242 = arith.constant 0 : index
      %845 = vector.load %arg8[%c0_241, %c0_242] : memref<1x128xf32, #tpu.memory_space<vmem>>, vector<1x128xf32>
      %846 = vector.broadcast %845 : vector<1x128xf32> to vector<152x128xf32>
      %847 = arith.addf %844, %846 : vector<152x128xf32>
      %848 = arith.truncf %847 : vector<152x128xf32> to vector<152x128xbf16>
      %c0_243 = arith.constant 0 : index
      %c0_244 = arith.constant 0 : index
      %849 = vector.load %arg9[%c0_243, %c0_244] : memref<128x128xbf16, #tpu.memory_space<vmem>>, vector<128x128xbf16>
      %cst_245 = arith.constant dense<0.000000e+00> : vector<152x128xf32>
      %850 = tpu.matmul %848, %849, %cst_245 {dimension_numbers = #tpu.dot_dimension_numbers<[1], [0], [0], [1], [0, 0, 1, 1], [], []>} : vector<152x128xbf16>, vector<128x128xbf16>, vector<152x128xf32> -> vector<152x128xf32>
      %c0_246 = arith.constant 0 : index
      %c0_247 = arith.constant 0 : index
      %851 = vector.load %arg10[%c0_246, %c0_247] : memref<1x128xf32, #tpu.memory_space<vmem>>, vector<1x128xf32>
      %852 = vector.broadcast %851 : vector<1x128xf32> to vector<152x128xf32>
      %853 = arith.addf %850, %852 : vector<152x128xf32>
      %cst_248 = arith.constant 5.000000e-01 : f32
      %854 = vector.broadcast %cst_248 : f32 to vector<152x128xf32>
      %855 = arith.mulf %854, %853 : vector<152x128xf32>
      %cst_249 = arith.constant 0.707106769 : f32
      %856 = vector.broadcast %cst_249 : f32 to vector<152x128xf32>
      %857 = arith.mulf %853, %856 : vector<152x128xf32>
      %858 = math.erf %857 : vector<152x128xf32>
      %cst_250 = arith.constant 1.000000e+00 : f32
      %859 = vector.broadcast %cst_250 : f32 to vector<152x128xf32>
      %860 = arith.addf %859, %858 : vector<152x128xf32>
      %861 = arith.mulf %855, %860 : vector<152x128xf32>
      %862 = arith.truncf %861 : vector<152x128xf32> to vector<152x128xbf16>
      %c0_251 = arith.constant 0 : index
      %c0_252 = arith.constant 0 : index
      %863 = vector.load %arg17[%c0_251, %c0_252] : memref<152x128xbf16, #tpu.memory_space<vmem>>, vector<152x128xbf16>
      tpu.vector_store %arg17[%c0_251, %c0_252], %862 {strides = array<i32>} : memref<152x128xbf16, #tpu.memory_space<vmem>>, vector<152x128xbf16>,
    } else {
    }
    %c0 = arith.constant 0 : index
    %c0_1 = arith.constant 0 : index
    %3 = vector.load %arg17[%c0, %c0_1] : memref<152x128xbf16, #tpu.memory_space<vmem>>, vector<152x128xbf16>
    %c0_2 = arith.constant 0 : index
    %c0_3 = arith.constant 0 : index
    %4 = vector.load %arg11[%c0_2, %c0_3] : memref<128x128xbf16, #tpu.memory_space<vmem>>, vector<128x128xbf16>
    %cst = arith.constant dense<0.000000e+00> : vector<152x128xf32>
    %5 = tpu.matmul %3, %4, %cst {dimension_numbers = #tpu.dot_dimension_numbers<[1], [0], [0], [1], [0, 0, 1, 1], [], []>} : vector<152x128xbf16>, vector<128x128xbf16>, vector<152x128xf32> -> vector<152x128xf32>
    %c0_4 = arith.constant 0 : index
    %c0_5 = arith.constant 0 : index
    %6 = vector.load %arg12[%c0_4, %c0_5] : memref<1x128xf32, #tpu.memory_space<vmem>>, vector<1x128xf32>
    %7 = vector.broadcast %6 : vector<1x128xf32> to vector<152x128xf32>
    %8 = arith.addf %5, %7 : vector<152x128xf32>
    %c0_6 = arith.constant 0 : index
    %c0_7 = arith.constant 0 : index
    %9 = vector.load %arg13[%c0_6, %c0_7] : memref<152x128xf32, #tpu.memory_space<vmem>>, vector<152x128xf32>
    tpu.vector_store %arg13[%c0_6, %c0_7], %8 {strides = array<i32>} : memref<152x128xf32, #tpu.memory_space<vmem>>, vector<152x128xf32>,
    return
  }
  func.func @transform_0(%arg0: i32) -> (i32, i32) {
    %c0_i32 = arith.constant 0 : i32
    %c0_i32_0 = arith.constant 0 : i32
    %c0_i32_1 = arith.constant 0 : i32
    return %c0_i32, %c0_i32_0 : i32, i32
  }
  func.func @transform_1(%arg0: i32) -> (i32, i32) {
    %c0_i32 = arith.constant 0 : i32
    %c0_i32_0 = arith.constant 0 : i32
    %c0_i32_1 = arith.constant 0 : i32
    return %c0_i32, %c0_i32_0 : i32, i32
  }
  func.func @transform_2(%arg0: i32) -> (i32, i32) {
    %c0_i32 = arith.constant 0 : i32
    %c0_i32_0 = arith.constant 0 : i32
    %c0_i32_1 = arith.constant 0 : i32
    return %c0_i32, %c0_i32_0 : i32, i32
  }
  func.func @transform_3(%arg0: i32) -> (i32, i32) {
    %c0_i32 = arith.constant 0 : i32
    %c0_i32_0 = arith.constant 0 : i32
    %c0_i32_1 = arith.constant 0 : i32
    return %c0_i32, %c0_i32_0 : i32, i32
  }
  func.func @transform_4(%arg0: i32) -> (i32, i32) {
    %c0_i32 = arith.constant 0 : i32
    %c0_i32_0 = arith.constant 0 : i32
    %c0_i32_1 = arith.constant 0 : i32
    return %c0_i32, %c0_i32_0 : i32, i32
  }
  func.func @transform_5(%arg0: i32) -> (i32, i32) {
    %c0_i32 = arith.constant 0 : i32
    %c0_i32_0 = arith.constant 0 : i32
    %c0_i32_1 = arith.constant 0 : i32
    return %c0_i32, %c0_i32_0 : i32, i32
  }
  func.func @transform_6(%arg0: i32) -> (i32, i32) {
    %c0_i32 = arith.constant 0 : i32
    %c0_i32_0 = arith.constant 0 : i32
    %c0_i32_1 = arith.constant 0 : i32
    return %c0_i32, %c0_i32_0 : i32, i32
  }
  func.func @transform_7(%arg0: i32) -> (i32, i32) {
    %c0_i32 = arith.constant 0 : i32
    %c0_i32_0 = arith.constant 0 : i32
    %c0_i32_1 = arith.constant 0 : i32
    return %c0_i32, %c0_i32_0 : i32, i32
  }
  func.func @transform_8(%arg0: i32) -> (i32, i32) {
    %c0_i32 = arith.constant 0 : i32
    %c0_i32_0 = arith.constant 0 : i32
    %c0_i32_1 = arith.constant 0 : i32
    return %c0_i32, %c0_i32_0 : i32, i32
  }
  func.func @transform_9(%arg0: i32) -> (i32, i32) {
    %c0_i32 = arith.constant 0 : i32
    %c0_i32_0 = arith.constant 0 : i32
    %c0_i32_1 = arith.constant 0 : i32
    return %c0_i32, %c0_i32_0 : i32, i32
  }
  func.func @transform_10(%arg0: i32) -> (i32, i32) {
    %c0_i32 = arith.constant 0 : i32
    %c0_i32_0 = arith.constant 0 : i32
    return %c0_i32, %arg0 : i32, i32
  }
  func.func @transform_11(%arg0: i32) -> (i32, i32) {
    %c0_i32 = arith.constant 0 : i32
    %c0_i32_0 = arith.constant 0 : i32
    return %c0_i32, %arg0 : i32, i32
  }
  func.func @transform_12(%arg0: i32) -> (i32, i32) {
    %c0_i32 = arith.constant 0 : i32
    %c0_i32_0 = arith.constant 0 : i32
    return %c0_i32, %arg0 : i32, i32
  }
}

</mosaic_0001>

<llo_original>
// kernel: tpu_custom_call.1
$region0: #{tpu_custom_call.1}
  #allocation0 [shape = 'u32[]', space=smem, size = 0x4, offset = 0x4, fixed_abs, tag = 'smem constant byte address 0x4 - core index']
  #allocation1 [shape = 'u32[144,128]{1,0:T(1,128)}', space=vmem, size = 0x12000, scoped, tag = 'internal scratch']
  #allocation2 [shape = 'f32[152,384]{1,0:T(8,128)}', space=vmem, size = 0x39000, scoped, tag = 'scratch operand']
  #allocation3 [shape = 'f32[152,128]{1,0:T(8,128)}', space=vmem, size = 0x13000, scoped, tag = 'scratch operand']
  #allocation4 [shape = 'f32[8,128]{1,0:T(8,128)}', space=vmem, size = 0x1000, scoped, tag = 'scratch operand']
  #allocation5 [shape = 'bf16[152,128]{1,0:T(8,128)(2,1)}', space=vmem, size = 0x9800, scoped, tag = 'scratch operand']
  %s0 = inlined_call_operand.vmem [shape: bf16[152,32], index: 0, kind: input, shape index: {}]
  %s1 = inlined_call_operand.vmem [shape: s32[8,1], index: 1, kind: input, shape index: {}]
  %s2 = inlined_call_operand.hbm [shape: bf16[32,384], index: 2, kind: input, shape index: {}]
  %s3 = inlined_call_operand.hbm [shape: f32[128,384], index: 3, kind: input, shape index: {}]
  %s4 = inlined_call_operand.vmem [shape: f32[1,384], index: 4, kind: input, shape index: {}]
  %s5 = inlined_call_operand.vmem [shape: f32[1,128], index: 5, kind: input, shape index: {}]
  %s6 = inlined_call_operand.vmem [shape: bf16[128,128], index: 6, kind: input, shape index: {}]
  %s7 = inlined_call_operand.vmem [shape: f32[1,128], index: 7, kind: input, shape index: {}]
  %s8 = inlined_call_operand.vmem [shape: bf16[128,128], index: 8, kind: input, shape index: {}]
  %s9 = inlined_call_operand.vmem [shape: f32[1,128], index: 9, kind: input, shape index: {}]
  %s10 = inlined_call_operand.hbm [shape: bf16[128,128], index: 10, kind: input, shape index: {}]
  %s11 = inlined_call_operand.vmem [shape: f32[1,128], index: 11, kind: input, shape index: {}]
  %s12 = inlined_call_operand.hbm [shape: f32[152,128], index: 12, kind: output, shape index: {}]
  %s13 = sld [smem:[#allocation0]]
  $region74: #{tpu_custom_call.1} parent=0
    _
  %s15 = ssub.s32 1, %s13
  %s16 = scalar_select 0, %s15, %s13
  $region1: #{tpu_custom_call.1} parent=0
    #allocation6 [shape = 'u8[24576]{0}', space=vmem, size = 0x6000, scoped, tag = 'input window, operand 2, single buffered']
    #allocation7 [shape = 's32[1]{0}', space=sflag, size = 0x4, scoped, tag = 'scoped memory for tpu_custom_call.1']
    #allocation8 [shape = 's32[1]{0}', space=sflag, size = 0x4, scoped, tag = 'scoped memory for tpu_custom_call.1']
    #allocation9 [shape = 'u8[196608]{0}', space=vmem, size = 0x30000, scoped, tag = 'input window, operand 3, single buffered']
    #allocation10 [shape = 's32[1]{0}', space=sflag, size = 0x4, scoped, tag = 'scoped memory for tpu_custom_call.1']
    #allocation11 [shape = 'u8[32768]{0}', space=vmem, size = 0x8000, scoped, tag = 'input window, operand 10, single buffered']
    #allocation12 [shape = 'u8[77824]{0}', space=vmem, size = 0x13000, scoped, tag = 'output window, operand 0, single buffered']
    %17 = vsyncpa [#allocation7], 0
    %18 = vsyncpa [#allocation10], 0
    %19 = vsyncpa [#allocation8], 0
    // Predicated region
    $region2: #{tpu_custom_call.1} parent=1 // pred_check
      _
    $region3: #{tpu_custom_call.1} parent=1 // pred_check_branch
      %21 = sbr.rel (0) target = $region5
    $region4: #{tpu_custom_call.1} parent=1 // pred_region
      _
    $region5: #{tpu_custom_call.1} parent=1 // pred_fallthru
      _
    // Predicated region
    $region6: #{tpu_custom_call.1} parent=1 // pred_check
      _
    $region7: #{tpu_custom_call.1} parent=1 // pred_check_branch
      %23 = sbr.rel (0) target = $region9
    $region8: #{tpu_custom_call.1} parent=1 // pred_region
      _
    $region9: #{tpu_custom_call.1} parent=1 // pred_fallthru
      _
    // Predicated region
    $region10: #{tpu_custom_call.1} parent=1 // pred_check
      _
    $region11: #{tpu_custom_call.1} parent=1 // pred_check_branch
      %25 = sbr.rel (0) target = $region13
    $region12: #{tpu_custom_call.1} parent=1 // pred_region
      %s27 = ssub.s32 768, 768
      %28 = vsyncadd [#allocation7], %s27
      %s29 = sshll.u32 [#allocation6], 4
      %s30 = int_to_ptr.vmem [resolvable:$true] %s29
      %35 = dma.hbm_to_vmem [thread:$0]  %s2, 768, %s30, [#allocation7], 192, 192, 12
    $region13: #{tpu_custom_call.1} parent=1 // pred_fallthru
      _
    // Predicated region
    $region14: #{tpu_custom_call.1} parent=1 // pred_check
      _
    $region15: #{tpu_custom_call.1} parent=1 // pred_check_branch
      %37 = sbr.rel (0) target = $region17
    $region16: #{tpu_custom_call.1} parent=1 // pred_region
      %s39 = ssub.s32 6144, 6144
      %40 = vsyncadd [#allocation10], %s39
      %s41 = sshll.u32 [#allocation9], 4
      %s42 = int_to_ptr.vmem [resolvable:$true] %s41
      %47 = dma.hbm_to_vmem [thread:$0]  %s3, 6144, %s42, [#allocation10], 384, 384, 24
    $region17: #{tpu_custom_call.1} parent=1 // pred_fallthru
      _
    // Predicated region
    $region18: #{tpu_custom_call.1} parent=1 // pred_check
      _
    $region19: #{tpu_custom_call.1} parent=1 // pred_check_branch
      %49 = sbr.rel (0) target = $region21
    $region20: #{tpu_custom_call.1} parent=1 // pred_region
      _
    $region21: #{tpu_custom_call.1} parent=1 // pred_fallthru
      _
    // Predicated region
    $region22: #{tpu_custom_call.1} parent=1 // pred_check
      _
    $region23: #{tpu_custom_call.1} parent=1 // pred_check_branch
      %51 = sbr.rel (0) target = $region25
    $region24: #{tpu_custom_call.1} parent=1 // pred_region
      _
    $region25: #{tpu_custom_call.1} parent=1 // pred_fallthru
      _
    // Predicated region
    $region26: #{tpu_custom_call.1} parent=1 // pred_check
      _
    $region27: #{tpu_custom_call.1} parent=1 // pred_check_branch
      %53 = sbr.rel (0) target = $region29
    $region28: #{tpu_custom_call.1} parent=1 // pred_region
      _
    $region29: #{tpu_custom_call.1} parent=1 // pred_fallthru
      _
    // Predicated region
    $region30: #{tpu_custom_call.1} parent=1 // pred_check
      _
    $region31: #{tpu_custom_call.1} parent=1 // pred_check_branch
      %55 = sbr.rel (0) target = $region33
    $region32: #{tpu_custom_call.1} parent=1 // pred_region
      _
    $region33: #{tpu_custom_call.1} parent=1 // pred_fallthru
      _
    // Predicated region
    $region34: #{tpu_custom_call.1} parent=1 // pred_check
      _
    $region35: #{tpu_custom_call.1} parent=1 // pred_check_branch
      %57 = sbr.rel (0) target = $region37
    $region36: #{tpu_custom_call.1} parent=1 // pred_region
      _
    $region37: #{tpu_custom_call.1} parent=1 // pred_fallthru
      _
    // Predicated region
    $region38: #{tpu_custom_call.1} parent=1 // pred_check
      _
    $region39: #{tpu_custom_call.1} parent=1 // pred_check_branch
      %59 = sbr.rel (0) target = $region41
    $region40: #{tpu_custom_call.1} parent=1 // pred_region
      _
    $region41: #{tpu_custom_call.1} parent=1 // pred_fallthru
      _
    // Predicated region
    $region42: #{tpu_custom_call.1} parent=1 // pred_check
      _
    $region43: #{tpu_custom_call.1} parent=1 // pred_check_branch
      %61 = sbr.rel (0) target = $region45
    $region44: #{tpu_custom_call.1} parent=1 // pred_region
      %s63 = ssub.s32 1024, 1024
      %64 = vsyncadd [#allocation10], %s63
      %s65 = sshll.u32 [#allocation11], 4
      %s66 = int_to_ptr.vmem [resolvable:$true] %s65
      %71 = dma.hbm_to_vmem [thread:$0]  %s10, 1024, %s66, [#allocation10], 64, 64, 4
    $region45: #{tpu_custom_call.1} parent=1 // pred_fallthru
      _
    // Predicated region
    $region46: #{tpu_custom_call.1} parent=1 // pred_check
      _
    $region47: #{tpu_custom_call.1} parent=1 // pred_check_branch
      %73 = sbr.rel (0) target = $region49
    $region48: #{tpu_custom_call.1} parent=1 // pred_region
      _
    $region49: #{tpu_custom_call.1} parent=1 // pred_fallthru
      _
    // Predicated region
    $region50: #{tpu_custom_call.1} parent=1 // pred_check
      _
    $region51: #{tpu_custom_call.1} parent=1 // pred_check_branch
      %75 = sbr.rel (0) target = $region53
    $region52: #{tpu_custom_call.1} parent=1 // pred_region
      %76 = dma.done [#allocation7], 768
    $region53: #{tpu_custom_call.1} parent=1 // pred_fallthru
      _
    // Predicated region
    $region54: #{tpu_custom_call.1} parent=1 // pred_check
      _
    $region55: #{tpu_custom_call.1} parent=1 // pred_check_branch
      %78 = sbr.rel (0) target = $region57
    $region56: #{tpu_custom_call.1} parent=1 // pred_region
      %79 = dma.done [#allocation10], 6144
    $region57: #{tpu_custom_call.1} parent=1 // pred_fallthru
      _
    // Predicated region
    $region58: #{tpu_custom_call.1} parent=1 // pred_check
      _
    $region59: #{tpu_custom_call.1} parent=1 // pred_check_branch
      %81 = sbr.rel (0) target = $region61
    $region60: #{tpu_custom_call.1} parent=1 // pred_region
      %82 = dma.done [#allocation10], 1024
    $region61: #{tpu_custom_call.1} parent=1 // pred_fallthru
      _
    %p84 = scmp.eq.s32.totalorder 0, 0
    // Predicated region
    $region62: #{tpu_custom_call.1} parent=1 // pred_check
      %p85 = pneg %p84
    $region63: #{tpu_custom_call.1} parent=1 // pred_check_branch
      %87 = sbr.rel (%p85) target = $region65
    $region64: #{tpu_custom_call.1} parent=1 // pred_region
      %v88 = vld [vmem:[%s0] sm:$0xf]
      %v89 = vld [vmem:[%s0 + $0x4] sm:$0xf]
      %v90 = vld [vmem:[%s0 + $0x8] sm:$0xf]
      %v91 = vld [vmem:[%s0 + $0xc] sm:$0xf]
      %v92 = vld [vmem:[%s0 + $0x10] sm:$0xf]
      %v93 = vld [vmem:[%s0 + $0x14] sm:$0xf]
      %v94 = vld [vmem:[%s0 + $0x18] sm:$0xf]
      %v95 = vld [vmem:[%s0 + $0x1c] sm:$0xf]
      %v96 = vld [vmem:[%s0 + $0x20] sm:$0xf]
      %v97 = vld [vmem:[%s0 + $0x24] sm:$0xf]
      %v98 = vld [vmem:[%s0 + $0x28] sm:$0xf]
      %v99 = vld [vmem:[%s0 + $0x2c] sm:$0xf]
      %v100 = vld [vmem:[%s0 + $0x30] sm:$0xf]
      %v101 = vld [vmem:[%s0 + $0x34] sm:$0xf]
      %v102 = vld [vmem:[%s0 + $0x38] sm:$0xf]
      %v103 = vld [vmem:[%s0 + $0x3c] sm:$0xf]
      %v104 = vld [vmem:[%s0 + $0x40] sm:$0xf]
      %v105 = vld [vmem:[%s0 + $0x44] sm:$0xf]
      %v106 = vld [vmem:[%s0 + $0x48] sm:$0xf]
      %v107 = vld [vmem:[#allocation6] sm:$0xff]
      %v108 = vld [vmem:[#allocation6 + $0x8] sm:$0xf]
      %v109 = vld [vmem:[#allocation6 + $0xc] sm:$0xff]
      %v110 = vld [vmem:[#allocation6 + $0x14] sm:$0xf]
      %v111 = vld [vmem:[#allocation6 + $0x18] sm:$0xff]
      %v112 = vld [vmem:[#allocation6 + $0x20] sm:$0xf]
      %v113 = vld [vmem:[#allocation6 + $0x24] sm:$0xff]
      %v114 = vld [vmem:[#allocation6 + $0x2c] sm:$0xf]
      %v115 = vld [vmem:[%s4] sm:$0x7]
      %v117 = vlaneseq
      %v118 = vshrl.u32 %v117, 7
      %v119 = vsub.s32 0, %v118
      %v120 = vrot.slane %v115, %v119
      %v121 = vlaneseq
      %v122 = vshrl.u32 %v121, 7
      %v123 = vsub.s32 1, %v122
      %v124 = vrot.slane %v115, %v123
      %v125 = vlaneseq
      %v126 = vshrl.u32 %v125, 7
      %v127 = vsub.s32 2, %v126
      %v128 = vrot.slane %v115, %v127
      %v151 = vunpack.c.l.b16 %v88
      %v152 = vunpack.c.l.b16 %v89
      %v153 = vunpack.c.l.b16 %v90
      %v154 = vunpack.c.l.b16 %v91
      %v155 = vunpack.c.l.b16 %v92
      %v156 = vunpack.c.l.b16 %v93
      %v157 = vunpack.c.l.b16 %v94
      %v158 = vunpack.c.l.b16 %v95
      %v159 = vunpack.c.l.b16 %v96
      %v160 = vunpack.c.l.b16 %v97
      %v161 = vunpack.c.l.b16 %v98
      %v162 = vunpack.c.l.b16 %v99
      %v163 = vunpack.c.l.b16 %v100
      %v164 = vunpack.c.l.b16 %v101
      %v165 = vunpack.c.l.b16 %v102
      %v166 = vunpack.c.l.b16 %v103
      %v167 = vunpack.c.l.b16 %v104
      %v168 = vunpack.c.l.b16 %v105
      %v169 = vunpack.c.l.b16 %v106
      %v170 = vpack.c.b16 %v152, %v151
      %v171 = vpack.c.b16 %v154, %v153
      %v172 = vpack.c.b16 %v156, %v155
      %v173 = vpack.c.b16 %v158, %v157
      %v174 = vpack.c.b16 %v160, %v159
      %v175 = vpack.c.b16 %v162, %v161
      %v176 = vpack.c.b16 %v164, %v163
      %v177 = vpack.c.b16 %v166, %v165
      %v178 = vpack.c.b16 %v168, %v167
      %v179 = vpack.c.b16 %v169, %v169
      %v188 = vunpack.c.l.b16 %v107
      %v189 = vunpack.c.h.b16 %v107
      %v190 = vunpack.c.l.b16 %v108
      %v191 = vunpack.c.l.b16 %v109
      %v192 = vunpack.c.h.b16 %v109
      %v193 = vunpack.c.l.b16 %v110
      %v194 = vunpack.c.l.b16 %v111
      %v195 = vunpack.c.h.b16 %v111
      %v196 = vunpack.c.l.b16 %v112
      %v197 = vunpack.c.l.b16 %v113
      %v198 = vunpack.c.h.b16 %v113
      %v199 = vunpack.c.l.b16 %v114
      %v200 = vpack.c.b16 %v191, %v188
      %v201 = vpack.c.b16 %v192, %v189
      %v202 = vpack.c.b16 %v193, %v190
      %v203 = vpack.c.b16 %v197, %v194
      %v204 = vpack.c.b16 %v198, %v195
      %v205 = vpack.c.b16 %v199, %v196
      %vm212 = vcmask 261120
      %v214 = vsel %vm212, %v170, 0
      %v217 = vsel %vm212, %v171, 0
      %v220 = vsel %vm212, %v172, 0
      %v223 = vsel %vm212, %v173, 0
      %v226 = vsel %vm212, %v174, 0
      %v229 = vsel %vm212, %v175, 0
      %v232 = vsel %vm212, %v176, 0
      %v235 = vsel %vm212, %v177, 0
      %v238 = vsel %vm212, %v178, 0
      %v241 = vsel %vm212, %v179, 0
      %243 = vmatprep.subr.bf16.mxu0 %v201
      %244 = vmatpush1.bf16.msra.mxu0 %v200
      %245 = vmatprep.subr.bf16.mxu0 %v204
      %246 = vmatpush1.bf16.msra.mxu0 %v203
      %247 = vmatprep.subr.bf16.mxu0 0
      %248 = vmatpush1.bf16.msra.mxu0 0
      %249 = vmatprep.subr.bf16.mxu0 0
      %250 = vmatpush1.bf16.msra.mxu0 0
      %251 = vmatprep.subr.bf16.mxu0 0
      %252 = vmatpush1.bf16.msra.mxu0 0
      %253 = vmatprep.subr.bf16.mxu0 0
      %254 = vmatpush1.bf16.msra.mxu0 0
      %255 = vmatprep.subr.bf16.mxu0 0
      %256 = vmatpush1.bf16.msra.mxu0 0
      %257 = vmatprep.subr.bf16.mxu0 0
      %258 = vmatpush1.bf16.msra.mxu0 0
      %259 = vmatprep.subr.bf16.mxu0 0
      %260 = vmatpush1.bf16.msra.mxu0 0
      %261 = vmatprep.subr.bf16.mxu0 0
      %262 = vmatpush1.bf16.msra.mxu0 0
      %263 = vmatprep.subr.bf16.mxu0 0
      %264 = vmatpush1.bf16.msra.mxu0 0
      %265 = vmatprep.subr.bf16.mxu0 0
      %266 = vmatpush1.bf16.msra.mxu0 0
      %267 = vmatprep.subr.bf16.mxu0 0
      %268 = vmatpush1.bf16.msra.mxu0 0
      %269 = vmatprep.subr.bf16.mxu0 0
      %270 = vmatpush1.bf16.msra.mxu0 0
      %271 = vmatprep.subr.bf16.mxu0 0
      %272 = vmatpush1.bf16.msra.mxu0 0
      %273 = vmatprep.subr.bf16.mxu0 0
      %274 = vmatpush1.bf16.msra.mxu0 0
      %275 = vmatprep.mubr.bf16.mxu0 0
      %276 = vmatmul.mubr.bf16.gmra.mrb[0].mxu0 %v214
      %v277 = vpop.f32.mrb[0].mxu0
      %v278 = vadd.f32 %v120, %v277
      %v279 = vpop.f32.mrb[0].mxu0
      %v280 = vadd.f32 %v124, %v279
      %v281 = vpop.f32.mrb[0].mxu0
      %v282 = vadd.f32 %v120, %v281
      %v283 = vpop.f32.mrb[0].mxu0
      %v284 = vadd.f32 %v124, %v283
      %285 = vmatprep.mubr.bf16.mxu0 0
      %286 = vmatmul.mubr.bf16.gmra.mrb[0].mxu0 %v217
      %v287 = vpop.f32.mrb[0].mxu0
      %v288 = vadd.f32 %v120, %v287
      %v289 = vpop.f32.mrb[0].mxu0
      %v290 = vadd.f32 %v124, %v289
      %v291 = vpop.f32.mrb[0].mxu0
      %v292 = vadd.f32 %v120, %v291
      %v293 = vpop.f32.mrb[0].mxu0
      %v294 = vadd.f32 %v124, %v293
      %295 = vmatprep.mubr.bf16.mxu0 0
      %296 = vmatmul.mubr.bf16.gmra.mrb[0].mxu0 %v220
      %v297 = vpop.f32.mrb[0].mxu0
      %v298 = vadd.f32 %v120, %v297
      %v299 = vpop.f32.mrb[0].mxu0
      %v300 = vadd.f32 %v124, %v299
      %v301 = vpop.f32.mrb[0].mxu0
      %v302 = vadd.f32 %v120, %v301
      %v303 = vpop.f32.mrb[0].mxu0
      %v304 = vadd.f32 %v124, %v303
      %305 = vmatprep.mubr.bf16.mxu0 0
      %306 = vmatmul.mubr.bf16.gmra.mrb[0].mxu0 %v223
      %v307 = vpop.f32.mrb[0].mxu0
      %v308 = vadd.f32 %v120, %v307
      %v309 = vpop.f32.mrb[0].mxu0
      %v310 = vadd.f32 %v124, %v309
      %v311 = vpop.f32.mrb[0].mxu0
      %v312 = vadd.f32 %v120, %v311
      %v313 = vpop.f32.mrb[0].mxu0
      %v314 = vadd.f32 %v124, %v313
      %315 = vmatprep.mubr.bf16.mxu0 0
      %316 = vmatmul.mubr.bf16.gmra.mrb[0].mxu0 %v226
      %v317 = vpop.f32.mrb[0].mxu0
      %v318 = vadd.f32 %v120, %v317
      %v319 = vpop.f32.mrb[0].mxu0
      %v320 = vadd.f32 %v124, %v319
      %v321 = vpop.f32.mrb[0].mxu0
      %v322 = vadd.f32 %v120, %v321
      %v323 = vpop.f32.mrb[0].mxu0
      %v324 = vadd.f32 %v124, %v323
      %325 = vmatprep.mubr.bf16.mxu0 0
      %326 = vmatmul.mubr.bf16.gmra.mrb[0].mxu0 %v229
      %v327 = vpop.f32.mrb[0].mxu0
      %v328 = vadd.f32 %v120, %v327
      %v329 = vpop.f32.mrb[0].mxu0
      %v330 = vadd.f32 %v124, %v329
      %v331 = vpop.f32.mrb[0].mxu0
      %v332 = vadd.f32 %v120, %v331
      %v333 = vpop.f32.mrb[0].mxu0
      %v334 = vadd.f32 %v124, %v333
      %335 = vmatprep.mubr.bf16.mxu0 0
      %336 = vmatmul.mubr.bf16.gmra.mrb[0].mxu0 %v232
      %v337 = vpop.f32.mrb[0].mxu0
      %v338 = vadd.f32 %v120, %v337
      %v339 = vpop.f32.mrb[0].mxu0
      %v340 = vadd.f32 %v124, %v339
      %v341 = vpop.f32.mrb[0].mxu0
      %v342 = vadd.f32 %v120, %v341
      %v343 = vpop.f32.mrb[0].mxu0
      %v344 = vadd.f32 %v124, %v343
      %345 = vmatprep.mubr.bf16.mxu0 0
      %346 = vmatmul.mubr.bf16.gmra.mrb[0].mxu0 %v235
      %v347 = vpop.f32.mrb[0].mxu0
      %v348 = vadd.f32 %v120, %v347
      %v349 = vpop.f32.mrb[0].mxu0
      %v350 = vadd.f32 %v124, %v349
      %v351 = vpop.f32.mrb[0].mxu0
      %v352 = vadd.f32 %v120, %v351
      %v353 = vpop.f32.mrb[0].mxu0
      %v354 = vadd.f32 %v124, %v353
      %355 = vmatprep.mubr.bf16.mxu0 0
      %356 = vmatmul.mubr.bf16.gmra.mrb[0].mxu0 %v238
      %v357 = vpop.f32.mrb[0].mxu0
      %v358 = vadd.f32 %v120, %v357
      %v359 = vpop.f32.mrb[0].mxu0
      %v360 = vadd.f32 %v124, %v359
      %v361 = vpop.f32.mrb[0].mxu0
      %v362 = vadd.f32 %v120, %v361
      %v363 = vpop.f32.mrb[0].mxu0
      %v364 = vadd.f32 %v124, %v363
      %365 = vmatprep.mubr.bf16.mxu0 0
      %366 = vmatmul.mubr.bf16.gmra.mrb[0].mxu0 %v241
      %v367 = vpop.f32.mrb[0].mxu0
      %v368 = vadd.f32 %v120, %v367
      %v369 = vpop.f32.mrb[0].mxu0
      %v370 = vadd.f32 %v124, %v369
      %v371 = vpop.f32.mrb[0].mxu0
      %v372 = vpop.f32.mrb[0].mxu0
      %373 = vdwg.mxu0
      %374 = vmatprep.subr.bf16.mxu0 0
      %375 = vmatpush1.bf16.msra.mxu0 %v202
      %376 = vmatprep.subr.bf16.mxu0 0
      %377 = vmatpush1.bf16.msra.mxu0 %v205
      %378 = vmatprep.subr.bf16.mxu0 0
      %379 = vmatpush1.bf16.msra.mxu0 0
      %380 = vmatprep.subr.bf16.mxu0 0
      %381 = vmatpush1.bf16.msra.mxu0 0
      %382 = vmatprep.subr.bf16.mxu0 0
      %383 = vmatpush1.bf16.msra.mxu0 0
      %384 = vmatprep.subr.bf16.mxu0 0
      %385 = vmatpush1.bf16.msra.mxu0 0
      %386 = vmatprep.subr.bf16.mxu0 0
      %387 = vmatpush1.bf16.msra.mxu0 0
      %388 = vmatprep.subr.bf16.mxu0 0
      %389 = vmatpush1.bf16.msra.mxu0 0
      %390 = vmatprep.subr.bf16.mxu0 0
      %391 = vmatpush1.bf16.msra.mxu0 0
      %392 = vmatprep.subr.bf16.mxu0 0
      %393 = vmatpush1.bf16.msra.mxu0 0
      %394 = vmatprep.subr.bf16.mxu0 0
      %395 = vmatpush1.bf16.msra.mxu0 0
      %396 = vmatprep.subr.bf16.mxu0 0
      %397 = vmatpush1.bf16.msra.mxu0 0
      %398 = vmatprep.subr.bf16.mxu0 0
      %399 = vmatpush1.bf16.msra.mxu0 0
      %400 = vmatprep.subr.bf16.mxu0 0
      %401 = vmatpush1.bf16.msra.mxu0 0
      %402 = vmatprep.subr.bf16.mxu0 0
      %403 = vmatpush1.bf16.msra.mxu0 0
      %404 = vmatprep.subr.bf16.mxu0 0
      %405 = vmatpush1.bf16.msra.mxu0 0
      %406 = vmatprep.mubr.bf16.mxu0 0
      %407 = vmatmul.mubr.bf16.gmra.mrb[0].mxu0 %v214
      %v408 = vpop.f32.mrb[0].mxu0
      %v409 = vadd.f32 %v128, %v408
      %v410 = vpop.f32.mrb[0].mxu0
      %v411 = vpop.f32.mrb[0].mxu0
      %v412 = vadd.f32 %v128, %v411
      %v413 = vpop.f32.mrb[0].mxu0
      %414 = vmatprep.mubr.bf16.mxu0 0
      %415 = vmatmul.mubr.bf16.gmra.mrb[0].mxu0 %v217
      %v416 = vpop.f32.mrb[0].mxu0
      %v417 = vadd.f32 %v128, %v416
      %v418 = vpop.f32.mrb[0].mxu0
      %v419 = vpop.f32.mrb[0].mxu0
      %v420 = vadd.f32 %v128, %v419
      %v421 = vpop.f32.mrb[0].mxu0
      %422 = vmatprep.mubr.bf16.mxu0 0
      %423 = vmatmul.mubr.bf16.gmra.mrb[0].mxu0 %v220
      %v424 = vpop.f32.mrb[0].mxu0
      %v425 = vadd.f32 %v128, %v424
      %v426 = vpop.f32.mrb[0].mxu0
      %v427 = vpop.f32.mrb[0].mxu0
      %v428 = vadd.f32 %v128, %v427
      %v429 = vpop.f32.mrb[0].mxu0
      %430 = vmatprep.mubr.bf16.mxu0 0
      %431 = vmatmul.mubr.bf16.gmra.mrb[0].mxu0 %v223
      %v432 = vpop.f32.mrb[0].mxu0
      %v433 = vadd.f32 %v128, %v432
      %v434 = vpop.f32.mrb[0].mxu0
      %v435 = vpop.f32.mrb[0].mxu0
      %v436 = vadd.f32 %v128, %v435
      %v437 = vpop.f32.mrb[0].mxu0
      %438 = vmatprep.mubr.bf16.mxu0 0
      %439 = vmatmul.mubr.bf16.gmra.mrb[0].mxu0 %v226
      %v440 = vpop.f32.mrb[0].mxu0
      %v441 = vadd.f32 %v128, %v440
      %v442 = vpop.f32.mrb[0].mxu0
      %v443 = vpop.f32.mrb[0].mxu0
      %v444 = vadd.f32 %v128, %v443
      %v445 = vpop.f32.mrb[0].mxu0
      %446 = vmatprep.mubr.bf16.mxu0 0
      %447 = vmatmul.mubr.bf16.gmra.mrb[0].mxu0 %v229
      %v448 = vpop.f32.mrb[0].mxu0
      %v449 = vadd.f32 %v128, %v448
      %v450 = vpop.f32.mrb[0].mxu0
      %v451 = vpop.f32.mrb[0].mxu0
      %v452 = vadd.f32 %v128, %v451
      %v453 = vpop.f32.mrb[0].mxu0
      %454 = vmatprep.mubr.bf16.mxu0 0
      %455 = vmatmul.mubr.bf16.gmra.mrb[0].mxu0 %v232
      %v456 = vpop.f32.mrb[0].mxu0
      %v457 = vadd.f32 %v128, %v456
      %v458 = vpop.f32.mrb[0].mxu0
      %v459 = vpop.f32.mrb[0].mxu0
      %v460 = vadd.f32 %v128, %v459
      %v461 = vpop.f32.mrb[0].mxu0
      %462 = vmatprep.mubr.bf16.mxu0 0
      %463 = vmatmul.mubr.bf16.gmra.mrb[0].mxu0 %v235
      %v464 = vpop.f32.mrb[0].mxu0
      %v465 = vadd.f32 %v128, %v464
      %v466 = vpop.f32.mrb[0].mxu0
      %v467 = vpop.f32.mrb[0].mxu0
      %v468 = vadd.f32 %v128, %v467
      %v469 = vpop.f32.mrb[0].mxu0
      %470 = vmatprep.mubr.bf16.mxu0 0
      %471 = vmatmul.mubr.bf16.gmra.mrb[0].mxu0 %v238
      %v472 = vpop.f32.mrb[0].mxu0
      %v473 = vadd.f32 %v128, %v472
      %v474 = vpop.f32.mrb[0].mxu0
      %v475 = vpop.f32.mrb[0].mxu0
      %v476 = vadd.f32 %v128, %v475
      %v477 = vpop.f32.mrb[0].mxu0
      %478 = vmatprep.mubr.bf16.mxu0 0
      %479 = vmatmul.mubr.bf16.gmra.mrb[0].mxu0 %v241
      %v480 = vpop.f32.mrb[0].mxu0
      %v481 = vadd.f32 %v128, %v480
      %v482 = vpop.f32.mrb[0].mxu0
      %v483 = vpop.f32.mrb[0].mxu0
      %v484 = vpop.f32.mrb[0].mxu0
      %485 = vdwg.mxu0
      %486 = vst [vmem:[#allocation2] sm:$0xff] %v278
      %487 = vst [vmem:[#allocation2 + $0x8] sm:$0xff] %v280
      %488 = vst [vmem:[#allocation2 + $0x10] sm:$0xff] %v409
      %489 = vst [vmem:[#allocation2 + $0x18] sm:$0xff] %v282
      %490 = vst [vmem:[#allocation2 + $0x20] sm:$0xff] %v284
      %491 = vst [vmem:[#allocation2 + $0x28] sm:$0xff] %v412
      %492 = vst [vmem:[#allocation2 + $0x30] sm:$0xff] %v288
      %493 = vst [vmem:[#allocation2 + $0x38] sm:$0xff] %v290
      %494 = vst [vmem:[#allocation2 + $0x40] sm:$0xff] %v417
      %495 = vst [vmem:[#allocation2 + $0x48] sm:$0xff] %v292
      %496 = vst [vmem:[#allocation2 + $0x50] sm:$0xff] %v294
      %497 = vst [vmem:[#allocation2 + $0x58] sm:$0xff] %v420
      %498 = vst [vmem:[#allocation2 + $0x60] sm:$0xff] %v298
      %499 = vst [vmem:[#allocation2 + $0x68] sm:$0xff] %v300
      %500 = vst [vmem:[#allocation2 + $0x70] sm:$0xff] %v425
      %501 = vst [vmem:[#allocation2 + $0x78] sm:$0xff] %v302
      %502 = vst [vmem:[#allocation2 + $0x80] sm:$0xff] %v304
      %503 = vst [vmem:[#allocation2 + $0x88] sm:$0xff] %v428
      %504 = vst [vmem:[#allocation2 + $0x90] sm:$0xff] %v308
      %505 = vst [vmem:[#allocation2 + $0x98] sm:$0xff] %v310
      %506 = vst [vmem:[#allocation2 + $0xa0] sm:$0xff] %v433
      %507 = vst [vmem:[#allocation2 + $0xa8] sm:$0xff] %v312
      %508 = vst [vmem:[#allocation2 + $0xb0] sm:$0xff] %v314
      %509 = vst [vmem:[#allocation2 + $0xb8] sm:$0xff] %v436
      %510 = vst [vmem:[#allocation2 + $0xc0] sm:$0xff] %v318
      %511 = vst [vmem:[#allocation2 + $0xc8] sm:$0xff] %v320
      %512 = vst [vmem:[#allocation2 + $0xd0] sm:$0xff] %v441
      %513 = vst [vmem:[#allocation2 + $0xd8] sm:$0xff] %v322
      %514 = vst [vmem:[#allocation2 + $0xe0] sm:$0xff] %v324
      %515 = vst [vmem:[#allocation2 + $0xe8] sm:$0xff] %v444
      %516 = vst [vmem:[#allocation2 + $0xf0] sm:$0xff] %v328
      %517 = vst [vmem:[#allocation2 + $0xf8] sm:$0xff] %v330
      %518 = vst [vmem:[#allocation2 + $0x100] sm:$0xff] %v449
      %519 = vst [vmem:[#allocation2 + $0x108] sm:$0xff] %v332
      %520 = vst [vmem:[#allocation2 + $0x110] sm:$0xff] %v334
      %521 = vst [vmem:[#allocation2 + $0x118] sm:$0xff] %v452
      %522 = vst [vmem:[#allocation2 + $0x120] sm:$0xff] %v338
      %523 = vst [vmem:[#allocation2 + $0x128] sm:$0xff] %v340
      %524 = vst [vmem:[#allocation2 + $0x130] sm:$0xff] %v457
      %525 = vst [vmem:[#allocation2 + $0x138] sm:$0xff] %v342
      %526 = vst [vmem:[#allocation2 + $0x140] sm:$0xff] %v344
      %527 = vst [vmem:[#allocation2 + $0x148] sm:$0xff] %v460
      %528 = vst [vmem:[#allocation2 + $0x150] sm:$0xff] %v348
      %529 = vst [vmem:[#allocation2 + $0x158] sm:$0xff] %v350
      %530 = vst [vmem:[#allocation2 + $0x160] sm:$0xff] %v465
      %531 = vst [vmem:[#allocation2 + $0x168] sm:$0xff] %v352
      %532 = vst [vmem:[#allocation2 + $0x170] sm:$0xff] %v354
      %533 = vst [vmem:[#allocation2 + $0x178] sm:$0xff] %v468
      %534 = vst [vmem:[#allocation2 + $0x180] sm:$0xff] %v358
      %535 = vst [vmem:[#allocation2 + $0x188] sm:$0xff] %v360
      %536 = vst [vmem:[#allocation2 + $0x190] sm:$0xff] %v473
      %537 = vst [vmem:[#allocation2 + $0x198] sm:$0xff] %v362
      %538 = vst [vmem:[#allocation2 + $0x1a0] sm:$0xff] %v364
      %539 = vst [vmem:[#allocation2 + $0x1a8] sm:$0xff] %v476
      %540 = vst [vmem:[#allocation2 + $0x1b0] sm:$0xff] %v368
      %541 = vst [vmem:[#allocation2 + $0x1b8] sm:$0xff] %v370
      %542 = vst [vmem:[#allocation2 + $0x1c0] sm:$0xff] %v481
      %543 = vst [vmem:[#allocation4] sm:$0xff] 0.0
      %v544 = vld [vmem:[%s1] sm:$0xff]
      %v545 = vld [vmem:[%s5] sm:$0x1]
      %v547 = vlaneseq
      %v548 = vshrl.u32 %v547, 7
      %v549 = vsub.s32 0, %v548
      %v550 = vrot.slane %v545, %v549
      %v552 = vld [vmem:[#allocation9] sm:$0xff]
      %v553 = vld [vmem:[#allocation9 + $0x8] sm:$0xff]
      %v554 = vld [vmem:[#allocation9 + $0x10] sm:$0xff]
      %v555 = vld [vmem:[#allocation9 + $0x18] sm:$0xff]
      %v556 = vld [vmem:[#allocation9 + $0x20] sm:$0xff]
      %v557 = vld [vmem:[#allocation9 + $0x28] sm:$0xff]
      %v558 = vld [vmem:[#allocation9 + $0x30] sm:$0xff]
      %v559 = vld [vmem:[#allocation9 + $0x38] sm:$0xff]
      %v560 = vld [vmem:[#allocation9 + $0x40] sm:$0xff]
      %v561 = vld [vmem:[#allocation9 + $0x48] sm:$0xff]
      %v562 = vld [vmem:[#allocation9 + $0x50] sm:$0xff]
      %v563 = vld [vmem:[#allocation9 + $0x58] sm:$0xff]
      %v564 = vld [vmem:[#allocation9 + $0x60] sm:$0xff]
      %v565 = vld [vmem:[#allocation9 + $0x68] sm:$0xff]
      %v566 = vld [vmem:[#allocation9 + $0x70] sm:$0xff]
      %v567 = vld [vmem:[#allocation9 + $0x78] sm:$0xff]
      %v568 = vld [vmem:[#allocation9 + $0x80] sm:$0xff]
      %v569 = vld [vmem:[#allocation9 + $0x88] sm:$0xff]
      %v570 = vld [vmem:[#allocation9 + $0x90] sm:$0xff]
      %v571 = vld [vmem:[#allocation9 + $0x98] sm:$0xff]
      %v572 = vld [vmem:[#allocation9 + $0xa0] sm:$0xff]
      %v573 = vld [vmem:[#allocation9 + $0xa8] sm:$0xff]
      %v574 = vld [vmem:[#allocation9 + $0xb0] sm:$0xff]
      %v575 = vld [vmem:[#allocation9 + $0xb8] sm:$0xff]
      %v576 = vld [vmem:[#allocation9 + $0xc0] sm:$0xff]
      %v577 = vld [vmem:[#allocation9 + $0xc8] sm:$0xff]
      %v578 = vld [vmem:[#allocation9 + $0xd0] sm:$0xff]
      %v579 = vld [vmem:[#allocation9 + $0xd8] sm:$0xff]
      %v580 = vld [vmem:[#allocation9 + $0xe0] sm:$0xff]
      %v581 = vld [vmem:[#allocation9 + $0xe8] sm:$0xff]
      %v582 = vld [vmem:[#allocation9 + $0xf0] sm:$0xff]
      %v583 = vld [vmem:[#allocation9 + $0xf8] sm:$0xff]
      %v584 = vld [vmem:[#allocation9 + $0x100] sm:$0xff]
      %v585 = vld [vmem:[#allocation9 + $0x108] sm:$0xff]
      %v586 = vld [vmem:[#allocation9 + $0x110] sm:$0xff]
      %v587 = vld [vmem:[#allocation9 + $0x118] sm:$0xff]
      %v588 = vld [vmem:[#allocation9 + $0x120] sm:$0xff]
      %v589 = vld [vmem:[#allocation9 + $0x128] sm:$0xff]
      %v590 = vld [vmem:[#allocation9 + $0x130] sm:$0xff]
      %v591 = vld [vmem:[#allocation9 + $0x138] sm:$0xff]
      %v592 = vld [vmem:[#allocation9 + $0x140] sm:$0xff]
      %v593 = vld [vmem:[#allocation9 + $0x148] sm:$0xff]
      %v594 = vld [vmem:[#allocation9 + $0x150] sm:$0xff]
      %v595 = vld [vmem:[#allocation9 + $0x158] sm:$0xff]
      %v596 = vld [vmem:[#allocation9 + $0x160] sm:$0xff]
      %v597 = vld [vmem:[#allocation9 + $0x168] sm:$0xff]
      %v598 = vld [vmem:[#allocation9 + $0x170] sm:$0xff]
      %v599 = vld [vmem:[#allocation9 + $0x178] sm:$0xff]
      %v600 = vld [vmem:[#allocation4] sm:$0xff]
      %s601 = smul.u32 0, 3
      %s602 = smul.addr %s601, 8
      %s603 = scalar_lea.vmem [#allocation2], %s602
      %v604 = vld [vmem:[%s603] sm:$0xff]
      %v605 = vld [vmem:[%s603 + $0x8] sm:$0xff]
      %v606 = vld [vmem:[%s603 + $0x10] sm:$0xff]
      %607 = vmatprep.subr.mxu0 %v553
      %608 = vmatpush1.msra.mxu0 %v552
      %609 = vmatprep.subr.mxu0 %v556
      %610 = vmatpush1.msra.mxu0 %v555
      %611 = vmatprep.subr.mxu0 %v559
      %612 = vmatpush1.msra.mxu0 %v558
      %613 = vmatprep.subr.mxu0 %v562
      %614 = vmatpush1.msra.mxu0 %v561
      %615 = vmatprep.subr.mxu0 %v565
      %616 = vmatpush1.msra.mxu0 %v564
      %617 = vmatprep.subr.mxu0 %v568
      %618 = vmatpush1.msra.mxu0 %v567
      %619 = vmatprep.subr.mxu0 %v571
      %620 = vmatpush1.msra.mxu0 %v570
      %621 = vmatprep.subr.mxu0 %v574
      %622 = vmatpush1.msra.mxu0 %v573
      %623 = vmatprep.subr.mxu0 %v577
      %624 = vmatpush1.msra.mxu0 %v576
      %625 = vmatprep.subr.mxu0 %v580
      %626 = vmatpush1.msra.mxu0 %v579
      %627 = vmatprep.subr.mxu0 %v583
      %628 = vmatpush1.msra.mxu0 %v582
      %629 = vmatprep.subr.mxu0 %v586
      %630 = vmatpush1.msra.mxu0 %v585
      %631 = vmatprep.subr.mxu0 %v589
      %632 = vmatpush1.msra.mxu0 %v588
      %633 = vmatprep.subr.mxu0 %v592
      %634 = vmatpush1.msra.mxu0 %v591
      %635 = vmatprep.subr.mxu0 %v595
      %636 = vmatpush1.msra.mxu0 %v594
      %637 = vmatprep.subr.mxu0 %v598
      %638 = vmatpush1.msra.mxu0 %v597
      %639 = vmatprep.subr.mxu0 0.0
      %640 = vmatpush1.msra.mxu0 0.0
      %641 = vmatprep.subr.mxu0 0.0
      %642 = vmatpush1.msra.mxu0 0.0
      %643 = vmatprep.subr.mxu0 0.0
      %644 = vmatpush1.msra.mxu0 0.0
      %645 = vmatprep.subr.mxu0 0.0
      %646 = vmatpush1.msra.mxu0 0.0
      %647 = vmatprep.subr.mxu0 0.0
      %648 = vmatpush1.msra.mxu0 0.0
      %649 = vmatprep.subr.mxu0 0.0
      %650 = vmatpush1.msra.mxu0 0.0
      %651 = vmatprep.subr.mxu0 0.0
      %652 = vmatpush1.msra.mxu0 0.0
      %653 = vmatprep.subr.mxu0 0.0
      %654 = vmatpush1.msra.mxu0 0.0
      %655 = vmatprep.subr.mxu0 0.0
      %656 = vmatpush1.msra.mxu0 0.0
      %657 = vmatprep.subr.mxu0 0.0
      %658 = vmatpush1.msra.mxu0 0.0
      %659 = vmatprep.subr.mxu0 0.0
      %660 = vmatpush1.msra.mxu0 0.0
      %661 = vmatprep.subr.mxu0 0.0
      %662 = vmatpush1.msra.mxu0 0.0
      %663 = vmatprep.subr.mxu0 0.0
      %664 = vmatpush1.msra.mxu0 0.0
      %665 = vmatprep.subr.mxu0 0.0
      %666 = vmatpush1.msra.mxu0 0.0
      %667 = vmatprep.subr.mxu0 0.0
      %668 = vmatpush1.msra.mxu0 0.0
      %669 = vmatprep.subr.mxu0 0.0
      %670 = vmatpush1.msra.mxu0 0.0
      %671 = vmatprep.mubr.f32.mxu0 0.0
      %672 = vmatmul.mubr.f32.gmra.mrb[0].mxu0 %v600
      %v673 = vpop.f32.mrb[0].mxu0
      %v674 = vadd.f32 0.0, %v673
      %v675 = vpop.f32.mrb[0].mxu0
      %v676 = vadd.f32 0.0, %v675
      %677 = vdwg.mxu0
      %678 = vmatprep.subr.mxu0 0.0
      %679 = vmatpush1.msra.mxu0 %v554
      %680 = vmatprep.subr.mxu0 0.0
      %681 = vmatpush1.msra.mxu0 %v557
      %682 = vmatprep.subr.mxu0 0.0
      %683 = vmatpush1.msra.mxu0 %v560
      %684 = vmatprep.subr.mxu0 0.0
      %685 = vmatpush1.msra.mxu0 %v563
      %686 = vmatprep.subr.mxu0 0.0
      %687 = vmatpush1.msra.mxu0 %v566
      %688 = vmatprep.subr.mxu0 0.0
      %689 = vmatpush1.msra.mxu0 %v569
      %690 = vmatprep.subr.mxu0 0.0
      %691 = vmatpush1.msra.mxu0 %v572
      %692 = vmatprep.subr.mxu0 0.0
      %693 = vmatpush1.msra.mxu0 %v575
      %694 = vmatprep.subr.mxu0 0.0
      %695 = vmatpush1.msra.mxu0 %v578
      %696 = vmatprep.subr.mxu0 0.0
      %697 = vmatpush1.msra.mxu0 %v581
      %698 = vmatprep.subr.mxu0 0.0
      %699 = vmatpush1.msra.mxu0 %v584
      %700 = vmatprep.subr.mxu0 0.0
      %701 = vmatpush1.msra.mxu0 %v587
      %702 = vmatprep.subr.mxu0 0.0
      %703 = vmatpush1.msra.mxu0 %v590
      %704 = vmatprep.subr.mxu0 0.0
      %705 = vmatpush1.msra.mxu0 %v593
      %706 = vmatprep.subr.mxu0 0.0
      %707 = vmatpush1.msra.mxu0 %v596
      %708 = vmatprep.subr.mxu0 0.0
      %709 = vmatpush1.msra.mxu0 %v599
      %710 = vmatprep.subr.mxu0 0.0
      %711 = vmatpush1.msra.mxu0 0.0
      %712 = vmatprep.subr.mxu0 0.0
      %713 = vmatpush1.msra.mxu0 0.0
      %714 = vmatprep.subr.mxu0 0.0
      %715 = vmatpush1.msra.mxu0 0.0
      %716 = vmatprep.subr.mxu0 0.0
      %717 = vmatpush1.msra.mxu0 0.0
      %718 = vmatprep.subr.mxu0 0.0
      %719 = vmatpush1.msra.mxu0 0.0
      %720 = vmatprep.subr.mxu0 0.0
      %721 = vmatpush1.msra.mxu0 0.0
      %722 = vmatprep.subr.mxu0 0.0
      %723 = vmatpush1.msra.mxu0 0.0
      %724 = vmatprep.subr.mxu0 0.0
      %725 = vmatpush1.msra.mxu0 0.0
      %726 = vmatprep.subr.mxu0 0.0
      %727 = vmatpush1.msra.mxu0 0.0
      %728 = vmatprep.subr.mxu0 0.0
      %729 = vmatpush1.msra.mxu0 0.0
      %730 = vmatprep.subr.mxu0 0.0
      %731 = vmatpush1.msra.mxu0 0.0
      %732 = vmatprep.subr.mxu0 0.0
      %733 = vmatpush1.msra.mxu0 0.0
      %734 = vmatprep.subr.mxu0 0.0
      %735 = vmatpush1.msra.mxu0 0.0
      %736 = vmatprep.subr.mxu0 0.0
      %737 = vmatpush1.msra.mxu0 0.0
      %738 = vmatprep.subr.mxu0 0.0
      %739 = vmatpush1.msra.mxu0 0.0
      %740 = vmatprep.subr.mxu0 0.0
      %741 = vmatpush1.msra.mxu0 0.0
      %742 = vmatprep.mubr.f32.mxu0 0.0
      %743 = vmatmul.mubr.f32.gmra.mrb[0].mxu0 %v600
      %v744 = vpop.f32.mrb[0].mxu0
      %v745 = vadd.f32 0.0, %v744
      %v746 = vpop.f32.mrb[0].mxu0
      %747 = vdwg.mxu0
      %v748 = vadd.f32 %v604, %v674
      %v749 = vxor.u32 %v748, 2147483648
      %v750 = vmul.f32 %v749, 1.442695
      %v751 = vpow.pop %v750
      %v752 = vadd.f32 %v751, 1.0
      %v753 = vrcp.pop %v752
      %v754 = vmul.f32 1.0, %v753
      %v755 = vadd.f32 %v605, %v676
      %v756 = vxor.u32 %v755, 2147483648
      %v757 = vmul.f32 %v756, 1.442695
      %v758 = vpow.pop %v757
      %v759 = vadd.f32 %v758, 1.0
      %v760 = vrcp.pop %v759
      %v761 = vmul.f32 1.0, %v760
      %v762 = vadd.f32 %v745, %v550
      %v763 = vmul.f32 %v754, %v762
      %v764 = vadd.f32 %v606, %v763
      %v765 = vtanh.pop %v764
      %v766 = vsub.f32 %v600, %v765
      %v767 = vmul.f32 %v761, %v766
      %v768 = vadd.f32 %v765, %v767
      %vm769 = vcmp.gt.s32.totalorder %v544, 0
      %v770 = vsel %vm769, 1, 0
      %771 = vset.pattern.permute.xlu0 0
      %772 = vperm.xlu0 %771, %v770
      %v773 = vpop.permute.xlu0 %772
      %vm774 = vcmp.eq.s32.totalorder %v773, 1
      %v775 = vsel %vm774, %v768, %v600
      %776 = vst [vmem:[#allocation4] sm:$0xff] %v775
      %v777 = vsel %vm774, %v768, 0.0
      %778 = vst [vmem:[#allocation3] sm:$0xff] %v777
      %v779 = vld [vmem:[#allocation4] sm:$0xff]
      %s780 = smul.u32 1, 3
      %s781 = smul.addr %s780, 8
      %s782 = scalar_lea.vmem [#allocation2], %s781
      %v783 = vld [vmem:[%s782] sm:$0xff]
      %v784 = vld [vmem:[%s782 + $0x8] sm:$0xff]
      %v785 = vld [vmem:[%s782 + $0x10] sm:$0xff]
      %786 = vmatprep.subr.mxu0 %v553
      %787 = vmatpush1.msra.mxu0 %v552
      %788 = vmatprep.subr.mxu0 %v556
      %789 = vmatpush1.msra.mxu0 %v555
      %790 = vmatprep.subr.mxu0 %v559
      %791 = vmatpush1.msra.mxu0 %v558
      %792 = vmatprep.subr.mxu0 %v562
      %793 = vmatpush1.msra.mxu0 %v561
      %794 = vmatprep.subr.mxu0 %v565
      %795 = vmatpush1.msra.mxu0 %v564
      %796 = vmatprep.subr.mxu0 %v568
      %797 = vmatpush1.msra.mxu0 %v567
      %798 = vmatprep.subr.mxu0 %v571
      %799 = vmatpush1.msra.mxu0 %v570
      %800 = vmatprep.subr.mxu0 %v574
      %801 = vmatpush1.msra.mxu0 %v573
      %802 = vmatprep.subr.mxu0 %v577
      %803 = vmatpush1.msra.mxu0 %v576
      %804 = vmatprep.subr.mxu0 %v580
      %805 = vmatpush1.msra.mxu0 %v579
      %806 = vmatprep.subr.mxu0 %v583
      %807 = vmatpush1.msra.mxu0 %v582
      %808 = vmatprep.subr.mxu0 %v586
      %809 = vmatpush1.msra.mxu0 %v585
      %810 = vmatprep.subr.mxu0 %v589
      %811 = vmatpush1.msra.mxu0 %v588
      %812 = vmatprep.subr.mxu0 %v592
      %813 = vmatpush1.msra.mxu0 %v591
      %814 = vmatprep.subr.mxu0 %v595
      %815 = vmatpush1.msra.mxu0 %v594
      %816 = vmatprep.subr.mxu0 %v598
      %817 = vmatpush1.msra.mxu0 %v597
      %818 = vmatprep.subr.mxu0 0.0
      %819 = vmatpush1.msra.mxu0 0.0
      %820 = vmatprep.subr.mxu0 0.0
      %821 = vmatpush1.msra.mxu0 0.0
      %822 = vmatprep.subr.mxu0 0.0
      %823 = vmatpush1.msra.mxu0 0.0
      %824 = vmatprep.subr.mxu0 0.0
      %825 = vmatpush1.msra.mxu0 0.0
      %826 = vmatprep.subr.mxu0 0.0
      %827 = vmatpush1.msra.mxu0 0.0
      %828 = vmatprep.subr.mxu0 0.0
      %829 = vmatpush1.msra.mxu0 0.0
      %830 = vmatprep.subr.mxu0 0.0
      %831 = vmatpush1.msra.mxu0 0.0
      %832 = vmatprep.subr.mxu0 0.0
      %833 = vmatpush1.msra.mxu0 0.0
      %834 = vmatprep.subr.mxu0 0.0
      %835 = vmatpush1.msra.mxu0 0.0
      %836 = vmatprep.subr.mxu0 0.0
      %837 = vmatpush1.msra.mxu0 0.0
      %838 = vmatprep.subr.mxu0 0.0
      %839 = vmatpush1.msra.mxu0 0.0
      %840 = vmatprep.subr.mxu0 0.0
      %841 = vmatpush1.msra.mxu0 0.0
      %842 = vmatprep.subr.mxu0 0.0
      %843 = vmatpush1.msra.mxu0 0.0
      %844 = vmatprep.subr.mxu0 0.0
      %845 = vmatpush1.msra.mxu0 0.0
      %846 = vmatprep.subr.mxu0 0.0
      %847 = vmatpush1.msra.mxu0 0.0
      %848 = vmatprep.subr.mxu0 0.0
      %849 = vmatpush1.msra.mxu0 0.0
      %850 = vmatprep.mubr.f32.mxu0 0.0
      %851 = vmatmul.mubr.f32.gmra.mrb[0].mxu0 %v779
      %v852 = vpop.f32.mrb[0].mxu0
      %v853 = vadd.f32 0.0, %v852
      %v854 = vpop.f32.mrb[0].mxu0
      %v855 = vadd.f32 0.0, %v854
      %856 = vdwg.mxu0
      %857 = vmatprep.subr.mxu0 0.0
      %858 = vmatpush1.msra.mxu0 %v554
      %859 = vmatprep.subr.mxu0 0.0
      %860 = vmatpush1.msra.mxu0 %v557
      %861 = vmatprep.subr.mxu0 0.0
      %862 = vmatpush1.msra.mxu0 %v560
      %863 = vmatprep.subr.mxu0 0.0
      %864 = vmatpush1.msra.mxu0 %v563
      %865 = vmatprep.subr.mxu0 0.0
      %866 = vmatpush1.msra.mxu0 %v566
      %867 = vmatprep.subr.mxu0 0.0
      %868 = vmatpush1.msra.mxu0 %v569
      %869 = vmatprep.subr.mxu0 0.0
      %870 = vmatpush1.msra.mxu0 %v572
      %871 = vmatprep.subr.mxu0 0.0
      %872 = vmatpush1.msra.mxu0 %v575
      %873 = vmatprep.subr.mxu0 0.0
      %874 = vmatpush1.msra.mxu0 %v578
      %875 = vmatprep.subr.mxu0 0.0
      %876 = vmatpush1.msra.mxu0 %v581
      %877 = vmatprep.subr.mxu0 0.0
      %878 = vmatpush1.msra.mxu0 %v584
      %879 = vmatprep.subr.mxu0 0.0
      %880 = vmatpush1.msra.mxu0 %v587
      %881 = vmatprep.subr.mxu0 0.0
      %882 = vmatpush1.msra.mxu0 %v590
      %883 = vmatprep.subr.mxu0 0.0
      %884 = vmatpush1.msra.mxu0 %v593
      %885 = vmatprep.subr.mxu0 0.0
      %886 = vmatpush1.msra.mxu0 %v596
      %887 = vmatprep.subr.mxu0 0.0
      %888 = vmatpush1.msra.mxu0 %v599
      %889 = vmatprep.subr.mxu0 0.0
      %890 = vmatpush1.msra.mxu0 0.0
      %891 = vmatprep.subr.mxu0 0.0
      %892 = vmatpush1.msra.mxu0 0.0
      %893 = vmatprep.subr.mxu0 0.0
      %894 = vmatpush1.msra.mxu0 0.0
      %895 = vmatprep.subr.mxu0 0.0
      %896 = vmatpush1.msra.mxu0 0.0
      %897 = vmatprep.subr.mxu0 0.0
      %898 = vmatpush1.msra.mxu0 0.0
      %899 = vmatprep.subr.mxu0 0.0
      %900 = vmatpush1.msra.mxu0 0.0
      %901 = vmatprep.subr.mxu0 0.0
      %902 = vmatpush1.msra.mxu0 0.0
      %903 = vmatprep.subr.mxu0 0.0
      %904 = vmatpush1.msra.mxu0 0.0
      %905 = vmatprep.subr.mxu0 0.0
      %906 = vmatpush1.msra.mxu0 0.0
      %907 = vmatprep.subr.mxu0 0.0
      %908 = vmatpush1.msra.mxu0 0.0
      %909 = vmatprep.subr.mxu0 0.0
      %910 = vmatpush1.msra.mxu0 0.0
      %911 = vmatprep.subr.mxu0 0.0
      %912 = vmatpush1.msra.mxu0 0.0
      %913 = vmatprep.subr.mxu0 0.0
      %914 = vmatpush1.msra.mxu0 0.0
      %915 = vmatprep.subr.mxu0 0.0
      %916 = vmatpush1.msra.mxu0 0.0
      %917 = vmatprep.subr.mxu0 0.0
      %918 = vmatpush1.msra.mxu0 0.0
      %919 = vmatprep.subr.mxu0 0.0
      %920 = vmatpush1.msra.mxu0 0.0
      %921 = vmatprep.mubr.f32.mxu0 0.0
      %922 = vmatmul.mubr.f32.gmra.mrb[0].mxu0 %v779
      %v923 = vpop.f32.mrb[0].mxu0
      %v924 = vadd.f32 0.0, %v923
      %v925 = vpop.f32.mrb[0].mxu0
      %926 = vdwg.mxu0
      %v927 = vadd.f32 %v783, %v853
      %v928 = vxor.u32 %v927, 2147483648
      %v929 = vmul.f32 %v928, 1.442695
      %v930 = vpow.pop %v929
      %v931 = vadd.f32 %v930, 1.0
      %v932 = vrcp.pop %v931
      %v933 = vmul.f32 1.0, %v932
      %v934 = vadd.f32 %v784, %v855
      %v935 = vxor.u32 %v934, 2147483648
      %v936 = vmul.f32 %v935, 1.442695
      %v937 = vpow.pop %v936
      %v938 = vadd.f32 %v937, 1.0
      %v939 = vrcp.pop %v938
      %v940 = vmul.f32 1.0, %v939
      %v941 = vadd.f32 %v924, %v550
      %v942 = vmul.f32 %v933, %v941
      %v943 = vadd.f32 %v785, %v942
      %v944 = vtanh.pop %v943
      %v945 = vsub.f32 %v779, %v944
      %v946 = vmul.f32 %v940, %v945
      %v947 = vadd.f32 %v944, %v946
      %vm948 = vcmp.gt.s32.totalorder %v544, 1
      %v949 = vsel %vm948, 1, 0
      %950 = vset.pattern.permute.xlu0 0
      %951 = vperm.xlu0 %950, %v949
      %v952 = vpop.permute.xlu0 %951
      %vm953 = vcmp.eq.s32.totalorder %v952, 1
      %v954 = vsel %vm953, %v947, %v779
      %955 = vst [vmem:[#allocation4] sm:$0xff] %v954
      %v956 = vsel %vm953, %v947, 0.0
      %s957 = scalar_lea.vmem [#allocation3], 8
      %958 = vst [vmem:[%s957] sm:$0xff] %v956
      %v959 = vld [vmem:[#allocation4] sm:$0xff]
      %s960 = smul.u32 2, 3
      %s961 = smul.addr %s960, 8
      %s962 = scalar_lea.vmem [#allocation2], %s961
      %v963 = vld [vmem:[%s962] sm:$0xff]
      %v964 = vld [vmem:[%s962 + $0x8] sm:$0xff]
      %v965 = vld [vmem:[%s962 + $0x10] sm:$0xff]
      %966 = vmatprep.subr.mxu0 %v553
      %967 = vmatpush1.msra.mxu0 %v552
      %968 = vmatprep.subr.mxu0 %v556
      %969 = vmatpush1.msra.mxu0 %v555
      %970 = vmatprep.subr.mxu0 %v559
      %971 = vmatpush1.msra.mxu0 %v558
      %972 = vmatprep.subr.mxu0 %v562
      %973 = vmatpush1.msra.mxu0 %v561
      %974 = vmatprep.subr.mxu0 %v565
      %975 = vmatpush1.msra.mxu0 %v564
      %976 = vmatprep.subr.mxu0 %v568
      %977 = vmatpush1.msra.mxu0 %v567
      %978 = vmatprep.subr.mxu0 %v571
      %979 = vmatpush1.msra.mxu0 %v570
      %980 = vmatprep.subr.mxu0 %v574
      %981 = vmatpush1.msra.mxu0 %v573
      %982 = vmatprep.subr.mxu0 %v577
      %983 = vmatpush1.msra.mxu0 %v576
      %984 = vmatprep.subr.mxu0 %v580
      %985 = vmatpush1.msra.mxu0 %v579
      %986 = vmatprep.subr.mxu0 %v583
      %987 = vmatpush1.msra.mxu0 %v582
      %988 = vmatprep.subr.mxu0 %v586
      %989 = vmatpush1.msra.mxu0 %v585
      %990 = vmatprep.subr.mxu0 %v589
      %991 = vmatpush1.msra.mxu0 %v588
      %992 = vmatprep.subr.mxu0 %v592
      %993 = vmatpush1.msra.mxu0 %v591
      %994 = vmatprep.subr.mxu0 %v595
      %995 = vmatpush1.msra.mxu0 %v594
      %996 = vmatprep.subr.mxu0 %v598
      %997 = vmatpush1.msra.mxu0 %v597
      %998 = vmatprep.subr.mxu0 0.0
      %999 = vmatpush1.msra.mxu0 0.0
      %1000 = vmatprep.subr.mxu0 0.0
      %1001 = vmatpush1.msra.mxu0 0.0
      %1002 = vmatprep.subr.mxu0 0.0
      %1003 = vmatpush1.msra.mxu0 0.0
      %1004 = vmatprep.subr.mxu0 0.0
      %1005 = vmatpush1.msra.mxu0 0.0
      %1006 = vmatprep.subr.mxu0 0.0
      %1007 = vmatpush1.msra.mxu0 0.0
      %1008 = vmatprep.subr.mxu0 0.0
      %1009 = vmatpush1.msra.mxu0 0.0
      %1010 = vmatprep.subr.mxu0 0.0
      %1011 = vmatpush1.msra.mxu0 0.0
      %1012 = vmatprep.subr.mxu0 0.0
      %1013 = vmatpush1.msra.mxu0 0.0
      %1014 = vmatprep.subr.mxu0 0.0
      %1015 = vmatpush1.msra.mxu0 0.0
      %1016 = vmatprep.subr.mxu0 0.0
      %1017 = vmatpush1.msra.mxu0 0.0
      %1018 = vmatprep.subr.mxu0 0.0
      %1019 = vmatpush1.msra.mxu0 0.0
      %1020 = vmatprep.subr.mxu0 0.0
      %1021 = vmatpush1.msra.mxu0 0.0
      %1022 = vmatprep.subr.mxu0 0.0
      %1023 = vmatpush1.msra.mxu0 0.0
      %1024 = vmatprep.subr.mxu0 0.0
      %1025 = vmatpush1.msra.mxu0 0.0
      %1026 = vmatprep.subr.mxu0 0.0
      %1027 = vmatpush1.msra.mxu0 0.0
      %1028 = vmatprep.subr.mxu0 0.0
      %1029 = vmatpush1.msra.mxu0 0.0
      %1030 = vmatprep.mubr.f32.mxu0 0.0
      %1031 = vmatmul.mubr.f32.gmra.mrb[0].mxu0 %v959
      %v1032 = vpop.f32.mrb[0].mxu0
      %v1033 = vadd.f32 0.0, %v1032
      %v1034 = vpop.f32.mrb[0].mxu0
      %v1035 = vadd.f32 0.0, %v1034
      %1036 = vdwg.mxu0
      %1037 = vmatprep.subr.mxu0 0.0
      %1038 = vmatpush1.msra.mxu0 %v554
      %1039 = vmatprep.subr.mxu0 0.0
      %1040 = vmatpush1.msra.mxu0 %v557
      %1041 = vmatprep.subr.mxu0 0.0
      %1042 = vmatpush1.msra.mxu0 %v560
      %1043 = vmatprep.subr.mxu0 0.0
      %1044 = vmatpush1.msra.mxu0 %v563
      %1045 = vmatprep.subr.mxu0 0.0
      %1046 = vmatpush1.msra.mxu0 %v566
      %1047 = vmatprep.subr.mxu0 0.0
      %1048 = vmatpush1.msra.mxu0 %v569
      %1049 = vmatprep.subr.mxu0 0.0
      %1050 = vmatpush1.msra.mxu0 %v572
      %1051 = vmatprep.subr.mxu0 0.0
      %1052 = vmatpush1.msra.mxu0 %v575
      %1053 = vmatprep.subr.mxu0 0.0
      %1054 = vmatpush1.msra.mxu0 %v578
      %1055 = vmatprep.subr.mxu0 0.0
      %1056 = vmatpush1.msra.mxu0 %v581
      %1057 = vmatprep.subr.mxu0 0.0
      %1058 = vmatpush1.msra.mxu0 %v584
      %1059 = vmatprep.subr.mxu0 0.0
      %1060 = vmatpush1.msra.mxu0 %v587
      %1061 = vmatprep.subr.mxu0 0.0
      %1062 = vmatpush1.msra.mxu0 %v590
      %1063 = vmatprep.subr.mxu0 0.0
      %1064 = vmatpush1.msra.mxu0 %v593
      %1065 = vmatprep.subr.mxu0 0.0
      %1066 = vmatpush1.msra.mxu0 %v596
      %1067 = vmatprep.subr.mxu0 0.0
      %1068 = vmatpush1.msra.mxu0 %v599
      %1069 = vmatprep.subr.mxu0 0.0
      %1070 = vmatpush1.msra.mxu0 0.0
      %1071 = vmatprep.subr.mxu0 0.0
      %1072 = vmatpush1.msra.mxu0 0.0
      %1073 = vmatprep.subr.mxu0 0.0
      %1074 = vmatpush1.msra.mxu0 0.0
      %1075 = vmatprep.subr.mxu0 0.0
      %1076 = vmatpush1.msra.mxu0 0.0
      %1077 = vmatprep.subr.mxu0 0.0
      %1078 = vmatpush1.msra.mxu0 0.0
      %1079 = vmatprep.subr.mxu0 0.0
      %1080 = vmatpush1.msra.mxu0 0.0
      %1081 = vmatprep.subr.mxu0 0.0
      %1082 = vmatpush1.msra.mxu0 0.0
      %1083 = vmatprep.subr.mxu0 0.0
      %1084 = vmatpush1.msra.mxu0 0.0
      %1085 = vmatprep.subr.mxu0 0.0
      %1086 = vmatpush1.msra.mxu0 0.0
      %1087 = vmatprep.subr.mxu0 0.0
      %1088 = vmatpush1.msra.mxu0 0.0
      %1089 = vmatprep.subr.mxu0 0.0
      %1090 = vmatpush1.msra.mxu0 0.0
      %1091 = vmatprep.subr.mxu0 0.0
      %1092 = vmatpush1.msra.mxu0 0.0
      %1093 = vmatprep.subr.mxu0 0.0
      %1094 = vmatpush1.msra.mxu0 0.0
      %1095 = vmatprep.subr.mxu0 0.0
      %1096 = vmatpush1.msra.mxu0 0.0
      %1097 = vmatprep.subr.mxu0 0.0
      %1098 = vmatpush1.msra.mxu0 0.0
      %1099 = vmatprep.subr.mxu0 0.0
      %1100 = vmatpush1.msra.mxu0 0.0
      %1101 = vmatprep.mubr.f32.mxu0 0.0
      %1102 = vmatmul.mubr.f32.gmra.mrb[0].mxu0 %v959
      %v1103 = vpop.f32.mrb[0].mxu0
      %v1104 = vadd.f32 0.0, %v1103
      %v1105 = vpop.f32.mrb[0].mxu0
      %1106 = vdwg.mxu0
      %v1107 = vadd.f32 %v963, %v1033
      %v1108 = vxor.u32 %v1107, 2147483648
      %v1109 = vmul.f32 %v1108, 1.442695
      %v1110 = vpow.pop %v1109
      %v1111 = vadd.f32 %v1110, 1.0
      %v1112 = vrcp.pop %v1111
      %v1113 = vmul.f32 1.0, %v1112
      %v1114 = vadd.f32 %v964, %v1035
      %v1115 = vxor.u32 %v1114, 2147483648
      %v1116 = vmul.f32 %v1115, 1.442695
      %v1117 = vpow.pop %v1116
      %v1118 = vadd.f32 %v1117, 1.0
      %v1119 = vrcp.pop %v1118
      %v1120 = vmul.f32 1.0, %v1119
      %v1121 = vadd.f32 %v1104, %v550
      %v1122 = vmul.f32 %v1113, %v1121
      %v1123 = vadd.f32 %v965, %v1122
      %v1124 = vtanh.pop %v1123
      %v1125 = vsub.f32 %v959, %v1124
      %v1126 = vmul.f32 %v1120, %v1125
      %v1127 = vadd.f32 %v1124, %v1126
      %vm1128 = vcmp.gt.s32.totalorder %v544, 2
      %v1129 = vsel %vm1128, 1, 0
      %1130 = vset.pattern.permute.xlu0 0
      %1131 = vperm.xlu0 %1130, %v1129
      %v1132 = vpop.permute.xlu0 %1131
      %vm1133 = vcmp.eq.s32.totalorder %v1132, 1
      %v1134 = vsel %vm1133, %v1127, %v959
      %1135 = vst [vmem:[#allocation4] sm:$0xff] %v1134
      %v1136 = vsel %vm1133, %v1127, 0.0
      %s1137 = scalar_lea.vmem [#allocation3], 16
      %1138 = vst [vmem:[%s1137] sm:$0xff] %v1136
      %v1139 = vld [vmem:[#allocation4] sm:$0xff]
      %s1140 = smul.u32 3, 3
      %s1141 = smul.addr %s1140, 8
      %s1142 = scalar_lea.vmem [#allocation2], %s1141
      %v1143 = vld [vmem:[%s1142] sm:$0xff]
      %v1144 = vld [vmem:[%s1142 + $0x8] sm:$0xff]
      %v1145 = vld [vmem:[%s1142 + $0x10] sm:$0xff]
      %1146 = vmatprep.subr.mxu0 %v553
      %1147 = vmatpush1.msra.mxu0 %v552
      %1148 = vmatprep.subr.mxu0 %v556
      %1149 = vmatpush1.msra.mxu0 %v555
      %1150 = vmatprep.subr.mxu0 %v559
      %1151 = vmatpush1.msra.mxu0 %v558
      %1152 = vmatprep.subr.mxu0 %v562
      %1153 = vmatpush1.msra.mxu0 %v561
      %1154 = vmatprep.subr.mxu0 %v565
      %1155 = vmatpush1.msra.mxu0 %v564
      %1156 = vmatprep.subr.mxu0 %v568
      %1157 = vmatpush1.msra.mxu0 %v567
      %1158 = vmatprep.subr.mxu0 %v571
      %1159 = vmatpush1.msra.mxu0 %v570
      %1160 = vmatprep.subr.mxu0 %v574
      %1161 = vmatpush1.msra.mxu0 %v573
      %1162 = vmatprep.subr.mxu0 %v577
      %1163 = vmatpush1.msra.mxu0 %v576
      %1164 = vmatprep.subr.mxu0 %v580
      %1165 = vmatpush1.msra.mxu0 %v579
      %1166 = vmatprep.subr.mxu0 %v583
      %1167 = vmatpush1.msra.mxu0 %v582
      %1168 = vmatprep.subr.mxu0 %v586
      %1169 = vmatpush1.msra.mxu0 %v585
      %1170 = vmatprep.subr.mxu0 %v589
      %1171 = vmatpush1.msra.mxu0 %v588
      %1172 = vmatprep.subr.mxu0 %v592
      %1173 = vmatpush1.msra.mxu0 %v591
      %1174 = vmatprep.subr.mxu0 %v595
      %1175 = vmatpush1.msra.mxu0 %v594
      %1176 = vmatprep.subr.mxu0 %v598
      %1177 = vmatpush1.msra.mxu0 %v597
      %1178 = vmatprep.subr.mxu0 0.0
      %1179 = vmatpush1.msra.mxu0 0.0
      %1180 = vmatprep.subr.mxu0 0.0
      %1181 = vmatpush1.msra.mxu0 0.0
      %1182 = vmatprep.subr.mxu0 0.0
      %1183 = vmatpush1.msra.mxu0 0.0
      %1184 = vmatprep.subr.mxu0 0.0
      %1185 = vmatpush1.msra.mxu0 0.0
      %1186 = vmatprep.subr.mxu0 0.0
      %1187 = vmatpush1.msra.mxu0 0.0
      %1188 = vmatprep.subr.mxu0 0.0
      %1189 = vmatpush1.msra.mxu0 0.0
      %1190 = vmatprep.subr.mxu0 0.0
      %1191 = vmatpush1.msra.mxu0 0.0
      %1192 = vmatprep.subr.mxu0 0.0
      %1193 = vmatpush1.msra.mxu0 0.0
      %1194 = vmatprep.subr.mxu0 0.0
      %1195 = vmatpush1.msra.mxu0 0.0
      %1196 = vmatprep.subr.mxu0 0.0
      %1197 = vmatpush1.msra.mxu0 0.0
      %1198 = vmatprep.subr.mxu0 0.0
      %1199 = vmatpush1.msra.mxu0 0.0
      %1200 = vmatprep.subr.mxu0 0.0
      %1201 = vmatpush1.msra.mxu0 0.0
      %1202 = vmatprep.subr.mxu0 0.0
      %1203 = vmatpush1.msra.mxu0 0.0
      %1204 = vmatprep.subr.mxu0 0.0
      %1205 = vmatpush1.msra.mxu0 0.0
      %1206 = vmatprep.subr.mxu0 0.0
      %1207 = vmatpush1.msra.mxu0 0.0
      %1208 = vmatprep.subr.mxu0 0.0
      %1209 = vmatpush1.msra.mxu0 0.0
      %1210 = vmatprep.mubr.f32.mxu0 0.0
      %1211 = vmatmul.mubr.f32.gmra.mrb[0].mxu0 %v1139
      %v1212 = vpop.f32.mrb[0].mxu0
      %v1213 = vadd.f32 0.0, %v1212
      %v1214 = vpop.f32.mrb[0].mxu0
      %v1215 = vadd.f32 0.0, %v1214
      %1216 = vdwg.mxu0
      %1217 = vmatprep.subr.mxu0 0.0
      %1218 = vmatpush1.msra.mxu0 %v554
      %1219 = vmatprep.subr.mxu0 0.0
      %1220 = vmatpush1.msra.mxu0 %v557
      %1221 = vmatprep.subr.mxu0 0.0
      %1222 = vmatpush1.msra.mxu0 %v560
      %1223 = vmatprep.subr.mxu0 0.0
      %1224 = vmatpush1.msra.mxu0 %v563
      %1225 = vmatprep.subr.mxu0 0.0
      %1226 = vmatpush1.msra.mxu0 %v566
      %1227 = vmatprep.subr.mxu0 0.0
      %1228 = vmatpush1.msra.mxu0 %v569
      %1229 = vmatprep.subr.mxu0 0.0
      %1230 = vmatpush1.msra.mxu0 %v572
      %1231 = vmatprep.subr.mxu0 0.0
      %1232 = vmatpush1.msra.mxu0 %v575
      %1233 = vmatprep.subr.mxu0 0.0
      %1234 = vmatpush1.msra.mxu0 %v578
      %1235 = vmatprep.subr.mxu0 0.0
      %1236 = vmatpush1.msra.mxu0 %v581
      %1237 = vmatprep.subr.mxu0 0.0
      %1238 = vmatpush1.msra.mxu0 %v584
      %1239 = vmatprep.subr.mxu0 0.0
      %1240 = vmatpush1.msra.mxu0 %v587
      %1241 = vmatprep.subr.mxu0 0.0
      %1242 = vmatpush1.msra.mxu0 %v590
      %1243 = vmatprep.subr.mxu0 0.0
      %1244 = vmatpush1.msra.mxu0 %v593
      %1245 = vmatprep.subr.mxu0 0.0
      %1246 = vmatpush1.msra.mxu0 %v596
      %1247 = vmatprep.subr.mxu0 0.0
      %1248 = vmatpush1.msra.mxu0 %v599
      %1249 = vmatprep.subr.mxu0 0.0
      %1250 = vmatpush1.msra.mxu0 0.0
      %1251 = vmatprep.subr.mxu0 0.0
      %1252 = vmatpush1.msra.mxu0 0.0
      %1253 = vmatprep.subr.mxu0 0.0
      %1254 = vmatpush1.msra.mxu0 0.0
      %1255 = vmatprep.subr.mxu0 0.0
      %1256 = vmatpush1.msra.mxu0 0.0
      %1257 = vmatprep.subr.mxu0 0.0
      %1258 = vmatpush1.msra.mxu0 0.0
      %1259 = vmatprep.subr.mxu0 0.0
      %1260 = vmatpush1.msra.mxu0 0.0
      %1261 = vmatprep.subr.mxu0 0.0
      %1262 = vmatpush1.msra.mxu0 0.0
      %1263 = vmatprep.subr.mxu0 0.0
      %1264 = vmatpush1.msra.mxu0 0.0
      %1265 = vmatprep.subr.mxu0 0.0
      %1266 = vmatpush1.msra.mxu0 0.0
      %1267 = vmatprep.subr.mxu0 0.0
      %1268 = vmatpush1.msra.mxu0 0.0
      %1269 = vmatprep.subr.mxu0 0.0
      %1270 = vmatpush1.msra.mxu0 0.0
      %1271 = vmatprep.subr.mxu0 0.0
      %1272 = vmatpush1.msra.mxu0 0.0
      %1273 = vmatprep.subr.mxu0 0.0
      %1274 = vmatpush1.msra.mxu0 0.0
      %1275 = vmatprep.subr.mxu0 0.0
      %1276 = vmatpush1.msra.mxu0 0.0
      %1277 = vmatprep.subr.mxu0 0.0
      %1278 = vmatpush1.msra.mxu0 0.0
      %1279 = vmatprep.subr.mxu0 0.0
      %1280 = vmatpush1.msra.mxu0 0.0
      %1281 = vmatprep.mubr.f32.mxu0 0.0
      %1282 = vmatmul.mubr.f32.gmra.mrb[0].mxu0 %v1139
      %v1283 = vpop.f32.mrb[0].mxu0
      %v1284 = vadd.f32 0.0, %v1283
      %v1285 = vpop.f32.mrb[0].mxu0
      %1286 = vdwg.mxu0
      %v1287 = vadd.f32 %v1143, %v1213
      %v1288 = vxor.u32 %v1287, 2147483648
      %v1289 = vmul.f32 %v1288, 1.442695
      %v1290 = vpow.pop %v1289
      %v1291 = vadd.f32 %v1290, 1.0
      %v1292 = vrcp.pop %v1291
      %v1293 = vmul.f32 1.0, %v1292
      %v1294 = vadd.f32 %v1144, %v1215
      %v1295 = vxor.u32 %v1294, 2147483648
      %v1296 = vmul.f32 %v1295, 1.442695
      %v1297 = vpow.pop %v1296
      %v1298 = vadd.f32 %v1297, 1.0
      %v1299 = vrcp.pop %v1298
      %v1300 = vmul.f32 1.0, %v1299
      %v1301 = vadd.f32 %v1284, %v550
      %v1302 = vmul.f32 %v1293, %v1301
      %v1303 = vadd.f32 %v1145, %v1302
      %v1304 = vtanh.pop %v1303
      %v1305 = vsub.f32 %v1139, %v1304
      %v1306 = vmul.f32 %v1300, %v1305
      %v1307 = vadd.f32 %v1304, %v1306
      %vm1308 = vcmp.gt.s32.totalorder %v544, 3
      %v1309 = vsel %vm1308, 1, 0
      %1310 = vset.pattern.permute.xlu0 0
      %1311 = vperm.xlu0 %1310, %v1309
      %v1312 = vpop.permute.xlu0 %1311
      %vm1313 = vcmp.eq.s32.totalorder %v1312, 1
      %v1314 = vsel %vm1313, %v1307, %v1139
      %1315 = vst [vmem:[#allocation4] sm:$0xff] %v1314
      %v1316 = vsel %vm1313, %v1307, 0.0
      %s1317 = scalar_lea.vmem [#allocation3], 24
      %1318 = vst [vmem:[%s1317] sm:$0xff] %v1316
      %v1319 = vld [vmem:[#allocation4] sm:$0xff]
      %s1320 = smul.u32 4, 3
      %s1321 = smul.addr %s1320, 8
      %s1322 = scalar_lea.vmem [#allocation2], %s1321
      %v1323 = vld [vmem:[%s1322] sm:$0xff]
      %v1324 = vld [vmem:[%s1322 + $0x8] sm:$0xff]
      %v1325 = vld [vmem:[%s1322 + $0x10] sm:$0xff]
      %1326 = vmatprep.subr.mxu0 %v553
      %1327 = vmatpush1.msra.mxu0 %v552
      %1328 = vmatprep.subr.mxu0 %v556
      %1329 = vmatpush1.msra.mxu0 %v555
      %1330 = vmatprep.subr.mxu0 %v559
      %1331 = vmatpush1.msra.mxu0 %v558
      %1332 = vmatprep.subr.mxu0 %v562
      %1333 = vmatpush1.msra.mxu0 %v561
      %1334 = vmatprep.subr.mxu0 %v565
      %1335 = vmatpush1.msra.mxu0 %v564
      %1336 = vmatprep.subr.mxu0 %v568
      %1337 = vmatpush1.msra.mxu0 %v567
      %1338 = vmatprep.subr.mxu0 %v571
      %1339 = vmatpush1.msra.mxu0 %v570
      %1340 = vmatprep.subr.mxu0 %v574
      %1341 = vmatpush1.msra.mxu0 %v573
      %1342 = vmatprep.subr.mxu0 %v577
      %1343 = vmatpush1.msra.mxu0 %v576
      %1344 = vmatprep.subr.mxu0 %v580
      %1345 = vmatpush1.msra.mxu0 %v579
      %1346 = vmatprep.subr.mxu0 %v583
      %1347 = vmatpush1.msra.mxu0 %v582
      %1348 = vmatprep.subr.mxu0 %v586
      %1349 = vmatpush1.msra.mxu0 %v585
      %1350 = vmatprep.subr.mxu0 %v589
      %1351 = vmatpush1.msra.mxu0 %v588
      %1352 = vmatprep.subr.mxu0 %v592
      %1353 = vmatpush1.msra.mxu0 %v591
      %1354 = vmatprep.subr.mxu0 %v595
      %1355 = vmatpush1.msra.mxu0 %v594
      %1356 = vmatprep.subr.mxu0 %v598
      %1357 = vmatpush1.msra.mxu0 %v597
      %1358 = vmatprep.subr.mxu0 0.0
      %1359 = vmatpush1.msra.mxu0 0.0
      %1360 = vmatprep.subr.mxu0 0.0
      %1361 = vmatpush1.msra.mxu0 0.0
      %1362 = vmatprep.subr.mxu0 0.0
      %1363 = vmatpush1.msra.mxu0 0.0
      %1364 = vmatprep.subr.mxu0 0.0
      %1365 = vmatpush1.msra.mxu0 0.0
      %1366 = vmatprep.subr.mxu0 0.0
      %1367 = vmatpush1.msra.mxu0 0.0
      %1368 = vmatprep.subr.mxu0 0.0
      %1369 = vmatpush1.msra.mxu0 0.0
      %1370 = vmatprep.subr.mxu0 0.0
      %1371 = vmatpush1.msra.mxu0 0.0
      %1372 = vmatprep.subr.mxu0 0.0
      %1373 = vmatpush1.msra.mxu0 0.0
      %1374 = vmatprep.subr.mxu0 0.0
      %1375 = vmatpush1.msra.mxu0 0.0
      %1376 = vmatprep.subr.mxu0 0.0
      %1377 = vmatpush1.msra.mxu0 0.0
      %1378 = vmatprep.subr.mxu0 0.0
      %1379 = vmatpush1.msra.mxu0 0.0
      %1380 = vmatprep.subr.mxu0 0.0
      %1381 = vmatpush1.msra.mxu0 0.0
      %1382 = vmatprep.subr.mxu0 0.0
      %1383 = vmatpush1.msra.mxu0 0.0
      %1384 = vmatprep.subr.mxu0 0.0
      %1385 = vmatpush1.msra.mxu0 0.0
      %1386 = vmatprep.subr.mxu0 0.0
      %1387 = vmatpush1.msra.mxu0 0.0
      %1388 = vmatprep.subr.mxu0 0.0
      %1389 = vmatpush1.msra.mxu0 0.0
      %1390 = vmatprep.mubr.f32.mxu0 0.0
      %1391 = vmatmul.mubr.f32.gmra.mrb[0].mxu0 %v1319
      %v1392 = vpop.f32.mrb[0].mxu0
      %v1393 = vadd.f32 0.0, %v1392
      %v1394 = vpop.f32.mrb[0].mxu0
      %v1395 = vadd.f32 0.0, %v1394
      %1396 = vdwg.mxu0
      %1397 = vmatprep.subr.mxu0 0.0
      %1398 = vmatpush1.msra.mxu0 %v554
      %1399 = vmatprep.subr.mxu0 0.0
      %1400 = vmatpush1.msra.mxu0 %v557
      %1401 = vmatprep.subr.mxu0 0.0
      %1402 = vmatpush1.msra.mxu0 %v560
      %1403 = vmatprep.subr.mxu0 0.0
      %1404 = vmatpush1.msra.mxu0 %v563
      %1405 = vmatprep.subr.mxu0 0.0
      %1406 = vmatpush1.msra.mxu0 %v566
      %1407 = vmatprep.subr.mxu0 0.0
      %1408 = vmatpush1.msra.mxu0 %v569
      %1409 = vmatprep.subr.mxu0 0.0
      %1410 = vmatpush1.msra.mxu0 %v572
      %1411 = vmatprep.subr.mxu0 0.0
      %1412 = vmatpush1.msra.mxu0 %v575
      %1413 = vmatprep.subr.mxu0 0.0
      %1414 = vmatpush1.msra.mxu0 %v578
      %1415 = vmatprep.subr.mxu0 0.0
      %1416 = vmatpush1.msra.mxu0 %v581
      %1417 = vmatprep.subr.mxu0 0.0
      %1418 = vmatpush1.msra.mxu0 %v584
      %1419 = vmatprep.subr.mxu0 0.0
      %1420 = vmatpush1.msra.mxu0 %v587
      %1421 = vmatprep.subr.mxu0 0.0
      %1422 = vmatpush1.msra.mxu0 %v590
      %1423 = vmatprep.subr.mxu0 0.0
      %1424 = vmatpush1.msra.mxu0 %v593
      %1425 = vmatprep.subr.mxu0 0.0
      %1426 = vmatpush1.msra.mxu0 %v596
      %1427 = vmatprep.subr.mxu0 0.0
      %1428 = vmatpush1.msra.mxu0 %v599
      %1429 = vmatprep.subr.mxu0 0.0
      %1430 = vmatpush1.msra.mxu0 0.0
      %1431 = vmatprep.subr.mxu0 0.0
      %1432 = vmatpush1.msra.mxu0 0.0
      %1433 = vmatprep.subr.mxu0 0.0
      %1434 = vmatpush1.msra.mxu0 0.0
      %1435 = vmatprep.subr.mxu0 0.0
      %1436 = vmatpush1.msra.mxu0 0.0
      %1437 = vmatprep.subr.mxu0 0.0
      %1438 = vmatpush1.msra.mxu0 0.0
      %1439 = vmatprep.subr.mxu0 0.0
      %1440 = vmatpush1.msra.mxu0 0.0
      %1441 = vmatprep.subr.mxu0 0.0
      %1442 = vmatpush1.msra.mxu0 0.0
      %1443 = vmatprep.subr.mxu0 0.0
      %1444 = vmatpush1.msra.mxu0 0.0
      %1445 = vmatprep.subr.mxu0 0.0
      %1446 = vmatpush1.msra.mxu0 0.0
      %1447 = vmatprep.subr.mxu0 0.0
      %1448 = vmatpush1.msra.mxu0 0.0
      %1449 = vmatprep.subr.mxu0 0.0
      %1450 = vmatpush1.msra.mxu0 0.0
      %1451 = vmatprep.subr.mxu0 0.0
      %1452 = vmatpush1.msra.mxu0 0.0
      %1453 = vmatprep.subr.mxu0 0.0
      %1454 = vmatpush1.msra.mxu0 0.0
      %1455 = vmatprep.subr.mxu0 0.0
      %1456 = vmatpush1.msra.mxu0 0.0
      %1457 = vmatprep.subr.mxu0 0.0
      %1458 = vmatpush1.msra.mxu0 0.0
      %1459 = vmatprep.subr.mxu0 0.0
      %1460 = vmatpush1.msra.mxu0 0.0
      %1461 = vmatprep.mubr.f32.mxu0 0.0
      %1462 = vmatmul.mubr.f32.gmra.mrb[0].mxu0 %v1319
      %v1463 = vpop.f32.mrb[0].mxu0
      %v1464 = vadd.f32 0.0, %v1463
      %v1465 = vpop.f32.mrb[0].mxu0
      %1466 = vdwg.mxu0
      %v1467 = vadd.f32 %v1323, %v1393
      %v1468 = vxor.u32 %v1467, 2147483648
      %v1469 = vmul.f32 %v1468, 1.442695
      %v1470 = vpow.pop %v1469
      %v1471 = vadd.f32 %v1470, 1.0
      %v1472 = vrcp.pop %v1471
      %v1473 = vmul.f32 1.0, %v1472
      %v1474 = vadd.f32 %v1324, %v1395
      %v1475 = vxor.u32 %v1474, 2147483648
      %v1476 = vmul.f32 %v1475, 1.442695
      %v1477 = vpow.pop %v1476
      %v1478 = vadd.f32 %v1477, 1.0
      %v1479 = vrcp.pop %v1478
      %v1480 = vmul.f32 1.0, %v1479
      %v1481 = vadd.f32 %v1464, %v550
      %v1482 = vmul.f32 %v1473, %v1481
      %v1483 = vadd.f32 %v1325, %v1482
      %v1484 = vtanh.pop %v1483
      %v1485 = vsub.f32 %v1319, %v1484
      %v1486 = vmul.f32 %v1480, %v1485
      %v1487 = vadd.f32 %v1484, %v1486
      %vm1488 = vcmp.gt.s32.totalorder %v544, 4
      %v1489 = vsel %vm1488, 1, 0
      %1490 = vset.pattern.permute.xlu0 0
      %1491 = vperm.xlu0 %1490, %v1489
      %v1492 = vpop.permute.xlu0 %1491
      %vm1493 = vcmp.eq.s32.totalorder %v1492, 1
      %v1494 = vsel %vm1493, %v1487, %v1319
      %1495 = vst [vmem:[#allocation4] sm:$0xff] %v1494
      %v1496 = vsel %vm1493, %v1487, 0.0
      %s1497 = scalar_lea.vmem [#allocation3], 32
      %1498 = vst [vmem:[%s1497] sm:$0xff] %v1496
      %v1499 = vld [vmem:[#allocation4] sm:$0xff]
      %s1500 = smul.u32 5, 3
      %s1501 = smul.addr %s1500, 8
      %s1502 = scalar_lea.vmem [#allocation2], %s1501
      %v1503 = vld [vmem:[%s1502] sm:$0xff]
      %v1504 = vld [vmem:[%s1502 + $0x8] sm:$0xff]
      %v1505 = vld [vmem:[%s1502 + $0x10] sm:$0xff]
      %1506 = vmatprep.subr.mxu0 %v553
      %1507 = vmatpush1.msra.mxu0 %v552
      %1508 = vmatprep.subr.mxu0 %v556
      %1509 = vmatpush1.msra.mxu0 %v555
      %1510 = vmatprep.subr.mxu0 %v559
      %1511 = vmatpush1.msra.mxu0 %v558
      %1512 = vmatprep.subr.mxu0 %v562
      %1513 = vmatpush1.msra.mxu0 %v561
      %1514 = vmatprep.subr.mxu0 %v565
      %1515 = vmatpush1.msra.mxu0 %v564
      %1516 = vmatprep.subr.mxu0 %v568
      %1517 = vmatpush1.msra.mxu0 %v567
      %1518 = vmatprep.subr.mxu0 %v571
      %1519 = vmatpush1.msra.mxu0 %v570
      %1520 = vmatprep.subr.mxu0 %v574
      %1521 = vmatpush1.msra.mxu0 %v573
      %1522 = vmatprep.subr.mxu0 %v577
      %1523 = vmatpush1.msra.mxu0 %v576
      %1524 = vmatprep.subr.mxu0 %v580
      %1525 = vmatpush1.msra.mxu0 %v579
      %1526 = vmatprep.subr.mxu0 %v583
      %1527 = vmatpush1.msra.mxu0 %v582
      %1528 = vmatprep.subr.mxu0 %v586
      %1529 = vmatpush1.msra.mxu0 %v585
      %1530 = vmatprep.subr.mxu0 %v589
      %1531 = vmatpush1.msra.mxu0 %v588
      %1532 = vmatprep.subr.mxu0 %v592
      %1533 = vmatpush1.msra.mxu0 %v591
      %1534 = vmatprep.subr.mxu0 %v595
      %1535 = vmatpush1.msra.mxu0 %v594
      %1536 = vmatprep.subr.mxu0 %v598
      %1537 = vmatpush1.msra.mxu0 %v597
      %1538 = vmatprep.subr.mxu0 0.0
      %1539 = vmatpush1.msra.mxu0 0.0
      %1540 = vmatprep.subr.mxu0 0.0
      %1541 = vmatpush1.msra.mxu0 0.0
      %1542 = vmatprep.subr.mxu0 0.0
      %1543 = vmatpush1.msra.mxu0 0.0
      %1544 = vmatprep.subr.mxu0 0.0
      %1545 = vmatpush1.msra.mxu0 0.0
      %1546 = vmatprep.subr.mxu0 0.0
      %1547 = vmatpush1.msra.mxu0 0.0
      %1548 = vmatprep.subr.mxu0 0.0
      %1549 = vmatpush1.msra.mxu0 0.0
      %1550 = vmatprep.subr.mxu0 0.0
      %1551 = vmatpush1.msra.mxu0 0.0
      %1552 = vmatprep.subr.mxu0 0.0
      %1553 = vmatpush1.msra.mxu0 0.0
      %1554 = vmatprep.subr.mxu0 0.0
      %1555 = vmatpush1.msra.mxu0 0.0
      %1556 = vmatprep.subr.mxu0 0.0
      %1557 = vmatpush1.msra.mxu0 0.0
      %1558 = vmatprep.subr.mxu0 0.0
      %1559 = vmatpush1.msra.mxu0 0.0
      %1560 = vmatprep.subr.mxu0 0.0
      %1561 = vmatpush1.msra.mxu0 0.0
      %1562 = vmatprep.subr.mxu0 0.0
      %1563 = vmatpush1.msra.mxu0 0.0
      %1564 = vmatprep.subr.mxu0 0.0
      %1565 = vmatpush1.msra.mxu0 0.0
      %1566 = vmatprep.subr.mxu0 0.0
      %1567 = vmatpush1.msra.mxu0 0.0
      %1568 = vmatprep.subr.mxu0 0.0
      %1569 = vmatpush1.msra.mxu0 0.0
      %1570 = vmatprep.mubr.f32.mxu0 0.0
      %1571 = vmatmul.mubr.f32.gmra.mrb[0].mxu0 %v1499
      %v1572 = vpop.f32.mrb[0].mxu0
      %v1573 = vadd.f32 0.0, %v1572
      %v1574 = vpop.f32.mrb[0].mxu0
      %v1575 = vadd.f32 0.0, %v1574
      %1576 = vdwg.mxu0
      %1577 = vmatprep.subr.mxu0 0.0
      %1578 = vmatpush1.msra.mxu0 %v554
      %1579 = vmatprep.subr.mxu0 0.0
      %1580 = vmatpush1.msra.mxu0 %v557
      %1581 = vmatprep.subr.mxu0 0.0
      %1582 = vmatpush1.msra.mxu0 %v560
      %1583 = vmatprep.subr.mxu0 0.0
      %1584 = vmatpush1.msra.mxu0 %v563
      %1585 = vmatprep.subr.mxu0 0.0
      %1586 = vmatpush1.msra.mxu0 %v566
      %1587 = vmatprep.subr.mxu0 0.0
      %1588 = vmatpush1.msra.mxu0 %v569
      %1589 = vmatprep.subr.mxu0 0.0
      %1590 = vmatpush1.msra.mxu0 %v572
      %1591 = vmatprep.subr.mxu0 0.0
      %1592 = vmatpush1.msra.mxu0 %v575
      %1593 = vmatprep.subr.mxu0 0.0
      %1594 = vmatpush1.msra.mxu0 %v578
      %1595 = vmatprep.subr.mxu0 0.0
      %1596 = vmatpush1.msra.mxu0 %v581
      %1597 = vmatprep.subr.mxu0 0.0
      %1598 = vmatpush1.msra.mxu0 %v584
      %1599 = vmatprep.subr.mxu0 0.0
      %1600 = vmatpush1.msra.mxu0 %v587
      %1601 = vmatprep.subr.mxu0 0.0
      %1602 = vmatpush1.msra.mxu0 %v590
      %1603 = vmatprep.subr.mxu0 0.0
      %1604 = vmatpush1.msra.mxu0 %v593
      %1605 = vmatprep.subr.mxu0 0.0
      %1606 = vmatpush1.msra.mxu0 %v596
      %1607 = vmatprep.subr.mxu0 0.0
      %1608 = vmatpush1.msra.mxu0 %v599
      %1609 = vmatprep.subr.mxu0 0.0
      %1610 = vmatpush1.msra.mxu0 0.0
      %1611 = vmatprep.subr.mxu0 0.0
      %1612 = vmatpush1.msra.mxu0 0.0
      %1613 = vmatprep.subr.mxu0 0.0
      %1614 = vmatpush1.msra.mxu0 0.0
      %1615 = vmatprep.subr.mxu0 0.0
      %1616 = vmatpush1.msra.mxu0 0.0
      %1617 = vmatprep.subr.mxu0 0.0
      %1618 = vmatpush1.msra.mxu0 0.0
      %1619 = vmatprep.subr.mxu0 0.0
      %1620 = vmatpush1.msra.mxu0 0.0
      %1621 = vmatprep.subr.mxu0 0.0
      %1622 = vmatpush1.msra.mxu0 0.0
      %1623 = vmatprep.subr.mxu0 0.0
      %1624 = vmatpush1.msra.mxu0 0.0
      %1625 = vmatprep.subr.mxu0 0.0
      %1626 = vmatpush1.msra.mxu0 0.0
      %1627 = vmatprep.subr.mxu0 0.0
      %1628 = vmatpush1.msra.mxu0 0.0
      %1629 = vmatprep.subr.mxu0 0.0
      %1630 = vmatpush1.msra.mxu0 0.0
      %1631 = vmatprep.subr.mxu0 0.0
      %1632 = vmatpush1.msra.mxu0 0.0
      %1633 = vmatprep.subr.mxu0 0.0
      %1634 = vmatpush1.msra.mxu0 0.0
      %1635 = vmatprep.subr.mxu0 0.0
      %1636 = vmatpush1.msra.mxu0 0.0
      %1637 = vmatprep.subr.mxu0 0.0
      %1638 = vmatpush1.msra.mxu0 0.0
      %1639 = vmatprep.subr.mxu0 0.0
      %1640 = vmatpush1.msra.mxu0 0.0
      %1641 = vmatprep.mubr.f32.mxu0 0.0
      %1642 = vmatmul.mubr.f32.gmra.mrb[0].mxu0 %v1499
      %v1643 = vpop.f32.mrb[0].mxu0
      %v1644 = vadd.f32 0.0, %v1643
      %v1645 = vpop.f32.mrb[0].mxu0
      %1646 = vdwg.mxu0
      %v1647 = vadd.f32 %v1503, %v1573
      %v1648 = vxor.u32 %v1647, 2147483648
      %v1649 = vmul.f32 %v1648, 1.442695
      %v1650 = vpow.pop %v1649
      %v1651 = vadd.f32 %v1650, 1.0
      %v1652 = vrcp.pop %v1651
      %v1653 = vmul.f32 1.0, %v1652
      %v1654 = vadd.f32 %v1504, %v1575
      %v1655 = vxor.u32 %v1654, 2147483648
      %v1656 = vmul.f32 %v1655, 1.442695
      %v1657 = vpow.pop %v1656
      %v1658 = vadd.f32 %v1657, 1.0
      %v1659 = vrcp.pop %v1658
      %v1660 = vmul.f32 1.0, %v1659
      %v1661 = vadd.f32 %v1644, %v550
      %v1662 = vmul.f32 %v1653, %v1661
      %v1663 = vadd.f32 %v1505, %v1662
      %v1664 = vtanh.pop %v1663
      %v1665 = vsub.f32 %v1499, %v1664
      %v1666 = vmul.f32 %v1660, %v1665
      %v1667 = vadd.f32 %v1664, %v1666
      %vm1668 = vcmp.gt.s32.totalorder %v544, 5
      %v1669 = vsel %vm1668, 1, 0
      %1670 = vset.pattern.permute.xlu0 0
      %1671 = vperm.xlu0 %1670, %v1669
      %v1672 = vpop.permute.xlu0 %1671
      %vm1673 = vcmp.eq.s32.totalorder %v1672, 1
      %v1674 = vsel %vm1673, %v1667, %v1499
      %1675 = vst [vmem:[#allocation4] sm:$0xff] %v1674
      %v1676 = vsel %vm1673, %v1667, 0.0
      %s1677 = scalar_lea.vmem [#allocation3], 40
      %1678 = vst [vmem:[%s1677] sm:$0xff] %v1676
      %v1679 = vld [vmem:[#allocation4] sm:$0xff]
      %s1680 = smul.u32 6, 3
      %s1681 = smul.addr %s1680, 8
      %s1682 = scalar_lea.vmem [#allocation2], %s1681
      %v1683 = vld [vmem:[%s1682] sm:$0xff]
      %v1684 = vld [vmem:[%s1682 + $0x8] sm:$0xff]
      %v1685 = vld [vmem:[%s1682 + $0x10] sm:$0xff]
      %1686 = vmatprep.subr.mxu0 %v553
      %1687 = vmatpush1.msra.mxu0 %v552
      %1688 = vmatprep.subr.mxu0 %v556
      %1689 = vmatpush1.msra.mxu0 %v555
      %1690 = vmatprep.subr.mxu0 %v559
      %1691 = vmatpush1.msra.mxu0 %v558
      %1692 = vmatprep.subr.mxu0 %v562
      %1693 = vmatpush1.msra.mxu0 %v561
      %1694 = vmatprep.subr.mxu0 %v565
      %1695 = vmatpush1.msra.mxu0 %v564
      %1696 = vmatprep.subr.mxu0 %v568
      %1697 = vmatpush1.msra.mxu0 %v567
      %1698 = vmatprep.subr.mxu0 %v571
      %1699 = vmatpush1.msra.mxu0 %v570
      %1700 = vmatprep.subr.mxu0 %v574
      %1701 = vmatpush1.msra.mxu0 %v573
      %1702 = vmatprep.subr.mxu0 %v577
      %1703 = vmatpush1.msra.mxu0 %v576
      %1704 = vmatprep.subr.mxu0 %v580
      %1705 = vmatpush1.msra.mxu0 %v579
      %1706 = vmatprep.subr.mxu0 %v583
      %1707 = vmatpush1.msra.mxu0 %v582
      %1708 = vmatprep.subr.mxu0 %v586
      %1709 = vmatpush1.msra.mxu0 %v585
      %1710 = vmatprep.subr.mxu0 %v589
      %1711 = vmatpush1.msra.mxu0 %v588
      %1712 = vmatprep.subr.mxu0 %v592
      %1713 = vmatpush1.msra.mxu0 %v591
      %1714 = vmatprep.subr.mxu0 %v595
      %1715 = vmatpush1.msra.mxu0 %v594
      %1716 = vmatprep.subr.mxu0 %v598
      %1717 = vmatpush1.msra.mxu0 %v597
      %1718 = vmatprep.subr.mxu0 0.0
      %1719 = vmatpush1.msra.mxu0 0.0
      %1720 = vmatprep.subr.mxu0 0.0
      %1721 = vmatpush1.msra.mxu0 0.0
      %1722 = vmatprep.subr.mxu0 0.0
      %1723 = vmatpush1.msra.mxu0 0.0
      %1724 = vmatprep.subr.mxu0 0.0
      %1725 = vmatpush1.msra.mxu0 0.0
      %1726 = vmatprep.subr.mxu0 0.0
      %1727 = vmatpush1.msra.mxu0 0.0
      %1728 = vmatprep.subr.mxu0 0.0
      %1729 = vmatpush1.msra.mxu0 0.0
      %1730 = vmatprep.subr.mxu0 0.0
      %1731 = vmatpush1.msra.mxu0 0.0
      %1732 = vmatprep.subr.mxu0 0.0
      %1733 = vmatpush1.msra.mxu0 0.0
      %1734 = vmatprep.subr.mxu0 0.0
      %1735 = vmatpush1.msra.mxu0 0.0
      %1736 = vmatprep.subr.mxu0 0.0
      %1737 = vmatpush1.msra.mxu0 0.0
      %1738 = vmatprep.subr.mxu0 0.0
      %1739 = vmatpush1.msra.mxu0 0.0
      %1740 = vmatprep.subr.mxu0 0.0
      %1741 = vmatpush1.msra.mxu0 0.0
      %1742 = vmatprep.subr.mxu0 0.0
      %1743 = vmatpush1.msra.mxu0 0.0
      %1744 = vmatprep.subr.mxu0 0.0
      %1745 = vmatpush1.msra.mxu0 0.0
      %1746 = vmatprep.subr.mxu0 0.0
      %1747 = vmatpush1.msra.mxu0 0.0
      %1748 = vmatprep.subr.mxu0 0.0
      %1749 = vmatpush1.msra.mxu0 0.0
      %1750 = vmatprep.mubr.f32.mxu0 0.0
      %1751 = vmatmul.mubr.f32.gmra.mrb[0].mxu0 %v1679
      %v1752 = vpop.f32.mrb[0].mxu0
      %v1753 = vadd.f32 0.0, %v1752
      %v1754 = vpop.f32.mrb[0].mxu0
      %v1755 = vadd.f32 0.0, %v1754
      %1756 = vdwg.mxu0
      %1757 = vmatprep.subr.mxu0 0.0
      %1758 = vmatpush1.msra.mxu0 %v554
      %1759 = vmatprep.subr.mxu0 0.0
      %1760 = vmatpush1.msra.mxu0 %v557
      %1761 = vmatprep.subr.mxu0 0.0
      %1762 = vmatpush1.msra.mxu0 %v560
      %1763 = vmatprep.subr.mxu0 0.0
      %1764 = vmatpush1.msra.mxu0 %v563
      %1765 = vmatprep.subr.mxu0 0.0
      %1766 = vmatpush1.msra.mxu0 %v566
      %1767 = vmatprep.subr.mxu0 0.0
      %1768 = vmatpush1.msra.mxu0 %v569
      %1769 = vmatprep.subr.mxu0 0.0
      %1770 = vmatpush1.msra.mxu0 %v572
      %1771 = vmatprep.subr.mxu0 0.0
      %1772 = vmatpush1.msra.mxu0 %v575
      %1773 = vmatprep.subr.mxu0 0.0
      %1774 = vmatpush1.msra.mxu0 %v578
      %1775 = vmatprep.subr.mxu0 0.0
      %1776 = vmatpush1.msra.mxu0 %v581
      %1777 = vmatprep.subr.mxu0 0.0
      %1778 = vmatpush1.msra.mxu0 %v584
      %1779 = vmatprep.subr.mxu0 0.0
      %1780 = vmatpush1.msra.mxu0 %v587
      %1781 = vmatprep.subr.mxu0 0.0
      %1782 = vmatpush1.msra.mxu0 %v590
      %1783 = vmatprep.subr.mxu0 0.0
      %1784 = vmatpush1.msra.mxu0 %v593
      %1785 = vmatprep.subr.mxu0 0.0
      %1786 = vmatpush1.msra.mxu0 %v596
      %1787 = vmatprep.subr.mxu0 0.0
      %1788 = vmatpush1.msra.mxu0 %v599
      %1789 = vmatprep.subr.mxu0 0.0
      %1790 = vmatpush1.msra.mxu0 0.0
      %1791 = vmatprep.subr.mxu0 0.0
      %1792 = vmatpush1.msra.mxu0 0.0
      %1793 = vmatprep.subr.mxu0 0.0
      %1794 = vmatpush1.msra.mxu0 0.0
      %1795 = vmatprep.subr.mxu0 0.0
      %1796 = vmatpush1.msra.mxu0 0.0
      %1797 = vmatprep.subr.mxu0 0.0
      %1798 = vmatpush1.msra.mxu0 0.0
      %1799 = vmatprep.subr.mxu0 0.0
      %1800 = vmatpush1.msra.mxu0 0.0
      %1801 = vmatprep.subr.mxu0 0.0
      %1802 = vmatpush1.msra.mxu0 0.0
      %1803 = vmatprep.subr.mxu0 0.0
      %1804 = vmatpush1.msra.mxu0 0.0
      %1805 = vmatprep.subr.mxu0 0.0
      %1806 = vmatpush1.msra.mxu0 0.0
      %1807 = vmatprep.subr.mxu0 0.0
      %1808 = vmatpush1.msra.mxu0 0.0
      %1809 = vmatprep.subr.mxu0 0.0
      %1810 = vmatpush1.msra.mxu0 0.0
      %1811 = vmatprep.subr.mxu0 0.0
      %1812 = vmatpush1.msra.mxu0 0.0
      %1813 = vmatprep.subr.mxu0 0.0
      %1814 = vmatpush1.msra.mxu0 0.0
      %1815 = vmatprep.subr.mxu0 0.0
      %1816 = vmatpush1.msra.mxu0 0.0
      %1817 = vmatprep.subr.mxu0 0.0
      %1818 = vmatpush1.msra.mxu0 0.0
      %1819 = vmatprep.subr.mxu0 0.0
      %1820 = vmatpush1.msra.mxu0 0.0
      %1821 = vmatprep.mubr.f32.mxu0 0.0
      %1822 = vmatmul.mubr.f32.gmra.mrb[0].mxu0 %v1679
      %v1823 = vpop.f32.mrb[0].mxu0
      %v1824 = vadd.f32 0.0, %v1823
      %v1825 = vpop.f32.mrb[0].mxu0
      %1826 = vdwg.mxu0
      %v1827 = vadd.f32 %v1683, %v1753
      %v1828 = vxor.u32 %v1827, 2147483648
      %v1829 = vmul.f32 %v1828, 1.442695
      %v1830 = vpow.pop %v1829
      %v1831 = vadd.f32 %v1830, 1.0
      %v1832 = vrcp.pop %v1831
      %v1833 = vmul.f32 1.0, %v1832
      %v1834 = vadd.f32 %v1684, %v1755
      %v1835 = vxor.u32 %v1834, 2147483648
      %v1836 = vmul.f32 %v1835, 1.442695
      %v1837 = vpow.pop %v1836
      %v1838 = vadd.f32 %v1837, 1.0
      %v1839 = vrcp.pop %v1838
      %v1840 = vmul.f32 1.0, %v1839
      %v1841 = vadd.f32 %v1824, %v550
      %v1842 = vmul.f32 %v1833, %v1841
      %v1843 = vadd.f32 %v1685, %v1842
      %v1844 = vtanh.pop %v1843
      %v1845 = vsub.f32 %v1679, %v1844
      %v1846 = vmul.f32 %v1840, %v1845
      %v1847 = vadd.f32 %v1844, %v1846
      %vm1848 = vcmp.gt.s32.totalorder %v544, 6
      %v1849 = vsel %vm1848, 1, 0
      %1850 = vset.pattern.permute.xlu0 0
      %1851 = vperm.xlu0 %1850, %v1849
      %v1852 = vpop.permute.xlu0 %1851
      %vm1853 = vcmp.eq.s32.totalorder %v1852, 1
      %v1854 = vsel %vm1853, %v1847, %v1679
      %1855 = vst [vmem:[#allocation4] sm:$0xff] %v1854
      %v1856 = vsel %vm1853, %v1847, 0.0
      %s1857 = scalar_lea.vmem [#allocation3], 48
      %1858 = vst [vmem:[%s1857] sm:$0xff] %v1856
      %v1859 = vld [vmem:[#allocation4] sm:$0xff]
      %s1860 = smul.u32 7, 3
      %s1861 = smul.addr %s1860, 8
      %s1862 = scalar_lea.vmem [#allocation2], %s1861
      %v1863 = vld [vmem:[%s1862] sm:$0xff]
      %v1864 = vld [vmem:[%s1862 + $0x8] sm:$0xff]
      %v1865 = vld [vmem:[%s1862 + $0x10] sm:$0xff]
      %1866 = vmatprep.subr.mxu0 %v553
      %1867 = vmatpush1.msra.mxu0 %v552
      %1868 = vmatprep.subr.mxu0 %v556
      %1869 = vmatpush1.msra.mxu0 %v555
      %1870 = vmatprep.subr.mxu0 %v559
      %1871 = vmatpush1.msra.mxu0 %v558
      %1872 = vmatprep.subr.mxu0 %v562
      %1873 = vmatpush1.msra.mxu0 %v561
      %1874 = vmatprep.subr.mxu0 %v565
      %1875 = vmatpush1.msra.mxu0 %v564
      %1876 = vmatprep.subr.mxu0 %v568
      %1877 = vmatpush1.msra.mxu0 %v567
      %1878 = vmatprep.subr.mxu0 %v571
      %1879 = vmatpush1.msra.mxu0 %v570
      %1880 = vmatprep.subr.mxu0 %v574
      %1881 = vmatpush1.msra.mxu0 %v573
      %1882 = vmatprep.subr.mxu0 %v577
      %1883 = vmatpush1.msra.mxu0 %v576
      %1884 = vmatprep.subr.mxu0 %v580
      %1885 = vmatpush1.msra.mxu0 %v579
      %1886 = vmatprep.subr.mxu0 %v583
      %1887 = vmatpush1.msra.mxu0 %v582
      %1888 = vmatprep.subr.mxu0 %v586
      %1889 = vmatpush1.msra.mxu0 %v585
      %1890 = vmatprep.subr.mxu0 %v589
      %1891 = vmatpush1.msra.mxu0 %v588
      %1892 = vmatprep.subr.mxu0 %v592
      %1893 = vmatpush1.msra.mxu0 %v591
      %1894 = vmatprep.subr.mxu0 %v595
      %1895 = vmatpush1.msra.mxu0 %v594
      %1896 = vmatprep.subr.mxu0 %v598
      %1897 = vmatpush1.msra.mxu0 %v597
      %1898 = vmatprep.subr.mxu0 0.0
      %1899 = vmatpush1.msra.mxu0 0.0
      %1900 = vmatprep.subr.mxu0 0.0
      %1901 = vmatpush1.msra.mxu0 0.0
      %1902 = vmatprep.subr.mxu0 0.0
      %1903 = vmatpush1.msra.mxu0 0.0
      %1904 = vmatprep.subr.mxu0 0.0
      %1905 = vmatpush1.msra.mxu0 0.0
      %1906 = vmatprep.subr.mxu0 0.0
      %1907 = vmatpush1.msra.mxu0 0.0
      %1908 = vmatprep.subr.mxu0 0.0
      %1909 = vmatpush1.msra.mxu0 0.0
      %1910 = vmatprep.subr.mxu0 0.0
      %1911 = vmatpush1.msra.mxu0 0.0
      %1912 = vmatprep.subr.mxu0 0.0
      %1913 = vmatpush1.msra.mxu0 0.0
      %1914 = vmatprep.subr.mxu0 0.0
      %1915 = vmatpush1.msra.mxu0 0.0
      %1916 = vmatprep.subr.mxu0 0.0
      %1917 = vmatpush1.msra.mxu0 0.0
      %1918 = vmatprep.subr.mxu0 0.0
      %1919 = vmatpush1.msra.mxu0 0.0
      %1920 = vmatprep.subr.mxu0 0.0
      %1921 = vmatpush1.msra.mxu0 0.0
      %1922 = vmatprep.subr.mxu0 0.0
      %1923 = vmatpush1.msra.mxu0 0.0
      %1924 = vmatprep.subr.mxu0 0.0
      %1925 = vmatpush1.msra.mxu0 0.0
      %1926 = vmatprep.subr.mxu0 0.0
      %1927 = vmatpush1.msra.mxu0 0.0
      %1928 = vmatprep.subr.mxu0 0.0
      %1929 = vmatpush1.msra.mxu0 0.0
      %1930 = vmatprep.mubr.f32.mxu0 0.0
      %1931 = vmatmul.mubr.f32.gmra.mrb[0].mxu0 %v1859
      %v1932 = vpop.f32.mrb[0].mxu0
      %v1933 = vadd.f32 0.0, %v1932
      %v1934 = vpop.f32.mrb[0].mxu0
      %v1935 = vadd.f32 0.0, %v1934
      %1936 = vdwg.mxu0
      %1937 = vmatprep.subr.mxu0 0.0
      %1938 = vmatpush1.msra.mxu0 %v554
      %1939 = vmatprep.subr.mxu0 0.0
      %1940 = vmatpush1.msra.mxu0 %v557
      %1941 = vmatprep.subr.mxu0 0.0
      %1942 = vmatpush1.msra.mxu0 %v560
      %1943 = vmatprep.subr.mxu0 0.0
      %1944 = vmatpush1.msra.mxu0 %v563
      %1945 = vmatprep.subr.mxu0 0.0
      %1946 = vmatpush1.msra.mxu0 %v566
      %1947 = vmatprep.subr.mxu0 0.0
      %1948 = vmatpush1.msra.mxu0 %v569
      %1949 = vmatprep.subr.mxu0 0.0
      %1950 = vmatpush1.msra.mxu0 %v572
      %1951 = vmatprep.subr.mxu0 0.0
      %1952 = vmatpush1.msra.mxu0 %v575
      %1953 = vmatprep.subr.mxu0 0.0
      %1954 = vmatpush1.msra.mxu0 %v578
      %1955 = vmatprep.subr.mxu0 0.0
      %1956 = vmatpush1.msra.mxu0 %v581
      %1957 = vmatprep.subr.mxu0 0.0
      %1958 = vmatpush1.msra.mxu0 %v584
      %1959 = vmatprep.subr.mxu0 0.0
      %1960 = vmatpush1.msra.mxu0 %v587
      %1961 = vmatprep.subr.mxu0 0.0
      %1962 = vmatpush1.msra.mxu0 %v590
      %1963 = vmatprep.subr.mxu0 0.0
      %1964 = vmatpush1.msra.mxu0 %v593
      %1965 = vmatprep.subr.mxu0 0.0
      %1966 = vmatpush1.msra.mxu0 %v596
      %1967 = vmatprep.subr.mxu0 0.0
      %1968 = vmatpush1.msra.mxu0 %v599
      %1969 = vmatprep.subr.mxu0 0.0
      %1970 = vmatpush1.msra.mxu0 0.0
      %1971 = vmatprep.subr.mxu0 0.0
      %1972 = vmatpush1.msra.mxu0 0.0
      %1973 = vmatprep.subr.mxu0 0.0
      %1974 = vmatpush1.msra.mxu0 0.0
      %1975 = vmatprep.subr.mxu0 0.0
      %1976 = vmatpush1.msra.mxu0 0.0
      %1977 = vmatprep.subr.mxu0 0.0
      %1978 = vmatpush1.msra.mxu0 0.0
      %1979 = vmatprep.subr.mxu0 0.0
      %1980 = vmatpush1.msra.mxu0 0.0
      %1981 = vmatprep.subr.mxu0 0.0
      %1982 = vmatpush1.msra.mxu0 0.0
      %1983 = vmatprep.subr.mxu0 0.0
      %1984 = vmatpush1.msra.mxu0 0.0
      %1985 = vmatprep.subr.mxu0 0.0
      %1986 = vmatpush1.msra.mxu0 0.0
      %1987 = vmatprep.subr.mxu0 0.0
      %1988 = vmatpush1.msra.mxu0 0.0
      %1989 = vmatprep.subr.mxu0 0.0
      %1990 = vmatpush1.msra.mxu0 0.0
      %1991 = vmatprep.subr.mxu0 0.0
      %1992 = vmatpush1.msra.mxu0 0.0
      %1993 = vmatprep.subr.mxu0 0.0
      %1994 = vmatpush1.msra.mxu0 0.0
      %1995 = vmatprep.subr.mxu0 0.0
      %1996 = vmatpush1.msra.mxu0 0.0
      %1997 = vmatprep.subr.mxu0 0.0
      %1998 = vmatpush1.msra.mxu0 0.0
      %1999 = vmatprep.subr.mxu0 0.0
      %2000 = vmatpush1.msra.mxu0 0.0
      %2001 = vmatprep.mubr.f32.mxu0 0.0
      %2002 = vmatmul.mubr.f32.gmra.mrb[0].mxu0 %v1859
      %v2003 = vpop.f32.mrb[0].mxu0
      %v2004 = vadd.f32 0.0, %v2003
      %v2005 = vpop.f32.mrb[0].mxu0
      %2006 = vdwg.mxu0
      %v2007 = vadd.f32 %v1863, %v1933
      %v2008 = vxor.u32 %v2007, 2147483648
      %v2009 = vmul.f32 %v2008, 1.442695
      %v2010 = vpow.pop %v2009
      %v2011 = vadd.f32 %v2010, 1.0
      %v2012 = vrcp.pop %v2011
      %v2013 = vmul.f32 1.0, %v2012
      %v2014 = vadd.f32 %v1864, %v1935
      %v2015 = vxor.u32 %v2014, 2147483648
      %v2016 = vmul.f32 %v2015, 1.442695
      %v2017 = vpow.pop %v2016
      %v2018 = vadd.f32 %v2017, 1.0
      %v2019 = vrcp.pop %v2018
      %v2020 = vmul.f32 1.0, %v2019
      %v2021 = vadd.f32 %v2004, %v550
      %v2022 = vmul.f32 %v2013, %v2021
      %v2023 = vadd.f32 %v1865, %v2022
      %v2024 = vtanh.pop %v2023
      %v2025 = vsub.f32 %v1859, %v2024
      %v2026 = vmul.f32 %v2020, %v2025
      %v2027 = vadd.f32 %v2024, %v2026
      %vm2028 = vcmp.gt.s32.totalorder %v544, 7
      %v2029 = vsel %vm2028, 1, 0
      %2030 = vset.pattern.permute.xlu0 0
      %2031 = vperm.xlu0 %2030, %v2029
      %v2032 = vpop.permute.xlu0 %2031
      %vm2033 = vcmp.eq.s32.totalorder %v2032, 1
      %v2034 = vsel %vm2033, %v2027, %v1859
      %2035 = vst [vmem:[#allocation4] sm:$0xff] %v2034
      %v2036 = vsel %vm2033, %v2027, 0.0
      %s2037 = scalar_lea.vmem [#allocation3], 56
      %2038 = vst [vmem:[%s2037] sm:$0xff] %v2036
      %v2039 = vld [vmem:[#allocation4] sm:$0xff]
      %s2040 = smul.u32 8, 3
      %s2041 = smul.addr %s2040, 8
      %s2042 = scalar_lea.vmem [#allocation2], %s2041
      %v2043 = vld [vmem:[%s2042] sm:$0xff]
      %v2044 = vld [vmem:[%s2042 + $0x8] sm:$0xff]
      %v2045 = vld [vmem:[%s2042 + $0x10] sm:$0xff]
      %2046 = vmatprep.subr.mxu0 %v553
      %2047 = vmatpush1.msra.mxu0 %v552
      %2048 = vmatprep.subr.mxu0 %v556
      %2049 = vmatpush1.msra.mxu0 %v555
      %2050 = vmatprep.subr.mxu0 %v559
      %2051 = vmatpush1.msra.mxu0 %v558
      %2052 = vmatprep.subr.mxu0 %v562
      %2053 = vmatpush1.msra.mxu0 %v561
      %2054 = vmatprep.subr.mxu0 %v565
      %2055 = vmatpush1.msra.mxu0 %v564
      %2056 = vmatprep.subr.mxu0 %v568
      %2057 = vmatpush1.msra.mxu0 %v567
      %2058 = vmatprep.subr.mxu0 %v571
      %2059 = vmatpush1.msra.mxu0 %v570
      %2060 = vmatprep.subr.mxu0 %v574
      %2061 = vmatpush1.msra.mxu0 %v573
      %2062 = vmatprep.subr.mxu0 %v577
      %2063 = vmatpush1.msra.mxu0 %v576
      %2064 = vmatprep.subr.mxu0 %v580
      %2065 = vmatpush1.msra.mxu0 %v579
      %2066 = vmatprep.subr.mxu0 %v583
      %2067 = vmatpush1.msra.mxu0 %v582
      %2068 = vmatprep.subr.mxu0 %v586
      %2069 = vmatpush1.msra.mxu0 %v585
      %2070 = vmatprep.subr.mxu0 %v589
      %2071 = vmatpush1.msra.mxu0 %v588
      %2072 = vmatprep.subr.mxu0 %v592
      %2073 = vmatpush1.msra.mxu0 %v591
      %2074 = vmatprep.subr.mxu0 %v595
      %2075 = vmatpush1.msra.mxu0 %v594
      %2076 = vmatprep.subr.mxu0 %v598
      %2077 = vmatpush1.msra.mxu0 %v597
      %2078 = vmatprep.subr.mxu0 0.0
      %2079 = vmatpush1.msra.mxu0 0.0
      %2080 = vmatprep.subr.mxu0 0.0
      %2081 = vmatpush1.msra.mxu0 0.0
      %2082 = vmatprep.subr.mxu0 0.0
      %2083 = vmatpush1.msra.mxu0 0.0
      %2084 = vmatprep.subr.mxu0 0.0
      %2085 = vmatpush1.msra.mxu0 0.0
      %2086 = vmatprep.subr.mxu0 0.0
      %2087 = vmatpush1.msra.mxu0 0.0
      %2088 = vmatprep.subr.mxu0 0.0
      %2089 = vmatpush1.msra.mxu0 0.0
      %2090 = vmatprep.subr.mxu0 0.0
      %2091 = vmatpush1.msra.mxu0 0.0
      %2092 = vmatprep.subr.mxu0 0.0
      %2093 = vmatpush1.msra.mxu0 0.0
      %2094 = vmatprep.subr.mxu0 0.0
      %2095 = vmatpush1.msra.mxu0 0.0
      %2096 = vmatprep.subr.mxu0 0.0
      %2097 = vmatpush1.msra.mxu0 0.0
      %2098 = vmatprep.subr.mxu0 0.0
      %2099 = vmatpush1.msra.mxu0 0.0
      %2100 = vmatprep.subr.mxu0 0.0
      %2101 = vmatpush1.msra.mxu0 0.0
      %2102 = vmatprep.subr.mxu0 0.0
      %2103 = vmatpush1.msra.mxu0 0.0
      %2104 = vmatprep.subr.mxu0 0.0
      %2105 = vmatpush1.msra.mxu0 0.0
      %2106 = vmatprep.subr.mxu0 0.0
      %2107 = vmatpush1.msra.mxu0 0.0
      %2108 = vmatprep.subr.mxu0 0.0
      %2109 = vmatpush1.msra.mxu0 0.0
      %2110 = vmatprep.mubr.f32.mxu0 0.0
      %2111 = vmatmul.mubr.f32.gmra.mrb[0].mxu0 %v2039
      %v2112 = vpop.f32.mrb[0].mxu0
      %v2113 = vadd.f32 0.0, %v2112
      %v2114 = vpop.f32.mrb[0].mxu0
      %v2115 = vadd.f32 0.0, %v2114
      %2116 = vdwg.mxu0
      %2117 = vmatprep.subr.mxu0 0.0
      %2118 = vmatpush1.msra.mxu0 %v554
      %2119 = vmatprep.subr.mxu0 0.0
      %2120 = vmatpush1.msra.mxu0 %v557
      %2121 = vmatprep.subr.mxu0 0.0
      %2122 = vmatpush1.msra.mxu0 %v560
      %2123 = vmatprep.subr.mxu0 0.0
      %2124 = vmatpush1.msra.mxu0 %v563
      %2125 = vmatprep.subr.mxu0 0.0
      %2126 = vmatpush1.msra.mxu0 %v566
      %2127 = vmatprep.subr.mxu0 0.0
      %2128 = vmatpush1.msra.mxu0 %v569
      %2129 = vmatprep.subr.mxu0 0.0
      %2130 = vmatpush1.msra.mxu0 %v572
      %2131 = vmatprep.subr.mxu0 0.0
      %2132 = vmatpush1.msra.mxu0 %v575
      %2133 = vmatprep.subr.mxu0 0.0
      %2134 = vmatpush1.msra.mxu0 %v578
      %2135 = vmatprep.subr.mxu0 0.0
      %2136 = vmatpush1.msra.mxu0 %v581
      %2137 = vmatprep.subr.mxu0 0.0
      %2138 = vmatpush1.msra.mxu0 %v584
      %2139 = vmatprep.subr.mxu0 0.0
      %2140 = vmatpush1.msra.mxu0 %v587
      %2141 = vmatprep.subr.mxu0 0.0
      %2142 = vmatpush1.msra.mxu0 %v590
      %2143 = vmatprep.subr.mxu0 0.0
      %2144 = vmatpush1.msra.mxu0 %v593
      %2145 = vmatprep.subr.mxu0 0.0
      %2146 = vmatpush1.msra.mxu0 %v596
      %2147 = vmatprep.subr.mxu0 0.0
      %2148 = vmatpush1.msra.mxu0 %v599
      %2149 = vmatprep.subr.mxu0 0.0
      %2150 = vmatpush1.msra.mxu0 0.0
      %2151 = vmatprep.subr.mxu0 0.0
      %2152 = vmatpush1.msra.mxu0 0.0
      %2153 = vmatprep.subr.mxu0 0.0
      %2154 = vmatpush1.msra.mxu0 0.0
      %2155 = vmatprep.subr.mxu0 0.0
      %2156 = vmatpush1.msra.mxu0 0.0
      %2157 = vmatprep.subr.mxu0 0.0
      %2158 = vmatpush1.msra.mxu0 0.0
      %2159 = vmatprep.subr.mxu0 0.0
      %2160 = vmatpush1.msra.mxu0 0.0
      %2161 = vmatprep.subr.mxu0 0.0
      %2162 = vmatpush1.msra.mxu0 0.0
      %2163 = vmatprep.subr.mxu0 0.0
      %2164 = vmatpush1.msra.mxu0 0.0
      %2165 = vmatprep.subr.mxu0 0.0
      %2166 = vmatpush1.msra.mxu0 0.0
      %2167 = vmatprep.subr.mxu0 0.0
      %2168 = vmatpush1.msra.mxu0 0.0
      %2169 = vmatprep.subr.mxu0 0.0
      %2170 = vmatpush1.msra.mxu0 0.0
      %2171 = vmatprep.subr.mxu0 0.0
      %2172 = vmatpush1.msra.mxu0 0.0
      %2173 = vmatprep.subr.mxu0 0.0
      %2174 = vmatpush1.msra.mxu0 0.0
      %2175 = vmatprep.subr.mxu0 0.0
      %2176 = vmatpush1.msra.mxu0 0.0
      %2177 = vmatprep.subr.mxu0 0.0
      %2178 = vmatpush1.msra.mxu0 0.0
      %2179 = vmatprep.subr.mxu0 0.0
      %2180 = vmatpush1.msra.mxu0 0.0
      %2181 = vmatprep.mubr.f32.mxu0 0.0
      %2182 = vmatmul.mubr.f32.gmra.mrb[0].mxu0 %v2039
      %v2183 = vpop.f32.mrb[0].mxu0
      %v2184 = vadd.f32 0.0, %v2183
      %v2185 = vpop.f32.mrb[0].mxu0
      %2186 = vdwg.mxu0
      %v2187 = vadd.f32 %v2043, %v2113
      %v2188 = vxor.u32 %v2187, 2147483648
      %v2189 = vmul.f32 %v2188, 1.442695
      %v2190 = vpow.pop %v2189
      %v2191 = vadd.f32 %v2190, 1.0
      %v2192 = vrcp.pop %v2191
      %v2193 = vmul.f32 1.0, %v2192
      %v2194 = vadd.f32 %v2044, %v2115
      %v2195 = vxor.u32 %v2194, 2147483648
      %v2196 = vmul.f32 %v2195, 1.442695
      %v2197 = vpow.pop %v2196
      %v2198 = vadd.f32 %v2197, 1.0
      %v2199 = vrcp.pop %v2198
      %v2200 = vmul.f32 1.0, %v2199
      %v2201 = vadd.f32 %v2184, %v550
      %v2202 = vmul.f32 %v2193, %v2201
      %v2203 = vadd.f32 %v2045, %v2202
      %v2204 = vtanh.pop %v2203
      %v2205 = vsub.f32 %v2039, %v2204
      %v2206 = vmul.f32 %v2200, %v2205
      %v2207 = vadd.f32 %v2204, %v2206
      %vm2208 = vcmp.gt.s32.totalorder %v544, 8
      %v2209 = vsel %vm2208, 1, 0
      %2210 = vset.pattern.permute.xlu0 0
      %2211 = vperm.xlu0 %2210, %v2209
      %v2212 = vpop.permute.xlu0 %2211
      %vm2213 = vcmp.eq.s32.totalorder %v2212, 1
      %v2214 = vsel %vm2213, %v2207, %v2039
      %2215 = vst [vmem:[#allocation4] sm:$0xff] %v2214
      %v2216 = vsel %vm2213, %v2207, 0.0
      %s2217 = scalar_lea.vmem [#allocation3], 64
      %2218 = vst [vmem:[%s2217] sm:$0xff] %v2216
      %v2219 = vld [vmem:[#allocation4] sm:$0xff]
      %s2220 = smul.u32 9, 3
      %s2221 = smul.addr %s2220, 8
      %s2222 = scalar_lea.vmem [#allocation2], %s2221
      %v2223 = vld [vmem:[%s2222] sm:$0xff]
      %v2224 = vld [vmem:[%s2222 + $0x8] sm:$0xff]
      %v2225 = vld [vmem:[%s2222 + $0x10] sm:$0xff]
      %2226 = vmatprep.subr.mxu0 %v553
      %2227 = vmatpush1.msra.mxu0 %v552
      %2228 = vmatprep.subr.mxu0 %v556
      %2229 = vmatpush1.msra.mxu0 %v555
      %2230 = vmatprep.subr.mxu0 %v559
      %2231 = vmatpush1.msra.mxu0 %v558
      %2232 = vmatprep.subr.mxu0 %v562
      %2233 = vmatpush1.msra.mxu0 %v561
      %2234 = vmatprep.subr.mxu0 %v565
      %2235 = vmatpush1.msra.mxu0 %v564
      %2236 = vmatprep.subr.mxu0 %v568
      %2237 = vmatpush1.msra.mxu0 %v567
      %2238 = vmatprep.subr.mxu0 %v571
      %2239 = vmatpush1.msra.mxu0 %v570
      %2240 = vmatprep.subr.mxu0 %v574
      %2241 = vmatpush1.msra.mxu0 %v573
      %2242 = vmatprep.subr.mxu0 %v577
      %2243 = vmatpush1.msra.mxu0 %v576
      %2244 = vmatprep.subr.mxu0 %v580
      %2245 = vmatpush1.msra.mxu0 %v579
      %2246 = vmatprep.subr.mxu0 %v583
      %2247 = vmatpush1.msra.mxu0 %v582
      %2248 = vmatprep.subr.mxu0 %v586
      %2249 = vmatpush1.msra.mxu0 %v585
      %2250 = vmatprep.subr.mxu0 %v589
      %2251 = vmatpush1.msra.mxu0 %v588
      %2252 = vmatprep.subr.mxu0 %v592
      %2253 = vmatpush1.msra.mxu0 %v591
      %2254 = vmatprep.subr.mxu0 %v595
      %2255 = vmatpush1.msra.mxu0 %v594
      %2256 = vmatprep.subr.mxu0 %v598
      %2257 = vmatpush1.msra.mxu0 %v597
      %2258 = vmatprep.subr.mxu0 0.0
      %2259 = vmatpush1.msra.mxu0 0.0
      %2260 = vmatprep.subr.mxu0 0.0
      %2261 = vmatpush1.msra.mxu0 0.0
      %2262 = vmatprep.subr.mxu0 0.0
      %2263 = vmatpush1.msra.mxu0 0.0
      %2264 = vmatprep.subr.mxu0 0.0
      %2265 = vmatpush1.msra.mxu0 0.0
      %2266 = vmatprep.subr.mxu0 0.0
      %2267 = vmatpush1.msra.mxu0 0.0
      %2268 = vmatprep.subr.mxu0 0.0
      %2269 = vmatpush1.msra.mxu0 0.0
      %2270 = vmatprep.subr.mxu0 0.0
      %2271 = vmatpush1.msra.mxu0 0.0
      %2272 = vmatprep.subr.mxu0 0.0
      %2273 = vmatpush1.msra.mxu0 0.0
      %2274 = vmatprep.subr.mxu0 0.0
      %2275 = vmatpush1.msra.mxu0 0.0
      %2276 = vmatprep.subr.mxu0 0.0
      %2277 = vmatpush1.msra.mxu0 0.0
      %2278 = vmatprep.subr.mxu0 0.0
      %2279 = vmatpush1.msra.mxu0 0.0
      %2280 = vmatprep.subr.mxu0 0.0
      %2281 = vmatpush1.msra.mxu0 0.0
      %2282 = vmatprep.subr.mxu0 0.0
      %2283 = vmatpush1.msra.mxu0 0.0
      %2284 = vmatprep.subr.mxu0 0.0
      %2285 = vmatpush1.msra.mxu0 0.0
      %2286 = vmatprep.subr.mxu0 0.0
      %2287 = vmatpush1.msra.mxu0 0.0
      %2288 = vmatprep.subr.mxu0 0.0
      %2289 = vmatpush1.msra.mxu0 0.0
      %2290 = vmatprep.mubr.f32.mxu0 0.0
      %2291 = vmatmul.mubr.f32.gmra.mrb[0].mxu0 %v2219
      %v2292 = vpop.f32.mrb[0].mxu0
      %v2293 = vadd.f32 0.0, %v2292
      %v2294 = vpop.f32.mrb[0].mxu0
      %v2295 = vadd.f32 0.0, %v2294
      %2296 = vdwg.mxu0
      %2297 = vmatprep.subr.mxu0 0.0
      %2298 = vmatpush1.msra.mxu0 %v554
      %2299 = vmatprep.subr.mxu0 0.0
      %2300 = vmatpush1.msra.mxu0 %v557
      %2301 = vmatprep.subr.mxu0 0.0
      %2302 = vmatpush1.msra.mxu0 %v560
      %2303 = vmatprep.subr.mxu0 0.0
      %2304 = vmatpush1.msra.mxu0 %v563
      %2305 = vmatprep.subr.mxu0 0.0
      %2306 = vmatpush1.msra.mxu0 %v566
      %2307 = vmatprep.subr.mxu0 0.0
      %2308 = vmatpush1.msra.mxu0 %v569
      %2309 = vmatprep.subr.mxu0 0.0
      %2310 = vmatpush1.msra.mxu0 %v572
      %2311 = vmatprep.subr.mxu0 0.0
      %2312 = vmatpush1.msra.mxu0 %v575
      %2313 = vmatprep.subr.mxu0 0.0
      %2314 = vmatpush1.msra.mxu0 %v578
      %2315 = vmatprep.subr.mxu0 0.0
      %2316 = vmatpush1.msra.mxu0 %v581
      %2317 = vmatprep.subr.mxu0 0.0
      %2318 = vmatpush1.msra.mxu0 %v584
      %2319 = vmatprep.subr.mxu0 0.0
      %2320 = vmatpush1.msra.mxu0 %v587
      %2321 = vmatprep.subr.mxu0 0.0
      %2322 = vmatpush1.msra.mxu0 %v590
      %2323 = vmatprep.subr.mxu0 0.0
      %2324 = vmatpush1.msra.mxu0 %v593
      %2325 = vmatprep.subr.mxu0 0.0
      %2326 = vmatpush1.msra.mxu0 %v596
      %2327 = vmatprep.subr.mxu0 0.0
      %2328 = vmatpush1.msra.mxu0 %v599
      %2329 = vmatprep.subr.mxu0 0.0
      %2330 = vmatpush1.msra.mxu0 0.0
      %2331 = vmatprep.subr.mxu0 0.0
      %2332 = vmatpush1.msra.mxu0 0.0
      %2333 = vmatprep.subr.mxu0 0.0
      %2334 = vmatpush1.msra.mxu0 0.0
      %2335 = vmatprep.subr.mxu0 0.0
      %2336 = vmatpush1.msra.mxu0 0.0
      %2337 = vmatprep.subr.mxu0 0.0
      %2338 = vmatpush1.msra.mxu0 0.0
      %2339 = vmatprep.subr.mxu0 0.0
      %2340 = vmatpush1.msra.mxu0 0.0
      %2341 = vmatprep.subr.mxu0 0.0
      %2342 = vmatpush1.msra.mxu0 0.0
      %2343 = vmatprep.subr.mxu0 0.0
      %2344 = vmatpush1.msra.mxu0 0.0
      %2345 = vmatprep.subr.mxu0 0.0
      %2346 = vmatpush1.msra.mxu0 0.0
      %2347 = vmatprep.subr.mxu0 0.0
      %2348 = vmatpush1.msra.mxu0 0.0
      %2349 = vmatprep.subr.mxu0 0.0
      %2350 = vmatpush1.msra.mxu0 0.0
      %2351 = vmatprep.subr.mxu0 0.0
      %2352 = vmatpush1.msra.mxu0 0.0
      %2353 = vmatprep.subr.mxu0 0.0
      %2354 = vmatpush1.msra.mxu0 0.0
      %2355 = vmatprep.subr.mxu0 0.0
      %2356 = vmatpush1.msra.mxu0 0.0
      %2357 = vmatprep.subr.mxu0 0.0
      %2358 = vmatpush1.msra.mxu0 0.0
      %2359 = vmatprep.subr.mxu0 0.0
      %2360 = vmatpush1.msra.mxu0 0.0
      %2361 = vmatprep.mubr.f32.mxu0 0.0
      %2362 = vmatmul.mubr.f32.gmra.mrb[0].mxu0 %v2219
      %v2363 = vpop.f32.mrb[0].mxu0
      %v2364 = vadd.f32 0.0, %v2363
      %v2365 = vpop.f32.mrb[0].mxu0
      %2366 = vdwg.mxu0
      %v2367 = vadd.f32 %v2223, %v2293
      %v2368 = vxor.u32 %v2367, 2147483648
      %v2369 = vmul.f32 %v2368, 1.442695
      %v2370 = vpow.pop %v2369
      %v2371 = vadd.f32 %v2370, 1.0
      %v2372 = vrcp.pop %v2371
      %v2373 = vmul.f32 1.0, %v2372
      %v2374 = vadd.f32 %v2224, %v2295
      %v2375 = vxor.u32 %v2374, 2147483648
      %v2376 = vmul.f32 %v2375, 1.442695
      %v2377 = vpow.pop %v2376
      %v2378 = vadd.f32 %v2377, 1.0
      %v2379 = vrcp.pop %v2378
      %v2380 = vmul.f32 1.0, %v2379
      %v2381 = vadd.f32 %v2364, %v550
      %v2382 = vmul.f32 %v2373, %v2381
      %v2383 = vadd.f32 %v2225, %v2382
      %v2384 = vtanh.pop %v2383
      %v2385 = vsub.f32 %v2219, %v2384
      %v2386 = vmul.f32 %v2380, %v2385
      %v2387 = vadd.f32 %v2384, %v2386
      %vm2388 = vcmp.gt.s32.totalorder %v544, 9
      %v2389 = vsel %vm2388, 1, 0
      %2390 = vset.pattern.permute.xlu0 0
      %2391 = vperm.xlu0 %2390, %v2389
      %v2392 = vpop.permute.xlu0 %2391
      %vm2393 = vcmp.eq.s32.totalorder %v2392, 1
      %v2394 = vsel %vm2393, %v2387, %v2219
      %2395 = vst [vmem:[#allocation4] sm:$0xff] %v2394
      %v2396 = vsel %vm2393, %v2387, 0.0
      %s2397 = scalar_lea.vmem [#allocation3], 72
      %2398 = vst [vmem:[%s2397] sm:$0xff] %v2396
      %v2399 = vld [vmem:[#allocation4] sm:$0xff]
      %s2400 = smul.u32 10, 3
      %s2401 = smul.addr %s2400, 8
      %s2402 = scalar_lea.vmem [#allocation2], %s2401
      %v2403 = vld [vmem:[%s2402] sm:$0xff]
      %v2404 = vld [vmem:[%s2402 + $0x8] sm:$0xff]
      %v2405 = vld [vmem:[%s2402 + $0x10] sm:$0xff]
      %2406 = vmatprep.subr.mxu0 %v553
      %2407 = vmatpush1.msra.mxu0 %v552
      %2408 = vmatprep.subr.mxu0 %v556
      %2409 = vmatpush1.msra.mxu0 %v555
      %2410 = vmatprep.subr.mxu0 %v559
      %2411 = vmatpush1.msra.mxu0 %v558
      %2412 = vmatprep.subr.mxu0 %v562
      %2413 = vmatpush1.msra.mxu0 %v561
      %2414 = vmatprep.subr.mxu0 %v565
      %2415 = vmatpush1.msra.mxu0 %v564
      %2416 = vmatprep.subr.mxu0 %v568
      %2417 = vmatpush1.msra.mxu0 %v567
      %2418 = vmatprep.subr.mxu0 %v571
      %2419 = vmatpush1.msra.mxu0 %v570
      %2420 = vmatprep.subr.mxu0 %v574
      %2421 = vmatpush1.msra.mxu0 %v573
      %2422 = vmatprep.subr.mxu0 %v577
      %2423 = vmatpush1.msra.mxu0 %v576
      %2424 = vmatprep.subr.mxu0 %v580
      %2425 = vmatpush1.msra.mxu0 %v579
      %2426 = vmatprep.subr.mxu0 %v583
      %2427 = vmatpush1.msra.mxu0 %v582
      %2428 = vmatprep.subr.mxu0 %v586
      %2429 = vmatpush1.msra.mxu0 %v585
      %2430 = vmatprep.subr.mxu0 %v589
      %2431 = vmatpush1.msra.mxu0 %v588
      %2432 = vmatprep.subr.mxu0 %v592
      %2433 = vmatpush1.msra.mxu0 %v591
      %2434 = vmatprep.subr.mxu0 %v595
      %2435 = vmatpush1.msra.mxu0 %v594
      %2436 = vmatprep.subr.mxu0 %v598
      %2437 = vmatpush1.msra.mxu0 %v597
      %2438 = vmatprep.subr.mxu0 0.0
      %2439 = vmatpush1.msra.mxu0 0.0
      %2440 = vmatprep.subr.mxu0 0.0
      %2441 = vmatpush1.msra.mxu0 0.0
      %2442 = vmatprep.subr.mxu0 0.0
      %2443 = vmatpush1.msra.mxu0 0.0
      %2444 = vmatprep.subr.mxu0 0.0
      %2445 = vmatpush1.msra.mxu0 0.0
      %2446 = vmatprep.subr.mxu0 0.0
      %2447 = vmatpush1.msra.mxu0 0.0
      %2448 = vmatprep.subr.mxu0 0.0
      %2449 = vmatpush1.msra.mxu0 0.0
      %2450 = vmatprep.subr.mxu0 0.0
      %2451 = vmatpush1.msra.mxu0 0.0
      %2452 = vmatprep.subr.mxu0 0.0
      %2453 = vmatpush1.msra.mxu0 0.0
      %2454 = vmatprep.subr.mxu0 0.0
      %2455 = vmatpush1.msra.mxu0 0.0
      %2456 = vmatprep.subr.mxu0 0.0
      %2457 = vmatpush1.msra.mxu0 0.0
      %2458 = vmatprep.subr.mxu0 0.0
      %2459 = vmatpush1.msra.mxu0 0.0
      %2460 = vmatprep.subr.mxu0 0.0
      %2461 = vmatpush1.msra.mxu0 0.0
      %2462 = vmatprep.subr.mxu0 0.0
      %2463 = vmatpush1.msra.mxu0 0.0
      %2464 = vmatprep.subr.mxu0 0.0
      %2465 = vmatpush1.msra.mxu0 0.0
      %2466 = vmatprep.subr.mxu0 0.0
      %2467 = vmatpush1.msra.mxu0 0.0
      %2468 = vmatprep.subr.mxu0 0.0
      %2469 = vmatpush1.msra.mxu0 0.0
      %2470 = vmatprep.mubr.f32.mxu0 0.0
      %2471 = vmatmul.mubr.f32.gmra.mrb[0].mxu0 %v2399
      %v2472 = vpop.f32.mrb[0].mxu0
      %v2473 = vadd.f32 0.0, %v2472
      %v2474 = vpop.f32.mrb[0].mxu0
      %v2475 = vadd.f32 0.0, %v2474
      %2476 = vdwg.mxu0
      %2477 = vmatprep.subr.mxu0 0.0
      %2478 = vmatpush1.msra.mxu0 %v554
      %2479 = vmatprep.subr.mxu0 0.0
      %2480 = vmatpush1.msra.mxu0 %v557
      %2481 = vmatprep.subr.mxu0 0.0
      %2482 = vmatpush1.msra.mxu0 %v560
      %2483 = vmatprep.subr.mxu0 0.0
      %2484 = vmatpush1.msra.mxu0 %v563
      %2485 = vmatprep.subr.mxu0 0.0
      %2486 = vmatpush1.msra.mxu0 %v566
      %2487 = vmatprep.subr.mxu0 0.0
      %2488 = vmatpush1.msra.mxu0 %v569
      %2489 = vmatprep.subr.mxu0 0.0
      %2490 = vmatpush1.msra.mxu0 %v572
      %2491 = vmatprep.subr.mxu0 0.0
      %2492 = vmatpush1.msra.mxu0 %v575
      %2493 = vmatprep.subr.mxu0 0.0
      %2494 = vmatpush1.msra.mxu0 %v578
      %2495 = vmatprep.subr.mxu0 0.0
      %2496 = vmatpush1.msra.mxu0 %v581
      %2497 = vmatprep.subr.mxu0 0.0
      %2498 = vmatpush1.msra.mxu0 %v584
      %2499 = vmatprep.subr.mxu0 0.0
      %2500 = vmatpush1.msra.mxu0 %v587
      %2501 = vmatprep.subr.mxu0 0.0
      %2502 = vmatpush1.msra.mxu0 %v590
      %2503 = vmatprep.subr.mxu0 0.0
      %2504 = vmatpush1.msra.mxu0 %v593
      %2505 = vmatprep.subr.mxu0 0.0
      %2506 = vmatpush1.msra.mxu0 %v596
      %2507 = vmatprep.subr.mxu0 0.0
      %2508 = vmatpush1.msra.mxu0 %v599
      %2509 = vmatprep.subr.mxu0 0.0
      %2510 = vmatpush1.msra.mxu0 0.0
      %2511 = vmatprep.subr.mxu0 0.0
      %2512 = vmatpush1.msra.mxu0 0.0
      %2513 = vmatprep.subr.mxu0 0.0
      %2514 = vmatpush1.msra.mxu0 0.0
      %2515 = vmatprep.subr.mxu0 0.0
      %2516 = vmatpush1.msra.mxu0 0.0
      %2517 = vmatprep.subr.mxu0 0.0
      %2518 = vmatpush1.msra.mxu0 0.0
      %2519 = vmatprep.subr.mxu0 0.0
      %2520 = vmatpush1.msra.mxu0 0.0
      %2521 = vmatprep.subr.mxu0 0.0
      %2522 = vmatpush1.msra.mxu0 0.0
      %2523 = vmatprep.subr.mxu0 0.0
      %2524 = vmatpush1.msra.mxu0 0.0
      %2525 = vmatprep.subr.mxu0 0.0
      %2526 = vmatpush1.msra.mxu0 0.0
      %2527 = vmatprep.subr.mxu0 0.0
      %2528 = vmatpush1.msra.mxu0 0.0
      %2529 = vmatprep.subr.mxu0 0.0
      %2530 = vmatpush1.msra.mxu0 0.0
      %2531 = vmatprep.subr.mxu0 0.0
      %2532 = vmatpush1.msra.mxu0 0.0
      %2533 = vmatprep.subr.mxu0 0.0
      %2534 = vmatpush1.msra.mxu0 0.0
      %2535 = vmatprep.subr.mxu0 0.0
      %2536 = vmatpush1.msra.mxu0 0.0
      %2537 = vmatprep.subr.mxu0 0.0
      %2538 = vmatpush1.msra.mxu0 0.0
      %2539 = vmatprep.subr.mxu0 0.0
      %2540 = vmatpush1.msra.mxu0 0.0
      %2541 = vmatprep.mubr.f32.mxu0 0.0
      %2542 = vmatmul.mubr.f32.gmra.mrb[0].mxu0 %v2399
      %v2543 = vpop.f32.mrb[0].mxu0
      %v2544 = vadd.f32 0.0, %v2543
      %v2545 = vpop.f32.mrb[0].mxu0
      %2546 = vdwg.mxu0
      %v2547 = vadd.f32 %v2403, %v2473
      %v2548 = vxor.u32 %v2547, 2147483648
      %v2549 = vmul.f32 %v2548, 1.442695
      %v2550 = vpow.pop %v2549
      %v2551 = vadd.f32 %v2550, 1.0
      %v2552 = vrcp.pop %v2551
      %v2553 = vmul.f32 1.0, %v2552
      %v2554 = vadd.f32 %v2404, %v2475
      %v2555 = vxor.u32 %v2554, 2147483648
      %v2556 = vmul.f32 %v2555, 1.442695
      %v2557 = vpow.pop %v2556
      %v2558 = vadd.f32 %v2557, 1.0
      %v2559 = vrcp.pop %v2558
      %v2560 = vmul.f32 1.0, %v2559
      %v2561 = vadd.f32 %v2544, %v550
      %v2562 = vmul.f32 %v2553, %v2561
      %v2563 = vadd.f32 %v2405, %v2562
      %v2564 = vtanh.pop %v2563
      %v2565 = vsub.f32 %v2399, %v2564
      %v2566 = vmul.f32 %v2560, %v2565
      %v2567 = vadd.f32 %v2564, %v2566
      %vm2568 = vcmp.gt.s32.totalorder %v544, 10
      %v2569 = vsel %vm2568, 1, 0
      %2570 = vset.pattern.permute.xlu0 0
      %2571 = vperm.xlu0 %2570, %v2569
      %v2572 = vpop.permute.xlu0 %2571
      %vm2573 = vcmp.eq.s32.totalorder %v2572, 1
      %v2574 = vsel %vm2573, %v2567, %v2399
      %2575 = vst [vmem:[#allocation4] sm:$0xff] %v2574
      %v2576 = vsel %vm2573, %v2567, 0.0
      %s2577 = scalar_lea.vmem [#allocation3], 80
      %2578 = vst [vmem:[%s2577] sm:$0xff] %v2576
      %v2579 = vld [vmem:[#allocation4] sm:$0xff]
      %s2580 = smul.u32 11, 3
      %s2581 = smul.addr %s2580, 8
      %s2582 = scalar_lea.vmem [#allocation2], %s2581
      %v2583 = vld [vmem:[%s2582] sm:$0xff]
      %v2584 = vld [vmem:[%s2582 + $0x8] sm:$0xff]
      %v2585 = vld [vmem:[%s2582 + $0x10] sm:$0xff]
      %2586 = vmatprep.subr.mxu0 %v553
      %2587 = vmatpush1.msra.mxu0 %v552
      %2588 = vmatprep.subr.mxu0 %v556
      %2589 = vmatpush1.msra.mxu0 %v555
      %2590 = vmatprep.subr.mxu0 %v559
      %2591 = vmatpush1.msra.mxu0 %v558
      %2592 = vmatprep.subr.mxu0 %v562
      %2593 = vmatpush1.msra.mxu0 %v561
      %2594 = vmatprep.subr.mxu0 %v565
      %2595 = vmatpush1.msra.mxu0 %v564
      %2596 = vmatprep.subr.mxu0 %v568
      %2597 = vmatpush1.msra.mxu0 %v567
      %2598 = vmatprep.subr.mxu0 %v571
      %2599 = vmatpush1.msra.mxu0 %v570
      %2600 = vmatprep.subr.mxu0 %v574
      %2601 = vmatpush1.msra.mxu0 %v573
      %2602 = vmatprep.subr.mxu0 %v577
      %2603 = vmatpush1.msra.mxu0 %v576
      %2604 = vmatprep.subr.mxu0 %v580
      %2605 = vmatpush1.msra.mxu0 %v579
      %2606 = vmatprep.subr.mxu0 %v583
      %2607 = vmatpush1.msra.mxu0 %v582
      %2608 = vmatprep.subr.mxu0 %v586
      %2609 = vmatpush1.msra.mxu0 %v585
      %2610 = vmatprep.subr.mxu0 %v589
      %2611 = vmatpush1.msra.mxu0 %v588
      %2612 = vmatprep.subr.mxu0 %v592
      %2613 = vmatpush1.msra.mxu0 %v591
      %2614 = vmatprep.subr.mxu0 %v595
      %2615 = vmatpush1.msra.mxu0 %v594
      %2616 = vmatprep.subr.mxu0 %v598
      %2617 = vmatpush1.msra.mxu0 %v597
      %2618 = vmatprep.subr.mxu0 0.0
      %2619 = vmatpush1.msra.mxu0 0.0
      %2620 = vmatprep.subr.mxu0 0.0
      %2621 = vmatpush1.msra.mxu0 0.0
      %2622 = vmatprep.subr.mxu0 0.0
      %2623 = vmatpush1.msra.mxu0 0.0
      %2624 = vmatprep.subr.mxu0 0.0
      %2625 = vmatpush1.msra.mxu0 0.0
      %2626 = vmatprep.subr.mxu0 0.0
      %2627 = vmatpush1.msra.mxu0 0.0
      %2628 = vmatprep.subr.mxu0 0.0
      %2629 = vmatpush1.msra.mxu0 0.0
      %2630 = vmatprep.subr.mxu0 0.0
      %2631 = vmatpush1.msra.mxu0 0.0
      %2632 = vmatprep.subr.mxu0 0.0
      %2633 = vmatpush1.msra.mxu0 0.0
      %2634 = vmatprep.subr.mxu0 0.0
      %2635 = vmatpush1.msra.mxu0 0.0
      %2636 = vmatprep.subr.mxu0 0.0
      %2637 = vmatpush1.msra.mxu0 0.0
      %2638 = vmatprep.subr.mxu0 0.0
      %2639 = vmatpush1.msra.mxu0 0.0
      %2640 = vmatprep.subr.mxu0 0.0
      %2641 = vmatpush1.msra.mxu0 0.0
      %2642 = vmatprep.subr.mxu0 0.0
      %2643 = vmatpush1.msra.mxu0 0.0
      %2644 = vmatprep.subr.mxu0 0.0
      %2645 = vmatpush1.msra.mxu0 0.0
      %2646 = vmatprep.subr.mxu0 0.0
      %2647 = vmatpush1.msra.mxu0 0.0
      %2648 = vmatprep.subr.mxu0 0.0
      %2649 = vmatpush1.msra.mxu0 0.0
      %2650 = vmatprep.mubr.f32.mxu0 0.0
      %2651 = vmatmul.mubr.f32.gmra.mrb[0].mxu0 %v2579
      %v2652 = vpop.f32.mrb[0].mxu0
      %v2653 = vadd.f32 0.0, %v2652
      %v2654 = vpop.f32.mrb[0].mxu0
      %v2655 = vadd.f32 0.0, %v2654
      %2656 = vdwg.mxu0
      %2657 = vmatprep.subr.mxu0 0.0
      %2658 = vmatpush1.msra.mxu0 %v554
      %2659 = vmatprep.subr.mxu0 0.0
      %2660 = vmatpush1.msra.mxu0 %v557
      %2661 = vmatprep.subr.mxu0 0.0
      %2662 = vmatpush1.msra.mxu0 %v560
      %2663 = vmatprep.subr.mxu0 0.0
      %2664 = vmatpush1.msra.mxu0 %v563
      %2665 = vmatprep.subr.mxu0 0.0
      %2666 = vmatpush1.msra.mxu0 %v566
      %2667 = vmatprep.subr.mxu0 0.0
      %2668 = vmatpush1.msra.mxu0 %v569
      %2669 = vmatprep.subr.mxu0 0.0
      %2670 = vmatpush1.msra.mxu0 %v572
      %2671 = vmatprep.subr.mxu0 0.0
      %2672 = vmatpush1.msra.mxu0 %v575
      %2673 = vmatprep.subr.mxu0 0.0
      %2674 = vmatpush1.msra.mxu0 %v578
      %2675 = vmatprep.subr.mxu0 0.0
      %2676 = vmatpush1.msra.mxu0 %v581
      %2677 = vmatprep.subr.mxu0 0.0
      %2678 = vmatpush1.msra.mxu0 %v584
      %2679 = vmatprep.subr.mxu0 0.0
      %2680 = vmatpush1.msra.mxu0 %v587
      %2681 = vmatprep.subr.mxu0 0.0
      %2682 = vmatpush1.msra.mxu0 %v590
      %2683 = vmatprep.subr.mxu0 0.0
      %2684 = vmatpush1.msra.mxu0 %v593
      %2685 = vmatprep.subr.mxu0 0.0
      %2686 = vmatpush1.msra.mxu0 %v596
      %2687 = vmatprep.subr.mxu0 0.0
      %2688 = vmatpush1.msra.mxu0 %v599
      %2689 = vmatprep.subr.mxu0 0.0
      %2690 = vmatpush1.msra.mxu0 0.0
      %2691 = vmatprep.subr.mxu0 0.0
      %2692 = vmatpush1.msra.mxu0 0.0
      %2693 = vmatprep.subr.mxu0 0.0
      %2694 = vmatpush1.msra.mxu0 0.0
      %2695 = vmatprep.subr.mxu0 0.0
      %2696 = vmatpush1.msra.mxu0 0.0
      %2697 = vmatprep.subr.mxu0 0.0
      %2698 = vmatpush1.msra.mxu0 0.0
      %2699 = vmatprep.subr.mxu0 0.0
      %2700 = vmatpush1.msra.mxu0 0.0
      %2701 = vmatprep.subr.mxu0 0.0
      %2702 = vmatpush1.msra.mxu0 0.0
      %2703 = vmatprep.subr.mxu0 0.0
      %2704 = vmatpush1.msra.mxu0 0.0
      %2705 = vmatprep.subr.mxu0 0.0
      %2706 = vmatpush1.msra.mxu0 0.0
      %2707 = vmatprep.subr.mxu0 0.0
      %2708 = vmatpush1.msra.mxu0 0.0
      %2709 = vmatprep.subr.mxu0 0.0
      %2710 = vmatpush1.msra.mxu0 0.0
      %2711 = vmatprep.subr.mxu0 0.0
      %2712 = vmatpush1.msra.mxu0 0.0
      %2713 = vmatprep.subr.mxu0 0.0
      %2714 = vmatpush1.msra.mxu0 0.0
      %2715 = vmatprep.subr.mxu0 0.0
      %2716 = vmatpush1.msra.mxu0 0.0
      %2717 = vmatprep.subr.mxu0 0.0
      %2718 = vmatpush1.msra.mxu0 0.0
      %2719 = vmatprep.subr.mxu0 0.0
      %2720 = vmatpush1.msra.mxu0 0.0
      %2721 = vmatprep.mubr.f32.mxu0 0.0
      %2722 = vmatmul.mubr.f32.gmra.mrb[0].mxu0 %v2579
      %v2723 = vpop.f32.mrb[0].mxu0
      %v2724 = vadd.f32 0.0, %v2723
      %v2725 = vpop.f32.mrb[0].mxu0
      %2726 = vdwg.mxu0
      %v2727 = vadd.f32 %v2583, %v2653
      %v2728 = vxor.u32 %v2727, 2147483648
      %v2729 = vmul.f32 %v2728, 1.442695
      %v2730 = vpow.pop %v2729
      %v2731 = vadd.f32 %v2730, 1.0
      %v2732 = vrcp.pop %v2731
      %v2733 = vmul.f32 1.0, %v2732
      %v2734 = vadd.f32 %v2584, %v2655
      %v2735 = vxor.u32 %v2734, 2147483648
      %v2736 = vmul.f32 %v2735, 1.442695
      %v2737 = vpow.pop %v2736
      %v2738 = vadd.f32 %v2737, 1.0
      %v2739 = vrcp.pop %v2738
      %v2740 = vmul.f32 1.0, %v2739
      %v2741 = vadd.f32 %v2724, %v550
      %v2742 = vmul.f32 %v2733, %v2741
      %v2743 = vadd.f32 %v2585, %v2742
      %v2744 = vtanh.pop %v2743
      %v2745 = vsub.f32 %v2579, %v2744
      %v2746 = vmul.f32 %v2740, %v2745
      %v2747 = vadd.f32 %v2744, %v2746
      %vm2748 = vcmp.gt.s32.totalorder %v544, 11
      %v2749 = vsel %vm2748, 1, 0
      %2750 = vset.pattern.permute.xlu0 0
      %2751 = vperm.xlu0 %2750, %v2749
      %v2752 = vpop.permute.xlu0 %2751
      %vm2753 = vcmp.eq.s32.totalorder %v2752, 1
      %v2754 = vsel %vm2753, %v2747, %v2579
      %2755 = vst [vmem:[#allocation4] sm:$0xff] %v2754
      %v2756 = vsel %vm2753, %v2747, 0.0
      %s2757 = scalar_lea.vmem [#allocation3], 88
      %2758 = vst [vmem:[%s2757] sm:$0xff] %v2756
      %v2759 = vld [vmem:[#allocation4] sm:$0xff]
      %s2760 = smul.u32 12, 3
      %s2761 = smul.addr %s2760, 8
      %s2762 = scalar_lea.vmem [#allocation2], %s2761
      %v2763 = vld [vmem:[%s2762] sm:$0xff]
      %v2764 = vld [vmem:[%s2762 + $0x8] sm:$0xff]
      %v2765 = vld [vmem:[%s2762 + $0x10] sm:$0xff]
      %2766 = vmatprep.subr.mxu0 %v553
      %2767 = vmatpush1.msra.mxu0 %v552
      %2768 = vmatprep.subr.mxu0 %v556
      %2769 = vmatpush1.msra.mxu0 %v555
      %2770 = vmatprep.subr.mxu0 %v559
      %2771 = vmatpush1.msra.mxu0 %v558
      %2772 = vmatprep.subr.mxu0 %v562
      %2773 = vmatpush1.msra.mxu0 %v561
      %2774 = vmatprep.subr.mxu0 %v565
      %2775 = vmatpush1.msra.mxu0 %v564
      %2776 = vmatprep.subr.mxu0 %v568
      %2777 = vmatpush1.msra.mxu0 %v567
      %2778 = vmatprep.subr.mxu0 %v571
      %2779 = vmatpush1.msra.mxu0 %v570
      %2780 = vmatprep.subr.mxu0 %v574
      %2781 = vmatpush1.msra.mxu0 %v573
      %2782 = vmatprep.subr.mxu0 %v577
      %2783 = vmatpush1.msra.mxu0 %v576
      %2784 = vmatprep.subr.mxu0 %v580
      %2785 = vmatpush1.msra.mxu0 %v579
      %2786 = vmatprep.subr.mxu0 %v583
      %2787 = vmatpush1.msra.mxu0 %v582
      %2788 = vmatprep.subr.mxu0 %v586
      %2789 = vmatpush1.msra.mxu0 %v585
      %2790 = vmatprep.subr.mxu0 %v589
      %2791 = vmatpush1.msra.mxu0 %v588
      %2792 = vmatprep.subr.mxu0 %v592
      %2793 = vmatpush1.msra.mxu0 %v591
      %2794 = vmatprep.subr.mxu0 %v595
      %2795 = vmatpush1.msra.mxu0 %v594
      %2796 = vmatprep.subr.mxu0 %v598
      %2797 = vmatpush1.msra.mxu0 %v597
      %2798 = vmatprep.subr.mxu0 0.0
      %2799 = vmatpush1.msra.mxu0 0.0
      %2800 = vmatprep.subr.mxu0 0.0
      %2801 = vmatpush1.msra.mxu0 0.0
      %2802 = vmatprep.subr.mxu0 0.0
      %2803 = vmatpush1.msra.mxu0 0.0
      %2804 = vmatprep.subr.mxu0 0.0
      %2805 = vmatpush1.msra.mxu0 0.0
      %2806 = vmatprep.subr.mxu0 0.0
      %2807 = vmatpush1.msra.mxu0 0.0
      %2808 = vmatprep.subr.mxu0 0.0
      %2809 = vmatpush1.msra.mxu0 0.0
      %2810 = vmatprep.subr.mxu0 0.0
      %2811 = vmatpush1.msra.mxu0 0.0
      %2812 = vmatprep.subr.mxu0 0.0
      %2813 = vmatpush1.msra.mxu0 0.0
      %2814 = vmatprep.subr.mxu0 0.0
      %2815 = vmatpush1.msra.mxu0 0.0
      %2816 = vmatprep.subr.mxu0 0.0
      %2817 = vmatpush1.msra.mxu0 0.0
      %2818 = vmatprep.subr.mxu0 0.0
      %2819 = vmatpush1.msra.mxu0 0.0
      %2820 = vmatprep.subr.mxu0 0.0
      %2821 = vmatpush1.msra.mxu0 0.0
      %2822 = vmatprep.subr.mxu0 0.0
      %2823 = vmatpush1.msra.mxu0 0.0
      %2824 = vmatprep.subr.mxu0 0.0
      %2825 = vmatpush1.msra.mxu0 0.0
      %2826 = vmatprep.subr.mxu0 0.0
      %2827 = vmatpush1.msra.mxu0 0.0
      %2828 = vmatprep.subr.mxu0 0.0
      %2829 = vmatpush1.msra.mxu0 0.0
      %2830 = vmatprep.mubr.f32.mxu0 0.0
      %2831 = vmatmul.mubr.f32.gmra.mrb[0].mxu0 %v2759
      %v2832 = vpop.f32.mrb[0].mxu0
      %v2833 = vadd.f32 0.0, %v2832
      %v2834 = vpop.f32.mrb[0].mxu0
      %v2835 = vadd.f32 0.0, %v2834
      %2836 = vdwg.mxu0
      %2837 = vmatprep.subr.mxu0 0.0
      %2838 = vmatpush1.msra.mxu0 %v554
      %2839 = vmatprep.subr.mxu0 0.0
      %2840 = vmatpush1.msra.mxu0 %v557
      %2841 = vmatprep.subr.mxu0 0.0
      %2842 = vmatpush1.msra.mxu0 %v560
      %2843 = vmatprep.subr.mxu0 0.0
      %2844 = vmatpush1.msra.mxu0 %v563
      %2845 = vmatprep.subr.mxu0 0.0
      %2846 = vmatpush1.msra.mxu0 %v566
      %2847 = vmatprep.subr.mxu0 0.0
      %2848 = vmatpush1.msra.mxu0 %v569
      %2849 = vmatprep.subr.mxu0 0.0
      %2850 = vmatpush1.msra.mxu0 %v572
      %2851 = vmatprep.subr.mxu0 0.0
      %2852 = vmatpush1.msra.mxu0 %v575
      %2853 = vmatprep.subr.mxu0 0.0
      %2854 = vmatpush1.msra.mxu0 %v578
      %2855 = vmatprep.subr.mxu0 0.0
      %2856 = vmatpush1.msra.mxu0 %v581
      %2857 = vmatprep.subr.mxu0 0.0
      %2858 = vmatpush1.msra.mxu0 %v584
      %2859 = vmatprep.subr.mxu0 0.0
      %2860 = vmatpush1.msra.mxu0 %v587
      %2861 = vmatprep.subr.mxu0 0.0
      %2862 = vmatpush1.msra.mxu0 %v590
      %2863 = vmatprep.subr.mxu0 0.0
      %2864 = vmatpush1.msra.mxu0 %v593
      %2865 = vmatprep.subr.mxu0 0.0
      %2866 = vmatpush1.msra.mxu0 %v596
      %2867 = vmatprep.subr.mxu0 0.0
      %2868 = vmatpush1.msra.mxu0 %v599
      %2869 = vmatprep.subr.mxu0 0.0
      %2870 = vmatpush1.msra.mxu0 0.0
      %2871 = vmatprep.subr.mxu0 0.0
      %2872 = vmatpush1.msra.mxu0 0.0
      %2873 = vmatprep.subr.mxu0 0.0
      %2874 = vmatpush1.msra.mxu0 0.0
      %2875 = vmatprep.subr.mxu0 0.0
      %2876 = vmatpush1.msra.mxu0 0.0
      %2877 = vmatprep.subr.mxu0 0.0
      %2878 = vmatpush1.msra.mxu0 0.0
      %2879 = vmatprep.subr.mxu0 0.0
      %2880 = vmatpush1.msra.mxu0 0.0
      %2881 = vmatprep.subr.mxu0 0.0
      %2882 = vmatpush1.msra.mxu0 0.0
      %2883 = vmatprep.subr.mxu0 0.0
      %2884 = vmatpush1.msra.mxu0 0.0
      %2885 = vmatprep.subr.mxu0 0.0
      %2886 = vmatpush1.msra.mxu0 0.0
      %2887 = vmatprep.subr.mxu0 0.0
      %2888 = vmatpush1.msra.mxu0 0.0
      %2889 = vmatprep.subr.mxu0 0.0
      %2890 = vmatpush1.msra.mxu0 0.0
      %2891 = vmatprep.subr.mxu0 0.0
      %2892 = vmatpush1.msra.mxu0 0.0
      %2893 = vmatprep.subr.mxu0 0.0
      %2894 = vmatpush1.msra.mxu0 0.0
      %2895 = vmatprep.subr.mxu0 0.0
      %2896 = vmatpush1.msra.mxu0 0.0
      %2897 = vmatprep.subr.mxu0 0.0
      %2898 = vmatpush1.msra.mxu0 0.0
      %2899 = vmatprep.subr.mxu0 0.0
      %2900 = vmatpush1.msra.mxu0 0.0
      %2901 = vmatprep.mubr.f32.mxu0 0.0
      %2902 = vmatmul.mubr.f32.gmra.mrb[0].mxu0 %v2759
      %v2903 = vpop.f32.mrb[0].mxu0
      %v2904 = vadd.f32 0.0, %v2903
      %v2905 = vpop.f32.mrb[0].mxu0
      %2906 = vdwg.mxu0
      %v2907 = vadd.f32 %v2763, %v2833
      %v2908 = vxor.u32 %v2907, 2147483648
      %v2909 = vmul.f32 %v2908, 1.442695
      %v2910 = vpow.pop %v2909
      %v2911 = vadd.f32 %v2910, 1.0
      %v2912 = vrcp.pop %v2911
      %v2913 = vmul.f32 1.0, %v2912
      %v2914 = vadd.f32 %v2764, %v2835
      %v2915 = vxor.u32 %v2914, 2147483648
      %v2916 = vmul.f32 %v2915, 1.442695
      %v2917 = vpow.pop %v2916
      %v2918 = vadd.f32 %v2917, 1.0
      %v2919 = vrcp.pop %v2918
      %v2920 = vmul.f32 1.0, %v2919
      %v2921 = vadd.f32 %v2904, %v550
      %v2922 = vmul.f32 %v2913, %v2921
      %v2923 = vadd.f32 %v2765, %v2922
      %v2924 = vtanh.pop %v2923
      %v2925 = vsub.f32 %v2759, %v2924
      %v2926 = vmul.f32 %v2920, %v2925
      %v2927 = vadd.f32 %v2924, %v2926
      %vm2928 = vcmp.gt.s32.totalorder %v544, 12
      %v2929 = vsel %vm2928, 1, 0
      %2930 = vset.pattern.permute.xlu0 0
      %2931 = vperm.xlu0 %2930, %v2929
      %v2932 = vpop.permute.xlu0 %2931
      %vm2933 = vcmp.eq.s32.totalorder %v2932, 1
      %v2934 = vsel %vm2933, %v2927, %v2759
      %2935 = vst [vmem:[#allocation4] sm:$0xff] %v2934
      %v2936 = vsel %vm2933, %v2927, 0.0
      %s2937 = scalar_lea.vmem [#allocation3], 96
      %2938 = vst [vmem:[%s2937] sm:$0xff] %v2936
      %v2939 = vld [vmem:[#allocation4] sm:$0xff]
      %s2940 = smul.u32 13, 3
      %s2941 = smul.addr %s2940, 8
      %s2942 = scalar_lea.vmem [#allocation2], %s2941
      %v2943 = vld [vmem:[%s2942] sm:$0xff]
      %v2944 = vld [vmem:[%s2942 + $0x8] sm:$0xff]
      %v2945 = vld [vmem:[%s2942 + $0x10] sm:$0xff]
      %2946 = vmatprep.subr.mxu0 %v553
      %2947 = vmatpush1.msra.mxu0 %v552
      %2948 = vmatprep.subr.mxu0 %v556
      %2949 = vmatpush1.msra.mxu0 %v555
      %2950 = vmatprep.subr.mxu0 %v559
      %2951 = vmatpush1.msra.mxu0 %v558
      %2952 = vmatprep.subr.mxu0 %v562
      %2953 = vmatpush1.msra.mxu0 %v561
      %2954 = vmatprep.subr.mxu0 %v565
      %2955 = vmatpush1.msra.mxu0 %v564
      %2956 = vmatprep.subr.mxu0 %v568
      %2957 = vmatpush1.msra.mxu0 %v567
      %2958 = vmatprep.subr.mxu0 %v571
      %2959 = vmatpush1.msra.mxu0 %v570
      %2960 = vmatprep.subr.mxu0 %v574
      %2961 = vmatpush1.msra.mxu0 %v573
      %2962 = vmatprep.subr.mxu0 %v577
      %2963 = vmatpush1.msra.mxu0 %v576
      %2964 = vmatprep.subr.mxu0 %v580
      %2965 = vmatpush1.msra.mxu0 %v579
      %2966 = vmatprep.subr.mxu0 %v583
      %2967 = vmatpush1.msra.mxu0 %v582
      %2968 = vmatprep.subr.mxu0 %v586
      %2969 = vmatpush1.msra.mxu0 %v585
      %2970 = vmatprep.subr.mxu0 %v589
      %2971 = vmatpush1.msra.mxu0 %v588
      %2972 = vmatprep.subr.mxu0 %v592
      %2973 = vmatpush1.msra.mxu0 %v591
      %2974 = vmatprep.subr.mxu0 %v595
      %2975 = vmatpush1.msra.mxu0 %v594
      %2976 = vmatprep.subr.mxu0 %v598
      %2977 = vmatpush1.msra.mxu0 %v597
      %2978 = vmatprep.subr.mxu0 0.0
      %2979 = vmatpush1.msra.mxu0 0.0
      %2980 = vmatprep.subr.mxu0 0.0
      %2981 = vmatpush1.msra.mxu0 0.0
      %2982 = vmatprep.subr.mxu0 0.0
      %2983 = vmatpush1.msra.mxu0 0.0
      %2984 = vmatprep.subr.mxu0 0.0
      %2985 = vmatpush1.msra.mxu0 0.0
      %2986 = vmatprep.subr.mxu0 0.0
      %2987 = vmatpush1.msra.mxu0 0.0
      %2988 = vmatprep.subr.mxu0 0.0
      %2989 = vmatpush1.msra.mxu0 0.0
      %2990 = vmatprep.subr.mxu0 0.0
      %2991 = vmatpush1.msra.mxu0 0.0
      %2992 = vmatprep.subr.mxu0 0.0
      %2993 = vmatpush1.msra.mxu0 0.0
      %2994 = vmatprep.subr.mxu0 0.0
      %2995 = vmatpush1.msra.mxu0 0.0
      %2996 = vmatprep.subr.mxu0 0.0
      %2997 = vmatpush1.msra.mxu0 0.0
      %2998 = vmatprep.subr.mxu0 0.0
      %2999 = vmatpush1.msra.mxu0 0.0
      %3000 = vmatprep.subr.mxu0 0.0
      %3001 = vmatpush1.msra.mxu0 0.0
      %3002 = vmatprep.subr.mxu0 0.0
      %3003 = vmatpush1.msra.mxu0 0.0
      %3004 = vmatprep.subr.mxu0 0.0
      %3005 = vmatpush1.msra.mxu0 0.0
      %3006 = vmatprep.subr.mxu0 0.0
      %3007 = vmatpush1.msra.mxu0 0.0
      %3008 = vmatprep.subr.mxu0 0.0
      %3009 = vmatpush1.msra.mxu0 0.0
      %3010 = vmatprep.mubr.f32.mxu0 0.0
      %3011 = vmatmul.mubr.f32.gmra.mrb[0].mxu0 %v2939
      %v3012 = vpop.f32.mrb[0].mxu0
      %v3013 = vadd.f32 0.0, %v3012
      %v3014 = vpop.f32.mrb[0].mxu0
      %v3015 = vadd.f32 0.0, %v3014
      %3016 = vdwg.mxu0
      %3017 = vmatprep.subr.mxu0 0.0
      %3018 = vmatpush1.msra.mxu0 %v554
      %3019 = vmatprep.subr.mxu0 0.0
      %3020 = vmatpush1.msra.mxu0 %v557
      %3021 = vmatprep.subr.mxu0 0.0
      %3022 = vmatpush1.msra.mxu0 %v560
      %3023 = vmatprep.subr.mxu0 0.0
      %3024 = vmatpush1.msra.mxu0 %v563
      %3025 = vmatprep.subr.mxu0 0.0
      %3026 = vmatpush1.msra.mxu0 %v566
      %3027 = vmatprep.subr.mxu0 0.0
      %3028 = vmatpush1.msra.mxu0 %v569
      %3029 = vmatprep.subr.mxu0 0.0
      %3030 = vmatpush1.msra.mxu0 %v572
      %3031 = vmatprep.subr.mxu0 0.0
      %3032 = vmatpush1.msra.mxu0 %v575
      %3033 = vmatprep.subr.mxu0 0.0
      %3034 = vmatpush1.msra.mxu0 %v578
      %3035 = vmatprep.subr.mxu0 0.0
      %3036 = vmatpush1.msra.mxu0 %v581
      %3037 = vmatprep.subr.mxu0 0.0
      %3038 = vmatpush1.msra.mxu0 %v584
      %3039 = vmatprep.subr.mxu0 0.0
      %3040 = vmatpush1.msra.mxu0 %v587
      %3041 = vmatprep.subr.mxu0 0.0
      %3042 = vmatpush1.msra.mxu0 %v590
      %3043 = vmatprep.subr.mxu0 0.0
      %3044 = vmatpush1.msra.mxu0 %v593
      %3045 = vmatprep.subr.mxu0 0.0
      %3046 = vmatpush1.msra.mxu0 %v596
      %3047 = vmatprep.subr.mxu0 0.0
      %3048 = vmatpush1.msra.mxu0 %v599
      %3049 = vmatprep.subr.mxu0 0.0
      %3050 = vmatpush1.msra.mxu0 0.0
      %3051 = vmatprep.subr.mxu0 0.0
      %3052 = vmatpush1.msra.mxu0 0.0
      %3053 = vmatprep.subr.mxu0 0.0
      %3054 = vmatpush1.msra.mxu0 0.0
      %3055 = vmatprep.subr.mxu0 0.0
      %3056 = vmatpush1.msra.mxu0 0.0
      %3057 = vmatprep.subr.mxu0 0.0
      %3058 = vmatpush1.msra.mxu0 0.0
      %3059 = vmatprep.subr.mxu0 0.0
      %3060 = vmatpush1.msra.mxu0 0.0
      %3061 = vmatprep.subr.mxu0 0.0
      %3062 = vmatpush1.msra.mxu0 0.0
      %3063 = vmatprep.subr.mxu0 0.0
      %3064 = vmatpush1.msra.mxu0 0.0
      %3065 = vmatprep.subr.mxu0 0.0
      %3066 = vmatpush1.msra.mxu0 0.0
      %3067 = vmatprep.subr.mxu0 0.0
      %3068 = vmatpush1.msra.mxu0 0.0
      %3069 = vmatprep.subr.mxu0 0.0
      %3070 = vmatpush1.msra.mxu0 0.0
      %3071 = vmatprep.subr.mxu0 0.0
      %3072 = vmatpush1.msra.mxu0 0.0
      %3073 = vmatprep.subr.mxu0 0.0
      %3074 = vmatpush1.msra.mxu0 0.0
      %3075 = vmatprep.subr.mxu0 0.0
      %3076 = vmatpush1.msra.mxu0 0.0
      %3077 = vmatprep.subr.mxu0 0.0
      %3078 = vmatpush1.msra.mxu0 0.0
      %3079 = vmatprep.subr.mxu0 0.0
      %3080 = vmatpush1.msra.mxu0 0.0
      %3081 = vmatprep.mubr.f32.mxu0 0.0
      %3082 = vmatmul.mubr.f32.gmra.mrb[0].mxu0 %v2939
      %v3083 = vpop.f32.mrb[0].mxu0
      %v3084 = vadd.f32 0.0, %v3083
      %v3085 = vpop.f32.mrb[0].mxu0
      %3086 = vdwg.mxu0
      %v3087 = vadd.f32 %v2943, %v3013
      %v3088 = vxor.u32 %v3087, 2147483648
      %v3089 = vmul.f32 %v3088, 1.442695
      %v3090 = vpow.pop %v3089
      %v3091 = vadd.f32 %v3090, 1.0
      %v3092 = vrcp.pop %v3091
      %v3093 = vmul.f32 1.0, %v3092
      %v3094 = vadd.f32 %v2944, %v3015
      %v3095 = vxor.u32 %v3094, 2147483648
      %v3096 = vmul.f32 %v3095, 1.442695
      %v3097 = vpow.pop %v3096
      %v3098 = vadd.f32 %v3097, 1.0
      %v3099 = vrcp.pop %v3098
      %v3100 = vmul.f32 1.0, %v3099
      %v3101 = vadd.f32 %v3084, %v550
      %v3102 = vmul.f32 %v3093, %v3101
      %v3103 = vadd.f32 %v2945, %v3102
      %v3104 = vtanh.pop %v3103
      %v3105 = vsub.f32 %v2939, %v3104
      %v3106 = vmul.f32 %v3100, %v3105
      %v3107 = vadd.f32 %v3104, %v3106
      %vm3108 = vcmp.gt.s32.totalorder %v544, 13
      %v3109 = vsel %vm3108, 1, 0
      %3110 = vset.pattern.permute.xlu0 0
      %3111 = vperm.xlu0 %3110, %v3109
      %v3112 = vpop.permute.xlu0 %3111
      %vm3113 = vcmp.eq.s32.totalorder %v3112, 1
      %v3114 = vsel %vm3113, %v3107, %v2939
      %3115 = vst [vmem:[#allocation4] sm:$0xff] %v3114
      %v3116 = vsel %vm3113, %v3107, 0.0
      %s3117 = scalar_lea.vmem [#allocation3], 104
      %3118 = vst [vmem:[%s3117] sm:$0xff] %v3116
      %v3119 = vld [vmem:[#allocation4] sm:$0xff]
      %s3120 = smul.u32 14, 3
      %s3121 = smul.addr %s3120, 8
      %s3122 = scalar_lea.vmem [#allocation2], %s3121
      %v3123 = vld [vmem:[%s3122] sm:$0xff]
      %v3124 = vld [vmem:[%s3122 + $0x8] sm:$0xff]
      %v3125 = vld [vmem:[%s3122 + $0x10] sm:$0xff]
      %3126 = vmatprep.subr.mxu0 %v553
      %3127 = vmatpush1.msra.mxu0 %v552
      %3128 = vmatprep.subr.mxu0 %v556
      %3129 = vmatpush1.msra.mxu0 %v555
      %3130 = vmatprep.subr.mxu0 %v559
      %3131 = vmatpush1.msra.mxu0 %v558
      %3132 = vmatprep.subr.mxu0 %v562
      %3133 = vmatpush1.msra.mxu0 %v561
      %3134 = vmatprep.subr.mxu0 %v565
      %3135 = vmatpush1.msra.mxu0 %v564
      %3136 = vmatprep.subr.mxu0 %v568
      %3137 = vmatpush1.msra.mxu0 %v567
      %3138 = vmatprep.subr.mxu0 %v571
      %3139 = vmatpush1.msra.mxu0 %v570
      %3140 = vmatprep.subr.mxu0 %v574
      %3141 = vmatpush1.msra.mxu0 %v573
      %3142 = vmatprep.subr.mxu0 %v577
      %3143 = vmatpush1.msra.mxu0 %v576
      %3144 = vmatprep.subr.mxu0 %v580
      %3145 = vmatpush1.msra.mxu0 %v579
      %3146 = vmatprep.subr.mxu0 %v583
      %3147 = vmatpush1.msra.mxu0 %v582
      %3148 = vmatprep.subr.mxu0 %v586
      %3149 = vmatpush1.msra.mxu0 %v585
      %3150 = vmatprep.subr.mxu0 %v589
      %3151 = vmatpush1.msra.mxu0 %v588
      %3152 = vmatprep.subr.mxu0 %v592
      %3153 = vmatpush1.msra.mxu0 %v591
      %3154 = vmatprep.subr.mxu0 %v595
      %3155 = vmatpush1.msra.mxu0 %v594
      %3156 = vmatprep.subr.mxu0 %v598
      %3157 = vmatpush1.msra.mxu0 %v597
      %3158 = vmatprep.subr.mxu0 0.0
      %3159 = vmatpush1.msra.mxu0 0.0
      %3160 = vmatprep.subr.mxu0 0.0
      %3161 = vmatpush1.msra.mxu0 0.0
      %3162 = vmatprep.subr.mxu0 0.0
      %3163 = vmatpush1.msra.mxu0 0.0
      %3164 = vmatprep.subr.mxu0 0.0
      %3165 = vmatpush1.msra.mxu0 0.0
      %3166 = vmatprep.subr.mxu0 0.0
      %3167 = vmatpush1.msra.mxu0 0.0
      %3168 = vmatprep.subr.mxu0 0.0
      %3169 = vmatpush1.msra.mxu0 0.0
      %3170 = vmatprep.subr.mxu0 0.0
      %3171 = vmatpush1.msra.mxu0 0.0
      %3172 = vmatprep.subr.mxu0 0.0
      %3173 = vmatpush1.msra.mxu0 0.0
      %3174 = vmatprep.subr.mxu0 0.0
      %3175 = vmatpush1.msra.mxu0 0.0
      %3176 = vmatprep.subr.mxu0 0.0
      %3177 = vmatpush1.msra.mxu0 0.0
      %3178 = vmatprep.subr.mxu0 0.0
      %3179 = vmatpush1.msra.mxu0 0.0
      %3180 = vmatprep.subr.mxu0 0.0
      %3181 = vmatpush1.msra.mxu0 0.0
      %3182 = vmatprep.subr.mxu0 0.0
      %3183 = vmatpush1.msra.mxu0 0.0
      %3184 = vmatprep.subr.mxu0 0.0
      %3185 = vmatpush1.msra.mxu0 0.0
      %3186 = vmatprep.subr.mxu0 0.0
      %3187 = vmatpush1.msra.mxu0 0.0
      %3188 = vmatprep.subr.mxu0 0.0
      %3189 = vmatpush1.msra.mxu0 0.0
      %3190 = vmatprep.mubr.f32.mxu0 0.0
      %3191 = vmatmul.mubr.f32.gmra.mrb[0].mxu0 %v3119
      %v3192 = vpop.f32.mrb[0].mxu0
      %v3193 = vadd.f32 0.0, %v3192
      %v3194 = vpop.f32.mrb[0].mxu0
      %v3195 = vadd.f32 0.0, %v3194
      %3196 = vdwg.mxu0
      %3197 = vmatprep.subr.mxu0 0.0
      %3198 = vmatpush1.msra.mxu0 %v554
      %3199 = vmatprep.subr.mxu0 0.0
      %3200 = vmatpush1.msra.mxu0 %v557
      %3201 = vmatprep.subr.mxu0 0.0
      %3202 = vmatpush1.msra.mxu0 %v560
      %3203 = vmatprep.subr.mxu0 0.0
      %3204 = vmatpush1.msra.mxu0 %v563
      %3205 = vmatprep.subr.mxu0 0.0
      %3206 = vmatpush1.msra.mxu0 %v566
      %3207 = vmatprep.subr.mxu0 0.0
      %3208 = vmatpush1.msra.mxu0 %v569
      %3209 = vmatprep.subr.mxu0 0.0
      %3210 = vmatpush1.msra.mxu0 %v572
      %3211 = vmatprep.subr.mxu0 0.0
      %3212 = vmatpush1.msra.mxu0 %v575
      %3213 = vmatprep.subr.mxu0 0.0
      %3214 = vmatpush1.msra.mxu0 %v578
      %3215 = vmatprep.subr.mxu0 0.0
      %3216 = vmatpush1.msra.mxu0 %v581
      %3217 = vmatprep.subr.mxu0 0.0
      %3218 = vmatpush1.msra.mxu0 %v584
      %3219 = vmatprep.subr.mxu0 0.0
      %3220 = vmatpush1.msra.mxu0 %v587
      %3221 = vmatprep.subr.mxu0 0.0
      %3222 = vmatpush1.msra.mxu0 %v590
      %3223 = vmatprep.subr.mxu0 0.0
      %3224 = vmatpush1.msra.mxu0 %v593
      %3225 = vmatprep.subr.mxu0 0.0
      %3226 = vmatpush1.msra.mxu0 %v596
      %3227 = vmatprep.subr.mxu0 0.0
      %3228 = vmatpush1.msra.mxu0 %v599
      %3229 = vmatprep.subr.mxu0 0.0
      %3230 = vmatpush1.msra.mxu0 0.0
      %3231 = vmatprep.subr.mxu0 0.0
      %3232 = vmatpush1.msra.mxu0 0.0
      %3233 = vmatprep.subr.mxu0 0.0
      %3234 = vmatpush1.msra.mxu0 0.0
      %3235 = vmatprep.subr.mxu0 0.0
      %3236 = vmatpush1.msra.mxu0 0.0
      %3237 = vmatprep.subr.mxu0 0.0
      %3238 = vmatpush1.msra.mxu0 0.0
      %3239 = vmatprep.subr.mxu0 0.0
      %3240 = vmatpush1.msra.mxu0 0.0
      %3241 = vmatprep.subr.mxu0 0.0
      %3242 = vmatpush1.msra.mxu0 0.0
      %3243 = vmatprep.subr.mxu0 0.0
      %3244 = vmatpush1.msra.mxu0 0.0
      %3245 = vmatprep.subr.mxu0 0.0
      %3246 = vmatpush1.msra.mxu0 0.0
      %3247 = vmatprep.subr.mxu0 0.0
      %3248 = vmatpush1.msra.mxu0 0.0
      %3249 = vmatprep.subr.mxu0 0.0
      %3250 = vmatpush1.msra.mxu0 0.0
      %3251 = vmatprep.subr.mxu0 0.0
      %3252 = vmatpush1.msra.mxu0 0.0
      %3253 = vmatprep.subr.mxu0 0.0
      %3254 = vmatpush1.msra.mxu0 0.0
      %3255 = vmatprep.subr.mxu0 0.0
      %3256 = vmatpush1.msra.mxu0 0.0
      %3257 = vmatprep.subr.mxu0 0.0
      %3258 = vmatpush1.msra.mxu0 0.0
      %3259 = vmatprep.subr.mxu0 0.0
      %3260 = vmatpush1.msra.mxu0 0.0
      %3261 = vmatprep.mubr.f32.mxu0 0.0
      %3262 = vmatmul.mubr.f32.gmra.mrb[0].mxu0 %v3119
      %v3263 = vpop.f32.mrb[0].mxu0
      %v3264 = vadd.f32 0.0, %v3263
      %v3265 = vpop.f32.mrb[0].mxu0
      %3266 = vdwg.mxu0
      %v3267 = vadd.f32 %v3123, %v3193
      %v3268 = vxor.u32 %v3267, 2147483648
      %v3269 = vmul.f32 %v3268, 1.442695
      %v3270 = vpow.pop %v3269
      %v3271 = vadd.f32 %v3270, 1.0
      %v3272 = vrcp.pop %v3271
      %v3273 = vmul.f32 1.0, %v3272
      %v3274 = vadd.f32 %v3124, %v3195
      %v3275 = vxor.u32 %v3274, 2147483648
      %v3276 = vmul.f32 %v3275, 1.442695
      %v3277 = vpow.pop %v3276
      %v3278 = vadd.f32 %v3277, 1.0
      %v3279 = vrcp.pop %v3278
      %v3280 = vmul.f32 1.0, %v3279
      %v3281 = vadd.f32 %v3264, %v550
      %v3282 = vmul.f32 %v3273, %v3281
      %v3283 = vadd.f32 %v3125, %v3282
      %v3284 = vtanh.pop %v3283
      %v3285 = vsub.f32 %v3119, %v3284
      %v3286 = vmul.f32 %v3280, %v3285
      %v3287 = vadd.f32 %v3284, %v3286
      %vm3288 = vcmp.gt.s32.totalorder %v544, 14
      %v3289 = vsel %vm3288, 1, 0
      %3290 = vset.pattern.permute.xlu0 0
      %3291 = vperm.xlu0 %3290, %v3289
      %v3292 = vpop.permute.xlu0 %3291
      %vm3293 = vcmp.eq.s32.totalorder %v3292, 1
      %v3294 = vsel %vm3293, %v3287, %v3119
      %3295 = vst [vmem:[#allocation4] sm:$0xff] %v3294
      %v3296 = vsel %vm3293, %v3287, 0.0
      %s3297 = scalar_lea.vmem [#allocation3], 112
      %3298 = vst [vmem:[%s3297] sm:$0xff] %v3296
      %v3299 = vld [vmem:[#allocation4] sm:$0xff]
      %s3300 = smul.u32 15, 3
      %s3301 = smul.addr %s3300, 8
      %s3302 = scalar_lea.vmem [#allocation2], %s3301
      %v3303 = vld [vmem:[%s3302] sm:$0xff]
      %v3304 = vld [vmem:[%s3302 + $0x8] sm:$0xff]
      %v3305 = vld [vmem:[%s3302 + $0x10] sm:$0xff]
      %3306 = vmatprep.subr.mxu0 %v553
      %3307 = vmatpush1.msra.mxu0 %v552
      %3308 = vmatprep.subr.mxu0 %v556
      %3309 = vmatpush1.msra.mxu0 %v555
      %3310 = vmatprep.subr.mxu0 %v559
      %3311 = vmatpush1.msra.mxu0 %v558
      %3312 = vmatprep.subr.mxu0 %v562
      %3313 = vmatpush1.msra.mxu0 %v561
      %3314 = vmatprep.subr.mxu0 %v565
      %3315 = vmatpush1.msra.mxu0 %v564
      %3316 = vmatprep.subr.mxu0 %v568
      %3317 = vmatpush1.msra.mxu0 %v567
      %3318 = vmatprep.subr.mxu0 %v571
      %3319 = vmatpush1.msra.mxu0 %v570
      %3320 = vmatprep.subr.mxu0 %v574
      %3321 = vmatpush1.msra.mxu0 %v573
      %3322 = vmatprep.subr.mxu0 %v577
      %3323 = vmatpush1.msra.mxu0 %v576
      %3324 = vmatprep.subr.mxu0 %v580
      %3325 = vmatpush1.msra.mxu0 %v579
      %3326 = vmatprep.subr.mxu0 %v583
      %3327 = vmatpush1.msra.mxu0 %v582
      %3328 = vmatprep.subr.mxu0 %v586
      %3329 = vmatpush1.msra.mxu0 %v585
      %3330 = vmatprep.subr.mxu0 %v589
      %3331 = vmatpush1.msra.mxu0 %v588
      %3332 = vmatprep.subr.mxu0 %v592
      %3333 = vmatpush1.msra.mxu0 %v591
      %3334 = vmatprep.subr.mxu0 %v595
      %3335 = vmatpush1.msra.mxu0 %v594
      %3336 = vmatprep.subr.mxu0 %v598
      %3337 = vmatpush1.msra.mxu0 %v597
      %3338 = vmatprep.subr.mxu0 0.0
      %3339 = vmatpush1.msra.mxu0 0.0
      %3340 = vmatprep.subr.mxu0 0.0
      %3341 = vmatpush1.msra.mxu0 0.0
      %3342 = vmatprep.subr.mxu0 0.0
      %3343 = vmatpush1.msra.mxu0 0.0
      %3344 = vmatprep.subr.mxu0 0.0
      %3345 = vmatpush1.msra.mxu0 0.0
      %3346 = vmatprep.subr.mxu0 0.0
      %3347 = vmatpush1.msra.mxu0 0.0
      %3348 = vmatprep.subr.mxu0 0.0
      %3349 = vmatpush1.msra.mxu0 0.0
      %3350 = vmatprep.subr.mxu0 0.0
      %3351 = vmatpush1.msra.mxu0 0.0
      %3352 = vmatprep.subr.mxu0 0.0
      %3353 = vmatpush1.msra.mxu0 0.0
      %3354 = vmatprep.subr.mxu0 0.0
      %3355 = vmatpush1.msra.mxu0 0.0
      %3356 = vmatprep.subr.mxu0 0.0
      %3357 = vmatpush1.msra.mxu0 0.0
      %3358 = vmatprep.subr.mxu0 0.0
      %3359 = vmatpush1.msra.mxu0 0.0
      %3360 = vmatprep.subr.mxu0 0.0
      %3361 = vmatpush1.msra.mxu0 0.0
      %3362 = vmatprep.subr.mxu0 0.0
      %3363 = vmatpush1.msra.mxu0 0.0
      %3364 = vmatprep.subr.mxu0 0.0
      %3365 = vmatpush1.msra.mxu0 0.0
      %3366 = vmatprep.subr.mxu0 0.0
      %3367 = vmatpush1.msra.mxu0 0.0
      %3368 = vmatprep.subr.mxu0 0.0
      %3369 = vmatpush1.msra.mxu0 0.0
      %3370 = vmatprep.mubr.f32.mxu0 0.0
      %3371 = vmatmul.mubr.f32.gmra.mrb[0].mxu0 %v3299
      %v3372 = vpop.f32.mrb[0].mxu0
      %v3373 = vadd.f32 0.0, %v3372
      %v3374 = vpop.f32.mrb[0].mxu0
      %v3375 = vadd.f32 0.0, %v3374
      %3376 = vdwg.mxu0
      %3377 = vmatprep.subr.mxu0 0.0
      %3378 = vmatpush1.msra.mxu0 %v554
      %3379 = vmatprep.subr.mxu0 0.0
      %3380 = vmatpush1.msra.mxu0 %v557
      %3381 = vmatprep.subr.mxu0 0.0
      %3382 = vmatpush1.msra.mxu0 %v560
      %3383 = vmatprep.subr.mxu0 0.0
      %3384 = vmatpush1.msra.mxu0 %v563
      %3385 = vmatprep.subr.mxu0 0.0
      %3386 = vmatpush1.msra.mxu0 %v566
      %3387 = vmatprep.subr.mxu0 0.0
      %3388 = vmatpush1.msra.mxu0 %v569
      %3389 = vmatprep.subr.mxu0 0.0
      %3390 = vmatpush1.msra.mxu0 %v572
      %3391 = vmatprep.subr.mxu0 0.0
      %3392 = vmatpush1.msra.mxu0 %v575
      %3393 = vmatprep.subr.mxu0 0.0
      %3394 = vmatpush1.msra.mxu0 %v578
      %3395 = vmatprep.subr.mxu0 0.0
      %3396 = vmatpush1.msra.mxu0 %v581
      %3397 = vmatprep.subr.mxu0 0.0
      %3398 = vmatpush1.msra.mxu0 %v584
      %3399 = vmatprep.subr.mxu0 0.0
      %3400 = vmatpush1.msra.mxu0 %v587
      %3401 = vmatprep.subr.mxu0 0.0
      %3402 = vmatpush1.msra.mxu0 %v590
      %3403 = vmatprep.subr.mxu0 0.0
      %3404 = vmatpush1.msra.mxu0 %v593
      %3405 = vmatprep.subr.mxu0 0.0
      %3406 = vmatpush1.msra.mxu0 %v596
      %3407 = vmatprep.subr.mxu0 0.0
      %3408 = vmatpush1.msra.mxu0 %v599
      %3409 = vmatprep.subr.mxu0 0.0
      %3410 = vmatpush1.msra.mxu0 0.0
      %3411 = vmatprep.subr.mxu0 0.0
      %3412 = vmatpush1.msra.mxu0 0.0
      %3413 = vmatprep.subr.mxu0 0.0
      %3414 = vmatpush1.msra.mxu0 0.0
      %3415 = vmatprep.subr.mxu0 0.0
      %3416 = vmatpush1.msra.mxu0 0.0
      %3417 = vmatprep.subr.mxu0 0.0
      %3418 = vmatpush1.msra.mxu0 0.0
      %3419 = vmatprep.subr.mxu0 0.0
      %3420 = vmatpush1.msra.mxu0 0.0
      %3421 = vmatprep.subr.mxu0 0.0
      %3422 = vmatpush1.msra.mxu0 0.0
      %3423 = vmatprep.subr.mxu0 0.0
      %3424 = vmatpush1.msra.mxu0 0.0
      %3425 = vmatprep.subr.mxu0 0.0
      %3426 = vmatpush1.msra.mxu0 0.0
      %3427 = vmatprep.subr.mxu0 0.0
      %3428 = vmatpush1.msra.mxu0 0.0
      %3429 = vmatprep.subr.mxu0 0.0
      %3430 = vmatpush1.msra.mxu0 0.0
      %3431 = vmatprep.subr.mxu0 0.0
      %3432 = vmatpush1.msra.mxu0 0.0
      %3433 = vmatprep.subr.mxu0 0.0
      %3434 = vmatpush1.msra.mxu0 0.0
      %3435 = vmatprep.subr.mxu0 0.0
      %3436 = vmatpush1.msra.mxu0 0.0
      %3437 = vmatprep.subr.mxu0 0.0
      %3438 = vmatpush1.msra.mxu0 0.0
      %3439 = vmatprep.subr.mxu0 0.0
      %3440 = vmatpush1.msra.mxu0 0.0
      %3441 = vmatprep.mubr.f32.mxu0 0.0
      %3442 = vmatmul.mubr.f32.gmra.mrb[0].mxu0 %v3299
      %v3443 = vpop.f32.mrb[0].mxu0
      %v3444 = vadd.f32 0.0, %v3443
      %v3445 = vpop.f32.mrb[0].mxu0
      %3446 = vdwg.mxu0
      %v3447 = vadd.f32 %v3303, %v3373
      %v3448 = vxor.u32 %v3447, 2147483648
      %v3449 = vmul.f32 %v3448, 1.442695
      %v3450 = vpow.pop %v3449
      %v3451 = vadd.f32 %v3450, 1.0
      %v3452 = vrcp.pop %v3451
      %v3453 = vmul.f32 1.0, %v3452
      %v3454 = vadd.f32 %v3304, %v3375
      %v3455 = vxor.u32 %v3454, 2147483648
      %v3456 = vmul.f32 %v3455, 1.442695
      %v3457 = vpow.pop %v3456
      %v3458 = vadd.f32 %v3457, 1.0
      %v3459 = vrcp.pop %v3458
      %v3460 = vmul.f32 1.0, %v3459
      %v3461 = vadd.f32 %v3444, %v550
      %v3462 = vmul.f32 %v3453, %v3461
      %v3463 = vadd.f32 %v3305, %v3462
      %v3464 = vtanh.pop %v3463
      %v3465 = vsub.f32 %v3299, %v3464
      %v3466 = vmul.f32 %v3460, %v3465
      %v3467 = vadd.f32 %v3464, %v3466
      %vm3468 = vcmp.gt.s32.totalorder %v544, 15
      %v3469 = vsel %vm3468, 1, 0
      %3470 = vset.pattern.permute.xlu0 0
      %3471 = vperm.xlu0 %3470, %v3469
      %v3472 = vpop.permute.xlu0 %3471
      %vm3473 = vcmp.eq.s32.totalorder %v3472, 1
      %v3474 = vsel %vm3473, %v3467, %v3299
      %3475 = vst [vmem:[#allocation4] sm:$0xff] %v3474
      %v3476 = vsel %vm3473, %v3467, 0.0
      %s3477 = scalar_lea.vmem [#allocation3], 120
      %3478 = vst [vmem:[%s3477] sm:$0xff] %v3476
      %v3479 = vld [vmem:[#allocation4] sm:$0xff]
      %s3480 = smul.u32 16, 3
      %s3481 = smul.addr %s3480, 8
      %s3482 = scalar_lea.vmem [#allocation2], %s3481
      %v3483 = vld [vmem:[%s3482] sm:$0xff]
      %v3484 = vld [vmem:[%s3482 + $0x8] sm:$0xff]
      %v3485 = vld [vmem:[%s3482 + $0x10] sm:$0xff]
      %3486 = vmatprep.subr.mxu0 %v553
      %3487 = vmatpush1.msra.mxu0 %v552
      %3488 = vmatprep.subr.mxu0 %v556
      %3489 = vmatpush1.msra.mxu0 %v555
      %3490 = vmatprep.subr.mxu0 %v559
      %3491 = vmatpush1.msra.mxu0 %v558
      %3492 = vmatprep.subr.mxu0 %v562
      %3493 = vmatpush1.msra.mxu0 %v561
      %3494 = vmatprep.subr.mxu0 %v565
      %3495 = vmatpush1.msra.mxu0 %v564
      %3496 = vmatprep.subr.mxu0 %v568
      %3497 = vmatpush1.msra.mxu0 %v567
      %3498 = vmatprep.subr.mxu0 %v571
      %3499 = vmatpush1.msra.mxu0 %v570
      %3500 = vmatprep.subr.mxu0 %v574
      %3501 = vmatpush1.msra.mxu0 %v573
      %3502 = vmatprep.subr.mxu0 %v577
      %3503 = vmatpush1.msra.mxu0 %v576
      %3504 = vmatprep.subr.mxu0 %v580
      %3505 = vmatpush1.msra.mxu0 %v579
      %3506 = vmatprep.subr.mxu0 %v583
      %3507 = vmatpush1.msra.mxu0 %v582
      %3508 = vmatprep.subr.mxu0 %v586
      %3509 = vmatpush1.msra.mxu0 %v585
      %3510 = vmatprep.subr.mxu0 %v589
      %3511 = vmatpush1.msra.mxu0 %v588
      %3512 = vmatprep.subr.mxu0 %v592
      %3513 = vmatpush1.msra.mxu0 %v591
      %3514 = vmatprep.subr.mxu0 %v595
      %3515 = vmatpush1.msra.mxu0 %v594
      %3516 = vmatprep.subr.mxu0 %v598
      %3517 = vmatpush1.msra.mxu0 %v597
      %3518 = vmatprep.subr.mxu0 0.0
      %3519 = vmatpush1.msra.mxu0 0.0
      %3520 = vmatprep.subr.mxu0 0.0
      %3521 = vmatpush1.msra.mxu0 0.0
      %3522 = vmatprep.subr.mxu0 0.0
      %3523 = vmatpush1.msra.mxu0 0.0
      %3524 = vmatprep.subr.mxu0 0.0
      %3525 = vmatpush1.msra.mxu0 0.0
      %3526 = vmatprep.subr.mxu0 0.0
      %3527 = vmatpush1.msra.mxu0 0.0
      %3528 = vmatprep.subr.mxu0 0.0
      %3529 = vmatpush1.msra.mxu0 0.0
      %3530 = vmatprep.subr.mxu0 0.0
      %3531 = vmatpush1.msra.mxu0 0.0
      %3532 = vmatprep.subr.mxu0 0.0
      %3533 = vmatpush1.msra.mxu0 0.0
      %3534 = vmatprep.subr.mxu0 0.0
      %3535 = vmatpush1.msra.mxu0 0.0
      %3536 = vmatprep.subr.mxu0 0.0
      %3537 = vmatpush1.msra.mxu0 0.0
      %3538 = vmatprep.subr.mxu0 0.0
      %3539 = vmatpush1.msra.mxu0 0.0
      %3540 = vmatprep.subr.mxu0 0.0
      %3541 = vmatpush1.msra.mxu0 0.0
      %3542 = vmatprep.subr.mxu0 0.0
      %3543 = vmatpush1.msra.mxu0 0.0
      %3544 = vmatprep.subr.mxu0 0.0
      %3545 = vmatpush1.msra.mxu0 0.0
      %3546 = vmatprep.subr.mxu0 0.0
      %3547 = vmatpush1.msra.mxu0 0.0
      %3548 = vmatprep.subr.mxu0 0.0
      %3549 = vmatpush1.msra.mxu0 0.0
      %3550 = vmatprep.mubr.f32.mxu0 0.0
      %3551 = vmatmul.mubr.f32.gmra.mrb[0].mxu0 %v3479
      %v3552 = vpop.f32.mrb[0].mxu0
      %v3553 = vadd.f32 0.0, %v3552
      %v3554 = vpop.f32.mrb[0].mxu0
      %v3555 = vadd.f32 0.0, %v3554
      %3556 = vdwg.mxu0
      %3557 = vmatprep.subr.mxu0 0.0
      %3558 = vmatpush1.msra.mxu0 %v554
      %3559 = vmatprep.subr.mxu0 0.0
      %3560 = vmatpush1.msra.mxu0 %v557
      %3561 = vmatprep.subr.mxu0 0.0
      %3562 = vmatpush1.msra.mxu0 %v560
      %3563 = vmatprep.subr.mxu0 0.0
      %3564 = vmatpush1.msra.mxu0 %v563
      %3565 = vmatprep.subr.mxu0 0.0
      %3566 = vmatpush1.msra.mxu0 %v566
      %3567 = vmatprep.subr.mxu0 0.0
      %3568 = vmatpush1.msra.mxu0 %v569
      %3569 = vmatprep.subr.mxu0 0.0
      %3570 = vmatpush1.msra.mxu0 %v572
      %3571 = vmatprep.subr.mxu0 0.0
      %3572 = vmatpush1.msra.mxu0 %v575
      %3573 = vmatprep.subr.mxu0 0.0
      %3574 = vmatpush1.msra.mxu0 %v578
      %3575 = vmatprep.subr.mxu0 0.0
      %3576 = vmatpush1.msra.mxu0 %v581
      %3577 = vmatprep.subr.mxu0 0.0
      %3578 = vmatpush1.msra.mxu0 %v584
      %3579 = vmatprep.subr.mxu0 0.0
      %3580 = vmatpush1.msra.mxu0 %v587
      %3581 = vmatprep.subr.mxu0 0.0
      %3582 = vmatpush1.msra.mxu0 %v590
      %3583 = vmatprep.subr.mxu0 0.0
      %3584 = vmatpush1.msra.mxu0 %v593
      %3585 = vmatprep.subr.mxu0 0.0
      %3586 = vmatpush1.msra.mxu0 %v596
      %3587 = vmatprep.subr.mxu0 0.0
      %3588 = vmatpush1.msra.mxu0 %v599
      %3589 = vmatprep.subr.mxu0 0.0
      %3590 = vmatpush1.msra.mxu0 0.0
      %3591 = vmatprep.subr.mxu0 0.0
      %3592 = vmatpush1.msra.mxu0 0.0
      %3593 = vmatprep.subr.mxu0 0.0
      %3594 = vmatpush1.msra.mxu0 0.0
      %3595 = vmatprep.subr.mxu0 0.0
      %3596 = vmatpush1.msra.mxu0 0.0
      %3597 = vmatprep.subr.mxu0 0.0
      %3598 = vmatpush1.msra.mxu0 0.0
      %3599 = vmatprep.subr.mxu0 0.0
      %3600 = vmatpush1.msra.mxu0 0.0
      %3601 = vmatprep.subr.mxu0 0.0
      %3602 = vmatpush1.msra.mxu0 0.0
      %3603 = vmatprep.subr.mxu0 0.0
      %3604 = vmatpush1.msra.mxu0 0.0
      %3605 = vmatprep.subr.mxu0 0.0
      %3606 = vmatpush1.msra.mxu0 0.0
      %3607 = vmatprep.subr.mxu0 0.0
      %3608 = vmatpush1.msra.mxu0 0.0
      %3609 = vmatprep.subr.mxu0 0.0
      %3610 = vmatpush1.msra.mxu0 0.0
      %3611 = vmatprep.subr.mxu0 0.0
      %3612 = vmatpush1.msra.mxu0 0.0
      %3613 = vmatprep.subr.mxu0 0.0
      %3614 = vmatpush1.msra.mxu0 0.0
      %3615 = vmatprep.subr.mxu0 0.0
      %3616 = vmatpush1.msra.mxu0 0.0
      %3617 = vmatprep.subr.mxu0 0.0
      %3618 = vmatpush1.msra.mxu0 0.0
      %3619 = vmatprep.subr.mxu0 0.0
      %3620 = vmatpush1.msra.mxu0 0.0
      %3621 = vmatprep.mubr.f32.mxu0 0.0
      %3622 = vmatmul.mubr.f32.gmra.mrb[0].mxu0 %v3479
      %v3623 = vpop.f32.mrb[0].mxu0
      %v3624 = vadd.f32 0.0, %v3623
      %v3625 = vpop.f32.mrb[0].mxu0
      %3626 = vdwg.mxu0
      %v3627 = vadd.f32 %v3483, %v3553
      %v3628 = vxor.u32 %v3627, 2147483648
      %v3629 = vmul.f32 %v3628, 1.442695
      %v3630 = vpow.pop %v3629
      %v3631 = vadd.f32 %v3630, 1.0
      %v3632 = vrcp.pop %v3631
      %v3633 = vmul.f32 1.0, %v3632
      %v3634 = vadd.f32 %v3484, %v3555
      %v3635 = vxor.u32 %v3634, 2147483648
      %v3636 = vmul.f32 %v3635, 1.442695
      %v3637 = vpow.pop %v3636
      %v3638 = vadd.f32 %v3637, 1.0
      %v3639 = vrcp.pop %v3638
      %v3640 = vmul.f32 1.0, %v3639
      %v3641 = vadd.f32 %v3624, %v550
      %v3642 = vmul.f32 %v3633, %v3641
      %v3643 = vadd.f32 %v3485, %v3642
      %v3644 = vtanh.pop %v3643
      %v3645 = vsub.f32 %v3479, %v3644
      %v3646 = vmul.f32 %v3640, %v3645
      %v3647 = vadd.f32 %v3644, %v3646
      %vm3648 = vcmp.gt.s32.totalorder %v544, 16
      %v3649 = vsel %vm3648, 1, 0
      %3650 = vset.pattern.permute.xlu0 0
      %3651 = vperm.xlu0 %3650, %v3649
      %v3652 = vpop.permute.xlu0 %3651
      %vm3653 = vcmp.eq.s32.totalorder %v3652, 1
      %v3654 = vsel %vm3653, %v3647, %v3479
      %3655 = vst [vmem:[#allocation4] sm:$0xff] %v3654
      %v3656 = vsel %vm3653, %v3647, 0.0
      %s3657 = scalar_lea.vmem [#allocation3], 128
      %3658 = vst [vmem:[%s3657] sm:$0xff] %v3656
      %v3659 = vld [vmem:[#allocation4] sm:$0xff]
      %s3660 = smul.u32 17, 3
      %s3661 = smul.addr %s3660, 8
      %s3662 = scalar_lea.vmem [#allocation2], %s3661
      %v3663 = vld [vmem:[%s3662] sm:$0xff]
      %v3664 = vld [vmem:[%s3662 + $0x8] sm:$0xff]
      %v3665 = vld [vmem:[%s3662 + $0x10] sm:$0xff]
      %3666 = vmatprep.subr.mxu0 %v553
      %3667 = vmatpush1.msra.mxu0 %v552
      %3668 = vmatprep.subr.mxu0 %v556
      %3669 = vmatpush1.msra.mxu0 %v555
      %3670 = vmatprep.subr.mxu0 %v559
      %3671 = vmatpush1.msra.mxu0 %v558
      %3672 = vmatprep.subr.mxu0 %v562
      %3673 = vmatpush1.msra.mxu0 %v561
      %3674 = vmatprep.subr.mxu0 %v565
      %3675 = vmatpush1.msra.mxu0 %v564
      %3676 = vmatprep.subr.mxu0 %v568
      %3677 = vmatpush1.msra.mxu0 %v567
      %3678 = vmatprep.subr.mxu0 %v571
      %3679 = vmatpush1.msra.mxu0 %v570
      %3680 = vmatprep.subr.mxu0 %v574
      %3681 = vmatpush1.msra.mxu0 %v573
      %3682 = vmatprep.subr.mxu0 %v577
      %3683 = vmatpush1.msra.mxu0 %v576
      %3684 = vmatprep.subr.mxu0 %v580
      %3685 = vmatpush1.msra.mxu0 %v579
      %3686 = vmatprep.subr.mxu0 %v583
      %3687 = vmatpush1.msra.mxu0 %v582
      %3688 = vmatprep.subr.mxu0 %v586
      %3689 = vmatpush1.msra.mxu0 %v585
      %3690 = vmatprep.subr.mxu0 %v589
      %3691 = vmatpush1.msra.mxu0 %v588
      %3692 = vmatprep.subr.mxu0 %v592
      %3693 = vmatpush1.msra.mxu0 %v591
      %3694 = vmatprep.subr.mxu0 %v595
      %3695 = vmatpush1.msra.mxu0 %v594
      %3696 = vmatprep.subr.mxu0 %v598
      %3697 = vmatpush1.msra.mxu0 %v597
      %3698 = vmatprep.subr.mxu0 0.0
      %3699 = vmatpush1.msra.mxu0 0.0
      %3700 = vmatprep.subr.mxu0 0.0
      %3701 = vmatpush1.msra.mxu0 0.0
      %3702 = vmatprep.subr.mxu0 0.0
      %3703 = vmatpush1.msra.mxu0 0.0
      %3704 = vmatprep.subr.mxu0 0.0
      %3705 = vmatpush1.msra.mxu0 0.0
      %3706 = vmatprep.subr.mxu0 0.0
      %3707 = vmatpush1.msra.mxu0 0.0
      %3708 = vmatprep.subr.mxu0 0.0
      %3709 = vmatpush1.msra.mxu0 0.0
      %3710 = vmatprep.subr.mxu0 0.0
      %3711 = vmatpush1.msra.mxu0 0.0
      %3712 = vmatprep.subr.mxu0 0.0
      %3713 = vmatpush1.msra.mxu0 0.0
      %3714 = vmatprep.subr.mxu0 0.0
      %3715 = vmatpush1.msra.mxu0 0.0
      %3716 = vmatprep.subr.mxu0 0.0
      %3717 = vmatpush1.msra.mxu0 0.0
      %3718 = vmatprep.subr.mxu0 0.0
      %3719 = vmatpush1.msra.mxu0 0.0
      %3720 = vmatprep.subr.mxu0 0.0
      %3721 = vmatpush1.msra.mxu0 0.0
      %3722 = vmatprep.subr.mxu0 0.0
      %3723 = vmatpush1.msra.mxu0 0.0
      %3724 = vmatprep.subr.mxu0 0.0
      %3725 = vmatpush1.msra.mxu0 0.0
      %3726 = vmatprep.subr.mxu0 0.0
      %3727 = vmatpush1.msra.mxu0 0.0
      %3728 = vmatprep.subr.mxu0 0.0
      %3729 = vmatpush1.msra.mxu0 0.0
      %3730 = vmatprep.mubr.f32.mxu0 0.0
      %3731 = vmatmul.mubr.f32.gmra.mrb[0].mxu0 %v3659
      %v3732 = vpop.f32.mrb[0].mxu0
      %v3733 = vadd.f32 0.0, %v3732
      %v3734 = vpop.f32.mrb[0].mxu0
      %v3735 = vadd.f32 0.0, %v3734
      %3736 = vdwg.mxu0
      %3737 = vmatprep.subr.mxu0 0.0
      %3738 = vmatpush1.msra.mxu0 %v554
      %3739 = vmatprep.subr.mxu0 0.0
      %3740 = vmatpush1.msra.mxu0 %v557
      %3741 = vmatprep.subr.mxu0 0.0
      %3742 = vmatpush1.msra.mxu0 %v560
      %3743 = vmatprep.subr.mxu0 0.0
      %3744 = vmatpush1.msra.mxu0 %v563
      %3745 = vmatprep.subr.mxu0 0.0
      %3746 = vmatpush1.msra.mxu0 %v566
      %3747 = vmatprep.subr.mxu0 0.0
      %3748 = vmatpush1.msra.mxu0 %v569
      %3749 = vmatprep.subr.mxu0 0.0
      %3750 = vmatpush1.msra.mxu0 %v572
      %3751 = vmatprep.subr.mxu0 0.0
      %3752 = vmatpush1.msra.mxu0 %v575
      %3753 = vmatprep.subr.mxu0 0.0
      %3754 = vmatpush1.msra.mxu0 %v578
      %3755 = vmatprep.subr.mxu0 0.0
      %3756 = vmatpush1.msra.mxu0 %v581
      %3757 = vmatprep.subr.mxu0 0.0
      %3758 = vmatpush1.msra.mxu0 %v584
      %3759 = vmatprep.subr.mxu0 0.0
      %3760 = vmatpush1.msra.mxu0 %v587
      %3761 = vmatprep.subr.mxu0 0.0
      %3762 = vmatpush1.msra.mxu0 %v590
      %3763 = vmatprep.subr.mxu0 0.0
      %3764 = vmatpush1.msra.mxu0 %v593
      %3765 = vmatprep.subr.mxu0 0.0
      %3766 = vmatpush1.msra.mxu0 %v596
      %3767 = vmatprep.subr.mxu0 0.0
      %3768 = vmatpush1.msra.mxu0 %v599
      %3769 = vmatprep.subr.mxu0 0.0
      %3770 = vmatpush1.msra.mxu0 0.0
      %3771 = vmatprep.subr.mxu0 0.0
      %3772 = vmatpush1.msra.mxu0 0.0
      %3773 = vmatprep.subr.mxu0 0.0
      %3774 = vmatpush1.msra.mxu0 0.0
      %3775 = vmatprep.subr.mxu0 0.0
      %3776 = vmatpush1.msra.mxu0 0.0
      %3777 = vmatprep.subr.mxu0 0.0
      %3778 = vmatpush1.msra.mxu0 0.0
      %3779 = vmatprep.subr.mxu0 0.0
      %3780 = vmatpush1.msra.mxu0 0.0
      %3781 = vmatprep.subr.mxu0 0.0
      %3782 = vmatpush1.msra.mxu0 0.0
      %3783 = vmatprep.subr.mxu0 0.0
      %3784 = vmatpush1.msra.mxu0 0.0
      %3785 = vmatprep.subr.mxu0 0.0
      %3786 = vmatpush1.msra.mxu0 0.0
      %3787 = vmatprep.subr.mxu0 0.0
      %3788 = vmatpush1.msra.mxu0 0.0
      %3789 = vmatprep.subr.mxu0 0.0
      %3790 = vmatpush1.msra.mxu0 0.0
      %3791 = vmatprep.subr.mxu0 0.0
      %3792 = vmatpush1.msra.mxu0 0.0
      %3793 = vmatprep.subr.mxu0 0.0
      %3794 = vmatpush1.msra.mxu0 0.0
      %3795 = vmatprep.subr.mxu0 0.0
      %3796 = vmatpush1.msra.mxu0 0.0
      %3797 = vmatprep.subr.mxu0 0.0
      %3798 = vmatpush1.msra.mxu0 0.0
      %3799 = vmatprep.subr.mxu0 0.0
      %3800 = vmatpush1.msra.mxu0 0.0
      %3801 = vmatprep.mubr.f32.mxu0 0.0
      %3802 = vmatmul.mubr.f32.gmra.mrb[0].mxu0 %v3659
      %v3803 = vpop.f32.mrb[0].mxu0
      %v3804 = vadd.f32 0.0, %v3803
      %v3805 = vpop.f32.mrb[0].mxu0
      %3806 = vdwg.mxu0
      %v3807 = vadd.f32 %v3663, %v3733
      %v3808 = vxor.u32 %v3807, 2147483648
      %v3809 = vmul.f32 %v3808, 1.442695
      %v3810 = vpow.pop %v3809
      %v3811 = vadd.f32 %v3810, 1.0
      %v3812 = vrcp.pop %v3811
      %v3813 = vmul.f32 1.0, %v3812
      %v3814 = vadd.f32 %v3664, %v3735
      %v3815 = vxor.u32 %v3814, 2147483648
      %v3816 = vmul.f32 %v3815, 1.442695
      %v3817 = vpow.pop %v3816
      %v3818 = vadd.f32 %v3817, 1.0
      %v3819 = vrcp.pop %v3818
      %v3820 = vmul.f32 1.0, %v3819
      %v3821 = vadd.f32 %v3804, %v550
      %v3822 = vmul.f32 %v3813, %v3821
      %v3823 = vadd.f32 %v3665, %v3822
      %v3824 = vtanh.pop %v3823
      %v3825 = vsub.f32 %v3659, %v3824
      %v3826 = vmul.f32 %v3820, %v3825
      %v3827 = vadd.f32 %v3824, %v3826
      %vm3828 = vcmp.gt.s32.totalorder %v544, 17
      %v3829 = vsel %vm3828, 1, 0
      %3830 = vset.pattern.permute.xlu0 0
      %3831 = vperm.xlu0 %3830, %v3829
      %v3832 = vpop.permute.xlu0 %3831
      %vm3833 = vcmp.eq.s32.totalorder %v3832, 1
      %v3834 = vsel %vm3833, %v3827, %v3659
      %3835 = vst [vmem:[#allocation4] sm:$0xff] %v3834
      %v3836 = vsel %vm3833, %v3827, 0.0
      %s3837 = scalar_lea.vmem [#allocation3], 136
      %3838 = vst [vmem:[%s3837] sm:$0xff] %v3836
      %v3839 = vld [vmem:[#allocation4] sm:$0xff]
      %s3840 = smul.u32 18, 3
      %s3841 = smul.addr %s3840, 8
      %s3842 = scalar_lea.vmem [#allocation2], %s3841
      %v3843 = vld [vmem:[%s3842] sm:$0xff]
      %v3844 = vld [vmem:[%s3842 + $0x8] sm:$0xff]
      %v3845 = vld [vmem:[%s3842 + $0x10] sm:$0xff]
      %3846 = vmatprep.subr.mxu0 %v553
      %3847 = vmatpush1.msra.mxu0 %v552
      %3848 = vmatprep.subr.mxu0 %v556
      %3849 = vmatpush1.msra.mxu0 %v555
      %3850 = vmatprep.subr.mxu0 %v559
      %3851 = vmatpush1.msra.mxu0 %v558
      %3852 = vmatprep.subr.mxu0 %v562
      %3853 = vmatpush1.msra.mxu0 %v561
      %3854 = vmatprep.subr.mxu0 %v565
      %3855 = vmatpush1.msra.mxu0 %v564
      %3856 = vmatprep.subr.mxu0 %v568
      %3857 = vmatpush1.msra.mxu0 %v567
      %3858 = vmatprep.subr.mxu0 %v571
      %3859 = vmatpush1.msra.mxu0 %v570
      %3860 = vmatprep.subr.mxu0 %v574
      %3861 = vmatpush1.msra.mxu0 %v573
      %3862 = vmatprep.subr.mxu0 %v577
      %3863 = vmatpush1.msra.mxu0 %v576
      %3864 = vmatprep.subr.mxu0 %v580
      %3865 = vmatpush1.msra.mxu0 %v579
      %3866 = vmatprep.subr.mxu0 %v583
      %3867 = vmatpush1.msra.mxu0 %v582
      %3868 = vmatprep.subr.mxu0 %v586
      %3869 = vmatpush1.msra.mxu0 %v585
      %3870 = vmatprep.subr.mxu0 %v589
      %3871 = vmatpush1.msra.mxu0 %v588
      %3872 = vmatprep.subr.mxu0 %v592
      %3873 = vmatpush1.msra.mxu0 %v591
      %3874 = vmatprep.subr.mxu0 %v595
      %3875 = vmatpush1.msra.mxu0 %v594
      %3876 = vmatprep.subr.mxu0 %v598
      %3877 = vmatpush1.msra.mxu0 %v597
      %3878 = vmatprep.subr.mxu0 0.0
      %3879 = vmatpush1.msra.mxu0 0.0
      %3880 = vmatprep.subr.mxu0 0.0
      %3881 = vmatpush1.msra.mxu0 0.0
      %3882 = vmatprep.subr.mxu0 0.0
      %3883 = vmatpush1.msra.mxu0 0.0
      %3884 = vmatprep.subr.mxu0 0.0
      %3885 = vmatpush1.msra.mxu0 0.0
      %3886 = vmatprep.subr.mxu0 0.0
      %3887 = vmatpush1.msra.mxu0 0.0
      %3888 = vmatprep.subr.mxu0 0.0
      %3889 = vmatpush1.msra.mxu0 0.0
      %3890 = vmatprep.subr.mxu0 0.0
      %3891 = vmatpush1.msra.mxu0 0.0
      %3892 = vmatprep.subr.mxu0 0.0
      %3893 = vmatpush1.msra.mxu0 0.0
      %3894 = vmatprep.subr.mxu0 0.0
      %3895 = vmatpush1.msra.mxu0 0.0
      %3896 = vmatprep.subr.mxu0 0.0
      %3897 = vmatpush1.msra.mxu0 0.0
      %3898 = vmatprep.subr.mxu0 0.0
      %3899 = vmatpush1.msra.mxu0 0.0
      %3900 = vmatprep.subr.mxu0 0.0
      %3901 = vmatpush1.msra.mxu0 0.0
      %3902 = vmatprep.subr.mxu0 0.0
      %3903 = vmatpush1.msra.mxu0 0.0
      %3904 = vmatprep.subr.mxu0 0.0
      %3905 = vmatpush1.msra.mxu0 0.0
      %3906 = vmatprep.subr.mxu0 0.0
      %3907 = vmatpush1.msra.mxu0 0.0
      %3908 = vmatprep.subr.mxu0 0.0
      %3909 = vmatpush1.msra.mxu0 0.0
      %3910 = vmatprep.mubr.f32.mxu0 0.0
      %3911 = vmatmul.mubr.f32.gmra.mrb[0].mxu0 %v3839
      %v3912 = vpop.f32.mrb[0].mxu0
      %v3913 = vadd.f32 0.0, %v3912
      %v3914 = vpop.f32.mrb[0].mxu0
      %v3915 = vadd.f32 0.0, %v3914
      %3916 = vdwg.mxu0
      %3917 = vmatprep.subr.mxu0 0.0
      %3918 = vmatpush1.msra.mxu0 %v554
      %3919 = vmatprep.subr.mxu0 0.0
      %3920 = vmatpush1.msra.mxu0 %v557
      %3921 = vmatprep.subr.mxu0 0.0
      %3922 = vmatpush1.msra.mxu0 %v560
      %3923 = vmatprep.subr.mxu0 0.0
      %3924 = vmatpush1.msra.mxu0 %v563
      %3925 = vmatprep.subr.mxu0 0.0
      %3926 = vmatpush1.msra.mxu0 %v566
      %3927 = vmatprep.subr.mxu0 0.0
      %3928 = vmatpush1.msra.mxu0 %v569
      %3929 = vmatprep.subr.mxu0 0.0
      %3930 = vmatpush1.msra.mxu0 %v572
      %3931 = vmatprep.subr.mxu0 0.0
      %3932 = vmatpush1.msra.mxu0 %v575
      %3933 = vmatprep.subr.mxu0 0.0
      %3934 = vmatpush1.msra.mxu0 %v578
      %3935 = vmatprep.subr.mxu0 0.0
      %3936 = vmatpush1.msra.mxu0 %v581
      %3937 = vmatprep.subr.mxu0 0.0
      %3938 = vmatpush1.msra.mxu0 %v584
      %3939 = vmatprep.subr.mxu0 0.0
      %3940 = vmatpush1.msra.mxu0 %v587
      %3941 = vmatprep.subr.mxu0 0.0
      %3942 = vmatpush1.msra.mxu0 %v590
      %3943 = vmatprep.subr.mxu0 0.0
      %3944 = vmatpush1.msra.mxu0 %v593
      %3945 = vmatprep.subr.mxu0 0.0
      %3946 = vmatpush1.msra.mxu0 %v596
      %3947 = vmatprep.subr.mxu0 0.0
      %3948 = vmatpush1.msra.mxu0 %v599
      %3949 = vmatprep.subr.mxu0 0.0
      %3950 = vmatpush1.msra.mxu0 0.0
      %3951 = vmatprep.subr.mxu0 0.0
      %3952 = vmatpush1.msra.mxu0 0.0
      %3953 = vmatprep.subr.mxu0 0.0
      %3954 = vmatpush1.msra.mxu0 0.0
      %3955 = vmatprep.subr.mxu0 0.0
      %3956 = vmatpush1.msra.mxu0 0.0
      %3957 = vmatprep.subr.mxu0 0.0
      %3958 = vmatpush1.msra.mxu0 0.0
      %3959 = vmatprep.subr.mxu0 0.0
      %3960 = vmatpush1.msra.mxu0 0.0
      %3961 = vmatprep.subr.mxu0 0.0
      %3962 = vmatpush1.msra.mxu0 0.0
      %3963 = vmatprep.subr.mxu0 0.0
      %3964 = vmatpush1.msra.mxu0 0.0
      %3965 = vmatprep.subr.mxu0 0.0
      %3966 = vmatpush1.msra.mxu0 0.0
      %3967 = vmatprep.subr.mxu0 0.0
      %3968 = vmatpush1.msra.mxu0 0.0
      %3969 = vmatprep.subr.mxu0 0.0
      %3970 = vmatpush1.msra.mxu0 0.0
      %3971 = vmatprep.subr.mxu0 0.0
      %3972 = vmatpush1.msra.mxu0 0.0
      %3973 = vmatprep.subr.mxu0 0.0
      %3974 = vmatpush1.msra.mxu0 0.0
      %3975 = vmatprep.subr.mxu0 0.0
      %3976 = vmatpush1.msra.mxu0 0.0
      %3977 = vmatprep.subr.mxu0 0.0
      %3978 = vmatpush1.msra.mxu0 0.0
      %3979 = vmatprep.subr.mxu0 0.0
      %3980 = vmatpush1.msra.mxu0 0.0
      %3981 = vmatprep.mubr.f32.mxu0 0.0
      %3982 = vmatmul.mubr.f32.gmra.mrb[0].mxu0 %v3839
      %v3983 = vpop.f32.mrb[0].mxu0
      %v3984 = vadd.f32 0.0, %v3983
      %v3985 = vpop.f32.mrb[0].mxu0
      %3986 = vdwg.mxu0
      %v3987 = vadd.f32 %v3843, %v3913
      %v3988 = vxor.u32 %v3987, 2147483648
      %v3989 = vmul.f32 %v3988, 1.442695
      %v3990 = vpow.pop %v3989
      %v3991 = vadd.f32 %v3990, 1.0
      %v3992 = vrcp.pop %v3991
      %v3993 = vmul.f32 1.0, %v3992
      %v3994 = vadd.f32 %v3844, %v3915
      %v3995 = vxor.u32 %v3994, 2147483648
      %v3996 = vmul.f32 %v3995, 1.442695
      %v3997 = vpow.pop %v3996
      %v3998 = vadd.f32 %v3997, 1.0
      %v3999 = vrcp.pop %v3998
      %v4000 = vmul.f32 1.0, %v3999
      %v4001 = vadd.f32 %v3984, %v550
      %v4002 = vmul.f32 %v3993, %v4001
      %v4003 = vadd.f32 %v3845, %v4002
      %v4004 = vtanh.pop %v4003
      %v4005 = vsub.f32 %v3839, %v4004
      %v4006 = vmul.f32 %v4000, %v4005
      %v4007 = vadd.f32 %v4004, %v4006
      %vm4008 = vcmp.gt.s32.totalorder %v544, 18
      %v4009 = vsel %vm4008, 1, 0
      %4010 = vset.pattern.permute.xlu0 0
      %4011 = vperm.xlu0 %4010, %v4009
      %v4012 = vpop.permute.xlu0 %4011
      %vm4013 = vcmp.eq.s32.totalorder %v4012, 1
      %v4014 = vsel %vm4013, %v4007, %v3839
      %4015 = vst [vmem:[#allocation4] sm:$0xff] %v4014
      %v4016 = vsel %vm4013, %v4007, 0.0
      %s4017 = scalar_lea.vmem [#allocation3], 144
      %4018 = vst [vmem:[%s4017] sm:$0xff] %v4016
      %v4019 = vld [vmem:[#allocation3] sm:$0xff]
      %v4020 = vld [vmem:[#allocation3 + $0x8] sm:$0xff]
      %v4021 = vld [vmem:[#allocation3 + $0x10] sm:$0xff]
      %v4022 = vld [vmem:[#allocation3 + $0x18] sm:$0xff]
      %v4023 = vld [vmem:[#allocation3 + $0x20] sm:$0xff]
      %v4024 = vld [vmem:[#allocation3 + $0x28] sm:$0xff]
      %v4025 = vld [vmem:[#allocation3 + $0x30] sm:$0xff]
      %v4026 = vld [vmem:[#allocation3 + $0x38] sm:$0xff]
      %v4027 = vld [vmem:[#allocation3 + $0x40] sm:$0xff]
      %v4028 = vld [vmem:[#allocation3 + $0x48] sm:$0xff]
      %v4029 = vld [vmem:[#allocation3 + $0x50] sm:$0xff]
      %v4030 = vld [vmem:[#allocation3 + $0x58] sm:$0xff]
      %v4031 = vld [vmem:[#allocation3 + $0x60] sm:$0xff]
      %v4032 = vld [vmem:[#allocation3 + $0x68] sm:$0xff]
      %v4033 = vld [vmem:[#allocation3 + $0x70] sm:$0xff]
      %v4034 = vld [vmem:[#allocation3 + $0x78] sm:$0xff]
      %v4035 = vld [vmem:[#allocation3 + $0x80] sm:$0xff]
      %v4036 = vld [vmem:[#allocation3 + $0x88] sm:$0xff]
      %v4037 = vld [vmem:[#allocation3 + $0x90] sm:$0xff]
      %v4038 = vpack.c.bf16 %v4020, %v4019
      %v4039 = vpack.c.bf16 %v4022, %v4021
      %v4040 = vpack.c.bf16 %v4024, %v4023
      %v4041 = vpack.c.bf16 %v4026, %v4025
      %v4042 = vpack.c.bf16 %v4028, %v4027
      %v4043 = vpack.c.bf16 %v4030, %v4029
      %v4044 = vpack.c.bf16 %v4032, %v4031
      %v4045 = vpack.c.bf16 %v4034, %v4033
      %v4046 = vpack.c.bf16 %v4036, %v4035
      %v4047 = vpack.c.bf16 %v4037, %v4037
      %v4048 = vld [vmem:[%s6] sm:$0xf]
      %v4049 = vld [vmem:[%s6 + $0x4] sm:$0xf]
      %v4050 = vld [vmem:[%s6 + $0x8] sm:$0xf]
      %v4051 = vld [vmem:[%s6 + $0xc] sm:$0xf]
      %v4052 = vld [vmem:[%s6 + $0x10] sm:$0xf]
      %v4053 = vld [vmem:[%s6 + $0x14] sm:$0xf]
      %v4054 = vld [vmem:[%s6 + $0x18] sm:$0xf]
      %v4055 = vld [vmem:[%s6 + $0x1c] sm:$0xf]
      %v4056 = vld [vmem:[%s6 + $0x20] sm:$0xf]
      %v4057 = vld [vmem:[%s6 + $0x24] sm:$0xf]
      %v4058 = vld [vmem:[%s6 + $0x28] sm:$0xf]
      %v4059 = vld [vmem:[%s6 + $0x2c] sm:$0xf]
      %v4060 = vld [vmem:[%s6 + $0x30] sm:$0xf]
      %v4061 = vld [vmem:[%s6 + $0x34] sm:$0xf]
      %v4062 = vld [vmem:[%s6 + $0x38] sm:$0xf]
      %v4063 = vld [vmem:[%s6 + $0x3c] sm:$0xf]
      %v4064 = vld [vmem:[%s7] sm:$0x1]
      %v4066 = vlaneseq
      %v4067 = vshrl.u32 %v4066, 7
      %v4068 = vsub.s32 0, %v4067
      %v4069 = vrot.slane %v4064, %v4068
      %v4087 = vunpack.c.l.b16 %v4048
      %v4088 = vunpack.c.l.b16 %v4049
      %v4089 = vunpack.c.l.b16 %v4050
      %v4090 = vunpack.c.l.b16 %v4051
      %v4091 = vunpack.c.l.b16 %v4052
      %v4092 = vunpack.c.l.b16 %v4053
      %v4093 = vunpack.c.l.b16 %v4054
      %v4094 = vunpack.c.l.b16 %v4055
      %v4095 = vunpack.c.l.b16 %v4056
      %v4096 = vunpack.c.l.b16 %v4057
      %v4097 = vunpack.c.l.b16 %v4058
      %v4098 = vunpack.c.l.b16 %v4059
      %v4099 = vunpack.c.l.b16 %v4060
      %v4100 = vunpack.c.l.b16 %v4061
      %v4101 = vunpack.c.l.b16 %v4062
      %v4102 = vunpack.c.l.b16 %v4063
      %v4103 = vpack.c.b16 %v4088, %v4087
      %v4104 = vpack.c.b16 %v4090, %v4089
      %v4105 = vpack.c.b16 %v4092, %v4091
      %v4106 = vpack.c.b16 %v4094, %v4093
      %v4107 = vpack.c.b16 %v4096, %v4095
      %v4108 = vpack.c.b16 %v4098, %v4097
      %v4109 = vpack.c.b16 %v4100, %v4099
      %v4110 = vpack.c.b16 %v4102, %v4101
      %4119 = vmatprep.subr.bf16.mxu0 0
      %4120 = vmatpush1.bf16.msra.mxu0 %v4103
      %4121 = vmatprep.subr.bf16.mxu0 0
      %4122 = vmatpush1.bf16.msra.mxu0 %v4104
      %4123 = vmatprep.subr.bf16.mxu0 0
      %4124 = vmatpush1.bf16.msra.mxu0 %v4105
      %4125 = vmatprep.subr.bf16.mxu0 0
      %4126 = vmatpush1.bf16.msra.mxu0 %v4106
      %4127 = vmatprep.subr.bf16.mxu0 0
      %4128 = vmatpush1.bf16.msra.mxu0 %v4107
      %4129 = vmatprep.subr.bf16.mxu0 0
      %4130 = vmatpush1.bf16.msra.mxu0 %v4108
      %4131 = vmatprep.subr.bf16.mxu0 0
      %4132 = vmatpush1.bf16.msra.mxu0 %v4109
      %4133 = vmatprep.subr.bf16.mxu0 0
      %4134 = vmatpush1.bf16.msra.mxu0 %v4110
      %4135 = vmatprep.subr.bf16.mxu0 0
      %4136 = vmatpush1.bf16.msra.mxu0 0
      %4137 = vmatprep.subr.bf16.mxu0 0
      %4138 = vmatpush1.bf16.msra.mxu0 0
      %4139 = vmatprep.subr.bf16.mxu0 0
      %4140 = vmatpush1.bf16.msra.mxu0 0
      %4141 = vmatprep.subr.bf16.mxu0 0
      %4142 = vmatpush1.bf16.msra.mxu0 0
      %4143 = vmatprep.subr.bf16.mxu0 0
      %4144 = vmatpush1.bf16.msra.mxu0 0
      %4145 = vmatprep.subr.bf16.mxu0 0
      %4146 = vmatpush1.bf16.msra.mxu0 0
      %4147 = vmatprep.subr.bf16.mxu0 0
      %4148 = vmatpush1.bf16.msra.mxu0 0
      %4149 = vmatprep.subr.bf16.mxu0 0
      %4150 = vmatpush1.bf16.msra.mxu0 0
      %4151 = vmatprep.mubr.bf16.mxu0 0
      %4152 = vmatmul.mubr.bf16.gmra.mrb[0].mxu0 %v4038
      %v4153 = vpop.f32.mrb[0].mxu0
      %v4154 = vadd.f32 %v4069, %v4153
      %v4155 = vpop.f32.mrb[0].mxu0
      %v4156 = vpop.f32.mrb[0].mxu0
      %v4157 = vadd.f32 %v4069, %v4156
      %v4158 = vpop.f32.mrb[0].mxu0
      %4159 = vmatprep.mubr.bf16.mxu0 0
      %4160 = vmatmul.mubr.bf16.gmra.mrb[0].mxu0 %v4039
      %v4161 = vpop.f32.mrb[0].mxu0
      %v4162 = vadd.f32 %v4069, %v4161
      %v4163 = vpop.f32.mrb[0].mxu0
      %v4164 = vpop.f32.mrb[0].mxu0
      %v4165 = vadd.f32 %v4069, %v4164
      %v4166 = vpop.f32.mrb[0].mxu0
      %4167 = vmatprep.mubr.bf16.mxu0 0
      %4168 = vmatmul.mubr.bf16.gmra.mrb[0].mxu0 %v4040
      %v4169 = vpop.f32.mrb[0].mxu0
      %v4170 = vadd.f32 %v4069, %v4169
      %v4171 = vpop.f32.mrb[0].mxu0
      %v4172 = vpop.f32.mrb[0].mxu0
      %v4173 = vadd.f32 %v4069, %v4172
      %v4174 = vpop.f32.mrb[0].mxu0
      %4175 = vmatprep.mubr.bf16.mxu0 0
      %4176 = vmatmul.mubr.bf16.gmra.mrb[0].mxu0 %v4041
      %v4177 = vpop.f32.mrb[0].mxu0
      %v4178 = vadd.f32 %v4069, %v4177
      %v4179 = vpop.f32.mrb[0].mxu0
      %v4180 = vpop.f32.mrb[0].mxu0
      %v4181 = vadd.f32 %v4069, %v4180
      %v4182 = vpop.f32.mrb[0].mxu0
      %4183 = vmatprep.mubr.bf16.mxu0 0
      %4184 = vmatmul.mubr.bf16.gmra.mrb[0].mxu0 %v4042
      %v4185 = vpop.f32.mrb[0].mxu0
      %v4186 = vadd.f32 %v4069, %v4185
      %v4187 = vpop.f32.mrb[0].mxu0
      %v4188 = vpop.f32.mrb[0].mxu0
      %v4189 = vadd.f32 %v4069, %v4188
      %v4190 = vpop.f32.mrb[0].mxu0
      %4191 = vmatprep.mubr.bf16.mxu0 0
      %4192 = vmatmul.mubr.bf16.gmra.mrb[0].mxu0 %v4043
      %v4193 = vpop.f32.mrb[0].mxu0
      %v4194 = vadd.f32 %v4069, %v4193
      %v4195 = vpop.f32.mrb[0].mxu0
      %v4196 = vpop.f32.mrb[0].mxu0
      %v4197 = vadd.f32 %v4069, %v4196
      %v4198 = vpop.f32.mrb[0].mxu0
      %4199 = vmatprep.mubr.bf16.mxu0 0
      %4200 = vmatmul.mubr.bf16.gmra.mrb[0].mxu0 %v4044
      %v4201 = vpop.f32.mrb[0].mxu0
      %v4202 = vadd.f32 %v4069, %v4201
      %v4203 = vpop.f32.mrb[0].mxu0
      %v4204 = vpop.f32.mrb[0].mxu0
      %v4205 = vadd.f32 %v4069, %v4204
      %v4206 = vpop.f32.mrb[0].mxu0
      %4207 = vmatprep.mubr.bf16.mxu0 0
      %4208 = vmatmul.mubr.bf16.gmra.mrb[0].mxu0 %v4045
      %v4209 = vpop.f32.mrb[0].mxu0
      %v4210 = vadd.f32 %v4069, %v4209
      %v4211 = vpop.f32.mrb[0].mxu0
      %v4212 = vpop.f32.mrb[0].mxu0
      %v4213 = vadd.f32 %v4069, %v4212
      %v4214 = vpop.f32.mrb[0].mxu0
      %4215 = vmatprep.mubr.bf16.mxu0 0
      %4216 = vmatmul.mubr.bf16.gmra.mrb[0].mxu0 %v4046
      %v4217 = vpop.f32.mrb[0].mxu0
      %v4218 = vadd.f32 %v4069, %v4217
      %v4219 = vpop.f32.mrb[0].mxu0
      %v4220 = vpop.f32.mrb[0].mxu0
      %v4221 = vadd.f32 %v4069, %v4220
      %v4222 = vpop.f32.mrb[0].mxu0
      %4223 = vmatprep.mubr.bf16.mxu0 0
      %4224 = vmatmul.mubr.bf16.gmra.mrb[0].mxu0 %v4047
      %v4225 = vpop.f32.mrb[0].mxu0
      %v4226 = vadd.f32 %v4069, %v4225
      %v4227 = vpop.f32.mrb[0].mxu0
      %v4228 = vpop.f32.mrb[0].mxu0
      %v4229 = vpop.f32.mrb[0].mxu0
      %4230 = vdwg.mxu0
      %v4231 = vpack.c.bf16 %v4157, %v4154
      %v4232 = vpack.c.bf16 %v4165, %v4162
      %v4233 = vpack.c.bf16 %v4173, %v4170
      %v4234 = vpack.c.bf16 %v4181, %v4178
      %v4235 = vpack.c.bf16 %v4189, %v4186
      %v4236 = vpack.c.bf16 %v4197, %v4194
      %v4237 = vpack.c.bf16 %v4205, %v4202
      %v4238 = vpack.c.bf16 %v4213, %v4210
      %v4239 = vpack.c.bf16 %v4221, %v4218
      %v4240 = vpack.c.bf16 %v4226, %v4226
      %v4241 = vld [vmem:[%s8] sm:$0xf]
      %v4242 = vld [vmem:[%s8 + $0x4] sm:$0xf]
      %v4243 = vld [vmem:[%s8 + $0x8] sm:$0xf]
      %v4244 = vld [vmem:[%s8 + $0xc] sm:$0xf]
      %v4245 = vld [vmem:[%s8 + $0x10] sm:$0xf]
      %v4246 = vld [vmem:[%s8 + $0x14] sm:$0xf]
      %v4247 = vld [vmem:[%s8 + $0x18] sm:$0xf]
      %v4248 = vld [vmem:[%s8 + $0x1c] sm:$0xf]
      %v4249 = vld [vmem:[%s8 + $0x20] sm:$0xf]
      %v4250 = vld [vmem:[%s8 + $0x24] sm:$0xf]
      %v4251 = vld [vmem:[%s8 + $0x28] sm:$0xf]
      %v4252 = vld [vmem:[%s8 + $0x2c] sm:$0xf]
      %v4253 = vld [vmem:[%s8 + $0x30] sm:$0xf]
      %v4254 = vld [vmem:[%s8 + $0x34] sm:$0xf]
      %v4255 = vld [vmem:[%s8 + $0x38] sm:$0xf]
      %v4256 = vld [vmem:[%s8 + $0x3c] sm:$0xf]
      %v4257 = vld [vmem:[%s9] sm:$0x1]
      %v4259 = vlaneseq
      %v4260 = vshrl.u32 %v4259, 7
      %v4261 = vsub.s32 0, %v4260
      %v4262 = vrot.slane %v4257, %v4261
      %v4280 = vunpack.c.l.b16 %v4241
      %v4281 = vunpack.c.l.b16 %v4242
      %v4282 = vunpack.c.l.b16 %v4243
      %v4283 = vunpack.c.l.b16 %v4244
      %v4284 = vunpack.c.l.b16 %v4245
      %v4285 = vunpack.c.l.b16 %v4246
      %v4286 = vunpack.c.l.b16 %v4247
      %v4287 = vunpack.c.l.b16 %v4248
      %v4288 = vunpack.c.l.b16 %v4249
      %v4289 = vunpack.c.l.b16 %v4250
      %v4290 = vunpack.c.l.b16 %v4251
      %v4291 = vunpack.c.l.b16 %v4252
      %v4292 = vunpack.c.l.b16 %v4253
      %v4293 = vunpack.c.l.b16 %v4254
      %v4294 = vunpack.c.l.b16 %v4255
      %v4295 = vunpack.c.l.b16 %v4256
      %v4296 = vpack.c.b16 %v4281, %v4280
      %v4297 = vpack.c.b16 %v4283, %v4282
      %v4298 = vpack.c.b16 %v4285, %v4284
      %v4299 = vpack.c.b16 %v4287, %v4286
      %v4300 = vpack.c.b16 %v4289, %v4288
      %v4301 = vpack.c.b16 %v4291, %v4290
      %v4302 = vpack.c.b16 %v4293, %v4292
      %v4303 = vpack.c.b16 %v4295, %v4294
      %4312 = vmatprep.subr.bf16.mxu0 0
      %4313 = vmatpush1.bf16.msra.mxu0 %v4296
      %4314 = vmatprep.subr.bf16.mxu0 0
      %4315 = vmatpush1.bf16.msra.mxu0 %v4297
      %4316 = vmatprep.subr.bf16.mxu0 0
      %4317 = vmatpush1.bf16.msra.mxu0 %v4298
      %4318 = vmatprep.subr.bf16.mxu0 0
      %4319 = vmatpush1.bf16.msra.mxu0 %v4299
      %4320 = vmatprep.subr.bf16.mxu0 0
      %4321 = vmatpush1.bf16.msra.mxu0 %v4300
      %4322 = vmatprep.subr.bf16.mxu0 0
      %4323 = vmatpush1.bf16.msra.mxu0 %v4301
      %4324 = vmatprep.subr.bf16.mxu0 0
      %4325 = vmatpush1.bf16.msra.mxu0 %v4302
      %4326 = vmatprep.subr.bf16.mxu0 0
      %4327 = vmatpush1.bf16.msra.mxu0 %v4303
      %4328 = vmatprep.subr.bf16.mxu0 0
      %4329 = vmatpush1.bf16.msra.mxu0 0
      %4330 = vmatprep.subr.bf16.mxu0 0
      %4331 = vmatpush1.bf16.msra.mxu0 0
      %4332 = vmatprep.subr.bf16.mxu0 0
      %4333 = vmatpush1.bf16.msra.mxu0 0
      %4334 = vmatprep.subr.bf16.mxu0 0
      %4335 = vmatpush1.bf16.msra.mxu0 0
      %4336 = vmatprep.subr.bf16.mxu0 0
      %4337 = vmatpush1.bf16.msra.mxu0 0
      %4338 = vmatprep.subr.bf16.mxu0 0
      %4339 = vmatpush1.bf16.msra.mxu0 0
      %4340 = vmatprep.subr.bf16.mxu0 0
      %4341 = vmatpush1.bf16.msra.mxu0 0
      %4342 = vmatprep.subr.bf16.mxu0 0
      %4343 = vmatpush1.bf16.msra.mxu0 0
      %4344 = vmatprep.mubr.bf16.mxu0 0
      %4345 = vmatmul.mubr.bf16.gmra.mrb[0].mxu0 %v4231
      %v4346 = vpop.f32.mrb[0].mxu0
      %v4347 = vadd.f32 %v4262, %v4346
      %v4348 = vpop.f32.mrb[0].mxu0
      %v4349 = vpop.f32.mrb[0].mxu0
      %v4350 = vadd.f32 %v4262, %v4349
      %v4351 = vpop.f32.mrb[0].mxu0
      %4352 = vmatprep.mubr.bf16.mxu0 0
      %4353 = vmatmul.mubr.bf16.gmra.mrb[0].mxu0 %v4232
      %v4354 = vpop.f32.mrb[0].mxu0
      %v4355 = vadd.f32 %v4262, %v4354
      %v4356 = vpop.f32.mrb[0].mxu0
      %v4357 = vpop.f32.mrb[0].mxu0
      %v4358 = vadd.f32 %v4262, %v4357
      %v4359 = vpop.f32.mrb[0].mxu0
      %4360 = vmatprep.mubr.bf16.mxu0 0
      %4361 = vmatmul.mubr.bf16.gmra.mrb[0].mxu0 %v4233
      %v4362 = vpop.f32.mrb[0].mxu0
      %v4363 = vadd.f32 %v4262, %v4362
      %v4364 = vpop.f32.mrb[0].mxu0
      %v4365 = vpop.f32.mrb[0].mxu0
      %v4366 = vadd.f32 %v4262, %v4365
      %v4367 = vpop.f32.mrb[0].mxu0
      %4368 = vmatprep.mubr.bf16.mxu0 0
      %4369 = vmatmul.mubr.bf16.gmra.mrb[0].mxu0 %v4234
      %v4370 = vpop.f32.mrb[0].mxu0
      %v4371 = vadd.f32 %v4262, %v4370
      %v4372 = vpop.f32.mrb[0].mxu0
      %v4373 = vpop.f32.mrb[0].mxu0
      %v4374 = vadd.f32 %v4262, %v4373
      %v4375 = vpop.f32.mrb[0].mxu0
      %4376 = vmatprep.mubr.bf16.mxu0 0
      %4377 = vmatmul.mubr.bf16.gmra.mrb[0].mxu0 %v4235
      %v4378 = vpop.f32.mrb[0].mxu0
      %v4379 = vadd.f32 %v4262, %v4378
      %v4380 = vpop.f32.mrb[0].mxu0
      %v4381 = vpop.f32.mrb[0].mxu0
      %v4382 = vadd.f32 %v4262, %v4381
      %v4383 = vpop.f32.mrb[0].mxu0
      %4384 = vmatprep.mubr.bf16.mxu0 0
      %4385 = vmatmul.mubr.bf16.gmra.mrb[0].mxu0 %v4236
      %v4386 = vpop.f32.mrb[0].mxu0
      %v4387 = vadd.f32 %v4262, %v4386
      %v4388 = vpop.f32.mrb[0].mxu0
      %v4389 = vpop.f32.mrb[0].mxu0
      %v4390 = vadd.f32 %v4262, %v4389
      %v4391 = vpop.f32.mrb[0].mxu0
      %4392 = vmatprep.mubr.bf16.mxu0 0
      %4393 = vmatmul.mubr.bf16.gmra.mrb[0].mxu0 %v4237
      %v4394 = vpop.f32.mrb[0].mxu0
      %v4395 = vadd.f32 %v4262, %v4394
      %v4396 = vpop.f32.mrb[0].mxu0
      %v4397 = vpop.f32.mrb[0].mxu0
      %v4398 = vadd.f32 %v4262, %v4397
      %v4399 = vpop.f32.mrb[0].mxu0
      %4400 = vmatprep.mubr.bf16.mxu0 0
      %4401 = vmatmul.mubr.bf16.gmra.mrb[0].mxu0 %v4238
      %v4402 = vpop.f32.mrb[0].mxu0
      %v4403 = vadd.f32 %v4262, %v4402
      %v4404 = vpop.f32.mrb[0].mxu0
      %v4405 = vpop.f32.mrb[0].mxu0
      %v4406 = vadd.f32 %v4262, %v4405
      %v4407 = vpop.f32.mrb[0].mxu0
      %4408 = vmatprep.mubr.bf16.mxu0 0
      %4409 = vmatmul.mubr.bf16.gmra.mrb[0].mxu0 %v4239
      %v4410 = vpop.f32.mrb[0].mxu0
      %v4411 = vadd.f32 %v4262, %v4410
      %v4412 = vpop.f32.mrb[0].mxu0
      %v4413 = vpop.f32.mrb[0].mxu0
      %v4414 = vadd.f32 %v4262, %v4413
      %v4415 = vpop.f32.mrb[0].mxu0
      %4416 = vmatprep.mubr.bf16.mxu0 0
      %4417 = vmatmul.mubr.bf16.gmra.mrb[0].mxu0 %v4240
      %v4418 = vpop.f32.mrb[0].mxu0
      %v4419 = vadd.f32 %v4262, %v4418
      %v4420 = vpop.f32.mrb[0].mxu0
      %v4421 = vpop.f32.mrb[0].mxu0
      %v4422 = vpop.f32.mrb[0].mxu0
      %4423 = vdwg.mxu0
      %v4424 = vmul.f32 %v4347, 0.5
      %v4425 = vmul.f32 %v4350, 0.5
      %v4426 = vmul.f32 %v4355, 0.5
      %v4427 = vmul.f32 %v4358, 0.5
      %v4428 = vmul.f32 %v4363, 0.5
      %v4429 = vmul.f32 %v4366, 0.5
      %v4430 = vmul.f32 %v4371, 0.5
      %v4431 = vmul.f32 %v4374, 0.5
      %v4432 = vmul.f32 %v4379, 0.5
      %v4433 = vmul.f32 %v4382, 0.5
      %v4434 = vmul.f32 %v4387, 0.5
      %v4435 = vmul.f32 %v4390, 0.5
      %v4436 = vmul.f32 %v4395, 0.5
      %v4437 = vmul.f32 %v4398, 0.5
      %v4438 = vmul.f32 %v4403, 0.5
      %v4439 = vmul.f32 %v4406, 0.5
      %v4440 = vmul.f32 %v4411, 0.5
      %v4441 = vmul.f32 %v4414, 0.5
      %v4442 = vmul.f32 %v4419, 0.5
      %v4443 = vmul.f32 %v4347, 0.70710677
      %v4444 = vmul.f32 %v4350, 0.70710677
      %v4445 = vmul.f32 %v4355, 0.70710677
      %v4446 = vmul.f32 %v4358, 0.70710677
      %v4447 = vmul.f32 %v4363, 0.70710677
      %v4448 = vmul.f32 %v4366, 0.70710677
      %v4449 = vmul.f32 %v4371, 0.70710677
      %v4450 = vmul.f32 %v4374, 0.70710677
      %v4451 = vmul.f32 %v4379, 0.70710677
      %v4452 = vmul.f32 %v4382, 0.70710677
      %v4453 = vmul.f32 %v4387, 0.70710677
      %v4454 = vmul.f32 %v4390, 0.70710677
      %v4455 = vmul.f32 %v4395, 0.70710677
      %v4456 = vmul.f32 %v4398, 0.70710677
      %v4457 = vmul.f32 %v4403, 0.70710677
      %v4458 = vmul.f32 %v4406, 0.70710677
      %v4459 = vmul.f32 %v4411, 0.70710677
      %v4460 = vmul.f32 %v4414, 0.70710677
      %v4461 = vmul.f32 %v4419, 0.70710677
      %v4462 = verf.f32.pop %v4443
      %v4463 = verf.f32.pop %v4444
      %v4464 = verf.f32.pop %v4445
      %v4465 = verf.f32.pop %v4446
      %v4466 = verf.f32.pop %v4447
      %v4467 = verf.f32.pop %v4448
      %v4468 = verf.f32.pop %v4449
      %v4469 = verf.f32.pop %v4450
      %v4470 = verf.f32.pop %v4451
      %v4471 = verf.f32.pop %v4452
      %v4472 = verf.f32.pop %v4453
      %v4473 = verf.f32.pop %v4454
      %v4474 = verf.f32.pop %v4455
      %v4475 = verf.f32.pop %v4456
      %v4476 = verf.f32.pop %v4457
      %v4477 = verf.f32.pop %v4458
      %v4478 = verf.f32.pop %v4459
      %v4479 = verf.f32.pop %v4460
      %v4480 = verf.f32.pop %v4461
      %v4481 = vadd.f32 %v4462, 1.0
      %v4482 = vadd.f32 %v4463, 1.0
      %v4483 = vadd.f32 %v4464, 1.0
      %v4484 = vadd.f32 %v4465, 1.0
      %v4485 = vadd.f32 %v4466, 1.0
      %v4486 = vadd.f32 %v4467, 1.0
      %v4487 = vadd.f32 %v4468, 1.0
      %v4488 = vadd.f32 %v4469, 1.0
      %v4489 = vadd.f32 %v4470, 1.0
      %v4490 = vadd.f32 %v4471, 1.0
      %v4491 = vadd.f32 %v4472, 1.0
      %v4492 = vadd.f32 %v4473, 1.0
      %v4493 = vadd.f32 %v4474, 1.0
      %v4494 = vadd.f32 %v4475, 1.0
      %v4495 = vadd.f32 %v4476, 1.0
      %v4496 = vadd.f32 %v4477, 1.0
      %v4497 = vadd.f32 %v4478, 1.0
      %v4498 = vadd.f32 %v4479, 1.0
      %v4499 = vadd.f32 %v4480, 1.0
      %v4500 = vmul.f32 %v4424, %v4481
      %v4501 = vmul.f32 %v4425, %v4482
      %v4502 = vmul.f32 %v4426, %v4483
      %v4503 = vmul.f32 %v4427, %v4484
      %v4504 = vmul.f32 %v4428, %v4485
      %v4505 = vmul.f32 %v4429, %v4486
      %v4506 = vmul.f32 %v4430, %v4487
      %v4507 = vmul.f32 %v4431, %v4488
      %v4508 = vmul.f32 %v4432, %v4489
      %v4509 = vmul.f32 %v4433, %v4490
      %v4510 = vmul.f32 %v4434, %v4491
      %v4511 = vmul.f32 %v4435, %v4492
      %v4512 = vmul.f32 %v4436, %v4493
      %v4513 = vmul.f32 %v4437, %v4494
      %v4514 = vmul.f32 %v4438, %v4495
      %v4515 = vmul.f32 %v4439, %v4496
      %v4516 = vmul.f32 %v4440, %v4497
      %v4517 = vmul.f32 %v4441, %v4498
      %v4518 = vmul.f32 %v4442, %v4499
      %v4519 = vpack.c.bf16 %v4501, %v4500
      %v4520 = vpack.c.bf16 %v4503, %v4502
      %v4521 = vpack.c.bf16 %v4505, %v4504
      %v4522 = vpack.c.bf16 %v4507, %v4506
      %v4523 = vpack.c.bf16 %v4509, %v4508
      %v4524 = vpack.c.bf16 %v4511, %v4510
      %v4525 = vpack.c.bf16 %v4513, %v4512
      %v4526 = vpack.c.bf16 %v4515, %v4514
      %v4527 = vpack.c.bf16 %v4517, %v4516
      %v4528 = vpack.c.bf16 %v4518, %v4518
      %v4539 = vunpack.c.l.b16 %v4519
      %v4540 = vunpack.c.h.b16 %v4519
      %v4541 = vunpack.c.l.b16 %v4520
      %v4542 = vunpack.c.h.b16 %v4520
      %v4543 = vunpack.c.l.b16 %v4521
      %v4544 = vunpack.c.h.b16 %v4521
      %v4545 = vunpack.c.l.b16 %v4522
      %v4546 = vunpack.c.h.b16 %v4522
      %v4547 = vunpack.c.l.b16 %v4523
      %v4548 = vunpack.c.h.b16 %v4523
      %v4549 = vunpack.c.l.b16 %v4524
      %v4550 = vunpack.c.h.b16 %v4524
      %v4551 = vunpack.c.l.b16 %v4525
      %v4552 = vunpack.c.h.b16 %v4525
      %v4553 = vunpack.c.l.b16 %v4526
      %v4554 = vunpack.c.h.b16 %v4526
      %v4555 = vunpack.c.l.b16 %v4527
      %v4556 = vunpack.c.h.b16 %v4527
      %v4557 = vunpack.c.l.b16 %v4528
      %v4558 = vpack.c.b16 %v4539, %v4539
      %v4559 = vpack.c.b16 %v4540, %v4540
      %v4560 = vpack.c.b16 %v4541, %v4541
      %v4561 = vpack.c.b16 %v4542, %v4542
      %v4562 = vpack.c.b16 %v4543, %v4543
      %v4563 = vpack.c.b16 %v4544, %v4544
      %v4564 = vpack.c.b16 %v4545, %v4545
      %v4565 = vpack.c.b16 %v4546, %v4546
      %v4566 = vpack.c.b16 %v4547, %v4547
      %v4567 = vpack.c.b16 %v4548, %v4548
      %v4568 = vpack.c.b16 %v4549, %v4549
      %v4569 = vpack.c.b16 %v4550, %v4550
      %v4570 = vpack.c.b16 %v4551, %v4551
      %v4571 = vpack.c.b16 %v4552, %v4552
      %v4572 = vpack.c.b16 %v4553, %v4553
      %v4573 = vpack.c.b16 %v4554, %v4554
      %v4574 = vpack.c.b16 %v4555, %v4555
      %v4575 = vpack.c.b16 %v4556, %v4556
      %v4576 = vpack.c.b16 %v4557, %v4557
      %4596 = vst [vmem:[#allocation5] sm:$0xf] %v4558
      %4597 = vst [vmem:[#allocation5 + $0x4] sm:$0xf] %v4559
      %4598 = vst [vmem:[#allocation5 + $0x8] sm:$0xf] %v4560
      %4599 = vst [vmem:[#allocation5 + $0xc] sm:$0xf] %v4561
      %4600 = vst [vmem:[#allocation5 + $0x10] sm:$0xf] %v4562
      %4601 = vst [vmem:[#allocation5 + $0x14] sm:$0xf] %v4563
      %4602 = vst [vmem:[#allocation5 + $0x18] sm:$0xf] %v4564
      %4603 = vst [vmem:[#allocation5 + $0x1c] sm:$0xf] %v4565
      %4604 = vst [vmem:[#allocation5 + $0x20] sm:$0xf] %v4566
      %4605 = vst [vmem:[#allocation5 + $0x24] sm:$0xf] %v4567
      %4606 = vst [vmem:[#allocation5 + $0x28] sm:$0xf] %v4568
      %4607 = vst [vmem:[#allocation5 + $0x2c] sm:$0xf] %v4569
      %4608 = vst [vmem:[#allocation5 + $0x30] sm:$0xf] %v4570
      %4609 = vst [vmem:[#allocation5 + $0x34] sm:$0xf] %v4571
      %4610 = vst [vmem:[#allocation5 + $0x38] sm:$0xf] %v4572
      %4611 = vst [vmem:[#allocation5 + $0x3c] sm:$0xf] %v4573
      %4612 = vst [vmem:[#allocation5 + $0x40] sm:$0xf] %v4574
      %4613 = vst [vmem:[#allocation5 + $0x44] sm:$0xf] %v4575
      %4614 = vst [vmem:[#allocation5 + $0x48] sm:$0xf] %v4576
    $region65: #{tpu_custom_call.1} parent=1 // pred_fallthru
      _
    %v4615 = vld [vmem:[#allocation5] sm:$0xf]
    %v4616 = vld [vmem:[#allocation5 + $0x4] sm:$0xf]
    %v4617 = vld [vmem:[#allocation5 + $0x8] sm:$0xf]
    %v4618 = vld [vmem:[#allocation5 + $0xc] sm:$0xf]
    %v4619 = vld [vmem:[#allocation5 + $0x10] sm:$0xf]
    %v4620 = vld [vmem:[#allocation5 + $0x14] sm:$0xf]
    %v4621 = vld [vmem:[#allocation5 + $0x18] sm:$0xf]
    %v4622 = vld [vmem:[#allocation5 + $0x1c] sm:$0xf]
    %v4623 = vld [vmem:[#allocation5 + $0x20] sm:$0xf]
    %v4624 = vld [vmem:[#allocation5 + $0x24] sm:$0xf]
    %v4625 = vld [vmem:[#allocation5 + $0x28] sm:$0xf]
    %v4626 = vld [vmem:[#allocation5 + $0x2c] sm:$0xf]
    %v4627 = vld [vmem:[#allocation5 + $0x30] sm:$0xf]
    %v4628 = vld [vmem:[#allocation5 + $0x34] sm:$0xf]
    %v4629 = vld [vmem:[#allocation5 + $0x38] sm:$0xf]
    %v4630 = vld [vmem:[#allocation5 + $0x3c] sm:$0xf]
    %v4631 = vld [vmem:[#allocation5 + $0x40] sm:$0xf]
    %v4632 = vld [vmem:[#allocation5 + $0x44] sm:$0xf]
    %v4633 = vld [vmem:[#allocation5 + $0x48] sm:$0xf]
    %v4634 = vld [vmem:[#allocation11] sm:$0xf]
    %v4635 = vld [vmem:[#allocation11 + $0x4] sm:$0xf]
    %v4636 = vld [vmem:[#allocation11 + $0x8] sm:$0xf]
    %v4637 = vld [vmem:[#allocation11 + $0xc] sm:$0xf]
    %v4638 = vld [vmem:[#allocation11 + $0x10] sm:$0xf]
    %v4639 = vld [vmem:[#allocation11 + $0x14] sm:$0xf]
    %v4640 = vld [vmem:[#allocation11 + $0x18] sm:$0xf]
    %v4641 = vld [vmem:[#allocation11 + $0x1c] sm:$0xf]
    %v4642 = vld [vmem:[#allocation11 + $0x20] sm:$0xf]
    %v4643 = vld [vmem:[#allocation11 + $0x24] sm:$0xf]
    %v4644 = vld [vmem:[#allocation11 + $0x28] sm:$0xf]
    %v4645 = vld [vmem:[#allocation11 + $0x2c] sm:$0xf]
    %v4646 = vld [vmem:[#allocation11 + $0x30] sm:$0xf]
    %v4647 = vld [vmem:[#allocation11 + $0x34] sm:$0xf]
    %v4648 = vld [vmem:[#allocation11 + $0x38] sm:$0xf]
    %v4649 = vld [vmem:[#allocation11 + $0x3c] sm:$0xf]
    %v4650 = vld [vmem:[%s11] sm:$0x1]
    %v4652 = vlaneseq
    %v4653 = vshrl.u32 %v4652, 7
    %v4654 = vsub.s32 0, %v4653
    %v4655 = vrot.slane %v4650, %v4654
    %v4676 = vunpack.c.l.b16 %v4615
    %v4677 = vunpack.c.l.b16 %v4616
    %v4678 = vunpack.c.l.b16 %v4617
    %v4679 = vunpack.c.l.b16 %v4618
    %v4680 = vunpack.c.l.b16 %v4619
    %v4681 = vunpack.c.l.b16 %v4620
    %v4682 = vunpack.c.l.b16 %v4621
    %v4683 = vunpack.c.l.b16 %v4622
    %v4684 = vunpack.c.l.b16 %v4623
    %v4685 = vunpack.c.l.b16 %v4624
    %v4686 = vunpack.c.l.b16 %v4625
    %v4687 = vunpack.c.l.b16 %v4626
    %v4688 = vunpack.c.l.b16 %v4627
    %v4689 = vunpack.c.l.b16 %v4628
    %v4690 = vunpack.c.l.b16 %v4629
    %v4691 = vunpack.c.l.b16 %v4630
    %v4692 = vunpack.c.l.b16 %v4631
    %v4693 = vunpack.c.l.b16 %v4632
    %v4694 = vunpack.c.l.b16 %v4633
    %v4695 = vpack.c.b16 %v4677, %v4676
    %v4696 = vpack.c.b16 %v4679, %v4678
    %v4697 = vpack.c.b16 %v4681, %v4680
    %v4698 = vpack.c.b16 %v4683, %v4682
    %v4699 = vpack.c.b16 %v4685, %v4684
    %v4700 = vpack.c.b16 %v4687, %v4686
    %v4701 = vpack.c.b16 %v4689, %v4688
    %v4702 = vpack.c.b16 %v4691, %v4690
    %v4703 = vpack.c.b16 %v4693, %v4692
    %v4704 = vpack.c.b16 %v4694, %v4694
    %v4731 = vunpack.c.l.b16 %v4634
    %v4732 = vunpack.c.l.b16 %v4635
    %v4733 = vunpack.c.l.b16 %v4636
    %v4734 = vunpack.c.l.b16 %v4637
    %v4735 = vunpack.c.l.b16 %v4638
    %v4736 = vunpack.c.l.b16 %v4639
    %v4737 = vunpack.c.l.b16 %v4640
    %v4738 = vunpack.c.l.b16 %v4641
    %v4739 = vunpack.c.l.b16 %v4642
    %v4740 = vunpack.c.l.b16 %v4643
    %v4741 = vunpack.c.l.b16 %v4644
    %v4742 = vunpack.c.l.b16 %v4645
    %v4743 = vunpack.c.l.b16 %v4646
    %v4744 = vunpack.c.l.b16 %v4647
    %v4745 = vunpack.c.l.b16 %v4648
    %v4746 = vunpack.c.l.b16 %v4649
    %v4747 = vpack.c.b16 %v4732, %v4731
    %v4748 = vpack.c.b16 %v4734, %v4733
    %v4749 = vpack.c.b16 %v4736, %v4735
    %v4750 = vpack.c.b16 %v4738, %v4737
    %v4751 = vpack.c.b16 %v4740, %v4739
    %v4752 = vpack.c.b16 %v4742, %v4741
    %v4753 = vpack.c.b16 %v4744, %v4743
    %v4754 = vpack.c.b16 %v4746, %v4745
    %4763 = vmatprep.subr.bf16.mxu0 0
    %4764 = vmatpush1.bf16.msra.mxu0 %v4747
    %4765 = vmatprep.subr.bf16.mxu0 0
    %4766 = vmatpush1.bf16.msra.mxu0 %v4748
    %4767 = vmatprep.subr.bf16.mxu0 0
    %4768 = vmatpush1.bf16.msra.mxu0 %v4749
    %4769 = vmatprep.subr.bf16.mxu0 0
    %4770 = vmatpush1.bf16.msra.mxu0 %v4750
    %4771 = vmatprep.subr.bf16.mxu0 0
    %4772 = vmatpush1.bf16.msra.mxu0 %v4751
    %4773 = vmatprep.subr.bf16.mxu0 0
    %4774 = vmatpush1.bf16.msra.mxu0 %v4752
    %4775 = vmatprep.subr.bf16.mxu0 0
    %4776 = vmatpush1.bf16.msra.mxu0 %v4753
    %4777 = vmatprep.subr.bf16.mxu0 0
    %4778 = vmatpush1.bf16.msra.mxu0 %v4754
    %4779 = vmatprep.subr.bf16.mxu0 0
    %4780 = vmatpush1.bf16.msra.mxu0 0
    %4781 = vmatprep.subr.bf16.mxu0 0
    %4782 = vmatpush1.bf16.msra.mxu0 0
    %4783 = vmatprep.subr.bf16.mxu0 0
    %4784 = vmatpush1.bf16.msra.mxu0 0
    %4785 = vmatprep.subr.bf16.mxu0 0
    %4786 = vmatpush1.bf16.msra.mxu0 0
    %4787 = vmatprep.subr.bf16.mxu0 0
    %4788 = vmatpush1.bf16.msra.mxu0 0
    %4789 = vmatprep.subr.bf16.mxu0 0
    %4790 = vmatpush1.bf16.msra.mxu0 0
    %4791 = vmatprep.subr.bf16.mxu0 0
    %4792 = vmatpush1.bf16.msra.mxu0 0
    %4793 = vmatprep.subr.bf16.mxu0 0
    %4794 = vmatpush1.bf16.msra.mxu0 0
    %4795 = vmatprep.mubr.bf16.mxu0 0
    %4796 = vmatmul.mubr.bf16.gmra.mrb[0].mxu0 %v4695
    %v4797 = vpop.f32.mrb[0].mxu0
    %v4798 = vadd.f32 %v4655, %v4797
    %v4799 = vpop.f32.mrb[0].mxu0
    %v4800 = vpop.f32.mrb[0].mxu0
    %v4801 = vadd.f32 %v4655, %v4800
    %v4802 = vpop.f32.mrb[0].mxu0
    %4803 = vmatprep.mubr.bf16.mxu0 0
    %4804 = vmatmul.mubr.bf16.gmra.mrb[0].mxu0 %v4696
    %v4805 = vpop.f32.mrb[0].mxu0
    %v4806 = vadd.f32 %v4655, %v4805
    %v4807 = vpop.f32.mrb[0].mxu0
    %v4808 = vpop.f32.mrb[0].mxu0
    %v4809 = vadd.f32 %v4655, %v4808
    %v4810 = vpop.f32.mrb[0].mxu0
    %4811 = vmatprep.mubr.bf16.mxu0 0
    %4812 = vmatmul.mubr.bf16.gmra.mrb[0].mxu0 %v4697
    %v4813 = vpop.f32.mrb[0].mxu0
    %v4814 = vadd.f32 %v4655, %v4813
    %v4815 = vpop.f32.mrb[0].mxu0
    %v4816 = vpop.f32.mrb[0].mxu0
    %v4817 = vadd.f32 %v4655, %v4816
    %v4818 = vpop.f32.mrb[0].mxu0
    %4819 = vmatprep.mubr.bf16.mxu0 0
    %4820 = vmatmul.mubr.bf16.gmra.mrb[0].mxu0 %v4698
    %v4821 = vpop.f32.mrb[0].mxu0
    %v4822 = vadd.f32 %v4655, %v4821
    %v4823 = vpop.f32.mrb[0].mxu0
    %v4824 = vpop.f32.mrb[0].mxu0
    %v4825 = vadd.f32 %v4655, %v4824
    %v4826 = vpop.f32.mrb[0].mxu0
    %4827 = vmatprep.mubr.bf16.mxu0 0
    %4828 = vmatmul.mubr.bf16.gmra.mrb[0].mxu0 %v4699
    %v4829 = vpop.f32.mrb[0].mxu0
    %v4830 = vadd.f32 %v4655, %v4829
    %v4831 = vpop.f32.mrb[0].mxu0
    %v4832 = vpop.f32.mrb[0].mxu0
    %v4833 = vadd.f32 %v4655, %v4832
    %v4834 = vpop.f32.mrb[0].mxu0
    %4835 = vmatprep.mubr.bf16.mxu0 0
    %4836 = vmatmul.mubr.bf16.gmra.mrb[0].mxu0 %v4700
    %v4837 = vpop.f32.mrb[0].mxu0
    %v4838 = vadd.f32 %v4655, %v4837
    %v4839 = vpop.f32.mrb[0].mxu0
    %v4840 = vpop.f32.mrb[0].mxu0
    %v4841 = vadd.f32 %v4655, %v4840
    %v4842 = vpop.f32.mrb[0].mxu0
    %4843 = vmatprep.mubr.bf16.mxu0 0
    %4844 = vmatmul.mubr.bf16.gmra.mrb[0].mxu0 %v4701
    %v4845 = vpop.f32.mrb[0].mxu0
    %v4846 = vadd.f32 %v4655, %v4845
    %v4847 = vpop.f32.mrb[0].mxu0
    %v4848 = vpop.f32.mrb[0].mxu0
    %v4849 = vadd.f32 %v4655, %v4848
    %v4850 = vpop.f32.mrb[0].mxu0
    %4851 = vmatprep.mubr.bf16.mxu0 0
    %4852 = vmatmul.mubr.bf16.gmra.mrb[0].mxu0 %v4702
    %v4853 = vpop.f32.mrb[0].mxu0
    %v4854 = vadd.f32 %v4655, %v4853
    %v4855 = vpop.f32.mrb[0].mxu0
    %v4856 = vpop.f32.mrb[0].mxu0
    %v4857 = vadd.f32 %v4655, %v4856
    %v4858 = vpop.f32.mrb[0].mxu0
    %4859 = vmatprep.mubr.bf16.mxu0 0
    %4860 = vmatmul.mubr.bf16.gmra.mrb[0].mxu0 %v4703
    %v4861 = vpop.f32.mrb[0].mxu0
    %v4862 = vadd.f32 %v4655, %v4861
    %v4863 = vpop.f32.mrb[0].mxu0
    %v4864 = vpop.f32.mrb[0].mxu0
    %v4865 = vadd.f32 %v4655, %v4864
    %v4866 = vpop.f32.mrb[0].mxu0
    %4867 = vmatprep.mubr.bf16.mxu0 0
    %4868 = vmatmul.mubr.bf16.gmra.mrb[0].mxu0 %v4704
    %v4869 = vpop.f32.mrb[0].mxu0
    %v4870 = vadd.f32 %v4655, %v4869
    %v4871 = vpop.f32.mrb[0].mxu0
    %v4872 = vpop.f32.mrb[0].mxu0
    %v4873 = vpop.f32.mrb[0].mxu0
    %4874 = vdwg.mxu0
    %4875 = vst [vmem:[#allocation12] sm:$0xff] %v4798
    %4876 = vst [vmem:[#allocation12 + $0x8] sm:$0xff] %v4801
    %4877 = vst [vmem:[#allocation12 + $0x10] sm:$0xff] %v4806
    %4878 = vst [vmem:[#allocation12 + $0x18] sm:$0xff] %v4809
    %4879 = vst [vmem:[#allocation12 + $0x20] sm:$0xff] %v4814
    %4880 = vst [vmem:[#allocation12 + $0x28] sm:$0xff] %v4817
    %4881 = vst [vmem:[#allocation12 + $0x30] sm:$0xff] %v4822
    %4882 = vst [vmem:[#allocation12 + $0x38] sm:$0xff] %v4825
    %4883 = vst [vmem:[#allocation12 + $0x40] sm:$0xff] %v4830
    %4884 = vst [vmem:[#allocation12 + $0x48] sm:$0xff] %v4833
    %4885 = vst [vmem:[#allocation12 + $0x50] sm:$0xff] %v4838
    %4886 = vst [vmem:[#allocation12 + $0x58] sm:$0xff] %v4841
    %4887 = vst [vmem:[#allocation12 + $0x60] sm:$0xff] %v4846
    %4888 = vst [vmem:[#allocation12 + $0x68] sm:$0xff] %v4849
    %4889 = vst [vmem:[#allocation12 + $0x70] sm:$0xff] %v4854
    %4890 = vst [vmem:[#allocation12 + $0x78] sm:$0xff] %v4857
    %4891 = vst [vmem:[#allocation12 + $0x80] sm:$0xff] %v4862
    %4892 = vst [vmem:[#allocation12 + $0x88] sm:$0xff] %v4865
    %4893 = vst [vmem:[#allocation12 + $0x90] sm:$0xff] %v4870
    // Predicated region
    $region66: #{tpu_custom_call.1} parent=1 // pred_check
      _
    $region67: #{tpu_custom_call.1} parent=1 // pred_check_branch
      %4895 = sbr.rel (0) target = $region69
    $region68: #{tpu_custom_call.1} parent=1 // pred_region
      %s4897 = ssub.s32 2432, 2432
      %4898 = vsyncadd [#allocation8], %s4897
      %s4899 = sshll.u32 [#allocation12], 4
      %s4900 = int_to_ptr.vmem [resolvable:$true] %s4899
      %4905 = dma.vmem_to_hbm [thread:$0]  %s4900, 2432, %s12, [#allocation8], 128, 128, 8
    $region69: #{tpu_custom_call.1} parent=1 // pred_fallthru
      _
    // Predicated region
    $region70: #{tpu_custom_call.1} parent=1 // pred_check
      _
    $region71: #{tpu_custom_call.1} parent=1 // pred_check_branch
      %4907 = sbr.rel (0) target = $region73
    $region72: #{tpu_custom_call.1} parent=1 // pred_region
      %4908 = dma.done [#allocation8], 2432
    $region73: #{tpu_custom_call.1} parent=1 // pred_fallthru
      _
    %4909 = vsyncpa [#allocation7], 1
    %4910 = vsyncpa [#allocation10], 1
    %4911 = vsyncpa [#allocation8], 1

</llo_original>
